<compile_context>
chip_gen: v7x
topology: tpu7x:2x2x1
jax: 0.10.0
libtpu: 0.0.40
codegen_flags: <defaults>
</compile_context>

<pallas_src>
import jax
import jax.numpy as jnp
from jax.experimental import pallas as pl
from jax.experimental.pallas import tpu as pltpu


LANE = 128
SUBLANE = 8


def _round_up(x, m):
    return ((x + m - 1) // m) * m


def _cnvnet_kernel(x_ref,
                   w1_ref, s1_ref, w2_ref, s2_ref,
                   w3_ref, s3_ref, w4_ref, s4_ref,
                   o_ref):
    """One batch tile through all 4 fused [Linear(+folded BN) -> ReLU] layers.

    x_ref : (TM, K0p) bf16 activations (padded, lane-aligned)
    w*_ref: (Kp, Np)  bf16 weights with BN scale folded in
    s*_ref: (1, Np)   f32 folded bias/shift
    o_ref : (TM, N4p) f32 output (padded, lane-aligned)
    """
    h = x_ref[...]                                   # already bf16 for the MXU
    y = None
    for w_ref, s_ref in ((w1_ref, s1_ref), (w2_ref, s2_ref),
                         (w3_ref, s3_ref), (w4_ref, s4_ref)):
        y = jnp.dot(h, w_ref[...], preferred_element_type=jnp.float32)
        y = jnp.maximum(y + s_ref[...], 0.0)         # f32 epilogue (v5e-safe)
        h = y.astype(w_ref.dtype)                    # bf16 input to next matmul
    o_ref[...] = y.astype(o_ref.dtype)


def init_cnvnet_params(key, cnv_length, m_length):
    """Deterministic synthetic parameters matching CnvNet's shapes (PyTorch init style)."""
    dims = [cnv_length, 1300, 700, 300, m_length]
    params = []
    for i in range(4):
        key, kw, kb, kg, kbeta = jax.random.split(key, 5)
        fan_in, fan_out = dims[i], dims[i + 1]
        bound = 1.0 / jnp.sqrt(fan_in)
        # stored as (in, out) == PyTorch weight.T, so the hot path is x @ W
        w = jax.random.uniform(kw, (fan_in, fan_out), jnp.float32, -bound, bound)
        b = jax.random.uniform(kb, (fan_out,), jnp.float32, -bound, bound)
        gamma = 1.0 + 0.1 * jax.random.normal(kg, (fan_out,), jnp.float32)
        beta = 0.1 * jax.random.normal(kbeta, (fan_out,), jnp.float32)
        running_mean = jnp.zeros((fan_out,), jnp.float32)
        running_var = jnp.ones((fan_out,), jnp.float32)
        params.append((w, b, gamma, beta, running_mean, running_var))
    return params


def prepare_cnvnet_params(params, *, eps=1e-5, weight_dtype=jnp.bfloat16):
    """One-time setup: fold BN into Linear, zero-pad feature dims to 128, cast weights."""
    weights, shifts = [], []
    in_dim = params[0][0].shape[0]
    out_dim = params[-1][0].shape[1]
    for (w, b, gamma, beta, rm, rv) in params:
        K, N = w.shape
        scale = gamma / jnp.sqrt(rv + eps)                 # (N,)
        w_folded = w * scale[None, :]                      # BN scale into columns
        shift = scale * (b - rm) + beta                    # folded bias + BN shift
        Kp = _round_up(K, LANE)                            # matches prev layer's padded N
        Np = _round_up(N, LANE)
        wp = jnp.zeros((Kp, Np), jnp.float32).at[:K, :N].set(w_folded)
        sp = jnp.zeros((1, Np), jnp.float32).at[0, :N].set(shift)
        weights.append(wp.astype(weight_dtype))            # cast once, not per call
        shifts.append(sp)                                  # shift stays f32
    return {"weights": weights, "shifts": shifts,
            "in_dim": in_dim, "out_dim": out_dim}


def _pick_tile(B):
    """Batch-tile size per perf review (MXU fill vs. >=2 parallel tiles)."""
    if B >= 512:
        return 256          # fills 256-wide MXU (v6e/v7x), still >= 2 tiles
    if B >= 128:
        return 128          # fills v5e MXU; >= 2 tiles from B=256 up (v7x split)
    return _round_up(max(B, 16), 16)   # whole packed bf16 (16,128) sublanes


def cnvnet_forward(x, prepared):
    """CnvNet forward pass (eval mode), fully fused in one pallas_call."""
    weights = prepared["weights"]
    shifts = prepared["shifts"]
    in_dim = prepared["in_dim"]
    out_dim = prepared["out_dim"]

    B, K = x.shape
    assert K == in_dim, (K, in_dim)
    K0p = weights[0].shape[0]
    N4p = weights[-1].shape[1]

    TM = _pick_tile(B)
    Bp = _round_up(B, TM)

    # bf16 input path: half the per-tile DMA bytes; pad copy only when needed.
    x_bf16 = x.astype(jnp.bfloat16)
    if (Bp, K0p) != (B, K):
        xp = jnp.zeros((Bp, K0p), jnp.bfloat16).at[:B, :K].set(x_bf16)
    else:
        xp = x_bf16

    grid = (Bp // TM,)

    def make_call(single_buffer_weights):
        def const_spec(shape):
            # Weights/shifts: same block for every batch tile -> stay resident
            # in VMEM; single-buffer them to halve their VMEM footprint.
            if single_buffer_weights:
                return pl.BlockSpec(shape, lambda i: (0, 0),
                                    pipeline_mode=pl.Buffered(1))
            return pl.BlockSpec(shape, lambda i: (0, 0))

        in_specs = [pl.BlockSpec((TM, K0p), lambda i: (i, 0))]
        for w, s in zip(weights, shifts):
            in_specs.append(const_spec(w.shape))
            in_specs.append(const_spec(s.shape))

        return pl.pallas_call(
            _cnvnet_kernel,
            out_shape=jax.ShapeDtypeStruct((Bp, N4p), jnp.float32),
            grid=grid,
            in_specs=in_specs,
            out_specs=pl.BlockSpec((TM, N4p), lambda i: (i, 0)),
            compiler_params=pltpu.CompilerParams(
                dimension_semantics=("parallel",),
                vmem_limit_bytes=32 << 20,
            ),
        )

    args = (xp,
            weights[0], shifts[0],
            weights[1], shifts[1],
            weights[2], shifts[2],
            weights[3], shifts[3])

    try:
        out_padded = jax.block_until_ready(make_call(True)(*args))
    except Exception:
        # Fallback if this Pallas build rejects buffer_count=1 for inputs.
        out_padded = make_call(False)(*args)

    return out_padded[:B, :out_dim]


if __name__ == "__main__":
    key = jax.random.PRNGKey(0)
    k_params, k_x = jax.random.split(key)

    B = 8            # batch
    cnv_length = 256 # input dimension of CNV modality
    m_length = 64    # output dimension

    raw_params = init_cnvnet_params(k_params, cnv_length, m_length)
    prepared = prepare_cnvnet_params(raw_params)
    x = jax.random.normal(k_x, (B, cnv_length), jnp.float32)

    out = cnvnet_forward(x, prepared)
    out = jax.block_until_ready(out)

    assert out.shape == (B, m_length), out.shape
    assert bool(jnp.all(out >= 0.0)), "ReLU output must be non-negative"
    assert bool(jnp.all(jnp.isfinite(out))), "non-finite output"

    # Pure-JAX f32 reference (eval-mode BN with running stats, identity dropout).
    ref = x
    for (w, b, gamma, beta, rm, rv) in raw_params:
        y = ref @ w + b
        y = (y - rm) / jnp.sqrt(rv + 1e-5) * gamma + beta
        ref = jnp.maximum(y, 0.0)
    tol_ok = jnp.all(jnp.abs(out - ref) <= 0.05 + 0.05 * jnp.abs(ref))
    assert bool(tol_ok), "kernel output deviates from f32 reference beyond bf16 tolerance"

    print("KERNEL_OK")
</pallas_src>

<mosaic_0001>
module attributes {stable_mosaic.version = 11 : i64} {
  func.func @_cnvnet_kernel(%arg0: i32, %arg1: memref<16x256xbf16, #tpu.memory_space<vmem>>, %arg2: memref<256x1408xbf16, #tpu.memory_space<vmem>>, %arg3: memref<1x1408xf32, #tpu.memory_space<vmem>>, %arg4: memref<1408x768xbf16, #tpu.memory_space<vmem>>, %arg5: memref<1x768xf32, #tpu.memory_space<vmem>>, %arg6: memref<768x384xbf16, #tpu.memory_space<vmem>>, %arg7: memref<1x384xf32, #tpu.memory_space<vmem>>, %arg8: memref<384x128xbf16, #tpu.memory_space<vmem>>, %arg9: memref<1x128xf32, #tpu.memory_space<vmem>>, %arg10: memref<16x128xf32, #tpu.memory_space<vmem>>) attributes {dimension_semantics = [#tpu.dimension_semantics<parallel>], iteration_bounds = array<i64: 1>, scalar_prefetch = 0 : i64, scratch_operands = 0 : i64, tpu.core_type = #tpu.core_type<tc>, window_params = [{transform_indices = @transform_0, window_bounds = array<i64: 16, 256>}, {pipeline_mode = #tpu.pipeline_mode<synchronous>, transform_indices = @transform_1, window_bounds = array<i64: 256, 1408>}, {pipeline_mode = #tpu.pipeline_mode<synchronous>, transform_indices = @transform_2, window_bounds = array<i64: 1, 1408>}, {pipeline_mode = #tpu.pipeline_mode<synchronous>, transform_indices = @transform_3, window_bounds = array<i64: 1408, 768>}, {pipeline_mode = #tpu.pipeline_mode<synchronous>, transform_indices = @transform_4, window_bounds = array<i64: 1, 768>}, {pipeline_mode = #tpu.pipeline_mode<synchronous>, transform_indices = @transform_5, window_bounds = array<i64: 768, 384>}, {pipeline_mode = #tpu.pipeline_mode<synchronous>, transform_indices = @transform_6, window_bounds = array<i64: 1, 384>}, {pipeline_mode = #tpu.pipeline_mode<synchronous>, transform_indices = @transform_7, window_bounds = array<i64: 384, 128>}, {pipeline_mode = #tpu.pipeline_mode<synchronous>, transform_indices = @transform_8, window_bounds = array<i64: 1, 128>}, {transform_indices = @transform_9, window_bounds = array<i64: 16, 128>}]} {
    %c0 = arith.constant 0 : index
    %c0_0 = arith.constant 0 : index
    %0 = vector.load %arg1[%c0, %c0_0] : memref<16x256xbf16, #tpu.memory_space<vmem>>, vector<16x256xbf16>
    %c0_1 = arith.constant 0 : index
    %c0_2 = arith.constant 0 : index
    %1 = vector.load %arg2[%c0_1, %c0_2] : memref<256x1408xbf16, #tpu.memory_space<vmem>>, vector<256x1408xbf16>
    %cst = arith.constant dense<0.000000e+00> : vector<16x1408xf32>
    %2 = tpu.matmul %0, %1, %cst {dimension_numbers = #tpu.dot_dimension_numbers<[1], [0], [0], [1], [0, 0, 1, 1], [], []>} : vector<16x256xbf16>, vector<256x1408xbf16>, vector<16x1408xf32> -> vector<16x1408xf32>
    %c0_3 = arith.constant 0 : index
    %c0_4 = arith.constant 0 : index
    %3 = vector.load %arg3[%c0_3, %c0_4] : memref<1x1408xf32, #tpu.memory_space<vmem>>, vector<1x1408xf32>
    %4 = vector.broadcast %3 : vector<1x1408xf32> to vector<16x1408xf32>
    %5 = arith.addf %2, %4 : vector<16x1408xf32>
    %cst_5 = arith.constant 0.000000e+00 : f32
    %6 = vector.broadcast %cst_5 : f32 to vector<16x1408xf32>
    %7 = arith.maximumf %5, %6 : vector<16x1408xf32>
    %8 = arith.truncf %7 : vector<16x1408xf32> to vector<16x1408xbf16>
    %c0_6 = arith.constant 0 : index
    %c0_7 = arith.constant 0 : index
    %9 = vector.load %arg4[%c0_6, %c0_7] : memref<1408x768xbf16, #tpu.memory_space<vmem>>, vector<1408x768xbf16>
    %cst_8 = arith.constant dense<0.000000e+00> : vector<16x768xf32>
    %10 = tpu.matmul %8, %9, %cst_8 {dimension_numbers = #tpu.dot_dimension_numbers<[1], [0], [0], [1], [0, 0, 1, 1], [], []>} : vector<16x1408xbf16>, vector<1408x768xbf16>, vector<16x768xf32> -> vector<16x768xf32>
    %c0_9 = arith.constant 0 : index
    %c0_10 = arith.constant 0 : index
    %11 = vector.load %arg5[%c0_9, %c0_10] : memref<1x768xf32, #tpu.memory_space<vmem>>, vector<1x768xf32>
    %12 = vector.broadcast %11 : vector<1x768xf32> to vector<16x768xf32>
    %13 = arith.addf %10, %12 : vector<16x768xf32>
    %cst_11 = arith.constant 0.000000e+00 : f32
    %14 = vector.broadcast %cst_11 : f32 to vector<16x768xf32>
    %15 = arith.maximumf %13, %14 : vector<16x768xf32>
    %16 = arith.truncf %15 : vector<16x768xf32> to vector<16x768xbf16>
    %c0_12 = arith.constant 0 : index
    %c0_13 = arith.constant 0 : index
    %17 = vector.load %arg6[%c0_12, %c0_13] : memref<768x384xbf16, #tpu.memory_space<vmem>>, vector<768x384xbf16>
    %cst_14 = arith.constant dense<0.000000e+00> : vector<16x384xf32>
    %18 = tpu.matmul %16, %17, %cst_14 {dimension_numbers = #tpu.dot_dimension_numbers<[1], [0], [0], [1], [0, 0, 1, 1], [], []>} : vector<16x768xbf16>, vector<768x384xbf16>, vector<16x384xf32> -> vector<16x384xf32>
    %c0_15 = arith.constant 0 : index
    %c0_16 = arith.constant 0 : index
    %19 = vector.load %arg7[%c0_15, %c0_16] : memref<1x384xf32, #tpu.memory_space<vmem>>, vector<1x384xf32>
    %20 = vector.broadcast %19 : vector<1x384xf32> to vector<16x384xf32>
    %21 = arith.addf %18, %20 : vector<16x384xf32>
    %cst_17 = arith.constant 0.000000e+00 : f32
    %22 = vector.broadcast %cst_17 : f32 to vector<16x384xf32>
    %23 = arith.maximumf %21, %22 : vector<16x384xf32>
    %24 = arith.truncf %23 : vector<16x384xf32> to vector<16x384xbf16>
    %c0_18 = arith.constant 0 : index
    %c0_19 = arith.constant 0 : index
    %25 = vector.load %arg8[%c0_18, %c0_19] : memref<384x128xbf16, #tpu.memory_space<vmem>>, vector<384x128xbf16>
    %cst_20 = arith.constant dense<0.000000e+00> : vector<16x128xf32>
    %26 = tpu.matmul %24, %25, %cst_20 {dimension_numbers = #tpu.dot_dimension_numbers<[1], [0], [0], [1], [0, 0, 1, 1], [], []>} : vector<16x384xbf16>, vector<384x128xbf16>, vector<16x128xf32> -> vector<16x128xf32>
    %c0_21 = arith.constant 0 : index
    %c0_22 = arith.constant 0 : index
    %27 = vector.load %arg9[%c0_21, %c0_22] : memref<1x128xf32, #tpu.memory_space<vmem>>, vector<1x128xf32>
    %28 = vector.broadcast %27 : vector<1x128xf32> to vector<16x128xf32>
    %29 = arith.addf %26, %28 : vector<16x128xf32>
    %cst_23 = arith.constant 0.000000e+00 : f32
    %30 = vector.broadcast %cst_23 : f32 to vector<16x128xf32>
    %31 = arith.maximumf %29, %30 : vector<16x128xf32>
    %c0_24 = arith.constant 0 : index
    %c0_25 = arith.constant 0 : index
    %32 = vector.load %arg10[%c0_24, %c0_25] : memref<16x128xf32, #tpu.memory_space<vmem>>, vector<16x128xf32>
    tpu.vector_store %arg10[%c0_24, %c0_25], %31 {strides = array<i32>} : memref<16x128xf32, #tpu.memory_space<vmem>>, vector<16x128xf32>,
    return
  }
  func.func @transform_0(%arg0: i32) -> (i32, i32) {
    %c0_i32 = arith.constant 0 : i32
    %c0_i32_0 = arith.constant 0 : i32
    return %arg0, %c0_i32 : i32, i32
  }
  func.func @transform_1(%arg0: i32) -> (i32, i32) {
    %c0_i32 = arith.constant 0 : i32
    %c0_i32_0 = arith.constant 0 : i32
    %c0_i32_1 = arith.constant 0 : i32
    return %c0_i32, %c0_i32_0 : i32, i32
  }
  func.func @transform_2(%arg0: i32) -> (i32, i32) {
    %c0_i32 = arith.constant 0 : i32
    %c0_i32_0 = arith.constant 0 : i32
    %c0_i32_1 = arith.constant 0 : i32
    return %c0_i32, %c0_i32_0 : i32, i32
  }
  func.func @transform_3(%arg0: i32) -> (i32, i32) {
    %c0_i32 = arith.constant 0 : i32
    %c0_i32_0 = arith.constant 0 : i32
    %c0_i32_1 = arith.constant 0 : i32
    return %c0_i32, %c0_i32_0 : i32, i32
  }
  func.func @transform_4(%arg0: i32) -> (i32, i32) {
    %c0_i32 = arith.constant 0 : i32
    %c0_i32_0 = arith.constant 0 : i32
    %c0_i32_1 = arith.constant 0 : i32
    return %c0_i32, %c0_i32_0 : i32, i32
  }
  func.func @transform_5(%arg0: i32) -> (i32, i32) {
    %c0_i32 = arith.constant 0 : i32
    %c0_i32_0 = arith.constant 0 : i32
    %c0_i32_1 = arith.constant 0 : i32
    return %c0_i32, %c0_i32_0 : i32, i32
  }
  func.func @transform_6(%arg0: i32) -> (i32, i32) {
    %c0_i32 = arith.constant 0 : i32
    %c0_i32_0 = arith.constant 0 : i32
    %c0_i32_1 = arith.constant 0 : i32
    return %c0_i32, %c0_i32_0 : i32, i32
  }
  func.func @transform_7(%arg0: i32) -> (i32, i32) {
    %c0_i32 = arith.constant 0 : i32
    %c0_i32_0 = arith.constant 0 : i32
    %c0_i32_1 = arith.constant 0 : i32
    return %c0_i32, %c0_i32_0 : i32, i32
  }
  func.func @transform_8(%arg0: i32) -> (i32, i32) {
    %c0_i32 = arith.constant 0 : i32
    %c0_i32_0 = arith.constant 0 : i32
    %c0_i32_1 = arith.constant 0 : i32
    return %c0_i32, %c0_i32_0 : i32, i32
  }
  func.func @transform_9(%arg0: i32) -> (i32, i32) {
    %c0_i32 = arith.constant 0 : i32
    %c0_i32_0 = arith.constant 0 : i32
    return %arg0, %c0_i32 : i32, i32
  }
}

module attributes {stable_mosaic.version = 11 : i64} {
  func.func @_cnvnet_kernel(%arg0: i32, %arg1: memref<16x256xbf16, #tpu.memory_space<vmem>>, %arg2: memref<256x1408xbf16, #tpu.memory_space<vmem>>, %arg3: memref<1x1408xf32, #tpu.memory_space<vmem>>, %arg4: memref<1408x768xbf16, #tpu.memory_space<vmem>>, %arg5: memref<1x768xf32, #tpu.memory_space<vmem>>, %arg6: memref<768x384xbf16, #tpu.memory_space<vmem>>, %arg7: memref<1x384xf32, #tpu.memory_space<vmem>>, %arg8: memref<384x128xbf16, #tpu.memory_space<vmem>>, %arg9: memref<1x128xf32, #tpu.memory_space<vmem>>, %arg10: memref<16x128xf32, #tpu.memory_space<vmem>>) attributes {dimension_semantics = [#tpu.dimension_semantics<parallel>], iteration_bounds = array<i64: 1>, scalar_prefetch = 0 : i64, scratch_operands = 0 : i64, tpu.core_type = #tpu.core_type<tc>, window_params = [{transform_indices = @transform_0, window_bounds = array<i64: 16, 256>}, {pipeline_mode = #tpu.pipeline_mode<synchronous>, transform_indices = @transform_1, window_bounds = array<i64: 256, 1408>}, {pipeline_mode = #tpu.pipeline_mode<synchronous>, transform_indices = @transform_2, window_bounds = array<i64: 1, 1408>}, {pipeline_mode = #tpu.pipeline_mode<synchronous>, transform_indices = @transform_3, window_bounds = array<i64: 1408, 768>}, {pipeline_mode = #tpu.pipeline_mode<synchronous>, transform_indices = @transform_4, window_bounds = array<i64: 1, 768>}, {pipeline_mode = #tpu.pipeline_mode<synchronous>, transform_indices = @transform_5, window_bounds = array<i64: 768, 384>}, {pipeline_mode = #tpu.pipeline_mode<synchronous>, transform_indices = @transform_6, window_bounds = array<i64: 1, 384>}, {pipeline_mode = #tpu.pipeline_mode<synchronous>, transform_indices = @transform_7, window_bounds = array<i64: 384, 128>}, {pipeline_mode = #tpu.pipeline_mode<synchronous>, transform_indices = @transform_8, window_bounds = array<i64: 1, 128>}, {transform_indices = @transform_9, window_bounds = array<i64: 16, 128>}]} {
    %c0 = arith.constant 0 : index
    %c0_0 = arith.constant 0 : index
    %0 = vector.load %arg1[%c0, %c0_0] : memref<16x256xbf16, #tpu.memory_space<vmem>>, vector<16x256xbf16>
    %c0_1 = arith.constant 0 : index
    %c0_2 = arith.constant 0 : index
    %1 = vector.load %arg2[%c0_1, %c0_2] : memref<256x1408xbf16, #tpu.memory_space<vmem>>, vector<256x1408xbf16>
    %cst = arith.constant dense<0.000000e+00> : vector<16x1408xf32>
    %2 = tpu.matmul %0, %1, %cst {dimension_numbers = #tpu.dot_dimension_numbers<[1], [0], [0], [1], [0, 0, 1, 1], [], []>} : vector<16x256xbf16>, vector<256x1408xbf16>, vector<16x1408xf32> -> vector<16x1408xf32>
    %c0_3 = arith.constant 0 : index
    %c0_4 = arith.constant 0 : index
    %3 = vector.load %arg3[%c0_3, %c0_4] : memref<1x1408xf32, #tpu.memory_space<vmem>>, vector<1x1408xf32>
    %4 = vector.broadcast %3 : vector<1x1408xf32> to vector<16x1408xf32>
    %5 = arith.addf %2, %4 : vector<16x1408xf32>
    %cst_5 = arith.constant 0.000000e+00 : f32
    %6 = vector.broadcast %cst_5 : f32 to vector<16x1408xf32>
    %7 = arith.maximumf %5, %6 : vector<16x1408xf32>
    %8 = arith.truncf %7 : vector<16x1408xf32> to vector<16x1408xbf16>
    %c0_6 = arith.constant 0 : index
    %c0_7 = arith.constant 0 : index
    %9 = vector.load %arg4[%c0_6, %c0_7] : memref<1408x768xbf16, #tpu.memory_space<vmem>>, vector<1408x768xbf16>
    %cst_8 = arith.constant dense<0.000000e+00> : vector<16x768xf32>
    %10 = tpu.matmul %8, %9, %cst_8 {dimension_numbers = #tpu.dot_dimension_numbers<[1], [0], [0], [1], [0, 0, 1, 1], [], []>} : vector<16x1408xbf16>, vector<1408x768xbf16>, vector<16x768xf32> -> vector<16x768xf32>
    %c0_9 = arith.constant 0 : index
    %c0_10 = arith.constant 0 : index
    %11 = vector.load %arg5[%c0_9, %c0_10] : memref<1x768xf32, #tpu.memory_space<vmem>>, vector<1x768xf32>
    %12 = vector.broadcast %11 : vector<1x768xf32> to vector<16x768xf32>
    %13 = arith.addf %10, %12 : vector<16x768xf32>
    %cst_11 = arith.constant 0.000000e+00 : f32
    %14 = vector.broadcast %cst_11 : f32 to vector<16x768xf32>
    %15 = arith.maximumf %13, %14 : vector<16x768xf32>
    %16 = arith.truncf %15 : vector<16x768xf32> to vector<16x768xbf16>
    %c0_12 = arith.constant 0 : index
    %c0_13 = arith.constant 0 : index
    %17 = vector.load %arg6[%c0_12, %c0_13] : memref<768x384xbf16, #tpu.memory_space<vmem>>, vector<768x384xbf16>
    %cst_14 = arith.constant dense<0.000000e+00> : vector<16x384xf32>
    %18 = tpu.matmul %16, %17, %cst_14 {dimension_numbers = #tpu.dot_dimension_numbers<[1], [0], [0], [1], [0, 0, 1, 1], [], []>} : vector<16x768xbf16>, vector<768x384xbf16>, vector<16x384xf32> -> vector<16x384xf32>
    %c0_15 = arith.constant 0 : index
    %c0_16 = arith.constant 0 : index
    %19 = vector.load %arg7[%c0_15, %c0_16] : memref<1x384xf32, #tpu.memory_space<vmem>>, vector<1x384xf32>
    %20 = vector.broadcast %19 : vector<1x384xf32> to vector<16x384xf32>
    %21 = arith.addf %18, %20 : vector<16x384xf32>
    %cst_17 = arith.constant 0.000000e+00 : f32
    %22 = vector.broadcast %cst_17 : f32 to vector<16x384xf32>
    %23 = arith.maximumf %21, %22 : vector<16x384xf32>
    %24 = arith.truncf %23 : vector<16x384xf32> to vector<16x384xbf16>
    %c0_18 = arith.constant 0 : index
    %c0_19 = arith.constant 0 : index
    %25 = vector.load %arg8[%c0_18, %c0_19] : memref<384x128xbf16, #tpu.memory_space<vmem>>, vector<384x128xbf16>
    %cst_20 = arith.constant dense<0.000000e+00> : vector<16x128xf32>
    %26 = tpu.matmul %24, %25, %cst_20 {dimension_numbers = #tpu.dot_dimension_numbers<[1], [0], [0], [1], [0, 0, 1, 1], [], []>} : vector<16x384xbf16>, vector<384x128xbf16>, vector<16x128xf32> -> vector<16x128xf32>
    %c0_21 = arith.constant 0 : index
    %c0_22 = arith.constant 0 : index
    %27 = vector.load %arg9[%c0_21, %c0_22] : memref<1x128xf32, #tpu.memory_space<vmem>>, vector<1x128xf32>
    %28 = vector.broadcast %27 : vector<1x128xf32> to vector<16x128xf32>
    %29 = arith.addf %26, %28 : vector<16x128xf32>
    %cst_23 = arith.constant 0.000000e+00 : f32
    %30 = vector.broadcast %cst_23 : f32 to vector<16x128xf32>
    %31 = arith.maximumf %29, %30 : vector<16x128xf32>
    %c0_24 = arith.constant 0 : index
    %c0_25 = arith.constant 0 : index
    %32 = vector.load %arg10[%c0_24, %c0_25] : memref<16x128xf32, #tpu.memory_space<vmem>>, vector<16x128xf32>
    tpu.vector_store %arg10[%c0_24, %c0_25], %31 {strides = array<i32>} : memref<16x128xf32, #tpu.memory_space<vmem>>, vector<16x128xf32>,
    return
  }
  func.func @transform_0(%arg0: i32) -> (i32, i32) {
    %c0_i32 = arith.constant 0 : i32
    %c0_i32_0 = arith.constant 0 : i32
    return %arg0, %c0_i32 : i32, i32
  }
  func.func @transform_1(%arg0: i32) -> (i32, i32) {
    %c0_i32 = arith.constant 0 : i32
    %c0_i32_0 = arith.constant 0 : i32
    %c0_i32_1 = arith.constant 0 : i32
    return %c0_i32, %c0_i32_0 : i32, i32
  }
  func.func @transform_2(%arg0: i32) -> (i32, i32) {
    %c0_i32 = arith.constant 0 : i32
    %c0_i32_0 = arith.constant 0 : i32
    %c0_i32_1 = arith.constant 0 : i32
    return %c0_i32, %c0_i32_0 : i32, i32
  }
  func.func @transform_3(%arg0: i32) -> (i32, i32) {
    %c0_i32 = arith.constant 0 : i32
    %c0_i32_0 = arith.constant 0 : i32
    %c0_i32_1 = arith.constant 0 : i32
    return %c0_i32, %c0_i32_0 : i32, i32
  }
  func.func @transform_4(%arg0: i32) -> (i32, i32) {
    %c0_i32 = arith.constant 0 : i32
    %c0_i32_0 = arith.constant 0 : i32
    %c0_i32_1 = arith.constant 0 : i32
    return %c0_i32, %c0_i32_0 : i32, i32
  }
  func.func @transform_5(%arg0: i32) -> (i32, i32) {
    %c0_i32 = arith.constant 0 : i32
    %c0_i32_0 = arith.constant 0 : i32
    %c0_i32_1 = arith.constant 0 : i32
    return %c0_i32, %c0_i32_0 : i32, i32
  }
  func.func @transform_6(%arg0: i32) -> (i32, i32) {
    %c0_i32 = arith.constant 0 : i32
    %c0_i32_0 = arith.constant 0 : i32
    %c0_i32_1 = arith.constant 0 : i32
    return %c0_i32, %c0_i32_0 : i32, i32
  }
  func.func @transform_7(%arg0: i32) -> (i32, i32) {
    %c0_i32 = arith.constant 0 : i32
    %c0_i32_0 = arith.constant 0 : i32
    %c0_i32_1 = arith.constant 0 : i32
    return %c0_i32, %c0_i32_0 : i32, i32
  }
  func.func @transform_8(%arg0: i32) -> (i32, i32) {
    %c0_i32 = arith.constant 0 : i32
    %c0_i32_0 = arith.constant 0 : i32
    %c0_i32_1 = arith.constant 0 : i32
    return %c0_i32, %c0_i32_0 : i32, i32
  }
  func.func @transform_9(%arg0: i32) -> (i32, i32) {
    %c0_i32 = arith.constant 0 : i32
    %c0_i32_0 = arith.constant 0 : i32
    return %arg0, %c0_i32 : i32, i32
  }
}

</mosaic_0001>

<llo_original>
// kernel: tpu_custom_call.1
$region0: #{tpu_custom_call.1}
  #allocation0 [shape = 'u32[]', space=smem, size = 0x4, offset = 0x4, fixed_abs, tag = 'smem constant byte address 0x4 - core index']
  #allocation1 [shape = 'u32[144,128]{1,0:T(1,128)}', space=vmem, size = 0x12000, scoped, tag = 'internal scratch']
  %s0 = inlined_call_operand.hbm [shape: bf16[16,256], index: 0, kind: input, shape index: {}]
  %s1 = inlined_call_operand.hbm [shape: bf16[256,1408], index: 1, kind: input, shape index: {}]
  %s2 = inlined_call_operand.hbm [shape: f32[1,1408], index: 2, kind: input, shape index: {}]
  %s3 = inlined_call_operand.hbm [shape: bf16[1408,768], index: 3, kind: input, shape index: {}]
  %s4 = inlined_call_operand.hbm [shape: f32[1,768], index: 4, kind: input, shape index: {}]
  %s5 = inlined_call_operand.hbm [shape: bf16[768,384], index: 5, kind: input, shape index: {}]
  %s6 = inlined_call_operand.hbm [shape: f32[1,384], index: 6, kind: input, shape index: {}]
  %s7 = inlined_call_operand.hbm [shape: bf16[384,128], index: 7, kind: input, shape index: {}]
  %s8 = inlined_call_operand.hbm [shape: f32[1,128], index: 8, kind: input, shape index: {}]
  %s9 = inlined_call_operand.hbm [shape: f32[16,128], index: 9, kind: output, shape index: {}]
  %s10 = sld [smem:[#allocation0]]
  $region82: #{tpu_custom_call.1} parent=0
    _
  %s12 = ssub.s32 1, %s10
  %s13 = scalar_select 0, %s12, %s10
  $region1: #{tpu_custom_call.1} parent=0
    #allocation2 [shape = 'u8[8192]{0}', space=vmem, size = 0x2000, scoped, tag = 'input window, operand 0, single buffered']
    #allocation3 [shape = 's32[1]{0}', space=sflag, size = 0x4, scoped, tag = 'scoped memory for tpu_custom_call.1']
    #allocation4 [shape = 's32[1]{0}', space=sflag, size = 0x4, scoped, tag = 'scoped memory for tpu_custom_call.1']
    #allocation5 [shape = 'u8[720896]{0}', space=vmem, size = 0xb0000, scoped, tag = 'input window, operand 1, single buffered']
    #allocation6 [shape = 's32[1]{0}', space=sflag, size = 0x4, scoped, tag = 'scoped memory for tpu_custom_call.1']
    #allocation7 [shape = 'u8[5632]{0}', space=vmem, size = 0x1800, scoped, tag = 'input window, operand 2, single buffered']
    #allocation8 [shape = 'u8[2162688]{0}', space=vmem, size = 0x210000, scoped, tag = 'input window, operand 3, single buffered']
    #allocation9 [shape = 's32[1]{0}', space=sflag, size = 0x4, scoped, tag = 'scoped memory for tpu_custom_call.1']
    #allocation10 [shape = 'u8[3072]{0}', space=vmem, size = 0xc00, scoped, tag = 'input window, operand 4, single buffered']
    #allocation11 [shape = 'u8[589824]{0}', space=vmem, size = 0x90000, scoped, tag = 'input window, operand 5, single buffered']
    #allocation12 [shape = 's32[1]{0}', space=sflag, size = 0x4, scoped, tag = 'scoped memory for tpu_custom_call.1']
    #allocation13 [shape = 'u8[1536]{0}', space=vmem, size = 0x800, scoped, tag = 'input window, operand 6, single buffered']
    #allocation14 [shape = 'u8[98304]{0}', space=vmem, size = 0x18000, scoped, tag = 'input window, operand 7, single buffered']
    #allocation15 [shape = 's32[1]{0}', space=sflag, size = 0x4, scoped, tag = 'scoped memory for tpu_custom_call.1']
    #allocation16 [shape = 'u8[512]{0}', space=vmem, size = 0x400, scoped, tag = 'input window, operand 8, single buffered']
    #allocation17 [shape = 'u8[8192]{0}', space=vmem, size = 0x2000, scoped, tag = 'output window, operand 0, single buffered']
    %14 = vsyncpa [#allocation3], 0
    %15 = vsyncpa [#allocation6], 0
    %16 = vsyncpa [#allocation9], 0
    %17 = vsyncpa [#allocation12], 0
    %18 = vsyncpa [#allocation15], 0
    %19 = vsyncpa [#allocation4], 0
    // Predicated region
    $region2: #{tpu_custom_call.1} parent=1 // pred_check
      _
    $region3: #{tpu_custom_call.1} parent=1 // pred_check_branch
      %21 = sbr.rel (0) target = $region5
    $region4: #{tpu_custom_call.1} parent=1 // pred_region
      %s23 = ssub.s32 256, 256
      %24 = vsyncadd [#allocation3], %s23
      %s25 = sshll.u32 [#allocation2], 4
      %s26 = int_to_ptr.vmem [resolvable:$true] %s25
      %31 = dma.hbm_to_vmem [thread:$0]  %s0, 256, %s26, [#allocation3], 128, 128, 8
    $region5: #{tpu_custom_call.1} parent=1 // pred_fallthru
      _
    // Predicated region
    $region6: #{tpu_custom_call.1} parent=1 // pred_check
      _
    $region7: #{tpu_custom_call.1} parent=1 // pred_check_branch
      %33 = sbr.rel (0) target = $region9
    $region8: #{tpu_custom_call.1} parent=1 // pred_region
      %s35 = ssub.s32 22528, 22528
      %36 = vsyncadd [#allocation6], %s35
      %s37 = sshll.u32 [#allocation5], 4
      %s38 = int_to_ptr.vmem [resolvable:$true] %s37
      %43 = dma.hbm_to_vmem [thread:$0]  %s1, 22528, %s38, [#allocation6], 704, 704, 44
    $region9: #{tpu_custom_call.1} parent=1 // pred_fallthru
      _
    // Predicated region
    $region10: #{tpu_custom_call.1} parent=1 // pred_check
      _
    $region11: #{tpu_custom_call.1} parent=1 // pred_check_branch
      %45 = sbr.rel (0) target = $region13
    $region12: #{tpu_custom_call.1} parent=1 // pred_region
      %s47 = ssub.s32 176, 176
      %48 = vsyncadd [#allocation6], %s47
      %s50 = sshll.u32 [#allocation7], 4
      %s51 = int_to_ptr.vmem [resolvable:$true] %s50
      %53 = dma.hbm_to_vmem [thread:$0]  %s2, 176, %s51, [#allocation6]
    $region13: #{tpu_custom_call.1} parent=1 // pred_fallthru
      _
    // Predicated region
    $region14: #{tpu_custom_call.1} parent=1 // pred_check
      _
    $region15: #{tpu_custom_call.1} parent=1 // pred_check_branch
      %55 = sbr.rel (0) target = $region17
    $region16: #{tpu_custom_call.1} parent=1 // pred_region
      %s57 = ssub.s32 67584, 67584
      %58 = vsyncadd [#allocation9], %s57
      %s59 = sshll.u32 [#allocation8], 4
      %s60 = int_to_ptr.vmem [resolvable:$true] %s59
      %65 = dma.hbm_to_vmem [thread:$0]  %s3, 67584, %s60, [#allocation9], 384, 384, 24
    $region17: #{tpu_custom_call.1} parent=1 // pred_fallthru
      _
    // Predicated region
    $region18: #{tpu_custom_call.1} parent=1 // pred_check
      _
    $region19: #{tpu_custom_call.1} parent=1 // pred_check_branch
      %67 = sbr.rel (0) target = $region21
    $region20: #{tpu_custom_call.1} parent=1 // pred_region
      %s69 = ssub.s32 96, 96
      %70 = vsyncadd [#allocation9], %s69
      %s72 = sshll.u32 [#allocation10], 4
      %s73 = int_to_ptr.vmem [resolvable:$true] %s72
      %75 = dma.hbm_to_vmem [thread:$0]  %s4, 96, %s73, [#allocation9]
    $region21: #{tpu_custom_call.1} parent=1 // pred_fallthru
      _
    // Predicated region
    $region22: #{tpu_custom_call.1} parent=1 // pred_check
      _
    $region23: #{tpu_custom_call.1} parent=1 // pred_check_branch
      %77 = sbr.rel (0) target = $region25
    $region24: #{tpu_custom_call.1} parent=1 // pred_region
      %s79 = ssub.s32 18432, 18432
      %80 = vsyncadd [#allocation12], %s79
      %s81 = sshll.u32 [#allocation11], 4
      %s82 = int_to_ptr.vmem [resolvable:$true] %s81
      %87 = dma.hbm_to_vmem [thread:$0]  %s5, 18432, %s82, [#allocation12], 192, 192, 12
    $region25: #{tpu_custom_call.1} parent=1 // pred_fallthru
      _
    // Predicated region
    $region26: #{tpu_custom_call.1} parent=1 // pred_check
      _
    $region27: #{tpu_custom_call.1} parent=1 // pred_check_branch
      %89 = sbr.rel (0) target = $region29
    $region28: #{tpu_custom_call.1} parent=1 // pred_region
      %s91 = ssub.s32 48, 48
      %92 = vsyncadd [#allocation12], %s91
      %s94 = sshll.u32 [#allocation13], 4
      %s95 = int_to_ptr.vmem [resolvable:$true] %s94
      %97 = dma.hbm_to_vmem [thread:$0]  %s6, 48, %s95, [#allocation12]
    $region29: #{tpu_custom_call.1} parent=1 // pred_fallthru
      _
    // Predicated region
    $region30: #{tpu_custom_call.1} parent=1 // pred_check
      _
    $region31: #{tpu_custom_call.1} parent=1 // pred_check_branch
      %99 = sbr.rel (0) target = $region33
    $region32: #{tpu_custom_call.1} parent=1 // pred_region
      %s101 = ssub.s32 3072, 3072
      %102 = vsyncadd [#allocation15], %s101
      %s103 = sshll.u32 [#allocation14], 4
      %s104 = int_to_ptr.vmem [resolvable:$true] %s103
      %109 = dma.hbm_to_vmem [thread:$0]  %s7, 3072, %s104, [#allocation15], 64, 64, 4
    $region33: #{tpu_custom_call.1} parent=1 // pred_fallthru
      _
    // Predicated region
    $region34: #{tpu_custom_call.1} parent=1 // pred_check
      _
    $region35: #{tpu_custom_call.1} parent=1 // pred_check_branch
      %111 = sbr.rel (0) target = $region37
    $region36: #{tpu_custom_call.1} parent=1 // pred_region
      %s113 = ssub.s32 16, 16
      %114 = vsyncadd [#allocation15], %s113
      %s116 = sshll.u32 [#allocation16], 4
      %s117 = int_to_ptr.vmem [resolvable:$true] %s116
      %119 = dma.hbm_to_vmem [thread:$0]  %s8, 16, %s117, [#allocation15]
    $region37: #{tpu_custom_call.1} parent=1 // pred_fallthru
      _
    // Predicated region
    $region38: #{tpu_custom_call.1} parent=1 // pred_check
      _
    $region39: #{tpu_custom_call.1} parent=1 // pred_check_branch
      %121 = sbr.rel (0) target = $region41
    $region40: #{tpu_custom_call.1} parent=1 // pred_region
      %122 = dma.done [#allocation3], 256
    $region41: #{tpu_custom_call.1} parent=1 // pred_fallthru
      _
    // Predicated region
    $region42: #{tpu_custom_call.1} parent=1 // pred_check
      _
    $region43: #{tpu_custom_call.1} parent=1 // pred_check_branch
      %124 = sbr.rel (0) target = $region45
    $region44: #{tpu_custom_call.1} parent=1 // pred_region
      %125 = dma.done [#allocation6], 22528
    $region45: #{tpu_custom_call.1} parent=1 // pred_fallthru
      _
    // Predicated region
    $region46: #{tpu_custom_call.1} parent=1 // pred_check
      _
    $region47: #{tpu_custom_call.1} parent=1 // pred_check_branch
      %127 = sbr.rel (0) target = $region49
    $region48: #{tpu_custom_call.1} parent=1 // pred_region
      %128 = dma.done [#allocation6], 176
    $region49: #{tpu_custom_call.1} parent=1 // pred_fallthru
      _
    // Predicated region
    $region50: #{tpu_custom_call.1} parent=1 // pred_check
      _
    $region51: #{tpu_custom_call.1} parent=1 // pred_check_branch
      %130 = sbr.rel (0) target = $region53
    $region52: #{tpu_custom_call.1} parent=1 // pred_region
      %131 = dma.done [#allocation9], 67584
    $region53: #{tpu_custom_call.1} parent=1 // pred_fallthru
      _
    // Predicated region
    $region54: #{tpu_custom_call.1} parent=1 // pred_check
      _
    $region55: #{tpu_custom_call.1} parent=1 // pred_check_branch
      %133 = sbr.rel (0) target = $region57
    $region56: #{tpu_custom_call.1} parent=1 // pred_region
      %134 = dma.done [#allocation9], 96
    $region57: #{tpu_custom_call.1} parent=1 // pred_fallthru
      _
    // Predicated region
    $region58: #{tpu_custom_call.1} parent=1 // pred_check
      _
    $region59: #{tpu_custom_call.1} parent=1 // pred_check_branch
      %136 = sbr.rel (0) target = $region61
    $region60: #{tpu_custom_call.1} parent=1 // pred_region
      %137 = dma.done [#allocation12], 18432
    $region61: #{tpu_custom_call.1} parent=1 // pred_fallthru
      _
    // Predicated region
    $region62: #{tpu_custom_call.1} parent=1 // pred_check
      _
    $region63: #{tpu_custom_call.1} parent=1 // pred_check_branch
      %139 = sbr.rel (0) target = $region65
    $region64: #{tpu_custom_call.1} parent=1 // pred_region
      %140 = dma.done [#allocation12], 48
    $region65: #{tpu_custom_call.1} parent=1 // pred_fallthru
      _
    // Predicated region
    $region66: #{tpu_custom_call.1} parent=1 // pred_check
      _
    $region67: #{tpu_custom_call.1} parent=1 // pred_check_branch
      %142 = sbr.rel (0) target = $region69
    $region68: #{tpu_custom_call.1} parent=1 // pred_region
      %143 = dma.done [#allocation15], 3072
    $region69: #{tpu_custom_call.1} parent=1 // pred_fallthru
      _
    // Predicated region
    $region70: #{tpu_custom_call.1} parent=1 // pred_check
      _
    $region71: #{tpu_custom_call.1} parent=1 // pred_check_branch
      %145 = sbr.rel (0) target = $region73
    $region72: #{tpu_custom_call.1} parent=1 // pred_region
      %146 = dma.done [#allocation15], 16
    $region73: #{tpu_custom_call.1} parent=1 // pred_fallthru
      _
    %v148 = vld [vmem:[#allocation2] sm:$0xff]
    %v149 = vld [vmem:[#allocation2 + $0x8] sm:$0xff]
    %v150 = vld [vmem:[#allocation5] sm:$0xff]
    %v151 = vld [vmem:[#allocation5 + $0x8] sm:$0xff]
    %v152 = vld [vmem:[#allocation5 + $0x10] sm:$0xff]
    %v153 = vld [vmem:[#allocation5 + $0x18] sm:$0xff]
    %v154 = vld [vmem:[#allocation5 + $0x20] sm:$0xff]
    %v155 = vld [vmem:[#allocation5 + $0x28] sm:$0xf]
    %v156 = vld [vmem:[#allocation5 + $0x2c] sm:$0xff]
    %v157 = vld [vmem:[#allocation5 + $0x34] sm:$0xff]
    %v158 = vld [vmem:[#allocation5 + $0x3c] sm:$0xff]
    %v159 = vld [vmem:[#allocation5 + $0x44] sm:$0xff]
    %v160 = vld [vmem:[#allocation5 + $0x4c] sm:$0xff]
    %v161 = vld [vmem:[#allocation5 + $0x54] sm:$0xf]
    %v162 = vld [vmem:[#allocation5 + $0x58] sm:$0xff]
    %v163 = vld [vmem:[#allocation5 + $0x60] sm:$0xff]
    %v164 = vld [vmem:[#allocation5 + $0x68] sm:$0xff]
    %v165 = vld [vmem:[#allocation5 + $0x70] sm:$0xff]
    %v166 = vld [vmem:[#allocation5 + $0x78] sm:$0xff]
    %v167 = vld [vmem:[#allocation5 + $0x80] sm:$0xf]
    %v168 = vld [vmem:[#allocation5 + $0x84] sm:$0xff]
    %v169 = vld [vmem:[#allocation5 + $0x8c] sm:$0xff]
    %v170 = vld [vmem:[#allocation5 + $0x94] sm:$0xff]
    %v171 = vld [vmem:[#allocation5 + $0x9c] sm:$0xff]
    %v172 = vld [vmem:[#allocation5 + $0xa4] sm:$0xff]
    %v173 = vld [vmem:[#allocation5 + $0xac] sm:$0xf]
    %v174 = vld [vmem:[#allocation5 + $0xb0] sm:$0xff]
    %v175 = vld [vmem:[#allocation5 + $0xb8] sm:$0xff]
    %v176 = vld [vmem:[#allocation5 + $0xc0] sm:$0xff]
    %v177 = vld [vmem:[#allocation5 + $0xc8] sm:$0xff]
    %v178 = vld [vmem:[#allocation5 + $0xd0] sm:$0xff]
    %v179 = vld [vmem:[#allocation5 + $0xd8] sm:$0xf]
    %v180 = vld [vmem:[#allocation5 + $0xdc] sm:$0xff]
    %v181 = vld [vmem:[#allocation5 + $0xe4] sm:$0xff]
    %v182 = vld [vmem:[#allocation5 + $0xec] sm:$0xff]
    %v183 = vld [vmem:[#allocation5 + $0xf4] sm:$0xff]
    %v184 = vld [vmem:[#allocation5 + $0xfc] sm:$0xff]
    %v185 = vld [vmem:[#allocation5 + $0x104] sm:$0xf]
    %v186 = vld [vmem:[#allocation5 + $0x108] sm:$0xff]
    %v187 = vld [vmem:[#allocation5 + $0x110] sm:$0xff]
    %v188 = vld [vmem:[#allocation5 + $0x118] sm:$0xff]
    %v189 = vld [vmem:[#allocation5 + $0x120] sm:$0xff]
    %v190 = vld [vmem:[#allocation5 + $0x128] sm:$0xff]
    %v191 = vld [vmem:[#allocation5 + $0x130] sm:$0xf]
    %v192 = vld [vmem:[#allocation5 + $0x134] sm:$0xff]
    %v193 = vld [vmem:[#allocation5 + $0x13c] sm:$0xff]
    %v194 = vld [vmem:[#allocation5 + $0x144] sm:$0xff]
    %v195 = vld [vmem:[#allocation5 + $0x14c] sm:$0xff]
    %v196 = vld [vmem:[#allocation5 + $0x154] sm:$0xff]
    %v197 = vld [vmem:[#allocation5 + $0x15c] sm:$0xf]
    %v198 = vld [vmem:[#allocation5 + $0x160] sm:$0xff]
    %v199 = vld [vmem:[#allocation5 + $0x168] sm:$0xff]
    %v200 = vld [vmem:[#allocation5 + $0x170] sm:$0xff]
    %v201 = vld [vmem:[#allocation5 + $0x178] sm:$0xff]
    %v202 = vld [vmem:[#allocation5 + $0x180] sm:$0xff]
    %v203 = vld [vmem:[#allocation5 + $0x188] sm:$0xf]
    %v204 = vld [vmem:[#allocation5 + $0x18c] sm:$0xff]
    %v205 = vld [vmem:[#allocation5 + $0x194] sm:$0xff]
    %v206 = vld [vmem:[#allocation5 + $0x19c] sm:$0xff]
    %v207 = vld [vmem:[#allocation5 + $0x1a4] sm:$0xff]
    %v208 = vld [vmem:[#allocation5 + $0x1ac] sm:$0xff]
    %v209 = vld [vmem:[#allocation5 + $0x1b4] sm:$0xf]
    %v210 = vld [vmem:[#allocation5 + $0x1b8] sm:$0xff]
    %v211 = vld [vmem:[#allocation5 + $0x1c0] sm:$0xff]
    %v212 = vld [vmem:[#allocation5 + $0x1c8] sm:$0xff]
    %v213 = vld [vmem:[#allocation5 + $0x1d0] sm:$0xff]
    %v214 = vld [vmem:[#allocation5 + $0x1d8] sm:$0xff]
    %v215 = vld [vmem:[#allocation5 + $0x1e0] sm:$0xf]
    %v216 = vld [vmem:[#allocation5 + $0x1e4] sm:$0xff]
    %v217 = vld [vmem:[#allocation5 + $0x1ec] sm:$0xff]
    %v218 = vld [vmem:[#allocation5 + $0x1f4] sm:$0xff]
    %v219 = vld [vmem:[#allocation5 + $0x1fc] sm:$0xff]
    %v220 = vld [vmem:[#allocation5 + $0x204] sm:$0xff]
    %v221 = vld [vmem:[#allocation5 + $0x20c] sm:$0xf]
    %v222 = vld [vmem:[#allocation5 + $0x210] sm:$0xff]
    %v223 = vld [vmem:[#allocation5 + $0x218] sm:$0xff]
    %v224 = vld [vmem:[#allocation5 + $0x220] sm:$0xff]
    %v225 = vld [vmem:[#allocation5 + $0x228] sm:$0xff]
    %v226 = vld [vmem:[#allocation5 + $0x230] sm:$0xff]
    %v227 = vld [vmem:[#allocation5 + $0x238] sm:$0xf]
    %v228 = vld [vmem:[#allocation5 + $0x23c] sm:$0xff]
    %v229 = vld [vmem:[#allocation5 + $0x244] sm:$0xff]
    %v230 = vld [vmem:[#allocation5 + $0x24c] sm:$0xff]
    %v231 = vld [vmem:[#allocation5 + $0x254] sm:$0xff]
    %v232 = vld [vmem:[#allocation5 + $0x25c] sm:$0xff]
    %v233 = vld [vmem:[#allocation5 + $0x264] sm:$0xf]
    %v234 = vld [vmem:[#allocation5 + $0x268] sm:$0xff]
    %v235 = vld [vmem:[#allocation5 + $0x270] sm:$0xff]
    %v236 = vld [vmem:[#allocation5 + $0x278] sm:$0xff]
    %v237 = vld [vmem:[#allocation5 + $0x280] sm:$0xff]
    %v238 = vld [vmem:[#allocation5 + $0x288] sm:$0xff]
    %v239 = vld [vmem:[#allocation5 + $0x290] sm:$0xf]
    %v240 = vld [vmem:[#allocation5 + $0x294] sm:$0xff]
    %v241 = vld [vmem:[#allocation5 + $0x29c] sm:$0xff]
    %v242 = vld [vmem:[#allocation5 + $0x2a4] sm:$0xff]
    %v243 = vld [vmem:[#allocation5 + $0x2ac] sm:$0xff]
    %v244 = vld [vmem:[#allocation5 + $0x2b4] sm:$0xff]
    %v245 = vld [vmem:[#allocation5 + $0x2bc] sm:$0xf]
    %v246 = vld [vmem:[#allocation5 + $0x2c0] sm:$0xff]
    %v247 = vld [vmem:[#allocation5 + $0x2c8] sm:$0xff]
    %v248 = vld [vmem:[#allocation5 + $0x2d0] sm:$0xff]
    %v249 = vld [vmem:[#allocation5 + $0x2d8] sm:$0xff]
    %v250 = vld [vmem:[#allocation5 + $0x2e0] sm:$0xff]
    %v251 = vld [vmem:[#allocation5 + $0x2e8] sm:$0xf]
    %v252 = vld [vmem:[#allocation5 + $0x2ec] sm:$0xff]
    %v253 = vld [vmem:[#allocation5 + $0x2f4] sm:$0xff]
    %v254 = vld [vmem:[#allocation5 + $0x2fc] sm:$0xff]
    %v255 = vld [vmem:[#allocation5 + $0x304] sm:$0xff]
    %v256 = vld [vmem:[#allocation5 + $0x30c] sm:$0xff]
    %v257 = vld [vmem:[#allocation5 + $0x314] sm:$0xf]
    %v258 = vld [vmem:[#allocation5 + $0x318] sm:$0xff]
    %v259 = vld [vmem:[#allocation5 + $0x320] sm:$0xff]
    %v260 = vld [vmem:[#allocation5 + $0x328] sm:$0xff]
    %v261 = vld [vmem:[#allocation5 + $0x330] sm:$0xff]
    %v262 = vld [vmem:[#allocation5 + $0x338] sm:$0xff]
    %v263 = vld [vmem:[#allocation5 + $0x340] sm:$0xf]
    %v264 = vld [vmem:[#allocation5 + $0x344] sm:$0xff]
    %v265 = vld [vmem:[#allocation5 + $0x34c] sm:$0xff]
    %v266 = vld [vmem:[#allocation5 + $0x354] sm:$0xff]
    %v267 = vld [vmem:[#allocation5 + $0x35c] sm:$0xff]
    %v268 = vld [vmem:[#allocation5 + $0x364] sm:$0xff]
    %v269 = vld [vmem:[#allocation5 + $0x36c] sm:$0xf]
    %v270 = vld [vmem:[#allocation5 + $0x370] sm:$0xff]
    %v271 = vld [vmem:[#allocation5 + $0x378] sm:$0xff]
    %v272 = vld [vmem:[#allocation5 + $0x380] sm:$0xff]
    %v273 = vld [vmem:[#allocation5 + $0x388] sm:$0xff]
    %v274 = vld [vmem:[#allocation5 + $0x390] sm:$0xff]
    %v275 = vld [vmem:[#allocation5 + $0x398] sm:$0xf]
    %v276 = vld [vmem:[#allocation5 + $0x39c] sm:$0xff]
    %v277 = vld [vmem:[#allocation5 + $0x3a4] sm:$0xff]
    %v278 = vld [vmem:[#allocation5 + $0x3ac] sm:$0xff]
    %v279 = vld [vmem:[#allocation5 + $0x3b4] sm:$0xff]
    %v280 = vld [vmem:[#allocation5 + $0x3bc] sm:$0xff]
    %v281 = vld [vmem:[#allocation5 + $0x3c4] sm:$0xf]
    %v282 = vld [vmem:[#allocation5 + $0x3c8] sm:$0xff]
    %v283 = vld [vmem:[#allocation5 + $0x3d0] sm:$0xff]
    %v284 = vld [vmem:[#allocation5 + $0x3d8] sm:$0xff]
    %v285 = vld [vmem:[#allocation5 + $0x3e0] sm:$0xff]
    %v286 = vld [vmem:[#allocation5 + $0x3e8] sm:$0xff]
    %v287 = vld [vmem:[#allocation5 + $0x3f0] sm:$0xf]
    %v288 = vld [vmem:[#allocation5 + $0x3f4] sm:$0xff]
    %v289 = vld [vmem:[#allocation5 + $0x3fc] sm:$0xff]
    %v290 = vld [vmem:[#allocation5 + $0x404] sm:$0xff]
    %v291 = vld [vmem:[#allocation5 + $0x40c] sm:$0xff]
    %v292 = vld [vmem:[#allocation5 + $0x414] sm:$0xff]
    %v293 = vld [vmem:[#allocation5 + $0x41c] sm:$0xf]
    %v294 = vld [vmem:[#allocation5 + $0x420] sm:$0xff]
    %v295 = vld [vmem:[#allocation5 + $0x428] sm:$0xff]
    %v296 = vld [vmem:[#allocation5 + $0x430] sm:$0xff]
    %v297 = vld [vmem:[#allocation5 + $0x438] sm:$0xff]
    %v298 = vld [vmem:[#allocation5 + $0x440] sm:$0xff]
    %v299 = vld [vmem:[#allocation5 + $0x448] sm:$0xf]
    %v300 = vld [vmem:[#allocation5 + $0x44c] sm:$0xff]
    %v301 = vld [vmem:[#allocation5 + $0x454] sm:$0xff]
    %v302 = vld [vmem:[#allocation5 + $0x45c] sm:$0xff]
    %v303 = vld [vmem:[#allocation5 + $0x464] sm:$0xff]
    %v304 = vld [vmem:[#allocation5 + $0x46c] sm:$0xff]
    %v305 = vld [vmem:[#allocation5 + $0x474] sm:$0xf]
    %v306 = vld [vmem:[#allocation5 + $0x478] sm:$0xff]
    %v307 = vld [vmem:[#allocation5 + $0x480] sm:$0xff]
    %v308 = vld [vmem:[#allocation5 + $0x488] sm:$0xff]
    %v309 = vld [vmem:[#allocation5 + $0x490] sm:$0xff]
    %v310 = vld [vmem:[#allocation5 + $0x498] sm:$0xff]
    %v311 = vld [vmem:[#allocation5 + $0x4a0] sm:$0xf]
    %v312 = vld [vmem:[#allocation5 + $0x4a4] sm:$0xff]
    %v313 = vld [vmem:[#allocation5 + $0x4ac] sm:$0xff]
    %v314 = vld [vmem:[#allocation5 + $0x4b4] sm:$0xff]
    %v315 = vld [vmem:[#allocation5 + $0x4bc] sm:$0xff]
    %v316 = vld [vmem:[#allocation5 + $0x4c4] sm:$0xff]
    %v317 = vld [vmem:[#allocation5 + $0x4cc] sm:$0xf]
    %v318 = vld [vmem:[#allocation5 + $0x4d0] sm:$0xff]
    %v319 = vld [vmem:[#allocation5 + $0x4d8] sm:$0xff]
    %v320 = vld [vmem:[#allocation5 + $0x4e0] sm:$0xff]
    %v321 = vld [vmem:[#allocation5 + $0x4e8] sm:$0xff]
    %v322 = vld [vmem:[#allocation5 + $0x4f0] sm:$0xff]
    %v323 = vld [vmem:[#allocation5 + $0x4f8] sm:$0xf]
    %v324 = vld [vmem:[#allocation5 + $0x4fc] sm:$0xff]
    %v325 = vld [vmem:[#allocation5 + $0x504] sm:$0xff]
    %v326 = vld [vmem:[#allocation5 + $0x50c] sm:$0xff]
    %v327 = vld [vmem:[#allocation5 + $0x514] sm:$0xff]
    %v328 = vld [vmem:[#allocation5 + $0x51c] sm:$0xff]
    %v329 = vld [vmem:[#allocation5 + $0x524] sm:$0xf]
    %v330 = vld [vmem:[#allocation5 + $0x528] sm:$0xff]
    %v331 = vld [vmem:[#allocation5 + $0x530] sm:$0xff]
    %v332 = vld [vmem:[#allocation5 + $0x538] sm:$0xff]
    %v333 = vld [vmem:[#allocation5 + $0x540] sm:$0xff]
    %v334 = vld [vmem:[#allocation5 + $0x548] sm:$0xff]
    %v335 = vld [vmem:[#allocation5 + $0x550] sm:$0xf]
    %v336 = vld [vmem:[#allocation5 + $0x554] sm:$0xff]
    %v337 = vld [vmem:[#allocation5 + $0x55c] sm:$0xff]
    %v338 = vld [vmem:[#allocation5 + $0x564] sm:$0xff]
    %v339 = vld [vmem:[#allocation5 + $0x56c] sm:$0xff]
    %v340 = vld [vmem:[#allocation5 + $0x574] sm:$0xff]
    %v341 = vld [vmem:[#allocation5 + $0x57c] sm:$0xf]
    %v342 = vld [vmem:[#allocation7] sm:$0xff]
    %v343 = vld [vmem:[#allocation7 + $0x8] sm:$0x7]
    %v346 = vlaneseq
    %v347 = vshrl.u32 %v346, 7
    %v348 = vsub.s32 0, %v347
    %v349 = vrot.slane %v342, %v348
    %v350 = vlaneseq
    %v351 = vshrl.u32 %v350, 7
    %v352 = vsub.s32 1, %v351
    %v353 = vrot.slane %v342, %v352
    %v354 = vlaneseq
    %v355 = vshrl.u32 %v354, 7
    %v356 = vsub.s32 2, %v355
    %v357 = vrot.slane %v342, %v356
    %v358 = vlaneseq
    %v359 = vshrl.u32 %v358, 7
    %v360 = vsub.s32 3, %v359
    %v361 = vrot.slane %v342, %v360
    %v362 = vlaneseq
    %v363 = vshrl.u32 %v362, 7
    %v364 = vsub.s32 4, %v363
    %v365 = vrot.slane %v342, %v364
    %v366 = vlaneseq
    %v367 = vshrl.u32 %v366, 7
    %v368 = vsub.s32 5, %v367
    %v369 = vrot.slane %v342, %v368
    %v370 = vlaneseq
    %v371 = vshrl.u32 %v370, 7
    %v372 = vsub.s32 6, %v371
    %v373 = vrot.slane %v342, %v372
    %v374 = vlaneseq
    %v375 = vshrl.u32 %v374, 7
    %v376 = vsub.s32 7, %v375
    %v377 = vrot.slane %v342, %v376
    %v378 = vlaneseq
    %v379 = vshrl.u32 %v378, 7
    %v380 = vsub.s32 0, %v379
    %v381 = vrot.slane %v343, %v380
    %v382 = vlaneseq
    %v383 = vshrl.u32 %v382, 7
    %v384 = vsub.s32 1, %v383
    %v385 = vrot.slane %v343, %v384
    %v386 = vlaneseq
    %v387 = vshrl.u32 %v386, 7
    %v388 = vsub.s32 2, %v387
    %v389 = vrot.slane %v343, %v388
    %v403 = vunpack.c.l.b16 %v148
    %v404 = vunpack.c.h.b16 %v148
    %v405 = vunpack.c.l.b16 %v149
    %v406 = vunpack.c.h.b16 %v149
    %v407 = vpack.c.b16 %v405, %v403
    %v408 = vpack.c.b16 %v406, %v404
    %v603 = vunpack.c.l.b16 %v150
    %v604 = vunpack.c.h.b16 %v150
    %v605 = vunpack.c.l.b16 %v151
    %v606 = vunpack.c.h.b16 %v151
    %v607 = vunpack.c.l.b16 %v152
    %v608 = vunpack.c.h.b16 %v152
    %v609 = vunpack.c.l.b16 %v153
    %v610 = vunpack.c.h.b16 %v153
    %v611 = vunpack.c.l.b16 %v154
    %v612 = vunpack.c.h.b16 %v154
    %v613 = vunpack.c.l.b16 %v155
    %v614 = vunpack.c.l.b16 %v156
    %v615 = vunpack.c.h.b16 %v156
    %v616 = vunpack.c.l.b16 %v157
    %v617 = vunpack.c.h.b16 %v157
    %v618 = vunpack.c.l.b16 %v158
    %v619 = vunpack.c.h.b16 %v158
    %v620 = vunpack.c.l.b16 %v159
    %v621 = vunpack.c.h.b16 %v159
    %v622 = vunpack.c.l.b16 %v160
    %v623 = vunpack.c.h.b16 %v160
    %v624 = vunpack.c.l.b16 %v161
    %v625 = vunpack.c.l.b16 %v162
    %v626 = vunpack.c.h.b16 %v162
    %v627 = vunpack.c.l.b16 %v163
    %v628 = vunpack.c.h.b16 %v163
    %v629 = vunpack.c.l.b16 %v164
    %v630 = vunpack.c.h.b16 %v164
    %v631 = vunpack.c.l.b16 %v165
    %v632 = vunpack.c.h.b16 %v165
    %v633 = vunpack.c.l.b16 %v166
    %v634 = vunpack.c.h.b16 %v166
    %v635 = vunpack.c.l.b16 %v167
    %v636 = vunpack.c.l.b16 %v168
    %v637 = vunpack.c.h.b16 %v168
    %v638 = vunpack.c.l.b16 %v169
    %v639 = vunpack.c.h.b16 %v169
    %v640 = vunpack.c.l.b16 %v170
    %v641 = vunpack.c.h.b16 %v170
    %v642 = vunpack.c.l.b16 %v171
    %v643 = vunpack.c.h.b16 %v171
    %v644 = vunpack.c.l.b16 %v172
    %v645 = vunpack.c.h.b16 %v172
    %v646 = vunpack.c.l.b16 %v173
    %v647 = vunpack.c.l.b16 %v174
    %v648 = vunpack.c.h.b16 %v174
    %v649 = vunpack.c.l.b16 %v175
    %v650 = vunpack.c.h.b16 %v175
    %v651 = vunpack.c.l.b16 %v176
    %v652 = vunpack.c.h.b16 %v176
    %v653 = vunpack.c.l.b16 %v177
    %v654 = vunpack.c.h.b16 %v177
    %v655 = vunpack.c.l.b16 %v178
    %v656 = vunpack.c.h.b16 %v178
    %v657 = vunpack.c.l.b16 %v179
    %v658 = vunpack.c.l.b16 %v180
    %v659 = vunpack.c.h.b16 %v180
    %v660 = vunpack.c.l.b16 %v181
    %v661 = vunpack.c.h.b16 %v181
    %v662 = vunpack.c.l.b16 %v182
    %v663 = vunpack.c.h.b16 %v182
    %v664 = vunpack.c.l.b16 %v183
    %v665 = vunpack.c.h.b16 %v183
    %v666 = vunpack.c.l.b16 %v184
    %v667 = vunpack.c.h.b16 %v184
    %v668 = vunpack.c.l.b16 %v185
    %v669 = vunpack.c.l.b16 %v186
    %v670 = vunpack.c.h.b16 %v186
    %v671 = vunpack.c.l.b16 %v187
    %v672 = vunpack.c.h.b16 %v187
    %v673 = vunpack.c.l.b16 %v188
    %v674 = vunpack.c.h.b16 %v188
    %v675 = vunpack.c.l.b16 %v189
    %v676 = vunpack.c.h.b16 %v189
    %v677 = vunpack.c.l.b16 %v190
    %v678 = vunpack.c.h.b16 %v190
    %v679 = vunpack.c.l.b16 %v191
    %v680 = vunpack.c.l.b16 %v192
    %v681 = vunpack.c.h.b16 %v192
    %v682 = vunpack.c.l.b16 %v193
    %v683 = vunpack.c.h.b16 %v193
    %v684 = vunpack.c.l.b16 %v194
    %v685 = vunpack.c.h.b16 %v194
    %v686 = vunpack.c.l.b16 %v195
    %v687 = vunpack.c.h.b16 %v195
    %v688 = vunpack.c.l.b16 %v196
    %v689 = vunpack.c.h.b16 %v196
    %v690 = vunpack.c.l.b16 %v197
    %v691 = vunpack.c.l.b16 %v198
    %v692 = vunpack.c.h.b16 %v198
    %v693 = vunpack.c.l.b16 %v199
    %v694 = vunpack.c.h.b16 %v199
    %v695 = vunpack.c.l.b16 %v200
    %v696 = vunpack.c.h.b16 %v200
    %v697 = vunpack.c.l.b16 %v201
    %v698 = vunpack.c.h.b16 %v201
    %v699 = vunpack.c.l.b16 %v202
    %v700 = vunpack.c.h.b16 %v202
    %v701 = vunpack.c.l.b16 %v203
    %v702 = vunpack.c.l.b16 %v204
    %v703 = vunpack.c.h.b16 %v204
    %v704 = vunpack.c.l.b16 %v205
    %v705 = vunpack.c.h.b16 %v205
    %v706 = vunpack.c.l.b16 %v206
    %v707 = vunpack.c.h.b16 %v206
    %v708 = vunpack.c.l.b16 %v207
    %v709 = vunpack.c.h.b16 %v207
    %v710 = vunpack.c.l.b16 %v208
    %v711 = vunpack.c.h.b16 %v208
    %v712 = vunpack.c.l.b16 %v209
    %v713 = vunpack.c.l.b16 %v210
    %v714 = vunpack.c.h.b16 %v210
    %v715 = vunpack.c.l.b16 %v211
    %v716 = vunpack.c.h.b16 %v211
    %v717 = vunpack.c.l.b16 %v212
    %v718 = vunpack.c.h.b16 %v212
    %v719 = vunpack.c.l.b16 %v213
    %v720 = vunpack.c.h.b16 %v213
    %v721 = vunpack.c.l.b16 %v214
    %v722 = vunpack.c.h.b16 %v214
    %v723 = vunpack.c.l.b16 %v215
    %v724 = vunpack.c.l.b16 %v216
    %v725 = vunpack.c.h.b16 %v216
    %v726 = vunpack.c.l.b16 %v217
    %v727 = vunpack.c.h.b16 %v217
    %v728 = vunpack.c.l.b16 %v218
    %v729 = vunpack.c.h.b16 %v218
    %v730 = vunpack.c.l.b16 %v219
    %v731 = vunpack.c.h.b16 %v219
    %v732 = vunpack.c.l.b16 %v220
    %v733 = vunpack.c.h.b16 %v220
    %v734 = vunpack.c.l.b16 %v221
    %v735 = vunpack.c.l.b16 %v222
    %v736 = vunpack.c.h.b16 %v222
    %v737 = vunpack.c.l.b16 %v223
    %v738 = vunpack.c.h.b16 %v223
    %v739 = vunpack.c.l.b16 %v224
    %v740 = vunpack.c.h.b16 %v224
    %v741 = vunpack.c.l.b16 %v225
    %v742 = vunpack.c.h.b16 %v225
    %v743 = vunpack.c.l.b16 %v226
    %v744 = vunpack.c.h.b16 %v226
    %v745 = vunpack.c.l.b16 %v227
    %v746 = vunpack.c.l.b16 %v228
    %v747 = vunpack.c.h.b16 %v228
    %v748 = vunpack.c.l.b16 %v229
    %v749 = vunpack.c.h.b16 %v229
    %v750 = vunpack.c.l.b16 %v230
    %v751 = vunpack.c.h.b16 %v230
    %v752 = vunpack.c.l.b16 %v231
    %v753 = vunpack.c.h.b16 %v231
    %v754 = vunpack.c.l.b16 %v232
    %v755 = vunpack.c.h.b16 %v232
    %v756 = vunpack.c.l.b16 %v233
    %v757 = vunpack.c.l.b16 %v234
    %v758 = vunpack.c.h.b16 %v234
    %v759 = vunpack.c.l.b16 %v235
    %v760 = vunpack.c.h.b16 %v235
    %v761 = vunpack.c.l.b16 %v236
    %v762 = vunpack.c.h.b16 %v236
    %v763 = vunpack.c.l.b16 %v237
    %v764 = vunpack.c.h.b16 %v237
    %v765 = vunpack.c.l.b16 %v238
    %v766 = vunpack.c.h.b16 %v238
    %v767 = vunpack.c.l.b16 %v239
    %v768 = vunpack.c.l.b16 %v240
    %v769 = vunpack.c.h.b16 %v240
    %v770 = vunpack.c.l.b16 %v241
    %v771 = vunpack.c.h.b16 %v241
    %v772 = vunpack.c.l.b16 %v242
    %v773 = vunpack.c.h.b16 %v242
    %v774 = vunpack.c.l.b16 %v243
    %v775 = vunpack.c.h.b16 %v243
    %v776 = vunpack.c.l.b16 %v244
    %v777 = vunpack.c.h.b16 %v244
    %v778 = vunpack.c.l.b16 %v245
    %v779 = vunpack.c.l.b16 %v246
    %v780 = vunpack.c.h.b16 %v246
    %v781 = vunpack.c.l.b16 %v247
    %v782 = vunpack.c.h.b16 %v247
    %v783 = vunpack.c.l.b16 %v248
    %v784 = vunpack.c.h.b16 %v248
    %v785 = vunpack.c.l.b16 %v249
    %v786 = vunpack.c.h.b16 %v249
    %v787 = vunpack.c.l.b16 %v250
    %v788 = vunpack.c.h.b16 %v250
    %v789 = vunpack.c.l.b16 %v251
    %v790 = vunpack.c.l.b16 %v252
    %v791 = vunpack.c.h.b16 %v252
    %v792 = vunpack.c.l.b16 %v253
    %v793 = vunpack.c.h.b16 %v253
    %v794 = vunpack.c.l.b16 %v254
    %v795 = vunpack.c.h.b16 %v254
    %v796 = vunpack.c.l.b16 %v255
    %v797 = vunpack.c.h.b16 %v255
    %v798 = vunpack.c.l.b16 %v256
    %v799 = vunpack.c.h.b16 %v256
    %v800 = vunpack.c.l.b16 %v257
    %v801 = vunpack.c.l.b16 %v258
    %v802 = vunpack.c.h.b16 %v258
    %v803 = vunpack.c.l.b16 %v259
    %v804 = vunpack.c.h.b16 %v259
    %v805 = vunpack.c.l.b16 %v260
    %v806 = vunpack.c.h.b16 %v260
    %v807 = vunpack.c.l.b16 %v261
    %v808 = vunpack.c.h.b16 %v261
    %v809 = vunpack.c.l.b16 %v262
    %v810 = vunpack.c.h.b16 %v262
    %v811 = vunpack.c.l.b16 %v263
    %v812 = vunpack.c.l.b16 %v264
    %v813 = vunpack.c.h.b16 %v264
    %v814 = vunpack.c.l.b16 %v265
    %v815 = vunpack.c.h.b16 %v265
    %v816 = vunpack.c.l.b16 %v266
    %v817 = vunpack.c.h.b16 %v266
    %v818 = vunpack.c.l.b16 %v267
    %v819 = vunpack.c.h.b16 %v267
    %v820 = vunpack.c.l.b16 %v268
    %v821 = vunpack.c.h.b16 %v268
    %v822 = vunpack.c.l.b16 %v269
    %v823 = vunpack.c.l.b16 %v270
    %v824 = vunpack.c.h.b16 %v270
    %v825 = vunpack.c.l.b16 %v271
    %v826 = vunpack.c.h.b16 %v271
    %v827 = vunpack.c.l.b16 %v272
    %v828 = vunpack.c.h.b16 %v272
    %v829 = vunpack.c.l.b16 %v273
    %v830 = vunpack.c.h.b16 %v273
    %v831 = vunpack.c.l.b16 %v274
    %v832 = vunpack.c.h.b16 %v274
    %v833 = vunpack.c.l.b16 %v275
    %v834 = vunpack.c.l.b16 %v276
    %v835 = vunpack.c.h.b16 %v276
    %v836 = vunpack.c.l.b16 %v277
    %v837 = vunpack.c.h.b16 %v277
    %v838 = vunpack.c.l.b16 %v278
    %v839 = vunpack.c.h.b16 %v278
    %v840 = vunpack.c.l.b16 %v279
    %v841 = vunpack.c.h.b16 %v279
    %v842 = vunpack.c.l.b16 %v280
    %v843 = vunpack.c.h.b16 %v280
    %v844 = vunpack.c.l.b16 %v281
    %v845 = vunpack.c.l.b16 %v282
    %v846 = vunpack.c.h.b16 %v282
    %v847 = vunpack.c.l.b16 %v283
    %v848 = vunpack.c.h.b16 %v283
    %v849 = vunpack.c.l.b16 %v284
    %v850 = vunpack.c.h.b16 %v284
    %v851 = vunpack.c.l.b16 %v285
    %v852 = vunpack.c.h.b16 %v285
    %v853 = vunpack.c.l.b16 %v286
    %v854 = vunpack.c.h.b16 %v286
    %v855 = vunpack.c.l.b16 %v287
    %v856 = vunpack.c.l.b16 %v288
    %v857 = vunpack.c.h.b16 %v288
    %v858 = vunpack.c.l.b16 %v289
    %v859 = vunpack.c.h.b16 %v289
    %v860 = vunpack.c.l.b16 %v290
    %v861 = vunpack.c.h.b16 %v290
    %v862 = vunpack.c.l.b16 %v291
    %v863 = vunpack.c.h.b16 %v291
    %v864 = vunpack.c.l.b16 %v292
    %v865 = vunpack.c.h.b16 %v292
    %v866 = vunpack.c.l.b16 %v293
    %v867 = vunpack.c.l.b16 %v294
    %v868 = vunpack.c.h.b16 %v294
    %v869 = vunpack.c.l.b16 %v295
    %v870 = vunpack.c.h.b16 %v295
    %v871 = vunpack.c.l.b16 %v296
    %v872 = vunpack.c.h.b16 %v296
    %v873 = vunpack.c.l.b16 %v297
    %v874 = vunpack.c.h.b16 %v297
    %v875 = vunpack.c.l.b16 %v298
    %v876 = vunpack.c.h.b16 %v298
    %v877 = vunpack.c.l.b16 %v299
    %v878 = vunpack.c.l.b16 %v300
    %v879 = vunpack.c.h.b16 %v300
    %v880 = vunpack.c.l.b16 %v301
    %v881 = vunpack.c.h.b16 %v301
    %v882 = vunpack.c.l.b16 %v302
    %v883 = vunpack.c.h.b16 %v302
    %v884 = vunpack.c.l.b16 %v303
    %v885 = vunpack.c.h.b16 %v303
    %v886 = vunpack.c.l.b16 %v304
    %v887 = vunpack.c.h.b16 %v304
    %v888 = vunpack.c.l.b16 %v305
    %v889 = vunpack.c.l.b16 %v306
    %v890 = vunpack.c.h.b16 %v306
    %v891 = vunpack.c.l.b16 %v307
    %v892 = vunpack.c.h.b16 %v307
    %v893 = vunpack.c.l.b16 %v308
    %v894 = vunpack.c.h.b16 %v308
    %v895 = vunpack.c.l.b16 %v309
    %v896 = vunpack.c.h.b16 %v309
    %v897 = vunpack.c.l.b16 %v310
    %v898 = vunpack.c.h.b16 %v310
    %v899 = vunpack.c.l.b16 %v311
    %v900 = vunpack.c.l.b16 %v312
    %v901 = vunpack.c.h.b16 %v312
    %v902 = vunpack.c.l.b16 %v313
    %v903 = vunpack.c.h.b16 %v313
    %v904 = vunpack.c.l.b16 %v314
    %v905 = vunpack.c.h.b16 %v314
    %v906 = vunpack.c.l.b16 %v315
    %v907 = vunpack.c.h.b16 %v315
    %v908 = vunpack.c.l.b16 %v316
    %v909 = vunpack.c.h.b16 %v316
    %v910 = vunpack.c.l.b16 %v317
    %v911 = vunpack.c.l.b16 %v318
    %v912 = vunpack.c.h.b16 %v318
    %v913 = vunpack.c.l.b16 %v319
    %v914 = vunpack.c.h.b16 %v319
    %v915 = vunpack.c.l.b16 %v320
    %v916 = vunpack.c.h.b16 %v320
    %v917 = vunpack.c.l.b16 %v321
    %v918 = vunpack.c.h.b16 %v321
    %v919 = vunpack.c.l.b16 %v322
    %v920 = vunpack.c.h.b16 %v322
    %v921 = vunpack.c.l.b16 %v323
    %v922 = vunpack.c.l.b16 %v324
    %v923 = vunpack.c.h.b16 %v324
    %v924 = vunpack.c.l.b16 %v325
    %v925 = vunpack.c.h.b16 %v325
    %v926 = vunpack.c.l.b16 %v326
    %v927 = vunpack.c.h.b16 %v326
    %v928 = vunpack.c.l.b16 %v327
    %v929 = vunpack.c.h.b16 %v327
    %v930 = vunpack.c.l.b16 %v328
    %v931 = vunpack.c.h.b16 %v328
    %v932 = vunpack.c.l.b16 %v329
    %v933 = vunpack.c.l.b16 %v330
    %v934 = vunpack.c.h.b16 %v330
    %v935 = vunpack.c.l.b16 %v331
    %v936 = vunpack.c.h.b16 %v331
    %v937 = vunpack.c.l.b16 %v332
    %v938 = vunpack.c.h.b16 %v332
    %v939 = vunpack.c.l.b16 %v333
    %v940 = vunpack.c.h.b16 %v333
    %v941 = vunpack.c.l.b16 %v334
    %v942 = vunpack.c.h.b16 %v334
    %v943 = vunpack.c.l.b16 %v335
    %v944 = vunpack.c.l.b16 %v336
    %v945 = vunpack.c.h.b16 %v336
    %v946 = vunpack.c.l.b16 %v337
    %v947 = vunpack.c.h.b16 %v337
    %v948 = vunpack.c.l.b16 %v338
    %v949 = vunpack.c.h.b16 %v338
    %v950 = vunpack.c.l.b16 %v339
    %v951 = vunpack.c.h.b16 %v339
    %v952 = vunpack.c.l.b16 %v340
    %v953 = vunpack.c.h.b16 %v340
    %v954 = vunpack.c.l.b16 %v341
    %v955 = vpack.c.b16 %v614, %v603
    %v956 = vpack.c.b16 %v615, %v604
    %v957 = vpack.c.b16 %v616, %v605
    %v958 = vpack.c.b16 %v617, %v606
    %v959 = vpack.c.b16 %v618, %v607
    %v960 = vpack.c.b16 %v619, %v608
    %v961 = vpack.c.b16 %v620, %v609
    %v962 = vpack.c.b16 %v621, %v610
    %v963 = vpack.c.b16 %v622, %v611
    %v964 = vpack.c.b16 %v623, %v612
    %v965 = vpack.c.b16 %v624, %v613
    %v966 = vpack.c.b16 %v636, %v625
    %v967 = vpack.c.b16 %v637, %v626
    %v968 = vpack.c.b16 %v638, %v627
    %v969 = vpack.c.b16 %v639, %v628
    %v970 = vpack.c.b16 %v640, %v629
    %v971 = vpack.c.b16 %v641, %v630
    %v972 = vpack.c.b16 %v642, %v631
    %v973 = vpack.c.b16 %v643, %v632
    %v974 = vpack.c.b16 %v644, %v633
    %v975 = vpack.c.b16 %v645, %v634
    %v976 = vpack.c.b16 %v646, %v635
    %v977 = vpack.c.b16 %v658, %v647
    %v978 = vpack.c.b16 %v659, %v648
    %v979 = vpack.c.b16 %v660, %v649
    %v980 = vpack.c.b16 %v661, %v650
    %v981 = vpack.c.b16 %v662, %v651
    %v982 = vpack.c.b16 %v663, %v652
    %v983 = vpack.c.b16 %v664, %v653
    %v984 = vpack.c.b16 %v665, %v654
    %v985 = vpack.c.b16 %v666, %v655
    %v986 = vpack.c.b16 %v667, %v656
    %v987 = vpack.c.b16 %v668, %v657
    %v988 = vpack.c.b16 %v680, %v669
    %v989 = vpack.c.b16 %v681, %v670
    %v990 = vpack.c.b16 %v682, %v671
    %v991 = vpack.c.b16 %v683, %v672
    %v992 = vpack.c.b16 %v684, %v673
    %v993 = vpack.c.b16 %v685, %v674
    %v994 = vpack.c.b16 %v686, %v675
    %v995 = vpack.c.b16 %v687, %v676
    %v996 = vpack.c.b16 %v688, %v677
    %v997 = vpack.c.b16 %v689, %v678
    %v998 = vpack.c.b16 %v690, %v679
    %v999 = vpack.c.b16 %v702, %v691
    %v1000 = vpack.c.b16 %v703, %v692
    %v1001 = vpack.c.b16 %v704, %v693
    %v1002 = vpack.c.b16 %v705, %v694
    %v1003 = vpack.c.b16 %v706, %v695
    %v1004 = vpack.c.b16 %v707, %v696
    %v1005 = vpack.c.b16 %v708, %v697
    %v1006 = vpack.c.b16 %v709, %v698
    %v1007 = vpack.c.b16 %v710, %v699
    %v1008 = vpack.c.b16 %v711, %v700
    %v1009 = vpack.c.b16 %v712, %v701
    %v1010 = vpack.c.b16 %v724, %v713
    %v1011 = vpack.c.b16 %v725, %v714
    %v1012 = vpack.c.b16 %v726, %v715
    %v1013 = vpack.c.b16 %v727, %v716
    %v1014 = vpack.c.b16 %v728, %v717
    %v1015 = vpack.c.b16 %v729, %v718
    %v1016 = vpack.c.b16 %v730, %v719
    %v1017 = vpack.c.b16 %v731, %v720
    %v1018 = vpack.c.b16 %v732, %v721
    %v1019 = vpack.c.b16 %v733, %v722
    %v1020 = vpack.c.b16 %v734, %v723
    %v1021 = vpack.c.b16 %v746, %v735
    %v1022 = vpack.c.b16 %v747, %v736
    %v1023 = vpack.c.b16 %v748, %v737
    %v1024 = vpack.c.b16 %v749, %v738
    %v1025 = vpack.c.b16 %v750, %v739
    %v1026 = vpack.c.b16 %v751, %v740
    %v1027 = vpack.c.b16 %v752, %v741
    %v1028 = vpack.c.b16 %v753, %v742
    %v1029 = vpack.c.b16 %v754, %v743
    %v1030 = vpack.c.b16 %v755, %v744
    %v1031 = vpack.c.b16 %v756, %v745
    %v1032 = vpack.c.b16 %v768, %v757
    %v1033 = vpack.c.b16 %v769, %v758
    %v1034 = vpack.c.b16 %v770, %v759
    %v1035 = vpack.c.b16 %v771, %v760
    %v1036 = vpack.c.b16 %v772, %v761
    %v1037 = vpack.c.b16 %v773, %v762
    %v1038 = vpack.c.b16 %v774, %v763
    %v1039 = vpack.c.b16 %v775, %v764
    %v1040 = vpack.c.b16 %v776, %v765
    %v1041 = vpack.c.b16 %v777, %v766
    %v1042 = vpack.c.b16 %v778, %v767
    %v1043 = vpack.c.b16 %v790, %v779
    %v1044 = vpack.c.b16 %v791, %v780
    %v1045 = vpack.c.b16 %v792, %v781
    %v1046 = vpack.c.b16 %v793, %v782
    %v1047 = vpack.c.b16 %v794, %v783
    %v1048 = vpack.c.b16 %v795, %v784
    %v1049 = vpack.c.b16 %v796, %v785
    %v1050 = vpack.c.b16 %v797, %v786
    %v1051 = vpack.c.b16 %v798, %v787
    %v1052 = vpack.c.b16 %v799, %v788
    %v1053 = vpack.c.b16 %v800, %v789
    %v1054 = vpack.c.b16 %v812, %v801
    %v1055 = vpack.c.b16 %v813, %v802
    %v1056 = vpack.c.b16 %v814, %v803
    %v1057 = vpack.c.b16 %v815, %v804
    %v1058 = vpack.c.b16 %v816, %v805
    %v1059 = vpack.c.b16 %v817, %v806
    %v1060 = vpack.c.b16 %v818, %v807
    %v1061 = vpack.c.b16 %v819, %v808
    %v1062 = vpack.c.b16 %v820, %v809
    %v1063 = vpack.c.b16 %v821, %v810
    %v1064 = vpack.c.b16 %v822, %v811
    %v1065 = vpack.c.b16 %v834, %v823
    %v1066 = vpack.c.b16 %v835, %v824
    %v1067 = vpack.c.b16 %v836, %v825
    %v1068 = vpack.c.b16 %v837, %v826
    %v1069 = vpack.c.b16 %v838, %v827
    %v1070 = vpack.c.b16 %v839, %v828
    %v1071 = vpack.c.b16 %v840, %v829
    %v1072 = vpack.c.b16 %v841, %v830
    %v1073 = vpack.c.b16 %v842, %v831
    %v1074 = vpack.c.b16 %v843, %v832
    %v1075 = vpack.c.b16 %v844, %v833
    %v1076 = vpack.c.b16 %v856, %v845
    %v1077 = vpack.c.b16 %v857, %v846
    %v1078 = vpack.c.b16 %v858, %v847
    %v1079 = vpack.c.b16 %v859, %v848
    %v1080 = vpack.c.b16 %v860, %v849
    %v1081 = vpack.c.b16 %v861, %v850
    %v1082 = vpack.c.b16 %v862, %v851
    %v1083 = vpack.c.b16 %v863, %v852
    %v1084 = vpack.c.b16 %v864, %v853
    %v1085 = vpack.c.b16 %v865, %v854
    %v1086 = vpack.c.b16 %v866, %v855
    %v1087 = vpack.c.b16 %v878, %v867
    %v1088 = vpack.c.b16 %v879, %v868
    %v1089 = vpack.c.b16 %v880, %v869
    %v1090 = vpack.c.b16 %v881, %v870
    %v1091 = vpack.c.b16 %v882, %v871
    %v1092 = vpack.c.b16 %v883, %v872
    %v1093 = vpack.c.b16 %v884, %v873
    %v1094 = vpack.c.b16 %v885, %v874
    %v1095 = vpack.c.b16 %v886, %v875
    %v1096 = vpack.c.b16 %v887, %v876
    %v1097 = vpack.c.b16 %v888, %v877
    %v1098 = vpack.c.b16 %v900, %v889
    %v1099 = vpack.c.b16 %v901, %v890
    %v1100 = vpack.c.b16 %v902, %v891
    %v1101 = vpack.c.b16 %v903, %v892
    %v1102 = vpack.c.b16 %v904, %v893
    %v1103 = vpack.c.b16 %v905, %v894
    %v1104 = vpack.c.b16 %v906, %v895
    %v1105 = vpack.c.b16 %v907, %v896
    %v1106 = vpack.c.b16 %v908, %v897
    %v1107 = vpack.c.b16 %v909, %v898
    %v1108 = vpack.c.b16 %v910, %v899
    %v1109 = vpack.c.b16 %v922, %v911
    %v1110 = vpack.c.b16 %v923, %v912
    %v1111 = vpack.c.b16 %v924, %v913
    %v1112 = vpack.c.b16 %v925, %v914
    %v1113 = vpack.c.b16 %v926, %v915
    %v1114 = vpack.c.b16 %v927, %v916
    %v1115 = vpack.c.b16 %v928, %v917
    %v1116 = vpack.c.b16 %v929, %v918
    %v1117 = vpack.c.b16 %v930, %v919
    %v1118 = vpack.c.b16 %v931, %v920
    %v1119 = vpack.c.b16 %v932, %v921
    %v1120 = vpack.c.b16 %v944, %v933
    %v1121 = vpack.c.b16 %v945, %v934
    %v1122 = vpack.c.b16 %v946, %v935
    %v1123 = vpack.c.b16 %v947, %v936
    %v1124 = vpack.c.b16 %v948, %v937
    %v1125 = vpack.c.b16 %v949, %v938
    %v1126 = vpack.c.b16 %v950, %v939
    %v1127 = vpack.c.b16 %v951, %v940
    %v1128 = vpack.c.b16 %v952, %v941
    %v1129 = vpack.c.b16 %v953, %v942
    %v1130 = vpack.c.b16 %v954, %v943
    %1307 = vmatprep.subr.bf16.mxu0 %v956
    %1308 = vmatpush1.bf16.msra.mxu0 %v955
    %1309 = vmatprep.subr.bf16.mxu0 %v967
    %1310 = vmatpush1.bf16.msra.mxu0 %v966
    %1311 = vmatprep.subr.bf16.mxu0 %v978
    %1312 = vmatpush1.bf16.msra.mxu0 %v977
    %1313 = vmatprep.subr.bf16.mxu0 %v989
    %1314 = vmatpush1.bf16.msra.mxu0 %v988
    %1315 = vmatprep.subr.bf16.mxu0 %v1000
    %1316 = vmatpush1.bf16.msra.mxu0 %v999
    %1317 = vmatprep.subr.bf16.mxu0 %v1011
    %1318 = vmatpush1.bf16.msra.mxu0 %v1010
    %1319 = vmatprep.subr.bf16.mxu0 %v1022
    %1320 = vmatpush1.bf16.msra.mxu0 %v1021
    %1321 = vmatprep.subr.bf16.mxu0 %v1033
    %1322 = vmatpush1.bf16.msra.mxu0 %v1032
    %1323 = vmatprep.subr.bf16.mxu0 %v1044
    %1324 = vmatpush1.bf16.msra.mxu0 %v1043
    %1325 = vmatprep.subr.bf16.mxu0 %v1055
    %1326 = vmatpush1.bf16.msra.mxu0 %v1054
    %1327 = vmatprep.subr.bf16.mxu0 %v1066
    %1328 = vmatpush1.bf16.msra.mxu0 %v1065
    %1329 = vmatprep.subr.bf16.mxu0 %v1077
    %1330 = vmatpush1.bf16.msra.mxu0 %v1076
    %1331 = vmatprep.subr.bf16.mxu0 %v1088
    %1332 = vmatpush1.bf16.msra.mxu0 %v1087
    %1333 = vmatprep.subr.bf16.mxu0 %v1099
    %1334 = vmatpush1.bf16.msra.mxu0 %v1098
    %1335 = vmatprep.subr.bf16.mxu0 %v1110
    %1336 = vmatpush1.bf16.msra.mxu0 %v1109
    %1337 = vmatprep.subr.bf16.mxu0 %v1121
    %1338 = vmatpush1.bf16.msra.mxu0 %v1120
    %1339 = vmatprep.mubr.bf16.mxu0 %v408
    %1340 = vmatmul.mubr.bf16.gmra.mrb[0].mxu0 %v407
    %v1341 = vpop.f32.mrb[0].mxu0
    %v1342 = vadd.f32 %v349, %v1341
    %v1343 = vpop.f32.mrb[0].mxu0
    %v1344 = vadd.f32 %v353, %v1343
    %v1345 = vpop.f32.mrb[0].mxu0
    %v1346 = vadd.f32 %v349, %v1345
    %v1347 = vpop.f32.mrb[0].mxu0
    %v1348 = vadd.f32 %v353, %v1347
    %1349 = vdwg.mxu0
    %1350 = vmatprep.subr.bf16.mxu0 %v958
    %1351 = vmatpush1.bf16.msra.mxu0 %v957
    %1352 = vmatprep.subr.bf16.mxu0 %v969
    %1353 = vmatpush1.bf16.msra.mxu0 %v968
    %1354 = vmatprep.subr.bf16.mxu0 %v980
    %1355 = vmatpush1.bf16.msra.mxu0 %v979
    %1356 = vmatprep.subr.bf16.mxu0 %v991
    %1357 = vmatpush1.bf16.msra.mxu0 %v990
    %1358 = vmatprep.subr.bf16.mxu0 %v1002
    %1359 = vmatpush1.bf16.msra.mxu0 %v1001
    %1360 = vmatprep.subr.bf16.mxu0 %v1013
    %1361 = vmatpush1.bf16.msra.mxu0 %v1012
    %1362 = vmatprep.subr.bf16.mxu0 %v1024
    %1363 = vmatpush1.bf16.msra.mxu0 %v1023
    %1364 = vmatprep.subr.bf16.mxu0 %v1035
    %1365 = vmatpush1.bf16.msra.mxu0 %v1034
    %1366 = vmatprep.subr.bf16.mxu0 %v1046
    %1367 = vmatpush1.bf16.msra.mxu0 %v1045
    %1368 = vmatprep.subr.bf16.mxu0 %v1057
    %1369 = vmatpush1.bf16.msra.mxu0 %v1056
    %1370 = vmatprep.subr.bf16.mxu0 %v1068
    %1371 = vmatpush1.bf16.msra.mxu0 %v1067
    %1372 = vmatprep.subr.bf16.mxu0 %v1079
    %1373 = vmatpush1.bf16.msra.mxu0 %v1078
    %1374 = vmatprep.subr.bf16.mxu0 %v1090
    %1375 = vmatpush1.bf16.msra.mxu0 %v1089
    %1376 = vmatprep.subr.bf16.mxu0 %v1101
    %1377 = vmatpush1.bf16.msra.mxu0 %v1100
    %1378 = vmatprep.subr.bf16.mxu0 %v1112
    %1379 = vmatpush1.bf16.msra.mxu0 %v1111
    %1380 = vmatprep.subr.bf16.mxu0 %v1123
    %1381 = vmatpush1.bf16.msra.mxu0 %v1122
    %1382 = vmatprep.mubr.bf16.mxu0 %v408
    %1383 = vmatmul.mubr.bf16.gmra.mrb[0].mxu0 %v407
    %v1384 = vpop.f32.mrb[0].mxu0
    %v1385 = vadd.f32 %v357, %v1384
    %v1386 = vpop.f32.mrb[0].mxu0
    %v1387 = vadd.f32 %v361, %v1386
    %v1388 = vpop.f32.mrb[0].mxu0
    %v1389 = vadd.f32 %v357, %v1388
    %v1390 = vpop.f32.mrb[0].mxu0
    %v1391 = vadd.f32 %v361, %v1390
    %1392 = vdwg.mxu0
    %1393 = vmatprep.subr.bf16.mxu0 %v960
    %1394 = vmatpush1.bf16.msra.mxu0 %v959
    %1395 = vmatprep.subr.bf16.mxu0 %v971
    %1396 = vmatpush1.bf16.msra.mxu0 %v970
    %1397 = vmatprep.subr.bf16.mxu0 %v982
    %1398 = vmatpush1.bf16.msra.mxu0 %v981
    %1399 = vmatprep.subr.bf16.mxu0 %v993
    %1400 = vmatpush1.bf16.msra.mxu0 %v992
    %1401 = vmatprep.subr.bf16.mxu0 %v1004
    %1402 = vmatpush1.bf16.msra.mxu0 %v1003
    %1403 = vmatprep.subr.bf16.mxu0 %v1015
    %1404 = vmatpush1.bf16.msra.mxu0 %v1014
    %1405 = vmatprep.subr.bf16.mxu0 %v1026
    %1406 = vmatpush1.bf16.msra.mxu0 %v1025
    %1407 = vmatprep.subr.bf16.mxu0 %v1037
    %1408 = vmatpush1.bf16.msra.mxu0 %v1036
    %1409 = vmatprep.subr.bf16.mxu0 %v1048
    %1410 = vmatpush1.bf16.msra.mxu0 %v1047
    %1411 = vmatprep.subr.bf16.mxu0 %v1059
    %1412 = vmatpush1.bf16.msra.mxu0 %v1058
    %1413 = vmatprep.subr.bf16.mxu0 %v1070
    %1414 = vmatpush1.bf16.msra.mxu0 %v1069
    %1415 = vmatprep.subr.bf16.mxu0 %v1081
    %1416 = vmatpush1.bf16.msra.mxu0 %v1080
    %1417 = vmatprep.subr.bf16.mxu0 %v1092
    %1418 = vmatpush1.bf16.msra.mxu0 %v1091
    %1419 = vmatprep.subr.bf16.mxu0 %v1103
    %1420 = vmatpush1.bf16.msra.mxu0 %v1102
    %1421 = vmatprep.subr.bf16.mxu0 %v1114
    %1422 = vmatpush1.bf16.msra.mxu0 %v1113
    %1423 = vmatprep.subr.bf16.mxu0 %v1125
    %1424 = vmatpush1.bf16.msra.mxu0 %v1124
    %1425 = vmatprep.mubr.bf16.mxu0 %v408
    %1426 = vmatmul.mubr.bf16.gmra.mrb[0].mxu0 %v407
    %v1427 = vpop.f32.mrb[0].mxu0
    %v1428 = vadd.f32 %v365, %v1427
    %v1429 = vpop.f32.mrb[0].mxu0
    %v1430 = vadd.f32 %v369, %v1429
    %v1431 = vpop.f32.mrb[0].mxu0
    %v1432 = vadd.f32 %v365, %v1431
    %v1433 = vpop.f32.mrb[0].mxu0
    %v1434 = vadd.f32 %v369, %v1433
    %1435 = vdwg.mxu0
    %1436 = vmatprep.subr.bf16.mxu0 %v962
    %1437 = vmatpush1.bf16.msra.mxu0 %v961
    %1438 = vmatprep.subr.bf16.mxu0 %v973
    %1439 = vmatpush1.bf16.msra.mxu0 %v972
    %1440 = vmatprep.subr.bf16.mxu0 %v984
    %1441 = vmatpush1.bf16.msra.mxu0 %v983
    %1442 = vmatprep.subr.bf16.mxu0 %v995
    %1443 = vmatpush1.bf16.msra.mxu0 %v994
    %1444 = vmatprep.subr.bf16.mxu0 %v1006
    %1445 = vmatpush1.bf16.msra.mxu0 %v1005
    %1446 = vmatprep.subr.bf16.mxu0 %v1017
    %1447 = vmatpush1.bf16.msra.mxu0 %v1016
    %1448 = vmatprep.subr.bf16.mxu0 %v1028
    %1449 = vmatpush1.bf16.msra.mxu0 %v1027
    %1450 = vmatprep.subr.bf16.mxu0 %v1039
    %1451 = vmatpush1.bf16.msra.mxu0 %v1038
    %1452 = vmatprep.subr.bf16.mxu0 %v1050
    %1453 = vmatpush1.bf16.msra.mxu0 %v1049
    %1454 = vmatprep.subr.bf16.mxu0 %v1061
    %1455 = vmatpush1.bf16.msra.mxu0 %v1060
    %1456 = vmatprep.subr.bf16.mxu0 %v1072
    %1457 = vmatpush1.bf16.msra.mxu0 %v1071
    %1458 = vmatprep.subr.bf16.mxu0 %v1083
    %1459 = vmatpush1.bf16.msra.mxu0 %v1082
    %1460 = vmatprep.subr.bf16.mxu0 %v1094
    %1461 = vmatpush1.bf16.msra.mxu0 %v1093
    %1462 = vmatprep.subr.bf16.mxu0 %v1105
    %1463 = vmatpush1.bf16.msra.mxu0 %v1104
    %1464 = vmatprep.subr.bf16.mxu0 %v1116
    %1465 = vmatpush1.bf16.msra.mxu0 %v1115
    %1466 = vmatprep.subr.bf16.mxu0 %v1127
    %1467 = vmatpush1.bf16.msra.mxu0 %v1126
    %1468 = vmatprep.mubr.bf16.mxu0 %v408
    %1469 = vmatmul.mubr.bf16.gmra.mrb[0].mxu0 %v407
    %v1470 = vpop.f32.mrb[0].mxu0
    %v1471 = vadd.f32 %v373, %v1470
    %v1472 = vpop.f32.mrb[0].mxu0
    %v1473 = vadd.f32 %v377, %v1472
    %v1474 = vpop.f32.mrb[0].mxu0
    %v1475 = vadd.f32 %v373, %v1474
    %v1476 = vpop.f32.mrb[0].mxu0
    %v1477 = vadd.f32 %v377, %v1476
    %1478 = vdwg.mxu0
    %1479 = vmatprep.subr.bf16.mxu0 %v964
    %1480 = vmatpush1.bf16.msra.mxu0 %v963
    %1481 = vmatprep.subr.bf16.mxu0 %v975
    %1482 = vmatpush1.bf16.msra.mxu0 %v974
    %1483 = vmatprep.subr.bf16.mxu0 %v986
    %1484 = vmatpush1.bf16.msra.mxu0 %v985
    %1485 = vmatprep.subr.bf16.mxu0 %v997
    %1486 = vmatpush1.bf16.msra.mxu0 %v996
    %1487 = vmatprep.subr.bf16.mxu0 %v1008
    %1488 = vmatpush1.bf16.msra.mxu0 %v1007
    %1489 = vmatprep.subr.bf16.mxu0 %v1019
    %1490 = vmatpush1.bf16.msra.mxu0 %v1018
    %1491 = vmatprep.subr.bf16.mxu0 %v1030
    %1492 = vmatpush1.bf16.msra.mxu0 %v1029
    %1493 = vmatprep.subr.bf16.mxu0 %v1041
    %1494 = vmatpush1.bf16.msra.mxu0 %v1040
    %1495 = vmatprep.subr.bf16.mxu0 %v1052
    %1496 = vmatpush1.bf16.msra.mxu0 %v1051
    %1497 = vmatprep.subr.bf16.mxu0 %v1063
    %1498 = vmatpush1.bf16.msra.mxu0 %v1062
    %1499 = vmatprep.subr.bf16.mxu0 %v1074
    %1500 = vmatpush1.bf16.msra.mxu0 %v1073
    %1501 = vmatprep.subr.bf16.mxu0 %v1085
    %1502 = vmatpush1.bf16.msra.mxu0 %v1084
    %1503 = vmatprep.subr.bf16.mxu0 %v1096
    %1504 = vmatpush1.bf16.msra.mxu0 %v1095
    %1505 = vmatprep.subr.bf16.mxu0 %v1107
    %1506 = vmatpush1.bf16.msra.mxu0 %v1106
    %1507 = vmatprep.subr.bf16.mxu0 %v1118
    %1508 = vmatpush1.bf16.msra.mxu0 %v1117
    %1509 = vmatprep.subr.bf16.mxu0 %v1129
    %1510 = vmatpush1.bf16.msra.mxu0 %v1128
    %1511 = vmatprep.mubr.bf16.mxu0 %v408
    %1512 = vmatmul.mubr.bf16.gmra.mrb[0].mxu0 %v407
    %v1513 = vpop.f32.mrb[0].mxu0
    %v1514 = vadd.f32 %v381, %v1513
    %v1515 = vpop.f32.mrb[0].mxu0
    %v1516 = vadd.f32 %v385, %v1515
    %v1517 = vpop.f32.mrb[0].mxu0
    %v1518 = vadd.f32 %v381, %v1517
    %v1519 = vpop.f32.mrb[0].mxu0
    %v1520 = vadd.f32 %v385, %v1519
    %1521 = vdwg.mxu0
    %1522 = vmatprep.subr.bf16.mxu0 0
    %1523 = vmatpush1.bf16.msra.mxu0 %v965
    %1524 = vmatprep.subr.bf16.mxu0 0
    %1525 = vmatpush1.bf16.msra.mxu0 %v976
    %1526 = vmatprep.subr.bf16.mxu0 0
    %1527 = vmatpush1.bf16.msra.mxu0 %v987
    %1528 = vmatprep.subr.bf16.mxu0 0
    %1529 = vmatpush1.bf16.msra.mxu0 %v998
    %1530 = vmatprep.subr.bf16.mxu0 0
    %1531 = vmatpush1.bf16.msra.mxu0 %v1009
    %1532 = vmatprep.subr.bf16.mxu0 0
    %1533 = vmatpush1.bf16.msra.mxu0 %v1020
    %1534 = vmatprep.subr.bf16.mxu0 0
    %1535 = vmatpush1.bf16.msra.mxu0 %v1031
    %1536 = vmatprep.subr.bf16.mxu0 0
    %1537 = vmatpush1.bf16.msra.mxu0 %v1042
    %1538 = vmatprep.subr.bf16.mxu0 0
    %1539 = vmatpush1.bf16.msra.mxu0 %v1053
    %1540 = vmatprep.subr.bf16.mxu0 0
    %1541 = vmatpush1.bf16.msra.mxu0 %v1064
    %1542 = vmatprep.subr.bf16.mxu0 0
    %1543 = vmatpush1.bf16.msra.mxu0 %v1075
    %1544 = vmatprep.subr.bf16.mxu0 0
    %1545 = vmatpush1.bf16.msra.mxu0 %v1086
    %1546 = vmatprep.subr.bf16.mxu0 0
    %1547 = vmatpush1.bf16.msra.mxu0 %v1097
    %1548 = vmatprep.subr.bf16.mxu0 0
    %1549 = vmatpush1.bf16.msra.mxu0 %v1108
    %1550 = vmatprep.subr.bf16.mxu0 0
    %1551 = vmatpush1.bf16.msra.mxu0 %v1119
    %1552 = vmatprep.subr.bf16.mxu0 0
    %1553 = vmatpush1.bf16.msra.mxu0 %v1130
    %1554 = vmatprep.mubr.bf16.mxu0 %v408
    %1555 = vmatmul.mubr.bf16.gmra.mrb[0].mxu0 %v407
    %v1556 = vpop.f32.mrb[0].mxu0
    %v1557 = vadd.f32 %v389, %v1556
    %v1558 = vpop.f32.mrb[0].mxu0
    %v1559 = vpop.f32.mrb[0].mxu0
    %v1560 = vadd.f32 %v389, %v1559
    %v1561 = vpop.f32.mrb[0].mxu0
    %1562 = vdwg.mxu0
    %v1563 = vmax.f32 %v1342, 0.0
    %v1564 = vmax.f32 %v1344, 0.0
    %v1565 = vmax.f32 %v1385, 0.0
    %v1566 = vmax.f32 %v1387, 0.0
    %v1567 = vmax.f32 %v1428, 0.0
    %v1568 = vmax.f32 %v1430, 0.0
    %v1569 = vmax.f32 %v1471, 0.0
    %v1570 = vmax.f32 %v1473, 0.0
    %v1571 = vmax.f32 %v1514, 0.0
    %v1572 = vmax.f32 %v1516, 0.0
    %v1573 = vmax.f32 %v1557, 0.0
    %v1574 = vmax.f32 %v1346, 0.0
    %v1575 = vmax.f32 %v1348, 0.0
    %v1576 = vmax.f32 %v1389, 0.0
    %v1577 = vmax.f32 %v1391, 0.0
    %v1578 = vmax.f32 %v1432, 0.0
    %v1579 = vmax.f32 %v1434, 0.0
    %v1580 = vmax.f32 %v1475, 0.0
    %v1581 = vmax.f32 %v1477, 0.0
    %v1582 = vmax.f32 %v1518, 0.0
    %v1583 = vmax.f32 %v1520, 0.0
    %v1584 = vmax.f32 %v1560, 0.0
    %v1585 = vpack.c.bf16 %v1574, %v1563
    %v1586 = vpack.c.bf16 %v1575, %v1564
    %v1587 = vpack.c.bf16 %v1576, %v1565
    %v1588 = vpack.c.bf16 %v1577, %v1566
    %v1589 = vpack.c.bf16 %v1578, %v1567
    %v1590 = vpack.c.bf16 %v1579, %v1568
    %v1591 = vpack.c.bf16 %v1580, %v1569
    %v1592 = vpack.c.bf16 %v1581, %v1570
    %v1593 = vpack.c.bf16 %v1582, %v1571
    %v1594 = vpack.c.bf16 %v1583, %v1572
    %v1595 = vpack.c.bf16 %v1584, %v1573
    %v1596 = vld [vmem:[#allocation8] sm:$0xff]
    %v1597 = vld [vmem:[#allocation8 + $0x8] sm:$0xff]
    %v1598 = vld [vmem:[#allocation8 + $0x10] sm:$0xff]
    %v1599 = vld [vmem:[#allocation8 + $0x18] sm:$0xff]
    %v1600 = vld [vmem:[#allocation8 + $0x20] sm:$0xff]
    %v1601 = vld [vmem:[#allocation8 + $0x28] sm:$0xff]
    %v1602 = vld [vmem:[#allocation8 + $0x30] sm:$0xff]
    %v1603 = vld [vmem:[#allocation8 + $0x38] sm:$0xff]
    %v1604 = vld [vmem:[#allocation8 + $0x40] sm:$0xff]
    %v1605 = vld [vmem:[#allocation8 + $0x48] sm:$0xff]
    %v1606 = vld [vmem:[#allocation8 + $0x50] sm:$0xff]
    %v1607 = vld [vmem:[#allocation8 + $0x58] sm:$0xff]
    %v1608 = vld [vmem:[#allocation8 + $0x60] sm:$0xff]
    %v1609 = vld [vmem:[#allocation8 + $0x68] sm:$0xff]
    %v1610 = vld [vmem:[#allocation8 + $0x70] sm:$0xff]
    %v1611 = vld [vmem:[#allocation8 + $0x78] sm:$0xff]
    %v1612 = vld [vmem:[#allocation8 + $0x80] sm:$0xff]
    %v1613 = vld [vmem:[#allocation8 + $0x88] sm:$0xff]
    %v1614 = vld [vmem:[#allocation8 + $0x90] sm:$0xff]
    %v1615 = vld [vmem:[#allocation8 + $0x98] sm:$0xff]
    %v1616 = vld [vmem:[#allocation8 + $0xa0] sm:$0xff]
    %v1617 = vld [vmem:[#allocation8 + $0xa8] sm:$0xff]
    %v1618 = vld [vmem:[#allocation8 + $0xb0] sm:$0xff]
    %v1619 = vld [vmem:[#allocation8 + $0xb8] sm:$0xff]
    %v1620 = vld [vmem:[#allocation8 + $0xc0] sm:$0xff]
    %v1621 = vld [vmem:[#allocation8 + $0xc8] sm:$0xff]
    %v1622 = vld [vmem:[#allocation8 + $0xd0] sm:$0xff]
    %v1623 = vld [vmem:[#allocation8 + $0xd8] sm:$0xff]
    %v1624 = vld [vmem:[#allocation8 + $0xe0] sm:$0xff]
    %v1625 = vld [vmem:[#allocation8 + $0xe8] sm:$0xff]
    %v1626 = vld [vmem:[#allocation8 + $0xf0] sm:$0xff]
    %v1627 = vld [vmem:[#allocation8 + $0xf8] sm:$0xff]
    %v1628 = vld [vmem:[#allocation8 + $0x100] sm:$0xff]
    %v1629 = vld [vmem:[#allocation8 + $0x108] sm:$0xff]
    %v1630 = vld [vmem:[#allocation8 + $0x110] sm:$0xff]
    %v1631 = vld [vmem:[#allocation8 + $0x118] sm:$0xff]
    %v1632 = vld [vmem:[#allocation8 + $0x120] sm:$0xff]
    %v1633 = vld [vmem:[#allocation8 + $0x128] sm:$0xff]
    %v1634 = vld [vmem:[#allocation8 + $0x130] sm:$0xff]
    %v1635 = vld [vmem:[#allocation8 + $0x138] sm:$0xff]
    %v1636 = vld [vmem:[#allocation8 + $0x140] sm:$0xff]
    %v1637 = vld [vmem:[#allocation8 + $0x148] sm:$0xff]
    %v1638 = vld [vmem:[#allocation8 + $0x150] sm:$0xff]
    %v1639 = vld [vmem:[#allocation8 + $0x158] sm:$0xff]
    %v1640 = vld [vmem:[#allocation8 + $0x160] sm:$0xff]
    %v1641 = vld [vmem:[#allocation8 + $0x168] sm:$0xff]
    %v1642 = vld [vmem:[#allocation8 + $0x170] sm:$0xff]
    %v1643 = vld [vmem:[#allocation8 + $0x178] sm:$0xff]
    %v1644 = vld [vmem:[#allocation8 + $0x180] sm:$0xff]
    %v1645 = vld [vmem:[#allocation8 + $0x188] sm:$0xff]
    %v1646 = vld [vmem:[#allocation8 + $0x190] sm:$0xff]
    %v1647 = vld [vmem:[#allocation8 + $0x198] sm:$0xff]
    %v1648 = vld [vmem:[#allocation8 + $0x1a0] sm:$0xff]
    %v1649 = vld [vmem:[#allocation8 + $0x1a8] sm:$0xff]
    %v1650 = vld [vmem:[#allocation8 + $0x1b0] sm:$0xff]
    %v1651 = vld [vmem:[#allocation8 + $0x1b8] sm:$0xff]
    %v1652 = vld [vmem:[#allocation8 + $0x1c0] sm:$0xff]
    %v1653 = vld [vmem:[#allocation8 + $0x1c8] sm:$0xff]
    %v1654 = vld [vmem:[#allocation8 + $0x1d0] sm:$0xff]
    %v1655 = vld [vmem:[#allocation8 + $0x1d8] sm:$0xff]
    %v1656 = vld [vmem:[#allocation8 + $0x1e0] sm:$0xff]
    %v1657 = vld [vmem:[#allocation8 + $0x1e8] sm:$0xff]
    %v1658 = vld [vmem:[#allocation8 + $0x1f0] sm:$0xff]
    %v1659 = vld [vmem:[#allocation8 + $0x1f8] sm:$0xff]
    %v1660 = vld [vmem:[#allocation8 + $0x200] sm:$0xff]
    %v1661 = vld [vmem:[#allocation8 + $0x208] sm:$0xff]
    %v1662 = vld [vmem:[#allocation8 + $0x210] sm:$0xff]
    %v1663 = vld [vmem:[#allocation8 + $0x218] sm:$0xff]
    %v1664 = vld [vmem:[#allocation8 + $0x220] sm:$0xff]
    %v1665 = vld [vmem:[#allocation8 + $0x228] sm:$0xff]
    %v1666 = vld [vmem:[#allocation8 + $0x230] sm:$0xff]
    %v1667 = vld [vmem:[#allocation8 + $0x238] sm:$0xff]
    %v1668 = vld [vmem:[#allocation8 + $0x240] sm:$0xff]
    %v1669 = vld [vmem:[#allocation8 + $0x248] sm:$0xff]
    %v1670 = vld [vmem:[#allocation8 + $0x250] sm:$0xff]
    %v1671 = vld [vmem:[#allocation8 + $0x258] sm:$0xff]
    %v1672 = vld [vmem:[#allocation8 + $0x260] sm:$0xff]
    %v1673 = vld [vmem:[#allocation8 + $0x268] sm:$0xff]
    %v1674 = vld [vmem:[#allocation8 + $0x270] sm:$0xff]
    %v1675 = vld [vmem:[#allocation8 + $0x278] sm:$0xff]
    %v1676 = vld [vmem:[#allocation8 + $0x280] sm:$0xff]
    %v1677 = vld [vmem:[#allocation8 + $0x288] sm:$0xff]
    %v1678 = vld [vmem:[#allocation8 + $0x290] sm:$0xff]
    %v1679 = vld [vmem:[#allocation8 + $0x298] sm:$0xff]
    %v1680 = vld [vmem:[#allocation8 + $0x2a0] sm:$0xff]
    %v1681 = vld [vmem:[#allocation8 + $0x2a8] sm:$0xff]
    %v1682 = vld [vmem:[#allocation8 + $0x2b0] sm:$0xff]
    %v1683 = vld [vmem:[#allocation8 + $0x2b8] sm:$0xff]
    %v1684 = vld [vmem:[#allocation8 + $0x2c0] sm:$0xff]
    %v1685 = vld [vmem:[#allocation8 + $0x2c8] sm:$0xff]
    %v1686 = vld [vmem:[#allocation8 + $0x2d0] sm:$0xff]
    %v1687 = vld [vmem:[#allocation8 + $0x2d8] sm:$0xff]
    %v1688 = vld [vmem:[#allocation8 + $0x2e0] sm:$0xff]
    %v1689 = vld [vmem:[#allocation8 + $0x2e8] sm:$0xff]
    %v1690 = vld [vmem:[#allocation8 + $0x2f0] sm:$0xff]
    %v1691 = vld [vmem:[#allocation8 + $0x2f8] sm:$0xff]
    %v1692 = vld [vmem:[#allocation8 + $0x300] sm:$0xff]
    %v1693 = vld [vmem:[#allocation8 + $0x308] sm:$0xff]
    %v1694 = vld [vmem:[#allocation8 + $0x310] sm:$0xff]
    %v1695 = vld [vmem:[#allocation8 + $0x318] sm:$0xff]
    %v1696 = vld [vmem:[#allocation8 + $0x320] sm:$0xff]
    %v1697 = vld [vmem:[#allocation8 + $0x328] sm:$0xff]
    %v1698 = vld [vmem:[#allocation8 + $0x330] sm:$0xff]
    %v1699 = vld [vmem:[#allocation8 + $0x338] sm:$0xff]
    %v1700 = vld [vmem:[#allocation8 + $0x340] sm:$0xff]
    %v1701 = vld [vmem:[#allocation8 + $0x348] sm:$0xff]
    %v1702 = vld [vmem:[#allocation8 + $0x350] sm:$0xff]
    %v1703 = vld [vmem:[#allocation8 + $0x358] sm:$0xff]
    %v1704 = vld [vmem:[#allocation8 + $0x360] sm:$0xff]
    %v1705 = vld [vmem:[#allocation8 + $0x368] sm:$0xff]
    %v1706 = vld [vmem:[#allocation8 + $0x370] sm:$0xff]
    %v1707 = vld [vmem:[#allocation8 + $0x378] sm:$0xff]
    %v1708 = vld [vmem:[#allocation8 + $0x380] sm:$0xff]
    %v1709 = vld [vmem:[#allocation8 + $0x388] sm:$0xff]
    %v1710 = vld [vmem:[#allocation8 + $0x390] sm:$0xff]
    %v1711 = vld [vmem:[#allocation8 + $0x398] sm:$0xff]
    %v1712 = vld [vmem:[#allocation8 + $0x3a0] sm:$0xff]
    %v1713 = vld [vmem:[#allocation8 + $0x3a8] sm:$0xff]
    %v1714 = vld [vmem:[#allocation8 + $0x3b0] sm:$0xff]
    %v1715 = vld [vmem:[#allocation8 + $0x3b8] sm:$0xff]
    %v1716 = vld [vmem:[#allocation8 + $0x3c0] sm:$0xff]
    %v1717 = vld [vmem:[#allocation8 + $0x3c8] sm:$0xff]
    %v1718 = vld [vmem:[#allocation8 + $0x3d0] sm:$0xff]
    %v1719 = vld [vmem:[#allocation8 + $0x3d8] sm:$0xff]
    %v1720 = vld [vmem:[#allocation8 + $0x3e0] sm:$0xff]
    %v1721 = vld [vmem:[#allocation8 + $0x3e8] sm:$0xff]
    %v1722 = vld [vmem:[#allocation8 + $0x3f0] sm:$0xff]
    %v1723 = vld [vmem:[#allocation8 + $0x3f8] sm:$0xff]
    %v1724 = vld [vmem:[#allocation8 + $0x400] sm:$0xff]
    %v1725 = vld [vmem:[#allocation8 + $0x408] sm:$0xff]
    %v1726 = vld [vmem:[#allocation8 + $0x410] sm:$0xff]
    %v1727 = vld [vmem:[#allocation8 + $0x418] sm:$0xff]
    %v1728 = vld [vmem:[#allocation8 + $0x420] sm:$0xff]
    %v1729 = vld [vmem:[#allocation8 + $0x428] sm:$0xff]
    %v1730 = vld [vmem:[#allocation8 + $0x430] sm:$0xff]
    %v1731 = vld [vmem:[#allocation8 + $0x438] sm:$0xff]
    %v1732 = vld [vmem:[#allocation8 + $0x440] sm:$0xff]
    %v1733 = vld [vmem:[#allocation8 + $0x448] sm:$0xff]
    %v1734 = vld [vmem:[#allocation8 + $0x450] sm:$0xff]
    %v1735 = vld [vmem:[#allocation8 + $0x458] sm:$0xff]
    %v1736 = vld [vmem:[#allocation8 + $0x460] sm:$0xff]
    %v1737 = vld [vmem:[#allocation8 + $0x468] sm:$0xff]
    %v1738 = vld [vmem:[#allocation8 + $0x470] sm:$0xff]
    %v1739 = vld [vmem:[#allocation8 + $0x478] sm:$0xff]
    %v1740 = vld [vmem:[#allocation8 + $0x480] sm:$0xff]
    %v1741 = vld [vmem:[#allocation8 + $0x488] sm:$0xff]
    %v1742 = vld [vmem:[#allocation8 + $0x490] sm:$0xff]
    %v1743 = vld [vmem:[#allocation8 + $0x498] sm:$0xff]
    %v1744 = vld [vmem:[#allocation8 + $0x4a0] sm:$0xff]
    %v1745 = vld [vmem:[#allocation8 + $0x4a8] sm:$0xff]
    %v1746 = vld [vmem:[#allocation8 + $0x4b0] sm:$0xff]
    %v1747 = vld [vmem:[#allocation8 + $0x4b8] sm:$0xff]
    %v1748 = vld [vmem:[#allocation8 + $0x4c0] sm:$0xff]
    %v1749 = vld [vmem:[#allocation8 + $0x4c8] sm:$0xff]
    %v1750 = vld [vmem:[#allocation8 + $0x4d0] sm:$0xff]
    %v1751 = vld [vmem:[#allocation8 + $0x4d8] sm:$0xff]
    %v1752 = vld [vmem:[#allocation8 + $0x4e0] sm:$0xff]
    %v1753 = vld [vmem:[#allocation8 + $0x4e8] sm:$0xff]
    %v1754 = vld [vmem:[#allocation8 + $0x4f0] sm:$0xff]
    %v1755 = vld [vmem:[#allocation8 + $0x4f8] sm:$0xff]
    %v1756 = vld [vmem:[#allocation8 + $0x500] sm:$0xff]
    %v1757 = vld [vmem:[#allocation8 + $0x508] sm:$0xff]
    %v1758 = vld [vmem:[#allocation8 + $0x510] sm:$0xff]
    %v1759 = vld [vmem:[#allocation8 + $0x518] sm:$0xff]
    %v1760 = vld [vmem:[#allocation8 + $0x520] sm:$0xff]
    %v1761 = vld [vmem:[#allocation8 + $0x528] sm:$0xff]
    %v1762 = vld [vmem:[#allocation8 + $0x530] sm:$0xff]
    %v1763 = vld [vmem:[#allocation8 + $0x538] sm:$0xff]
    %v1764 = vld [vmem:[#allocation8 + $0x540] sm:$0xff]
    %v1765 = vld [vmem:[#allocation8 + $0x548] sm:$0xff]
    %v1766 = vld [vmem:[#allocation8 + $0x550] sm:$0xff]
    %v1767 = vld [vmem:[#allocation8 + $0x558] sm:$0xff]
    %v1768 = vld [vmem:[#allocation8 + $0x560] sm:$0xff]
    %v1769 = vld [vmem:[#allocation8 + $0x568] sm:$0xff]
    %v1770 = vld [vmem:[#allocation8 + $0x570] sm:$0xff]
    %v1771 = vld [vmem:[#allocation8 + $0x578] sm:$0xff]
    %v1772 = vld [vmem:[#allocation8 + $0x580] sm:$0xff]
    %v1773 = vld [vmem:[#allocation8 + $0x588] sm:$0xff]
    %v1774 = vld [vmem:[#allocation8 + $0x590] sm:$0xff]
    %v1775 = vld [vmem:[#allocation8 + $0x598] sm:$0xff]
    %v1776 = vld [vmem:[#allocation8 + $0x5a0] sm:$0xff]
    %v1777 = vld [vmem:[#allocation8 + $0x5a8] sm:$0xff]
    %v1778 = vld [vmem:[#allocation8 + $0x5b0] sm:$0xff]
    %v1779 = vld [vmem:[#allocation8 + $0x5b8] sm:$0xff]
    %v1780 = vld [vmem:[#allocation8 + $0x5c0] sm:$0xff]
    %v1781 = vld [vmem:[#allocation8 + $0x5c8] sm:$0xff]
    %v1782 = vld [vmem:[#allocation8 + $0x5d0] sm:$0xff]
    %v1783 = vld [vmem:[#allocation8 + $0x5d8] sm:$0xff]
    %v1784 = vld [vmem:[#allocation8 + $0x5e0] sm:$0xff]
    %v1785 = vld [vmem:[#allocation8 + $0x5e8] sm:$0xff]
    %v1786 = vld [vmem:[#allocation8 + $0x5f0] sm:$0xff]
    %v1787 = vld [vmem:[#allocation8 + $0x5f8] sm:$0xff]
    %v1788 = vld [vmem:[#allocation8 + $0x600] sm:$0xff]
    %v1789 = vld [vmem:[#allocation8 + $0x608] sm:$0xff]
    %v1790 = vld [vmem:[#allocation8 + $0x610] sm:$0xff]
    %v1791 = vld [vmem:[#allocation8 + $0x618] sm:$0xff]
    %v1792 = vld [vmem:[#allocation8 + $0x620] sm:$0xff]
    %v1793 = vld [vmem:[#allocation8 + $0x628] sm:$0xff]
    %v1794 = vld [vmem:[#allocation8 + $0x630] sm:$0xff]
    %v1795 = vld [vmem:[#allocation8 + $0x638] sm:$0xff]
    %v1796 = vld [vmem:[#allocation8 + $0x640] sm:$0xff]
    %v1797 = vld [vmem:[#allocation8 + $0x648] sm:$0xff]
    %v1798 = vld [vmem:[#allocation8 + $0x650] sm:$0xff]
    %v1799 = vld [vmem:[#allocation8 + $0x658] sm:$0xff]
    %v1800 = vld [vmem:[#allocation8 + $0x660] sm:$0xff]
    %v1801 = vld [vmem:[#allocation8 + $0x668] sm:$0xff]
    %v1802 = vld [vmem:[#allocation8 + $0x670] sm:$0xff]
    %v1803 = vld [vmem:[#allocation8 + $0x678] sm:$0xff]
    %v1804 = vld [vmem:[#allocation8 + $0x680] sm:$0xff]
    %v1805 = vld [vmem:[#allocation8 + $0x688] sm:$0xff]
    %v1806 = vld [vmem:[#allocation8 + $0x690] sm:$0xff]
    %v1807 = vld [vmem:[#allocation8 + $0x698] sm:$0xff]
    %v1808 = vld [vmem:[#allocation8 + $0x6a0] sm:$0xff]
    %v1809 = vld [vmem:[#allocation8 + $0x6a8] sm:$0xff]
    %v1810 = vld [vmem:[#allocation8 + $0x6b0] sm:$0xff]
    %v1811 = vld [vmem:[#allocation8 + $0x6b8] sm:$0xff]
    %v1812 = vld [vmem:[#allocation8 + $0x6c0] sm:$0xff]
    %v1813 = vld [vmem:[#allocation8 + $0x6c8] sm:$0xff]
    %v1814 = vld [vmem:[#allocation8 + $0x6d0] sm:$0xff]
    %v1815 = vld [vmem:[#allocation8 + $0x6d8] sm:$0xff]
    %v1816 = vld [vmem:[#allocation8 + $0x6e0] sm:$0xff]
    %v1817 = vld [vmem:[#allocation8 + $0x6e8] sm:$0xff]
    %v1818 = vld [vmem:[#allocation8 + $0x6f0] sm:$0xff]
    %v1819 = vld [vmem:[#allocation8 + $0x6f8] sm:$0xff]
    %v1820 = vld [vmem:[#allocation8 + $0x700] sm:$0xff]
    %v1821 = vld [vmem:[#allocation8 + $0x708] sm:$0xff]
    %v1822 = vld [vmem:[#allocation8 + $0x710] sm:$0xff]
    %v1823 = vld [vmem:[#allocation8 + $0x718] sm:$0xff]
    %v1824 = vld [vmem:[#allocation8 + $0x720] sm:$0xff]
    %v1825 = vld [vmem:[#allocation8 + $0x728] sm:$0xff]
    %v1826 = vld [vmem:[#allocation8 + $0x730] sm:$0xff]
    %v1827 = vld [vmem:[#allocation8 + $0x738] sm:$0xff]
    %v1828 = vld [vmem:[#allocation8 + $0x740] sm:$0xff]
    %v1829 = vld [vmem:[#allocation8 + $0x748] sm:$0xff]
    %v1830 = vld [vmem:[#allocation8 + $0x750] sm:$0xff]
    %v1831 = vld [vmem:[#allocation8 + $0x758] sm:$0xff]
    %v1832 = vld [vmem:[#allocation8 + $0x760] sm:$0xff]
    %v1833 = vld [vmem:[#allocation8 + $0x768] sm:$0xff]
    %v1834 = vld [vmem:[#allocation8 + $0x770] sm:$0xff]
    %v1835 = vld [vmem:[#allocation8 + $0x778] sm:$0xff]
    %v1836 = vld [vmem:[#allocation8 + $0x780] sm:$0xff]
    %v1837 = vld [vmem:[#allocation8 + $0x788] sm:$0xff]
    %v1838 = vld [vmem:[#allocation8 + $0x790] sm:$0xff]
    %v1839 = vld [vmem:[#allocation8 + $0x798] sm:$0xff]
    %v1840 = vld [vmem:[#allocation8 + $0x7a0] sm:$0xff]
    %v1841 = vld [vmem:[#allocation8 + $0x7a8] sm:$0xff]
    %v1842 = vld [vmem:[#allocation8 + $0x7b0] sm:$0xff]
    %v1843 = vld [vmem:[#allocation8 + $0x7b8] sm:$0xff]
    %v1844 = vld [vmem:[#allocation8 + $0x7c0] sm:$0xff]
    %v1845 = vld [vmem:[#allocation8 + $0x7c8] sm:$0xff]
    %v1846 = vld [vmem:[#allocation8 + $0x7d0] sm:$0xff]
    %v1847 = vld [vmem:[#allocation8 + $0x7d8] sm:$0xff]
    %v1848 = vld [vmem:[#allocation8 + $0x7e0] sm:$0xff]
    %v1849 = vld [vmem:[#allocation8 + $0x7e8] sm:$0xff]
    %v1850 = vld [vmem:[#allocation8 + $0x7f0] sm:$0xff]
    %v1851 = vld [vmem:[#allocation8 + $0x7f8] sm:$0xff]
    %v1852 = vld [vmem:[#allocation8 + $0x800] sm:$0xff]
    %v1853 = vld [vmem:[#allocation8 + $0x808] sm:$0xff]
    %v1854 = vld [vmem:[#allocation8 + $0x810] sm:$0xff]
    %v1855 = vld [vmem:[#allocation8 + $0x818] sm:$0xff]
    %v1856 = vld [vmem:[#allocation8 + $0x820] sm:$0xff]
    %v1857 = vld [vmem:[#allocation8 + $0x828] sm:$0xff]
    %v1858 = vld [vmem:[#allocation8 + $0x830] sm:$0xff]
    %v1859 = vld [vmem:[#allocation8 + $0x838] sm:$0xff]
    %v1860 = vld [vmem:[#allocation8 + $0x840] sm:$0xff]
    %v1861 = vld [vmem:[#allocation8 + $0x848] sm:$0xff]
    %v1862 = vld [vmem:[#allocation8 + $0x850] sm:$0xff]
    %v1863 = vld [vmem:[#allocation8 + $0x858] sm:$0xff]
    %v1864 = vld [vmem:[#allocation8 + $0x860] sm:$0xff]
    %v1865 = vld [vmem:[#allocation8 + $0x868] sm:$0xff]
    %v1866 = vld [vmem:[#allocation8 + $0x870] sm:$0xff]
    %v1867 = vld [vmem:[#allocation8 + $0x878] sm:$0xff]
    %v1868 = vld [vmem:[#allocation8 + $0x880] sm:$0xff]
    %v1869 = vld [vmem:[#allocation8 + $0x888] sm:$0xff]
    %v1870 = vld [vmem:[#allocation8 + $0x890] sm:$0xff]
    %v1871 = vld [vmem:[#allocation8 + $0x898] sm:$0xff]
    %v1872 = vld [vmem:[#allocation8 + $0x8a0] sm:$0xff]
    %v1873 = vld [vmem:[#allocation8 + $0x8a8] sm:$0xff]
    %v1874 = vld [vmem:[#allocation8 + $0x8b0] sm:$0xff]
    %v1875 = vld [vmem:[#allocation8 + $0x8b8] sm:$0xff]
    %v1876 = vld [vmem:[#allocation8 + $0x8c0] sm:$0xff]
    %v1877 = vld [vmem:[#allocation8 + $0x8c8] sm:$0xff]
    %v1878 = vld [vmem:[#allocation8 + $0x8d0] sm:$0xff]
    %v1879 = vld [vmem:[#allocation8 + $0x8d8] sm:$0xff]
    %v1880 = vld [vmem:[#allocation8 + $0x8e0] sm:$0xff]
    %v1881 = vld [vmem:[#allocation8 + $0x8e8] sm:$0xff]
    %v1882 = vld [vmem:[#allocation8 + $0x8f0] sm:$0xff]
    %v1883 = vld [vmem:[#allocation8 + $0x8f8] sm:$0xff]
    %v1884 = vld [vmem:[#allocation8 + $0x900] sm:$0xff]
    %v1885 = vld [vmem:[#allocation8 + $0x908] sm:$0xff]
    %v1886 = vld [vmem:[#allocation8 + $0x910] sm:$0xff]
    %v1887 = vld [vmem:[#allocation8 + $0x918] sm:$0xff]
    %v1888 = vld [vmem:[#allocation8 + $0x920] sm:$0xff]
    %v1889 = vld [vmem:[#allocation8 + $0x928] sm:$0xff]
    %v1890 = vld [vmem:[#allocation8 + $0x930] sm:$0xff]
    %v1891 = vld [vmem:[#allocation8 + $0x938] sm:$0xff]
    %v1892 = vld [vmem:[#allocation8 + $0x940] sm:$0xff]
    %v1893 = vld [vmem:[#allocation8 + $0x948] sm:$0xff]
    %v1894 = vld [vmem:[#allocation8 + $0x950] sm:$0xff]
    %v1895 = vld [vmem:[#allocation8 + $0x958] sm:$0xff]
    %v1896 = vld [vmem:[#allocation8 + $0x960] sm:$0xff]
    %v1897 = vld [vmem:[#allocation8 + $0x968] sm:$0xff]
    %v1898 = vld [vmem:[#allocation8 + $0x970] sm:$0xff]
    %v1899 = vld [vmem:[#allocation8 + $0x978] sm:$0xff]
    %v1900 = vld [vmem:[#allocation8 + $0x980] sm:$0xff]
    %v1901 = vld [vmem:[#allocation8 + $0x988] sm:$0xff]
    %v1902 = vld [vmem:[#allocation8 + $0x990] sm:$0xff]
    %v1903 = vld [vmem:[#allocation8 + $0x998] sm:$0xff]
    %v1904 = vld [vmem:[#allocation8 + $0x9a0] sm:$0xff]
    %v1905 = vld [vmem:[#allocation8 + $0x9a8] sm:$0xff]
    %v1906 = vld [vmem:[#allocation8 + $0x9b0] sm:$0xff]
    %v1907 = vld [vmem:[#allocation8 + $0x9b8] sm:$0xff]
    %v1908 = vld [vmem:[#allocation8 + $0x9c0] sm:$0xff]
    %v1909 = vld [vmem:[#allocation8 + $0x9c8] sm:$0xff]
    %v1910 = vld [vmem:[#allocation8 + $0x9d0] sm:$0xff]
    %v1911 = vld [vmem:[#allocation8 + $0x9d8] sm:$0xff]
    %v1912 = vld [vmem:[#allocation8 + $0x9e0] sm:$0xff]
    %v1913 = vld [vmem:[#allocation8 + $0x9e8] sm:$0xff]
    %v1914 = vld [vmem:[#allocation8 + $0x9f0] sm:$0xff]
    %v1915 = vld [vmem:[#allocation8 + $0x9f8] sm:$0xff]
    %v1916 = vld [vmem:[#allocation8 + $0xa00] sm:$0xff]
    %v1917 = vld [vmem:[#allocation8 + $0xa08] sm:$0xff]
    %v1918 = vld [vmem:[#allocation8 + $0xa10] sm:$0xff]
    %v1919 = vld [vmem:[#allocation8 + $0xa18] sm:$0xff]
    %v1920 = vld [vmem:[#allocation8 + $0xa20] sm:$0xff]
    %v1921 = vld [vmem:[#allocation8 + $0xa28] sm:$0xff]
    %v1922 = vld [vmem:[#allocation8 + $0xa30] sm:$0xff]
    %v1923 = vld [vmem:[#allocation8 + $0xa38] sm:$0xff]
    %v1924 = vld [vmem:[#allocation8 + $0xa40] sm:$0xff]
    %v1925 = vld [vmem:[#allocation8 + $0xa48] sm:$0xff]
    %v1926 = vld [vmem:[#allocation8 + $0xa50] sm:$0xff]
    %v1927 = vld [vmem:[#allocation8 + $0xa58] sm:$0xff]
    %v1928 = vld [vmem:[#allocation8 + $0xa60] sm:$0xff]
    %v1929 = vld [vmem:[#allocation8 + $0xa68] sm:$0xff]
    %v1930 = vld [vmem:[#allocation8 + $0xa70] sm:$0xff]
    %v1931 = vld [vmem:[#allocation8 + $0xa78] sm:$0xff]
    %v1932 = vld [vmem:[#allocation8 + $0xa80] sm:$0xff]
    %v1933 = vld [vmem:[#allocation8 + $0xa88] sm:$0xff]
    %v1934 = vld [vmem:[#allocation8 + $0xa90] sm:$0xff]
    %v1935 = vld [vmem:[#allocation8 + $0xa98] sm:$0xff]
    %v1936 = vld [vmem:[#allocation8 + $0xaa0] sm:$0xff]
    %v1937 = vld [vmem:[#allocation8 + $0xaa8] sm:$0xff]
    %v1938 = vld [vmem:[#allocation8 + $0xab0] sm:$0xff]
    %v1939 = vld [vmem:[#allocation8 + $0xab8] sm:$0xff]
    %v1940 = vld [vmem:[#allocation8 + $0xac0] sm:$0xff]
    %v1941 = vld [vmem:[#allocation8 + $0xac8] sm:$0xff]
    %v1942 = vld [vmem:[#allocation8 + $0xad0] sm:$0xff]
    %v1943 = vld [vmem:[#allocation8 + $0xad8] sm:$0xff]
    %v1944 = vld [vmem:[#allocation8 + $0xae0] sm:$0xff]
    %v1945 = vld [vmem:[#allocation8 + $0xae8] sm:$0xff]
    %v1946 = vld [vmem:[#allocation8 + $0xaf0] sm:$0xff]
    %v1947 = vld [vmem:[#allocation8 + $0xaf8] sm:$0xff]
    %v1948 = vld [vmem:[#allocation8 + $0xb00] sm:$0xff]
    %v1949 = vld [vmem:[#allocation8 + $0xb08] sm:$0xff]
    %v1950 = vld [vmem:[#allocation8 + $0xb10] sm:$0xff]
    %v1951 = vld [vmem:[#allocation8 + $0xb18] sm:$0xff]
    %v1952 = vld [vmem:[#allocation8 + $0xb20] sm:$0xff]
    %v1953 = vld [vmem:[#allocation8 + $0xb28] sm:$0xff]
    %v1954 = vld [vmem:[#allocation8 + $0xb30] sm:$0xff]
    %v1955 = vld [vmem:[#allocation8 + $0xb38] sm:$0xff]
    %v1956 = vld [vmem:[#allocation8 + $0xb40] sm:$0xff]
    %v1957 = vld [vmem:[#allocation8 + $0xb48] sm:$0xff]
    %v1958 = vld [vmem:[#allocation8 + $0xb50] sm:$0xff]
    %v1959 = vld [vmem:[#allocation8 + $0xb58] sm:$0xff]
    %v1960 = vld [vmem:[#allocation8 + $0xb60] sm:$0xff]
    %v1961 = vld [vmem:[#allocation8 + $0xb68] sm:$0xff]
    %v1962 = vld [vmem:[#allocation8 + $0xb70] sm:$0xff]
    %v1963 = vld [vmem:[#allocation8 + $0xb78] sm:$0xff]
    %v1964 = vld [vmem:[#allocation8 + $0xb80] sm:$0xff]
    %v1965 = vld [vmem:[#allocation8 + $0xb88] sm:$0xff]
    %v1966 = vld [vmem:[#allocation8 + $0xb90] sm:$0xff]
    %v1967 = vld [vmem:[#allocation8 + $0xb98] sm:$0xff]
    %v1968 = vld [vmem:[#allocation8 + $0xba0] sm:$0xff]
    %v1969 = vld [vmem:[#allocation8 + $0xba8] sm:$0xff]
    %v1970 = vld [vmem:[#allocation8 + $0xbb0] sm:$0xff]
    %v1971 = vld [vmem:[#allocation8 + $0xbb8] sm:$0xff]
    %v1972 = vld [vmem:[#allocation8 + $0xbc0] sm:$0xff]
    %v1973 = vld [vmem:[#allocation8 + $0xbc8] sm:$0xff]
    %v1974 = vld [vmem:[#allocation8 + $0xbd0] sm:$0xff]
    %v1975 = vld [vmem:[#allocation8 + $0xbd8] sm:$0xff]
    %v1976 = vld [vmem:[#allocation8 + $0xbe0] sm:$0xff]
    %v1977 = vld [vmem:[#allocation8 + $0xbe8] sm:$0xff]
    %v1978 = vld [vmem:[#allocation8 + $0xbf0] sm:$0xff]
    %v1979 = vld [vmem:[#allocation8 + $0xbf8] sm:$0xff]
    %v1980 = vld [vmem:[#allocation8 + $0xc00] sm:$0xff]
    %v1981 = vld [vmem:[#allocation8 + $0xc08] sm:$0xff]
    %v1982 = vld [vmem:[#allocation8 + $0xc10] sm:$0xff]
    %v1983 = vld [vmem:[#allocation8 + $0xc18] sm:$0xff]
    %v1984 = vld [vmem:[#allocation8 + $0xc20] sm:$0xff]
    %v1985 = vld [vmem:[#allocation8 + $0xc28] sm:$0xff]
    %v1986 = vld [vmem:[#allocation8 + $0xc30] sm:$0xff]
    %v1987 = vld [vmem:[#allocation8 + $0xc38] sm:$0xff]
    %v1988 = vld [vmem:[#allocation8 + $0xc40] sm:$0xff]
    %v1989 = vld [vmem:[#allocation8 + $0xc48] sm:$0xff]
    %v1990 = vld [vmem:[#allocation8 + $0xc50] sm:$0xff]
    %v1991 = vld [vmem:[#allocation8 + $0xc58] sm:$0xff]
    %v1992 = vld [vmem:[#allocation8 + $0xc60] sm:$0xff]
    %v1993 = vld [vmem:[#allocation8 + $0xc68] sm:$0xff]
    %v1994 = vld [vmem:[#allocation8 + $0xc70] sm:$0xff]
    %v1995 = vld [vmem:[#allocation8 + $0xc78] sm:$0xff]
    %v1996 = vld [vmem:[#allocation8 + $0xc80] sm:$0xff]
    %v1997 = vld [vmem:[#allocation8 + $0xc88] sm:$0xff]
    %v1998 = vld [vmem:[#allocation8 + $0xc90] sm:$0xff]
    %v1999 = vld [vmem:[#allocation8 + $0xc98] sm:$0xff]
    %v2000 = vld [vmem:[#allocation8 + $0xca0] sm:$0xff]
    %v2001 = vld [vmem:[#allocation8 + $0xca8] sm:$0xff]
    %v2002 = vld [vmem:[#allocation8 + $0xcb0] sm:$0xff]
    %v2003 = vld [vmem:[#allocation8 + $0xcb8] sm:$0xff]
    %v2004 = vld [vmem:[#allocation8 + $0xcc0] sm:$0xff]
    %v2005 = vld [vmem:[#allocation8 + $0xcc8] sm:$0xff]
    %v2006 = vld [vmem:[#allocation8 + $0xcd0] sm:$0xff]
    %v2007 = vld [vmem:[#allocation8 + $0xcd8] sm:$0xff]
    %v2008 = vld [vmem:[#allocation8 + $0xce0] sm:$0xff]
    %v2009 = vld [vmem:[#allocation8 + $0xce8] sm:$0xff]
    %v2010 = vld [vmem:[#allocation8 + $0xcf0] sm:$0xff]
    %v2011 = vld [vmem:[#allocation8 + $0xcf8] sm:$0xff]
    %v2012 = vld [vmem:[#allocation8 + $0xd00] sm:$0xff]
    %v2013 = vld [vmem:[#allocation8 + $0xd08] sm:$0xff]
    %v2014 = vld [vmem:[#allocation8 + $0xd10] sm:$0xff]
    %v2015 = vld [vmem:[#allocation8 + $0xd18] sm:$0xff]
    %v2016 = vld [vmem:[#allocation8 + $0xd20] sm:$0xff]
    %v2017 = vld [vmem:[#allocation8 + $0xd28] sm:$0xff]
    %v2018 = vld [vmem:[#allocation8 + $0xd30] sm:$0xff]
    %v2019 = vld [vmem:[#allocation8 + $0xd38] sm:$0xff]
    %v2020 = vld [vmem:[#allocation8 + $0xd40] sm:$0xff]
    %v2021 = vld [vmem:[#allocation8 + $0xd48] sm:$0xff]
    %v2022 = vld [vmem:[#allocation8 + $0xd50] sm:$0xff]
    %v2023 = vld [vmem:[#allocation8 + $0xd58] sm:$0xff]
    %v2024 = vld [vmem:[#allocation8 + $0xd60] sm:$0xff]
    %v2025 = vld [vmem:[#allocation8 + $0xd68] sm:$0xff]
    %v2026 = vld [vmem:[#allocation8 + $0xd70] sm:$0xff]
    %v2027 = vld [vmem:[#allocation8 + $0xd78] sm:$0xff]
    %v2028 = vld [vmem:[#allocation8 + $0xd80] sm:$0xff]
    %v2029 = vld [vmem:[#allocation8 + $0xd88] sm:$0xff]
    %v2030 = vld [vmem:[#allocation8 + $0xd90] sm:$0xff]
    %v2031 = vld [vmem:[#allocation8 + $0xd98] sm:$0xff]
    %v2032 = vld [vmem:[#allocation8 + $0xda0] sm:$0xff]
    %v2033 = vld [vmem:[#allocation8 + $0xda8] sm:$0xff]
    %v2034 = vld [vmem:[#allocation8 + $0xdb0] sm:$0xff]
    %v2035 = vld [vmem:[#allocation8 + $0xdb8] sm:$0xff]
    %v2036 = vld [vmem:[#allocation8 + $0xdc0] sm:$0xff]
    %v2037 = vld [vmem:[#allocation8 + $0xdc8] sm:$0xff]
    %v2038 = vld [vmem:[#allocation8 + $0xdd0] sm:$0xff]
    %v2039 = vld [vmem:[#allocation8 + $0xdd8] sm:$0xff]
    %v2040 = vld [vmem:[#allocation8 + $0xde0] sm:$0xff]
    %v2041 = vld [vmem:[#allocation8 + $0xde8] sm:$0xff]
    %v2042 = vld [vmem:[#allocation8 + $0xdf0] sm:$0xff]
    %v2043 = vld [vmem:[#allocation8 + $0xdf8] sm:$0xff]
    %v2044 = vld [vmem:[#allocation8 + $0xe00] sm:$0xff]
    %v2045 = vld [vmem:[#allocation8 + $0xe08] sm:$0xff]
    %v2046 = vld [vmem:[#allocation8 + $0xe10] sm:$0xff]
    %v2047 = vld [vmem:[#allocation8 + $0xe18] sm:$0xff]
    %v2048 = vld [vmem:[#allocation8 + $0xe20] sm:$0xff]
    %v2049 = vld [vmem:[#allocation8 + $0xe28] sm:$0xff]
    %v2050 = vld [vmem:[#allocation8 + $0xe30] sm:$0xff]
    %v2051 = vld [vmem:[#allocation8 + $0xe38] sm:$0xff]
    %v2052 = vld [vmem:[#allocation8 + $0xe40] sm:$0xff]
    %v2053 = vld [vmem:[#allocation8 + $0xe48] sm:$0xff]
    %v2054 = vld [vmem:[#allocation8 + $0xe50] sm:$0xff]
    %v2055 = vld [vmem:[#allocation8 + $0xe58] sm:$0xff]
    %v2056 = vld [vmem:[#allocation8 + $0xe60] sm:$0xff]
    %v2057 = vld [vmem:[#allocation8 + $0xe68] sm:$0xff]
    %v2058 = vld [vmem:[#allocation8 + $0xe70] sm:$0xff]
    %v2059 = vld [vmem:[#allocation8 + $0xe78] sm:$0xff]
    %v2060 = vld [vmem:[#allocation8 + $0xe80] sm:$0xff]
    %v2061 = vld [vmem:[#allocation8 + $0xe88] sm:$0xff]
    %v2062 = vld [vmem:[#allocation8 + $0xe90] sm:$0xff]
    %v2063 = vld [vmem:[#allocation8 + $0xe98] sm:$0xff]
    %v2064 = vld [vmem:[#allocation8 + $0xea0] sm:$0xff]
    %v2065 = vld [vmem:[#allocation8 + $0xea8] sm:$0xff]
    %v2066 = vld [vmem:[#allocation8 + $0xeb0] sm:$0xff]
    %v2067 = vld [vmem:[#allocation8 + $0xeb8] sm:$0xff]
    %v2068 = vld [vmem:[#allocation8 + $0xec0] sm:$0xff]
    %v2069 = vld [vmem:[#allocation8 + $0xec8] sm:$0xff]
    %v2070 = vld [vmem:[#allocation8 + $0xed0] sm:$0xff]
    %v2071 = vld [vmem:[#allocation8 + $0xed8] sm:$0xff]
    %v2072 = vld [vmem:[#allocation8 + $0xee0] sm:$0xff]
    %v2073 = vld [vmem:[#allocation8 + $0xee8] sm:$0xff]
    %v2074 = vld [vmem:[#allocation8 + $0xef0] sm:$0xff]
    %v2075 = vld [vmem:[#allocation8 + $0xef8] sm:$0xff]
    %v2076 = vld [vmem:[#allocation8 + $0xf00] sm:$0xff]
    %v2077 = vld [vmem:[#allocation8 + $0xf08] sm:$0xff]
    %v2078 = vld [vmem:[#allocation8 + $0xf10] sm:$0xff]
    %v2079 = vld [vmem:[#allocation8 + $0xf18] sm:$0xff]
    %v2080 = vld [vmem:[#allocation8 + $0xf20] sm:$0xff]
    %v2081 = vld [vmem:[#allocation8 + $0xf28] sm:$0xff]
    %v2082 = vld [vmem:[#allocation8 + $0xf30] sm:$0xff]
    %v2083 = vld [vmem:[#allocation8 + $0xf38] sm:$0xff]
    %v2084 = vld [vmem:[#allocation8 + $0xf40] sm:$0xff]
    %v2085 = vld [vmem:[#allocation8 + $0xf48] sm:$0xff]
    %v2086 = vld [vmem:[#allocation8 + $0xf50] sm:$0xff]
    %v2087 = vld [vmem:[#allocation8 + $0xf58] sm:$0xff]
    %v2088 = vld [vmem:[#allocation8 + $0xf60] sm:$0xff]
    %v2089 = vld [vmem:[#allocation8 + $0xf68] sm:$0xff]
    %v2090 = vld [vmem:[#allocation8 + $0xf70] sm:$0xff]
    %v2091 = vld [vmem:[#allocation8 + $0xf78] sm:$0xff]
    %v2092 = vld [vmem:[#allocation8 + $0xf80] sm:$0xff]
    %v2093 = vld [vmem:[#allocation8 + $0xf88] sm:$0xff]
    %v2094 = vld [vmem:[#allocation8 + $0xf90] sm:$0xff]
    %v2095 = vld [vmem:[#allocation8 + $0xf98] sm:$0xff]
    %v2096 = vld [vmem:[#allocation8 + $0xfa0] sm:$0xff]
    %v2097 = vld [vmem:[#allocation8 + $0xfa8] sm:$0xff]
    %v2098 = vld [vmem:[#allocation8 + $0xfb0] sm:$0xff]
    %v2099 = vld [vmem:[#allocation8 + $0xfb8] sm:$0xff]
    %v2100 = vld [vmem:[#allocation8 + $0xfc0] sm:$0xff]
    %v2101 = vld [vmem:[#allocation8 + $0xfc8] sm:$0xff]
    %v2102 = vld [vmem:[#allocation8 + $0xfd0] sm:$0xff]
    %v2103 = vld [vmem:[#allocation8 + $0xfd8] sm:$0xff]
    %v2104 = vld [vmem:[#allocation8 + $0xfe0] sm:$0xff]
    %v2105 = vld [vmem:[#allocation8 + $0xfe8] sm:$0xff]
    %v2106 = vld [vmem:[#allocation8 + $0xff0] sm:$0xff]
    %v2107 = vld [vmem:[#allocation8 + $0xff8] sm:$0xff]
    %v2108 = vld [vmem:[#allocation8 + $0x1000] sm:$0xff]
    %v2109 = vld [vmem:[#allocation8 + $0x1008] sm:$0xff]
    %v2110 = vld [vmem:[#allocation8 + $0x1010] sm:$0xff]
    %v2111 = vld [vmem:[#allocation8 + $0x1018] sm:$0xff]
    %v2112 = vld [vmem:[#allocation8 + $0x1020] sm:$0xff]
    %v2113 = vld [vmem:[#allocation8 + $0x1028] sm:$0xff]
    %v2114 = vld [vmem:[#allocation8 + $0x1030] sm:$0xff]
    %v2115 = vld [vmem:[#allocation8 + $0x1038] sm:$0xff]
    %v2116 = vld [vmem:[#allocation8 + $0x1040] sm:$0xff]
    %v2117 = vld [vmem:[#allocation8 + $0x1048] sm:$0xff]
    %v2118 = vld [vmem:[#allocation8 + $0x1050] sm:$0xff]
    %v2119 = vld [vmem:[#allocation8 + $0x1058] sm:$0xff]
    %v2120 = vld [vmem:[#allocation8 + $0x1060] sm:$0xff]
    %v2121 = vld [vmem:[#allocation8 + $0x1068] sm:$0xff]
    %v2122 = vld [vmem:[#allocation8 + $0x1070] sm:$0xff]
    %v2123 = vld [vmem:[#allocation8 + $0x1078] sm:$0xff]
    %v2124 = vld [vmem:[#allocation10] sm:$0x3f]
    %v2126 = vlaneseq
    %v2127 = vshrl.u32 %v2126, 7
    %v2128 = vsub.s32 0, %v2127
    %v2129 = vrot.slane %v2124, %v2128
    %v2130 = vlaneseq
    %v2131 = vshrl.u32 %v2130, 7
    %v2132 = vsub.s32 1, %v2131
    %v2133 = vrot.slane %v2124, %v2132
    %v2134 = vlaneseq
    %v2135 = vshrl.u32 %v2134, 7
    %v2136 = vsub.s32 2, %v2135
    %v2137 = vrot.slane %v2124, %v2136
    %v2138 = vlaneseq
    %v2139 = vshrl.u32 %v2138, 7
    %v2140 = vsub.s32 3, %v2139
    %v2141 = vrot.slane %v2124, %v2140
    %v2142 = vlaneseq
    %v2143 = vshrl.u32 %v2142, 7
    %v2144 = vsub.s32 4, %v2143
    %v2145 = vrot.slane %v2124, %v2144
    %v2146 = vlaneseq
    %v2147 = vshrl.u32 %v2146, 7
    %v2148 = vsub.s32 5, %v2147
    %v2149 = vrot.slane %v2124, %v2148
    %v2684 = vunpack.c.l.b16 %v1596
    %v2685 = vunpack.c.h.b16 %v1596
    %v2686 = vunpack.c.l.b16 %v1597
    %v2687 = vunpack.c.h.b16 %v1597
    %v2688 = vunpack.c.l.b16 %v1598
    %v2689 = vunpack.c.h.b16 %v1598
    %v2690 = vunpack.c.l.b16 %v1599
    %v2691 = vunpack.c.h.b16 %v1599
    %v2692 = vunpack.c.l.b16 %v1600
    %v2693 = vunpack.c.h.b16 %v1600
    %v2694 = vunpack.c.l.b16 %v1601
    %v2695 = vunpack.c.h.b16 %v1601
    %v2696 = vunpack.c.l.b16 %v1602
    %v2697 = vunpack.c.h.b16 %v1602
    %v2698 = vunpack.c.l.b16 %v1603
    %v2699 = vunpack.c.h.b16 %v1603
    %v2700 = vunpack.c.l.b16 %v1604
    %v2701 = vunpack.c.h.b16 %v1604
    %v2702 = vunpack.c.l.b16 %v1605
    %v2703 = vunpack.c.h.b16 %v1605
    %v2704 = vunpack.c.l.b16 %v1606
    %v2705 = vunpack.c.h.b16 %v1606
    %v2706 = vunpack.c.l.b16 %v1607
    %v2707 = vunpack.c.h.b16 %v1607
    %v2708 = vunpack.c.l.b16 %v1608
    %v2709 = vunpack.c.h.b16 %v1608
    %v2710 = vunpack.c.l.b16 %v1609
    %v2711 = vunpack.c.h.b16 %v1609
    %v2712 = vunpack.c.l.b16 %v1610
    %v2713 = vunpack.c.h.b16 %v1610
    %v2714 = vunpack.c.l.b16 %v1611
    %v2715 = vunpack.c.h.b16 %v1611
    %v2716 = vunpack.c.l.b16 %v1612
    %v2717 = vunpack.c.h.b16 %v1612
    %v2718 = vunpack.c.l.b16 %v1613
    %v2719 = vunpack.c.h.b16 %v1613
    %v2720 = vunpack.c.l.b16 %v1614
    %v2721 = vunpack.c.h.b16 %v1614
    %v2722 = vunpack.c.l.b16 %v1615
    %v2723 = vunpack.c.h.b16 %v1615
    %v2724 = vunpack.c.l.b16 %v1616
    %v2725 = vunpack.c.h.b16 %v1616
    %v2726 = vunpack.c.l.b16 %v1617
    %v2727 = vunpack.c.h.b16 %v1617
    %v2728 = vunpack.c.l.b16 %v1618
    %v2729 = vunpack.c.h.b16 %v1618
    %v2730 = vunpack.c.l.b16 %v1619
    %v2731 = vunpack.c.h.b16 %v1619
    %v2732 = vunpack.c.l.b16 %v1620
    %v2733 = vunpack.c.h.b16 %v1620
    %v2734 = vunpack.c.l.b16 %v1621
    %v2735 = vunpack.c.h.b16 %v1621
    %v2736 = vunpack.c.l.b16 %v1622
    %v2737 = vunpack.c.h.b16 %v1622
    %v2738 = vunpack.c.l.b16 %v1623
    %v2739 = vunpack.c.h.b16 %v1623
    %v2740 = vunpack.c.l.b16 %v1624
    %v2741 = vunpack.c.h.b16 %v1624
    %v2742 = vunpack.c.l.b16 %v1625
    %v2743 = vunpack.c.h.b16 %v1625
    %v2744 = vunpack.c.l.b16 %v1626
    %v2745 = vunpack.c.h.b16 %v1626
    %v2746 = vunpack.c.l.b16 %v1627
    %v2747 = vunpack.c.h.b16 %v1627
    %v2748 = vunpack.c.l.b16 %v1628
    %v2749 = vunpack.c.h.b16 %v1628
    %v2750 = vunpack.c.l.b16 %v1629
    %v2751 = vunpack.c.h.b16 %v1629
    %v2752 = vunpack.c.l.b16 %v1630
    %v2753 = vunpack.c.h.b16 %v1630
    %v2754 = vunpack.c.l.b16 %v1631
    %v2755 = vunpack.c.h.b16 %v1631
    %v2756 = vunpack.c.l.b16 %v1632
    %v2757 = vunpack.c.h.b16 %v1632
    %v2758 = vunpack.c.l.b16 %v1633
    %v2759 = vunpack.c.h.b16 %v1633
    %v2760 = vunpack.c.l.b16 %v1634
    %v2761 = vunpack.c.h.b16 %v1634
    %v2762 = vunpack.c.l.b16 %v1635
    %v2763 = vunpack.c.h.b16 %v1635
    %v2764 = vunpack.c.l.b16 %v1636
    %v2765 = vunpack.c.h.b16 %v1636
    %v2766 = vunpack.c.l.b16 %v1637
    %v2767 = vunpack.c.h.b16 %v1637
    %v2768 = vunpack.c.l.b16 %v1638
    %v2769 = vunpack.c.h.b16 %v1638
    %v2770 = vunpack.c.l.b16 %v1639
    %v2771 = vunpack.c.h.b16 %v1639
    %v2772 = vunpack.c.l.b16 %v1640
    %v2773 = vunpack.c.h.b16 %v1640
    %v2774 = vunpack.c.l.b16 %v1641
    %v2775 = vunpack.c.h.b16 %v1641
    %v2776 = vunpack.c.l.b16 %v1642
    %v2777 = vunpack.c.h.b16 %v1642
    %v2778 = vunpack.c.l.b16 %v1643
    %v2779 = vunpack.c.h.b16 %v1643
    %v2780 = vunpack.c.l.b16 %v1644
    %v2781 = vunpack.c.h.b16 %v1644
    %v2782 = vunpack.c.l.b16 %v1645
    %v2783 = vunpack.c.h.b16 %v1645
    %v2784 = vunpack.c.l.b16 %v1646
    %v2785 = vunpack.c.h.b16 %v1646
    %v2786 = vunpack.c.l.b16 %v1647
    %v2787 = vunpack.c.h.b16 %v1647
    %v2788 = vunpack.c.l.b16 %v1648
    %v2789 = vunpack.c.h.b16 %v1648
    %v2790 = vunpack.c.l.b16 %v1649
    %v2791 = vunpack.c.h.b16 %v1649
    %v2792 = vunpack.c.l.b16 %v1650
    %v2793 = vunpack.c.h.b16 %v1650
    %v2794 = vunpack.c.l.b16 %v1651
    %v2795 = vunpack.c.h.b16 %v1651
    %v2796 = vunpack.c.l.b16 %v1652
    %v2797 = vunpack.c.h.b16 %v1652
    %v2798 = vunpack.c.l.b16 %v1653
    %v2799 = vunpack.c.h.b16 %v1653
    %v2800 = vunpack.c.l.b16 %v1654
    %v2801 = vunpack.c.h.b16 %v1654
    %v2802 = vunpack.c.l.b16 %v1655
    %v2803 = vunpack.c.h.b16 %v1655
    %v2804 = vunpack.c.l.b16 %v1656
    %v2805 = vunpack.c.h.b16 %v1656
    %v2806 = vunpack.c.l.b16 %v1657
    %v2807 = vunpack.c.h.b16 %v1657
    %v2808 = vunpack.c.l.b16 %v1658
    %v2809 = vunpack.c.h.b16 %v1658
    %v2810 = vunpack.c.l.b16 %v1659
    %v2811 = vunpack.c.h.b16 %v1659
    %v2812 = vunpack.c.l.b16 %v1660
    %v2813 = vunpack.c.h.b16 %v1660
    %v2814 = vunpack.c.l.b16 %v1661
    %v2815 = vunpack.c.h.b16 %v1661
    %v2816 = vunpack.c.l.b16 %v1662
    %v2817 = vunpack.c.h.b16 %v1662
    %v2818 = vunpack.c.l.b16 %v1663
    %v2819 = vunpack.c.h.b16 %v1663
    %v2820 = vunpack.c.l.b16 %v1664
    %v2821 = vunpack.c.h.b16 %v1664
    %v2822 = vunpack.c.l.b16 %v1665
    %v2823 = vunpack.c.h.b16 %v1665
    %v2824 = vunpack.c.l.b16 %v1666
    %v2825 = vunpack.c.h.b16 %v1666
    %v2826 = vunpack.c.l.b16 %v1667
    %v2827 = vunpack.c.h.b16 %v1667
    %v2828 = vunpack.c.l.b16 %v1668
    %v2829 = vunpack.c.h.b16 %v1668
    %v2830 = vunpack.c.l.b16 %v1669
    %v2831 = vunpack.c.h.b16 %v1669
    %v2832 = vunpack.c.l.b16 %v1670
    %v2833 = vunpack.c.h.b16 %v1670
    %v2834 = vunpack.c.l.b16 %v1671
    %v2835 = vunpack.c.h.b16 %v1671
    %v2836 = vunpack.c.l.b16 %v1672
    %v2837 = vunpack.c.h.b16 %v1672
    %v2838 = vunpack.c.l.b16 %v1673
    %v2839 = vunpack.c.h.b16 %v1673
    %v2840 = vunpack.c.l.b16 %v1674
    %v2841 = vunpack.c.h.b16 %v1674
    %v2842 = vunpack.c.l.b16 %v1675
    %v2843 = vunpack.c.h.b16 %v1675
    %v2844 = vunpack.c.l.b16 %v1676
    %v2845 = vunpack.c.h.b16 %v1676
    %v2846 = vunpack.c.l.b16 %v1677
    %v2847 = vunpack.c.h.b16 %v1677
    %v2848 = vunpack.c.l.b16 %v1678
    %v2849 = vunpack.c.h.b16 %v1678
    %v2850 = vunpack.c.l.b16 %v1679
    %v2851 = vunpack.c.h.b16 %v1679
    %v2852 = vunpack.c.l.b16 %v1680
    %v2853 = vunpack.c.h.b16 %v1680
    %v2854 = vunpack.c.l.b16 %v1681
    %v2855 = vunpack.c.h.b16 %v1681
    %v2856 = vunpack.c.l.b16 %v1682
    %v2857 = vunpack.c.h.b16 %v1682
    %v2858 = vunpack.c.l.b16 %v1683
    %v2859 = vunpack.c.h.b16 %v1683
    %v2860 = vunpack.c.l.b16 %v1684
    %v2861 = vunpack.c.h.b16 %v1684
    %v2862 = vunpack.c.l.b16 %v1685
    %v2863 = vunpack.c.h.b16 %v1685
    %v2864 = vunpack.c.l.b16 %v1686
    %v2865 = vunpack.c.h.b16 %v1686
    %v2866 = vunpack.c.l.b16 %v1687
    %v2867 = vunpack.c.h.b16 %v1687
    %v2868 = vunpack.c.l.b16 %v1688
    %v2869 = vunpack.c.h.b16 %v1688
    %v2870 = vunpack.c.l.b16 %v1689
    %v2871 = vunpack.c.h.b16 %v1689
    %v2872 = vunpack.c.l.b16 %v1690
    %v2873 = vunpack.c.h.b16 %v1690
    %v2874 = vunpack.c.l.b16 %v1691
    %v2875 = vunpack.c.h.b16 %v1691
    %v2876 = vunpack.c.l.b16 %v1692
    %v2877 = vunpack.c.h.b16 %v1692
    %v2878 = vunpack.c.l.b16 %v1693
    %v2879 = vunpack.c.h.b16 %v1693
    %v2880 = vunpack.c.l.b16 %v1694
    %v2881 = vunpack.c.h.b16 %v1694
    %v2882 = vunpack.c.l.b16 %v1695
    %v2883 = vunpack.c.h.b16 %v1695
    %v2884 = vunpack.c.l.b16 %v1696
    %v2885 = vunpack.c.h.b16 %v1696
    %v2886 = vunpack.c.l.b16 %v1697
    %v2887 = vunpack.c.h.b16 %v1697
    %v2888 = vunpack.c.l.b16 %v1698
    %v2889 = vunpack.c.h.b16 %v1698
    %v2890 = vunpack.c.l.b16 %v1699
    %v2891 = vunpack.c.h.b16 %v1699
    %v2892 = vunpack.c.l.b16 %v1700
    %v2893 = vunpack.c.h.b16 %v1700
    %v2894 = vunpack.c.l.b16 %v1701
    %v2895 = vunpack.c.h.b16 %v1701
    %v2896 = vunpack.c.l.b16 %v1702
    %v2897 = vunpack.c.h.b16 %v1702
    %v2898 = vunpack.c.l.b16 %v1703
    %v2899 = vunpack.c.h.b16 %v1703
    %v2900 = vunpack.c.l.b16 %v1704
    %v2901 = vunpack.c.h.b16 %v1704
    %v2902 = vunpack.c.l.b16 %v1705
    %v2903 = vunpack.c.h.b16 %v1705
    %v2904 = vunpack.c.l.b16 %v1706
    %v2905 = vunpack.c.h.b16 %v1706
    %v2906 = vunpack.c.l.b16 %v1707
    %v2907 = vunpack.c.h.b16 %v1707
    %v2908 = vunpack.c.l.b16 %v1708
    %v2909 = vunpack.c.h.b16 %v1708
    %v2910 = vunpack.c.l.b16 %v1709
    %v2911 = vunpack.c.h.b16 %v1709
    %v2912 = vunpack.c.l.b16 %v1710
    %v2913 = vunpack.c.h.b16 %v1710
    %v2914 = vunpack.c.l.b16 %v1711
    %v2915 = vunpack.c.h.b16 %v1711
    %v2916 = vunpack.c.l.b16 %v1712
    %v2917 = vunpack.c.h.b16 %v1712
    %v2918 = vunpack.c.l.b16 %v1713
    %v2919 = vunpack.c.h.b16 %v1713
    %v2920 = vunpack.c.l.b16 %v1714
    %v2921 = vunpack.c.h.b16 %v1714
    %v2922 = vunpack.c.l.b16 %v1715
    %v2923 = vunpack.c.h.b16 %v1715
    %v2924 = vunpack.c.l.b16 %v1716
    %v2925 = vunpack.c.h.b16 %v1716
    %v2926 = vunpack.c.l.b16 %v1717
    %v2927 = vunpack.c.h.b16 %v1717
    %v2928 = vunpack.c.l.b16 %v1718
    %v2929 = vunpack.c.h.b16 %v1718
    %v2930 = vunpack.c.l.b16 %v1719
    %v2931 = vunpack.c.h.b16 %v1719
    %v2932 = vunpack.c.l.b16 %v1720
    %v2933 = vunpack.c.h.b16 %v1720
    %v2934 = vunpack.c.l.b16 %v1721
    %v2935 = vunpack.c.h.b16 %v1721
    %v2936 = vunpack.c.l.b16 %v1722
    %v2937 = vunpack.c.h.b16 %v1722
    %v2938 = vunpack.c.l.b16 %v1723
    %v2939 = vunpack.c.h.b16 %v1723
    %v2940 = vunpack.c.l.b16 %v1724
    %v2941 = vunpack.c.h.b16 %v1724
    %v2942 = vunpack.c.l.b16 %v1725
    %v2943 = vunpack.c.h.b16 %v1725
    %v2944 = vunpack.c.l.b16 %v1726
    %v2945 = vunpack.c.h.b16 %v1726
    %v2946 = vunpack.c.l.b16 %v1727
    %v2947 = vunpack.c.h.b16 %v1727
    %v2948 = vunpack.c.l.b16 %v1728
    %v2949 = vunpack.c.h.b16 %v1728
    %v2950 = vunpack.c.l.b16 %v1729
    %v2951 = vunpack.c.h.b16 %v1729
    %v2952 = vunpack.c.l.b16 %v1730
    %v2953 = vunpack.c.h.b16 %v1730
    %v2954 = vunpack.c.l.b16 %v1731
    %v2955 = vunpack.c.h.b16 %v1731
    %v2956 = vunpack.c.l.b16 %v1732
    %v2957 = vunpack.c.h.b16 %v1732
    %v2958 = vunpack.c.l.b16 %v1733
    %v2959 = vunpack.c.h.b16 %v1733
    %v2960 = vunpack.c.l.b16 %v1734
    %v2961 = vunpack.c.h.b16 %v1734
    %v2962 = vunpack.c.l.b16 %v1735
    %v2963 = vunpack.c.h.b16 %v1735
    %v2964 = vunpack.c.l.b16 %v1736
    %v2965 = vunpack.c.h.b16 %v1736
    %v2966 = vunpack.c.l.b16 %v1737
    %v2967 = vunpack.c.h.b16 %v1737
    %v2968 = vunpack.c.l.b16 %v1738
    %v2969 = vunpack.c.h.b16 %v1738
    %v2970 = vunpack.c.l.b16 %v1739
    %v2971 = vunpack.c.h.b16 %v1739
    %v2972 = vunpack.c.l.b16 %v1740
    %v2973 = vunpack.c.h.b16 %v1740
    %v2974 = vunpack.c.l.b16 %v1741
    %v2975 = vunpack.c.h.b16 %v1741
    %v2976 = vunpack.c.l.b16 %v1742
    %v2977 = vunpack.c.h.b16 %v1742
    %v2978 = vunpack.c.l.b16 %v1743
    %v2979 = vunpack.c.h.b16 %v1743
    %v2980 = vunpack.c.l.b16 %v1744
    %v2981 = vunpack.c.h.b16 %v1744
    %v2982 = vunpack.c.l.b16 %v1745
    %v2983 = vunpack.c.h.b16 %v1745
    %v2984 = vunpack.c.l.b16 %v1746
    %v2985 = vunpack.c.h.b16 %v1746
    %v2986 = vunpack.c.l.b16 %v1747
    %v2987 = vunpack.c.h.b16 %v1747
    %v2988 = vunpack.c.l.b16 %v1748
    %v2989 = vunpack.c.h.b16 %v1748
    %v2990 = vunpack.c.l.b16 %v1749
    %v2991 = vunpack.c.h.b16 %v1749
    %v2992 = vunpack.c.l.b16 %v1750
    %v2993 = vunpack.c.h.b16 %v1750
    %v2994 = vunpack.c.l.b16 %v1751
    %v2995 = vunpack.c.h.b16 %v1751
    %v2996 = vunpack.c.l.b16 %v1752
    %v2997 = vunpack.c.h.b16 %v1752
    %v2998 = vunpack.c.l.b16 %v1753
    %v2999 = vunpack.c.h.b16 %v1753
    %v3000 = vunpack.c.l.b16 %v1754
    %v3001 = vunpack.c.h.b16 %v1754
    %v3002 = vunpack.c.l.b16 %v1755
    %v3003 = vunpack.c.h.b16 %v1755
    %v3004 = vunpack.c.l.b16 %v1756
    %v3005 = vunpack.c.h.b16 %v1756
    %v3006 = vunpack.c.l.b16 %v1757
    %v3007 = vunpack.c.h.b16 %v1757
    %v3008 = vunpack.c.l.b16 %v1758
    %v3009 = vunpack.c.h.b16 %v1758
    %v3010 = vunpack.c.l.b16 %v1759
    %v3011 = vunpack.c.h.b16 %v1759
    %v3012 = vunpack.c.l.b16 %v1760
    %v3013 = vunpack.c.h.b16 %v1760
    %v3014 = vunpack.c.l.b16 %v1761
    %v3015 = vunpack.c.h.b16 %v1761
    %v3016 = vunpack.c.l.b16 %v1762
    %v3017 = vunpack.c.h.b16 %v1762
    %v3018 = vunpack.c.l.b16 %v1763
    %v3019 = vunpack.c.h.b16 %v1763
    %v3020 = vunpack.c.l.b16 %v1764
    %v3021 = vunpack.c.h.b16 %v1764
    %v3022 = vunpack.c.l.b16 %v1765
    %v3023 = vunpack.c.h.b16 %v1765
    %v3024 = vunpack.c.l.b16 %v1766
    %v3025 = vunpack.c.h.b16 %v1766
    %v3026 = vunpack.c.l.b16 %v1767
    %v3027 = vunpack.c.h.b16 %v1767
    %v3028 = vunpack.c.l.b16 %v1768
    %v3029 = vunpack.c.h.b16 %v1768
    %v3030 = vunpack.c.l.b16 %v1769
    %v3031 = vunpack.c.h.b16 %v1769
    %v3032 = vunpack.c.l.b16 %v1770
    %v3033 = vunpack.c.h.b16 %v1770
    %v3034 = vunpack.c.l.b16 %v1771
    %v3035 = vunpack.c.h.b16 %v1771
    %v3036 = vunpack.c.l.b16 %v1772
    %v3037 = vunpack.c.h.b16 %v1772
    %v3038 = vunpack.c.l.b16 %v1773
    %v3039 = vunpack.c.h.b16 %v1773
    %v3040 = vunpack.c.l.b16 %v1774
    %v3041 = vunpack.c.h.b16 %v1774
    %v3042 = vunpack.c.l.b16 %v1775
    %v3043 = vunpack.c.h.b16 %v1775
    %v3044 = vunpack.c.l.b16 %v1776
    %v3045 = vunpack.c.h.b16 %v1776
    %v3046 = vunpack.c.l.b16 %v1777
    %v3047 = vunpack.c.h.b16 %v1777
    %v3048 = vunpack.c.l.b16 %v1778
    %v3049 = vunpack.c.h.b16 %v1778
    %v3050 = vunpack.c.l.b16 %v1779
    %v3051 = vunpack.c.h.b16 %v1779
    %v3052 = vunpack.c.l.b16 %v1780
    %v3053 = vunpack.c.h.b16 %v1780
    %v3054 = vunpack.c.l.b16 %v1781
    %v3055 = vunpack.c.h.b16 %v1781
    %v3056 = vunpack.c.l.b16 %v1782
    %v3057 = vunpack.c.h.b16 %v1782
    %v3058 = vunpack.c.l.b16 %v1783
    %v3059 = vunpack.c.h.b16 %v1783
    %v3060 = vunpack.c.l.b16 %v1784
    %v3061 = vunpack.c.h.b16 %v1784
    %v3062 = vunpack.c.l.b16 %v1785
    %v3063 = vunpack.c.h.b16 %v1785
    %v3064 = vunpack.c.l.b16 %v1786
    %v3065 = vunpack.c.h.b16 %v1786
    %v3066 = vunpack.c.l.b16 %v1787
    %v3067 = vunpack.c.h.b16 %v1787
    %v3068 = vunpack.c.l.b16 %v1788
    %v3069 = vunpack.c.h.b16 %v1788
    %v3070 = vunpack.c.l.b16 %v1789
    %v3071 = vunpack.c.h.b16 %v1789
    %v3072 = vunpack.c.l.b16 %v1790
    %v3073 = vunpack.c.h.b16 %v1790
    %v3074 = vunpack.c.l.b16 %v1791
    %v3075 = vunpack.c.h.b16 %v1791
    %v3076 = vunpack.c.l.b16 %v1792
    %v3077 = vunpack.c.h.b16 %v1792
    %v3078 = vunpack.c.l.b16 %v1793
    %v3079 = vunpack.c.h.b16 %v1793
    %v3080 = vunpack.c.l.b16 %v1794
    %v3081 = vunpack.c.h.b16 %v1794
    %v3082 = vunpack.c.l.b16 %v1795
    %v3083 = vunpack.c.h.b16 %v1795
    %v3084 = vunpack.c.l.b16 %v1796
    %v3085 = vunpack.c.h.b16 %v1796
    %v3086 = vunpack.c.l.b16 %v1797
    %v3087 = vunpack.c.h.b16 %v1797
    %v3088 = vunpack.c.l.b16 %v1798
    %v3089 = vunpack.c.h.b16 %v1798
    %v3090 = vunpack.c.l.b16 %v1799
    %v3091 = vunpack.c.h.b16 %v1799
    %v3092 = vunpack.c.l.b16 %v1800
    %v3093 = vunpack.c.h.b16 %v1800
    %v3094 = vunpack.c.l.b16 %v1801
    %v3095 = vunpack.c.h.b16 %v1801
    %v3096 = vunpack.c.l.b16 %v1802
    %v3097 = vunpack.c.h.b16 %v1802
    %v3098 = vunpack.c.l.b16 %v1803
    %v3099 = vunpack.c.h.b16 %v1803
    %v3100 = vunpack.c.l.b16 %v1804
    %v3101 = vunpack.c.h.b16 %v1804
    %v3102 = vunpack.c.l.b16 %v1805
    %v3103 = vunpack.c.h.b16 %v1805
    %v3104 = vunpack.c.l.b16 %v1806
    %v3105 = vunpack.c.h.b16 %v1806
    %v3106 = vunpack.c.l.b16 %v1807
    %v3107 = vunpack.c.h.b16 %v1807
    %v3108 = vunpack.c.l.b16 %v1808
    %v3109 = vunpack.c.h.b16 %v1808
    %v3110 = vunpack.c.l.b16 %v1809
    %v3111 = vunpack.c.h.b16 %v1809
    %v3112 = vunpack.c.l.b16 %v1810
    %v3113 = vunpack.c.h.b16 %v1810
    %v3114 = vunpack.c.l.b16 %v1811
    %v3115 = vunpack.c.h.b16 %v1811
    %v3116 = vunpack.c.l.b16 %v1812
    %v3117 = vunpack.c.h.b16 %v1812
    %v3118 = vunpack.c.l.b16 %v1813
    %v3119 = vunpack.c.h.b16 %v1813
    %v3120 = vunpack.c.l.b16 %v1814
    %v3121 = vunpack.c.h.b16 %v1814
    %v3122 = vunpack.c.l.b16 %v1815
    %v3123 = vunpack.c.h.b16 %v1815
    %v3124 = vunpack.c.l.b16 %v1816
    %v3125 = vunpack.c.h.b16 %v1816
    %v3126 = vunpack.c.l.b16 %v1817
    %v3127 = vunpack.c.h.b16 %v1817
    %v3128 = vunpack.c.l.b16 %v1818
    %v3129 = vunpack.c.h.b16 %v1818
    %v3130 = vunpack.c.l.b16 %v1819
    %v3131 = vunpack.c.h.b16 %v1819
    %v3132 = vunpack.c.l.b16 %v1820
    %v3133 = vunpack.c.h.b16 %v1820
    %v3134 = vunpack.c.l.b16 %v1821
    %v3135 = vunpack.c.h.b16 %v1821
    %v3136 = vunpack.c.l.b16 %v1822
    %v3137 = vunpack.c.h.b16 %v1822
    %v3138 = vunpack.c.l.b16 %v1823
    %v3139 = vunpack.c.h.b16 %v1823
    %v3140 = vunpack.c.l.b16 %v1824
    %v3141 = vunpack.c.h.b16 %v1824
    %v3142 = vunpack.c.l.b16 %v1825
    %v3143 = vunpack.c.h.b16 %v1825
    %v3144 = vunpack.c.l.b16 %v1826
    %v3145 = vunpack.c.h.b16 %v1826
    %v3146 = vunpack.c.l.b16 %v1827
    %v3147 = vunpack.c.h.b16 %v1827
    %v3148 = vunpack.c.l.b16 %v1828
    %v3149 = vunpack.c.h.b16 %v1828
    %v3150 = vunpack.c.l.b16 %v1829
    %v3151 = vunpack.c.h.b16 %v1829
    %v3152 = vunpack.c.l.b16 %v1830
    %v3153 = vunpack.c.h.b16 %v1830
    %v3154 = vunpack.c.l.b16 %v1831
    %v3155 = vunpack.c.h.b16 %v1831
    %v3156 = vunpack.c.l.b16 %v1832
    %v3157 = vunpack.c.h.b16 %v1832
    %v3158 = vunpack.c.l.b16 %v1833
    %v3159 = vunpack.c.h.b16 %v1833
    %v3160 = vunpack.c.l.b16 %v1834
    %v3161 = vunpack.c.h.b16 %v1834
    %v3162 = vunpack.c.l.b16 %v1835
    %v3163 = vunpack.c.h.b16 %v1835
    %v3164 = vunpack.c.l.b16 %v1836
    %v3165 = vunpack.c.h.b16 %v1836
    %v3166 = vunpack.c.l.b16 %v1837
    %v3167 = vunpack.c.h.b16 %v1837
    %v3168 = vunpack.c.l.b16 %v1838
    %v3169 = vunpack.c.h.b16 %v1838
    %v3170 = vunpack.c.l.b16 %v1839
    %v3171 = vunpack.c.h.b16 %v1839
    %v3172 = vunpack.c.l.b16 %v1840
    %v3173 = vunpack.c.h.b16 %v1840
    %v3174 = vunpack.c.l.b16 %v1841
    %v3175 = vunpack.c.h.b16 %v1841
    %v3176 = vunpack.c.l.b16 %v1842
    %v3177 = vunpack.c.h.b16 %v1842
    %v3178 = vunpack.c.l.b16 %v1843
    %v3179 = vunpack.c.h.b16 %v1843
    %v3180 = vunpack.c.l.b16 %v1844
    %v3181 = vunpack.c.h.b16 %v1844
    %v3182 = vunpack.c.l.b16 %v1845
    %v3183 = vunpack.c.h.b16 %v1845
    %v3184 = vunpack.c.l.b16 %v1846
    %v3185 = vunpack.c.h.b16 %v1846
    %v3186 = vunpack.c.l.b16 %v1847
    %v3187 = vunpack.c.h.b16 %v1847
    %v3188 = vunpack.c.l.b16 %v1848
    %v3189 = vunpack.c.h.b16 %v1848
    %v3190 = vunpack.c.l.b16 %v1849
    %v3191 = vunpack.c.h.b16 %v1849
    %v3192 = vunpack.c.l.b16 %v1850
    %v3193 = vunpack.c.h.b16 %v1850
    %v3194 = vunpack.c.l.b16 %v1851
    %v3195 = vunpack.c.h.b16 %v1851
    %v3196 = vunpack.c.l.b16 %v1852
    %v3197 = vunpack.c.h.b16 %v1852
    %v3198 = vunpack.c.l.b16 %v1853
    %v3199 = vunpack.c.h.b16 %v1853
    %v3200 = vunpack.c.l.b16 %v1854
    %v3201 = vunpack.c.h.b16 %v1854
    %v3202 = vunpack.c.l.b16 %v1855
    %v3203 = vunpack.c.h.b16 %v1855
    %v3204 = vunpack.c.l.b16 %v1856
    %v3205 = vunpack.c.h.b16 %v1856
    %v3206 = vunpack.c.l.b16 %v1857
    %v3207 = vunpack.c.h.b16 %v1857
    %v3208 = vunpack.c.l.b16 %v1858
    %v3209 = vunpack.c.h.b16 %v1858
    %v3210 = vunpack.c.l.b16 %v1859
    %v3211 = vunpack.c.h.b16 %v1859
    %v3212 = vunpack.c.l.b16 %v1860
    %v3213 = vunpack.c.h.b16 %v1860
    %v3214 = vunpack.c.l.b16 %v1861
    %v3215 = vunpack.c.h.b16 %v1861
    %v3216 = vunpack.c.l.b16 %v1862
    %v3217 = vunpack.c.h.b16 %v1862
    %v3218 = vunpack.c.l.b16 %v1863
    %v3219 = vunpack.c.h.b16 %v1863
    %v3220 = vunpack.c.l.b16 %v1864
    %v3221 = vunpack.c.h.b16 %v1864
    %v3222 = vunpack.c.l.b16 %v1865
    %v3223 = vunpack.c.h.b16 %v1865
    %v3224 = vunpack.c.l.b16 %v1866
    %v3225 = vunpack.c.h.b16 %v1866
    %v3226 = vunpack.c.l.b16 %v1867
    %v3227 = vunpack.c.h.b16 %v1867
    %v3228 = vunpack.c.l.b16 %v1868
    %v3229 = vunpack.c.h.b16 %v1868
    %v3230 = vunpack.c.l.b16 %v1869
    %v3231 = vunpack.c.h.b16 %v1869
    %v3232 = vunpack.c.l.b16 %v1870
    %v3233 = vunpack.c.h.b16 %v1870
    %v3234 = vunpack.c.l.b16 %v1871
    %v3235 = vunpack.c.h.b16 %v1871
    %v3236 = vunpack.c.l.b16 %v1872
    %v3237 = vunpack.c.h.b16 %v1872
    %v3238 = vunpack.c.l.b16 %v1873
    %v3239 = vunpack.c.h.b16 %v1873
    %v3240 = vunpack.c.l.b16 %v1874
    %v3241 = vunpack.c.h.b16 %v1874
    %v3242 = vunpack.c.l.b16 %v1875
    %v3243 = vunpack.c.h.b16 %v1875
    %v3244 = vunpack.c.l.b16 %v1876
    %v3245 = vunpack.c.h.b16 %v1876
    %v3246 = vunpack.c.l.b16 %v1877
    %v3247 = vunpack.c.h.b16 %v1877
    %v3248 = vunpack.c.l.b16 %v1878
    %v3249 = vunpack.c.h.b16 %v1878
    %v3250 = vunpack.c.l.b16 %v1879
    %v3251 = vunpack.c.h.b16 %v1879
    %v3252 = vunpack.c.l.b16 %v1880
    %v3253 = vunpack.c.h.b16 %v1880
    %v3254 = vunpack.c.l.b16 %v1881
    %v3255 = vunpack.c.h.b16 %v1881
    %v3256 = vunpack.c.l.b16 %v1882
    %v3257 = vunpack.c.h.b16 %v1882
    %v3258 = vunpack.c.l.b16 %v1883
    %v3259 = vunpack.c.h.b16 %v1883
    %v3260 = vunpack.c.l.b16 %v1884
    %v3261 = vunpack.c.h.b16 %v1884
    %v3262 = vunpack.c.l.b16 %v1885
    %v3263 = vunpack.c.h.b16 %v1885
    %v3264 = vunpack.c.l.b16 %v1886
    %v3265 = vunpack.c.h.b16 %v1886
    %v3266 = vunpack.c.l.b16 %v1887
    %v3267 = vunpack.c.h.b16 %v1887
    %v3268 = vunpack.c.l.b16 %v1888
    %v3269 = vunpack.c.h.b16 %v1888
    %v3270 = vunpack.c.l.b16 %v1889
    %v3271 = vunpack.c.h.b16 %v1889
    %v3272 = vunpack.c.l.b16 %v1890
    %v3273 = vunpack.c.h.b16 %v1890
    %v3274 = vunpack.c.l.b16 %v1891
    %v3275 = vunpack.c.h.b16 %v1891
    %v3276 = vunpack.c.l.b16 %v1892
    %v3277 = vunpack.c.h.b16 %v1892
    %v3278 = vunpack.c.l.b16 %v1893
    %v3279 = vunpack.c.h.b16 %v1893
    %v3280 = vunpack.c.l.b16 %v1894
    %v3281 = vunpack.c.h.b16 %v1894
    %v3282 = vunpack.c.l.b16 %v1895
    %v3283 = vunpack.c.h.b16 %v1895
    %v3284 = vunpack.c.l.b16 %v1896
    %v3285 = vunpack.c.h.b16 %v1896
    %v3286 = vunpack.c.l.b16 %v1897
    %v3287 = vunpack.c.h.b16 %v1897
    %v3288 = vunpack.c.l.b16 %v1898
    %v3289 = vunpack.c.h.b16 %v1898
    %v3290 = vunpack.c.l.b16 %v1899
    %v3291 = vunpack.c.h.b16 %v1899
    %v3292 = vunpack.c.l.b16 %v1900
    %v3293 = vunpack.c.h.b16 %v1900
    %v3294 = vunpack.c.l.b16 %v1901
    %v3295 = vunpack.c.h.b16 %v1901
    %v3296 = vunpack.c.l.b16 %v1902
    %v3297 = vunpack.c.h.b16 %v1902
    %v3298 = vunpack.c.l.b16 %v1903
    %v3299 = vunpack.c.h.b16 %v1903
    %v3300 = vunpack.c.l.b16 %v1904
    %v3301 = vunpack.c.h.b16 %v1904
    %v3302 = vunpack.c.l.b16 %v1905
    %v3303 = vunpack.c.h.b16 %v1905
    %v3304 = vunpack.c.l.b16 %v1906
    %v3305 = vunpack.c.h.b16 %v1906
    %v3306 = vunpack.c.l.b16 %v1907
    %v3307 = vunpack.c.h.b16 %v1907
    %v3308 = vunpack.c.l.b16 %v1908
    %v3309 = vunpack.c.h.b16 %v1908
    %v3310 = vunpack.c.l.b16 %v1909
    %v3311 = vunpack.c.h.b16 %v1909
    %v3312 = vunpack.c.l.b16 %v1910
    %v3313 = vunpack.c.h.b16 %v1910
    %v3314 = vunpack.c.l.b16 %v1911
    %v3315 = vunpack.c.h.b16 %v1911
    %v3316 = vunpack.c.l.b16 %v1912
    %v3317 = vunpack.c.h.b16 %v1912
    %v3318 = vunpack.c.l.b16 %v1913
    %v3319 = vunpack.c.h.b16 %v1913
    %v3320 = vunpack.c.l.b16 %v1914
    %v3321 = vunpack.c.h.b16 %v1914
    %v3322 = vunpack.c.l.b16 %v1915
    %v3323 = vunpack.c.h.b16 %v1915
    %v3324 = vunpack.c.l.b16 %v1916
    %v3325 = vunpack.c.h.b16 %v1916
    %v3326 = vunpack.c.l.b16 %v1917
    %v3327 = vunpack.c.h.b16 %v1917
    %v3328 = vunpack.c.l.b16 %v1918
    %v3329 = vunpack.c.h.b16 %v1918
    %v3330 = vunpack.c.l.b16 %v1919
    %v3331 = vunpack.c.h.b16 %v1919
    %v3332 = vunpack.c.l.b16 %v1920
    %v3333 = vunpack.c.h.b16 %v1920
    %v3334 = vunpack.c.l.b16 %v1921
    %v3335 = vunpack.c.h.b16 %v1921
    %v3336 = vunpack.c.l.b16 %v1922
    %v3337 = vunpack.c.h.b16 %v1922
    %v3338 = vunpack.c.l.b16 %v1923
    %v3339 = vunpack.c.h.b16 %v1923
    %v3340 = vunpack.c.l.b16 %v1924
    %v3341 = vunpack.c.h.b16 %v1924
    %v3342 = vunpack.c.l.b16 %v1925
    %v3343 = vunpack.c.h.b16 %v1925
    %v3344 = vunpack.c.l.b16 %v1926
    %v3345 = vunpack.c.h.b16 %v1926
    %v3346 = vunpack.c.l.b16 %v1927
    %v3347 = vunpack.c.h.b16 %v1927
    %v3348 = vunpack.c.l.b16 %v1928
    %v3349 = vunpack.c.h.b16 %v1928
    %v3350 = vunpack.c.l.b16 %v1929
    %v3351 = vunpack.c.h.b16 %v1929
    %v3352 = vunpack.c.l.b16 %v1930
    %v3353 = vunpack.c.h.b16 %v1930
    %v3354 = vunpack.c.l.b16 %v1931
    %v3355 = vunpack.c.h.b16 %v1931
    %v3356 = vunpack.c.l.b16 %v1932
    %v3357 = vunpack.c.h.b16 %v1932
    %v3358 = vunpack.c.l.b16 %v1933
    %v3359 = vunpack.c.h.b16 %v1933
    %v3360 = vunpack.c.l.b16 %v1934
    %v3361 = vunpack.c.h.b16 %v1934
    %v3362 = vunpack.c.l.b16 %v1935
    %v3363 = vunpack.c.h.b16 %v1935
    %v3364 = vunpack.c.l.b16 %v1936
    %v3365 = vunpack.c.h.b16 %v1936
    %v3366 = vunpack.c.l.b16 %v1937
    %v3367 = vunpack.c.h.b16 %v1937
    %v3368 = vunpack.c.l.b16 %v1938
    %v3369 = vunpack.c.h.b16 %v1938
    %v3370 = vunpack.c.l.b16 %v1939
    %v3371 = vunpack.c.h.b16 %v1939
    %v3372 = vunpack.c.l.b16 %v1940
    %v3373 = vunpack.c.h.b16 %v1940
    %v3374 = vunpack.c.l.b16 %v1941
    %v3375 = vunpack.c.h.b16 %v1941
    %v3376 = vunpack.c.l.b16 %v1942
    %v3377 = vunpack.c.h.b16 %v1942
    %v3378 = vunpack.c.l.b16 %v1943
    %v3379 = vunpack.c.h.b16 %v1943
    %v3380 = vunpack.c.l.b16 %v1944
    %v3381 = vunpack.c.h.b16 %v1944
    %v3382 = vunpack.c.l.b16 %v1945
    %v3383 = vunpack.c.h.b16 %v1945
    %v3384 = vunpack.c.l.b16 %v1946
    %v3385 = vunpack.c.h.b16 %v1946
    %v3386 = vunpack.c.l.b16 %v1947
    %v3387 = vunpack.c.h.b16 %v1947
    %v3388 = vunpack.c.l.b16 %v1948
    %v3389 = vunpack.c.h.b16 %v1948
    %v3390 = vunpack.c.l.b16 %v1949
    %v3391 = vunpack.c.h.b16 %v1949
    %v3392 = vunpack.c.l.b16 %v1950
    %v3393 = vunpack.c.h.b16 %v1950
    %v3394 = vunpack.c.l.b16 %v1951
    %v3395 = vunpack.c.h.b16 %v1951
    %v3396 = vunpack.c.l.b16 %v1952
    %v3397 = vunpack.c.h.b16 %v1952
    %v3398 = vunpack.c.l.b16 %v1953
    %v3399 = vunpack.c.h.b16 %v1953
    %v3400 = vunpack.c.l.b16 %v1954
    %v3401 = vunpack.c.h.b16 %v1954
    %v3402 = vunpack.c.l.b16 %v1955
    %v3403 = vunpack.c.h.b16 %v1955
    %v3404 = vunpack.c.l.b16 %v1956
    %v3405 = vunpack.c.h.b16 %v1956
    %v3406 = vunpack.c.l.b16 %v1957
    %v3407 = vunpack.c.h.b16 %v1957
    %v3408 = vunpack.c.l.b16 %v1958
    %v3409 = vunpack.c.h.b16 %v1958
    %v3410 = vunpack.c.l.b16 %v1959
    %v3411 = vunpack.c.h.b16 %v1959
    %v3412 = vunpack.c.l.b16 %v1960
    %v3413 = vunpack.c.h.b16 %v1960
    %v3414 = vunpack.c.l.b16 %v1961
    %v3415 = vunpack.c.h.b16 %v1961
    %v3416 = vunpack.c.l.b16 %v1962
    %v3417 = vunpack.c.h.b16 %v1962
    %v3418 = vunpack.c.l.b16 %v1963
    %v3419 = vunpack.c.h.b16 %v1963
    %v3420 = vunpack.c.l.b16 %v1964
    %v3421 = vunpack.c.h.b16 %v1964
    %v3422 = vunpack.c.l.b16 %v1965
    %v3423 = vunpack.c.h.b16 %v1965
    %v3424 = vunpack.c.l.b16 %v1966
    %v3425 = vunpack.c.h.b16 %v1966
    %v3426 = vunpack.c.l.b16 %v1967
    %v3427 = vunpack.c.h.b16 %v1967
    %v3428 = vunpack.c.l.b16 %v1968
    %v3429 = vunpack.c.h.b16 %v1968
    %v3430 = vunpack.c.l.b16 %v1969
    %v3431 = vunpack.c.h.b16 %v1969
    %v3432 = vunpack.c.l.b16 %v1970
    %v3433 = vunpack.c.h.b16 %v1970
    %v3434 = vunpack.c.l.b16 %v1971
    %v3435 = vunpack.c.h.b16 %v1971
    %v3436 = vunpack.c.l.b16 %v1972
    %v3437 = vunpack.c.h.b16 %v1972
    %v3438 = vunpack.c.l.b16 %v1973
    %v3439 = vunpack.c.h.b16 %v1973
    %v3440 = vunpack.c.l.b16 %v1974
    %v3441 = vunpack.c.h.b16 %v1974
    %v3442 = vunpack.c.l.b16 %v1975
    %v3443 = vunpack.c.h.b16 %v1975
    %v3444 = vunpack.c.l.b16 %v1976
    %v3445 = vunpack.c.h.b16 %v1976
    %v3446 = vunpack.c.l.b16 %v1977
    %v3447 = vunpack.c.h.b16 %v1977
    %v3448 = vunpack.c.l.b16 %v1978
    %v3449 = vunpack.c.h.b16 %v1978
    %v3450 = vunpack.c.l.b16 %v1979
    %v3451 = vunpack.c.h.b16 %v1979
    %v3452 = vunpack.c.l.b16 %v1980
    %v3453 = vunpack.c.h.b16 %v1980
    %v3454 = vunpack.c.l.b16 %v1981
    %v3455 = vunpack.c.h.b16 %v1981
    %v3456 = vunpack.c.l.b16 %v1982
    %v3457 = vunpack.c.h.b16 %v1982
    %v3458 = vunpack.c.l.b16 %v1983
    %v3459 = vunpack.c.h.b16 %v1983
    %v3460 = vunpack.c.l.b16 %v1984
    %v3461 = vunpack.c.h.b16 %v1984
    %v3462 = vunpack.c.l.b16 %v1985
    %v3463 = vunpack.c.h.b16 %v1985
    %v3464 = vunpack.c.l.b16 %v1986
    %v3465 = vunpack.c.h.b16 %v1986
    %v3466 = vunpack.c.l.b16 %v1987
    %v3467 = vunpack.c.h.b16 %v1987
    %v3468 = vunpack.c.l.b16 %v1988
    %v3469 = vunpack.c.h.b16 %v1988
    %v3470 = vunpack.c.l.b16 %v1989
    %v3471 = vunpack.c.h.b16 %v1989
    %v3472 = vunpack.c.l.b16 %v1990
    %v3473 = vunpack.c.h.b16 %v1990
    %v3474 = vunpack.c.l.b16 %v1991
    %v3475 = vunpack.c.h.b16 %v1991
    %v3476 = vunpack.c.l.b16 %v1992
    %v3477 = vunpack.c.h.b16 %v1992
    %v3478 = vunpack.c.l.b16 %v1993
    %v3479 = vunpack.c.h.b16 %v1993
    %v3480 = vunpack.c.l.b16 %v1994
    %v3481 = vunpack.c.h.b16 %v1994
    %v3482 = vunpack.c.l.b16 %v1995
    %v3483 = vunpack.c.h.b16 %v1995
    %v3484 = vunpack.c.l.b16 %v1996
    %v3485 = vunpack.c.h.b16 %v1996
    %v3486 = vunpack.c.l.b16 %v1997
    %v3487 = vunpack.c.h.b16 %v1997
    %v3488 = vunpack.c.l.b16 %v1998
    %v3489 = vunpack.c.h.b16 %v1998
    %v3490 = vunpack.c.l.b16 %v1999
    %v3491 = vunpack.c.h.b16 %v1999
    %v3492 = vunpack.c.l.b16 %v2000
    %v3493 = vunpack.c.h.b16 %v2000
    %v3494 = vunpack.c.l.b16 %v2001
    %v3495 = vunpack.c.h.b16 %v2001
    %v3496 = vunpack.c.l.b16 %v2002
    %v3497 = vunpack.c.h.b16 %v2002
    %v3498 = vunpack.c.l.b16 %v2003
    %v3499 = vunpack.c.h.b16 %v2003
    %v3500 = vunpack.c.l.b16 %v2004
    %v3501 = vunpack.c.h.b16 %v2004
    %v3502 = vunpack.c.l.b16 %v2005
    %v3503 = vunpack.c.h.b16 %v2005
    %v3504 = vunpack.c.l.b16 %v2006
    %v3505 = vunpack.c.h.b16 %v2006
    %v3506 = vunpack.c.l.b16 %v2007
    %v3507 = vunpack.c.h.b16 %v2007
    %v3508 = vunpack.c.l.b16 %v2008
    %v3509 = vunpack.c.h.b16 %v2008
    %v3510 = vunpack.c.l.b16 %v2009
    %v3511 = vunpack.c.h.b16 %v2009
    %v3512 = vunpack.c.l.b16 %v2010
    %v3513 = vunpack.c.h.b16 %v2010
    %v3514 = vunpack.c.l.b16 %v2011
    %v3515 = vunpack.c.h.b16 %v2011
    %v3516 = vunpack.c.l.b16 %v2012
    %v3517 = vunpack.c.h.b16 %v2012
    %v3518 = vunpack.c.l.b16 %v2013
    %v3519 = vunpack.c.h.b16 %v2013
    %v3520 = vunpack.c.l.b16 %v2014
    %v3521 = vunpack.c.h.b16 %v2014
    %v3522 = vunpack.c.l.b16 %v2015
    %v3523 = vunpack.c.h.b16 %v2015
    %v3524 = vunpack.c.l.b16 %v2016
    %v3525 = vunpack.c.h.b16 %v2016
    %v3526 = vunpack.c.l.b16 %v2017
    %v3527 = vunpack.c.h.b16 %v2017
    %v3528 = vunpack.c.l.b16 %v2018
    %v3529 = vunpack.c.h.b16 %v2018
    %v3530 = vunpack.c.l.b16 %v2019
    %v3531 = vunpack.c.h.b16 %v2019
    %v3532 = vunpack.c.l.b16 %v2020
    %v3533 = vunpack.c.h.b16 %v2020
    %v3534 = vunpack.c.l.b16 %v2021
    %v3535 = vunpack.c.h.b16 %v2021
    %v3536 = vunpack.c.l.b16 %v2022
    %v3537 = vunpack.c.h.b16 %v2022
    %v3538 = vunpack.c.l.b16 %v2023
    %v3539 = vunpack.c.h.b16 %v2023
    %v3540 = vunpack.c.l.b16 %v2024
    %v3541 = vunpack.c.h.b16 %v2024
    %v3542 = vunpack.c.l.b16 %v2025
    %v3543 = vunpack.c.h.b16 %v2025
    %v3544 = vunpack.c.l.b16 %v2026
    %v3545 = vunpack.c.h.b16 %v2026
    %v3546 = vunpack.c.l.b16 %v2027
    %v3547 = vunpack.c.h.b16 %v2027
    %v3548 = vunpack.c.l.b16 %v2028
    %v3549 = vunpack.c.h.b16 %v2028
    %v3550 = vunpack.c.l.b16 %v2029
    %v3551 = vunpack.c.h.b16 %v2029
    %v3552 = vunpack.c.l.b16 %v2030
    %v3553 = vunpack.c.h.b16 %v2030
    %v3554 = vunpack.c.l.b16 %v2031
    %v3555 = vunpack.c.h.b16 %v2031
    %v3556 = vunpack.c.l.b16 %v2032
    %v3557 = vunpack.c.h.b16 %v2032
    %v3558 = vunpack.c.l.b16 %v2033
    %v3559 = vunpack.c.h.b16 %v2033
    %v3560 = vunpack.c.l.b16 %v2034
    %v3561 = vunpack.c.h.b16 %v2034
    %v3562 = vunpack.c.l.b16 %v2035
    %v3563 = vunpack.c.h.b16 %v2035
    %v3564 = vunpack.c.l.b16 %v2036
    %v3565 = vunpack.c.h.b16 %v2036
    %v3566 = vunpack.c.l.b16 %v2037
    %v3567 = vunpack.c.h.b16 %v2037
    %v3568 = vunpack.c.l.b16 %v2038
    %v3569 = vunpack.c.h.b16 %v2038
    %v3570 = vunpack.c.l.b16 %v2039
    %v3571 = vunpack.c.h.b16 %v2039
    %v3572 = vunpack.c.l.b16 %v2040
    %v3573 = vunpack.c.h.b16 %v2040
    %v3574 = vunpack.c.l.b16 %v2041
    %v3575 = vunpack.c.h.b16 %v2041
    %v3576 = vunpack.c.l.b16 %v2042
    %v3577 = vunpack.c.h.b16 %v2042
    %v3578 = vunpack.c.l.b16 %v2043
    %v3579 = vunpack.c.h.b16 %v2043
    %v3580 = vunpack.c.l.b16 %v2044
    %v3581 = vunpack.c.h.b16 %v2044
    %v3582 = vunpack.c.l.b16 %v2045
    %v3583 = vunpack.c.h.b16 %v2045
    %v3584 = vunpack.c.l.b16 %v2046
    %v3585 = vunpack.c.h.b16 %v2046
    %v3586 = vunpack.c.l.b16 %v2047
    %v3587 = vunpack.c.h.b16 %v2047
    %v3588 = vunpack.c.l.b16 %v2048
    %v3589 = vunpack.c.h.b16 %v2048
    %v3590 = vunpack.c.l.b16 %v2049
    %v3591 = vunpack.c.h.b16 %v2049
    %v3592 = vunpack.c.l.b16 %v2050
    %v3593 = vunpack.c.h.b16 %v2050
    %v3594 = vunpack.c.l.b16 %v2051
    %v3595 = vunpack.c.h.b16 %v2051
    %v3596 = vunpack.c.l.b16 %v2052
    %v3597 = vunpack.c.h.b16 %v2052
    %v3598 = vunpack.c.l.b16 %v2053
    %v3599 = vunpack.c.h.b16 %v2053
    %v3600 = vunpack.c.l.b16 %v2054
    %v3601 = vunpack.c.h.b16 %v2054
    %v3602 = vunpack.c.l.b16 %v2055
    %v3603 = vunpack.c.h.b16 %v2055
    %v3604 = vunpack.c.l.b16 %v2056
    %v3605 = vunpack.c.h.b16 %v2056
    %v3606 = vunpack.c.l.b16 %v2057
    %v3607 = vunpack.c.h.b16 %v2057
    %v3608 = vunpack.c.l.b16 %v2058
    %v3609 = vunpack.c.h.b16 %v2058
    %v3610 = vunpack.c.l.b16 %v2059
    %v3611 = vunpack.c.h.b16 %v2059
    %v3612 = vunpack.c.l.b16 %v2060
    %v3613 = vunpack.c.h.b16 %v2060
    %v3614 = vunpack.c.l.b16 %v2061
    %v3615 = vunpack.c.h.b16 %v2061
    %v3616 = vunpack.c.l.b16 %v2062
    %v3617 = vunpack.c.h.b16 %v2062
    %v3618 = vunpack.c.l.b16 %v2063
    %v3619 = vunpack.c.h.b16 %v2063
    %v3620 = vunpack.c.l.b16 %v2064
    %v3621 = vunpack.c.h.b16 %v2064
    %v3622 = vunpack.c.l.b16 %v2065
    %v3623 = vunpack.c.h.b16 %v2065
    %v3624 = vunpack.c.l.b16 %v2066
    %v3625 = vunpack.c.h.b16 %v2066
    %v3626 = vunpack.c.l.b16 %v2067
    %v3627 = vunpack.c.h.b16 %v2067
    %v3628 = vunpack.c.l.b16 %v2068
    %v3629 = vunpack.c.h.b16 %v2068
    %v3630 = vunpack.c.l.b16 %v2069
    %v3631 = vunpack.c.h.b16 %v2069
    %v3632 = vunpack.c.l.b16 %v2070
    %v3633 = vunpack.c.h.b16 %v2070
    %v3634 = vunpack.c.l.b16 %v2071
    %v3635 = vunpack.c.h.b16 %v2071
    %v3636 = vunpack.c.l.b16 %v2072
    %v3637 = vunpack.c.h.b16 %v2072
    %v3638 = vunpack.c.l.b16 %v2073
    %v3639 = vunpack.c.h.b16 %v2073
    %v3640 = vunpack.c.l.b16 %v2074
    %v3641 = vunpack.c.h.b16 %v2074
    %v3642 = vunpack.c.l.b16 %v2075
    %v3643 = vunpack.c.h.b16 %v2075
    %v3644 = vunpack.c.l.b16 %v2076
    %v3645 = vunpack.c.h.b16 %v2076
    %v3646 = vunpack.c.l.b16 %v2077
    %v3647 = vunpack.c.h.b16 %v2077
    %v3648 = vunpack.c.l.b16 %v2078
    %v3649 = vunpack.c.h.b16 %v2078
    %v3650 = vunpack.c.l.b16 %v2079
    %v3651 = vunpack.c.h.b16 %v2079
    %v3652 = vunpack.c.l.b16 %v2080
    %v3653 = vunpack.c.h.b16 %v2080
    %v3654 = vunpack.c.l.b16 %v2081
    %v3655 = vunpack.c.h.b16 %v2081
    %v3656 = vunpack.c.l.b16 %v2082
    %v3657 = vunpack.c.h.b16 %v2082
    %v3658 = vunpack.c.l.b16 %v2083
    %v3659 = vunpack.c.h.b16 %v2083
    %v3660 = vunpack.c.l.b16 %v2084
    %v3661 = vunpack.c.h.b16 %v2084
    %v3662 = vunpack.c.l.b16 %v2085
    %v3663 = vunpack.c.h.b16 %v2085
    %v3664 = vunpack.c.l.b16 %v2086
    %v3665 = vunpack.c.h.b16 %v2086
    %v3666 = vunpack.c.l.b16 %v2087
    %v3667 = vunpack.c.h.b16 %v2087
    %v3668 = vunpack.c.l.b16 %v2088
    %v3669 = vunpack.c.h.b16 %v2088
    %v3670 = vunpack.c.l.b16 %v2089
    %v3671 = vunpack.c.h.b16 %v2089
    %v3672 = vunpack.c.l.b16 %v2090
    %v3673 = vunpack.c.h.b16 %v2090
    %v3674 = vunpack.c.l.b16 %v2091
    %v3675 = vunpack.c.h.b16 %v2091
    %v3676 = vunpack.c.l.b16 %v2092
    %v3677 = vunpack.c.h.b16 %v2092
    %v3678 = vunpack.c.l.b16 %v2093
    %v3679 = vunpack.c.h.b16 %v2093
    %v3680 = vunpack.c.l.b16 %v2094
    %v3681 = vunpack.c.h.b16 %v2094
    %v3682 = vunpack.c.l.b16 %v2095
    %v3683 = vunpack.c.h.b16 %v2095
    %v3684 = vunpack.c.l.b16 %v2096
    %v3685 = vunpack.c.h.b16 %v2096
    %v3686 = vunpack.c.l.b16 %v2097
    %v3687 = vunpack.c.h.b16 %v2097
    %v3688 = vunpack.c.l.b16 %v2098
    %v3689 = vunpack.c.h.b16 %v2098
    %v3690 = vunpack.c.l.b16 %v2099
    %v3691 = vunpack.c.h.b16 %v2099
    %v3692 = vunpack.c.l.b16 %v2100
    %v3693 = vunpack.c.h.b16 %v2100
    %v3694 = vunpack.c.l.b16 %v2101
    %v3695 = vunpack.c.h.b16 %v2101
    %v3696 = vunpack.c.l.b16 %v2102
    %v3697 = vunpack.c.h.b16 %v2102
    %v3698 = vunpack.c.l.b16 %v2103
    %v3699 = vunpack.c.h.b16 %v2103
    %v3700 = vunpack.c.l.b16 %v2104
    %v3701 = vunpack.c.h.b16 %v2104
    %v3702 = vunpack.c.l.b16 %v2105
    %v3703 = vunpack.c.h.b16 %v2105
    %v3704 = vunpack.c.l.b16 %v2106
    %v3705 = vunpack.c.h.b16 %v2106
    %v3706 = vunpack.c.l.b16 %v2107
    %v3707 = vunpack.c.h.b16 %v2107
    %v3708 = vunpack.c.l.b16 %v2108
    %v3709 = vunpack.c.h.b16 %v2108
    %v3710 = vunpack.c.l.b16 %v2109
    %v3711 = vunpack.c.h.b16 %v2109
    %v3712 = vunpack.c.l.b16 %v2110
    %v3713 = vunpack.c.h.b16 %v2110
    %v3714 = vunpack.c.l.b16 %v2111
    %v3715 = vunpack.c.h.b16 %v2111
    %v3716 = vunpack.c.l.b16 %v2112
    %v3717 = vunpack.c.h.b16 %v2112
    %v3718 = vunpack.c.l.b16 %v2113
    %v3719 = vunpack.c.h.b16 %v2113
    %v3720 = vunpack.c.l.b16 %v2114
    %v3721 = vunpack.c.h.b16 %v2114
    %v3722 = vunpack.c.l.b16 %v2115
    %v3723 = vunpack.c.h.b16 %v2115
    %v3724 = vunpack.c.l.b16 %v2116
    %v3725 = vunpack.c.h.b16 %v2116
    %v3726 = vunpack.c.l.b16 %v2117
    %v3727 = vunpack.c.h.b16 %v2117
    %v3728 = vunpack.c.l.b16 %v2118
    %v3729 = vunpack.c.h.b16 %v2118
    %v3730 = vunpack.c.l.b16 %v2119
    %v3731 = vunpack.c.h.b16 %v2119
    %v3732 = vunpack.c.l.b16 %v2120
    %v3733 = vunpack.c.h.b16 %v2120
    %v3734 = vunpack.c.l.b16 %v2121
    %v3735 = vunpack.c.h.b16 %v2121
    %v3736 = vunpack.c.l.b16 %v2122
    %v3737 = vunpack.c.h.b16 %v2122
    %v3738 = vunpack.c.l.b16 %v2123
    %v3739 = vunpack.c.h.b16 %v2123
    %v3740 = vpack.c.b16 %v2690, %v2684
    %v3741 = vpack.c.b16 %v2691, %v2685
    %v3742 = vpack.c.b16 %v2692, %v2686
    %v3743 = vpack.c.b16 %v2693, %v2687
    %v3744 = vpack.c.b16 %v2694, %v2688
    %v3745 = vpack.c.b16 %v2695, %v2689
    %v3746 = vpack.c.b16 %v2702, %v2696
    %v3747 = vpack.c.b16 %v2703, %v2697
    %v3748 = vpack.c.b16 %v2704, %v2698
    %v3749 = vpack.c.b16 %v2705, %v2699
    %v3750 = vpack.c.b16 %v2706, %v2700
    %v3751 = vpack.c.b16 %v2707, %v2701
    %v3752 = vpack.c.b16 %v2714, %v2708
    %v3753 = vpack.c.b16 %v2715, %v2709
    %v3754 = vpack.c.b16 %v2716, %v2710
    %v3755 = vpack.c.b16 %v2717, %v2711
    %v3756 = vpack.c.b16 %v2718, %v2712
    %v3757 = vpack.c.b16 %v2719, %v2713
    %v3758 = vpack.c.b16 %v2726, %v2720
    %v3759 = vpack.c.b16 %v2727, %v2721
    %v3760 = vpack.c.b16 %v2728, %v2722
    %v3761 = vpack.c.b16 %v2729, %v2723
    %v3762 = vpack.c.b16 %v2730, %v2724
    %v3763 = vpack.c.b16 %v2731, %v2725
    %v3764 = vpack.c.b16 %v2738, %v2732
    %v3765 = vpack.c.b16 %v2739, %v2733
    %v3766 = vpack.c.b16 %v2740, %v2734
    %v3767 = vpack.c.b16 %v2741, %v2735
    %v3768 = vpack.c.b16 %v2742, %v2736
    %v3769 = vpack.c.b16 %v2743, %v2737
    %v3770 = vpack.c.b16 %v2750, %v2744
    %v3771 = vpack.c.b16 %v2751, %v2745
    %v3772 = vpack.c.b16 %v2752, %v2746
    %v3773 = vpack.c.b16 %v2753, %v2747
    %v3774 = vpack.c.b16 %v2754, %v2748
    %v3775 = vpack.c.b16 %v2755, %v2749
    %v3776 = vpack.c.b16 %v2762, %v2756
    %v3777 = vpack.c.b16 %v2763, %v2757
    %v3778 = vpack.c.b16 %v2764, %v2758
    %v3779 = vpack.c.b16 %v2765, %v2759
    %v3780 = vpack.c.b16 %v2766, %v2760
    %v3781 = vpack.c.b16 %v2767, %v2761
    %v3782 = vpack.c.b16 %v2774, %v2768
    %v3783 = vpack.c.b16 %v2775, %v2769
    %v3784 = vpack.c.b16 %v2776, %v2770
    %v3785 = vpack.c.b16 %v2777, %v2771
    %v3786 = vpack.c.b16 %v2778, %v2772
    %v3787 = vpack.c.b16 %v2779, %v2773
    %v3788 = vpack.c.b16 %v2786, %v2780
    %v3789 = vpack.c.b16 %v2787, %v2781
    %v3790 = vpack.c.b16 %v2788, %v2782
    %v3791 = vpack.c.b16 %v2789, %v2783
    %v3792 = vpack.c.b16 %v2790, %v2784
    %v3793 = vpack.c.b16 %v2791, %v2785
    %v3794 = vpack.c.b16 %v2798, %v2792
    %v3795 = vpack.c.b16 %v2799, %v2793
    %v3796 = vpack.c.b16 %v2800, %v2794
    %v3797 = vpack.c.b16 %v2801, %v2795
    %v3798 = vpack.c.b16 %v2802, %v2796
    %v3799 = vpack.c.b16 %v2803, %v2797
    %v3800 = vpack.c.b16 %v2810, %v2804
    %v3801 = vpack.c.b16 %v2811, %v2805
    %v3802 = vpack.c.b16 %v2812, %v2806
    %v3803 = vpack.c.b16 %v2813, %v2807
    %v3804 = vpack.c.b16 %v2814, %v2808
    %v3805 = vpack.c.b16 %v2815, %v2809
    %v3806 = vpack.c.b16 %v2822, %v2816
    %v3807 = vpack.c.b16 %v2823, %v2817
    %v3808 = vpack.c.b16 %v2824, %v2818
    %v3809 = vpack.c.b16 %v2825, %v2819
    %v3810 = vpack.c.b16 %v2826, %v2820
    %v3811 = vpack.c.b16 %v2827, %v2821
    %v3812 = vpack.c.b16 %v2834, %v2828
    %v3813 = vpack.c.b16 %v2835, %v2829
    %v3814 = vpack.c.b16 %v2836, %v2830
    %v3815 = vpack.c.b16 %v2837, %v2831
    %v3816 = vpack.c.b16 %v2838, %v2832
    %v3817 = vpack.c.b16 %v2839, %v2833
    %v3818 = vpack.c.b16 %v2846, %v2840
    %v3819 = vpack.c.b16 %v2847, %v2841
    %v3820 = vpack.c.b16 %v2848, %v2842
    %v3821 = vpack.c.b16 %v2849, %v2843
    %v3822 = vpack.c.b16 %v2850, %v2844
    %v3823 = vpack.c.b16 %v2851, %v2845
    %v3824 = vpack.c.b16 %v2858, %v2852
    %v3825 = vpack.c.b16 %v2859, %v2853
    %v3826 = vpack.c.b16 %v2860, %v2854
    %v3827 = vpack.c.b16 %v2861, %v2855
    %v3828 = vpack.c.b16 %v2862, %v2856
    %v3829 = vpack.c.b16 %v2863, %v2857
    %v3830 = vpack.c.b16 %v2870, %v2864
    %v3831 = vpack.c.b16 %v2871, %v2865
    %v3832 = vpack.c.b16 %v2872, %v2866
    %v3833 = vpack.c.b16 %v2873, %v2867
    %v3834 = vpack.c.b16 %v2874, %v2868
    %v3835 = vpack.c.b16 %v2875, %v2869
    %v3836 = vpack.c.b16 %v2882, %v2876
    %v3837 = vpack.c.b16 %v2883, %v2877
    %v3838 = vpack.c.b16 %v2884, %v2878
    %v3839 = vpack.c.b16 %v2885, %v2879
    %v3840 = vpack.c.b16 %v2886, %v2880
    %v3841 = vpack.c.b16 %v2887, %v2881
    %v3842 = vpack.c.b16 %v2894, %v2888
    %v3843 = vpack.c.b16 %v2895, %v2889
    %v3844 = vpack.c.b16 %v2896, %v2890
    %v3845 = vpack.c.b16 %v2897, %v2891
    %v3846 = vpack.c.b16 %v2898, %v2892
    %v3847 = vpack.c.b16 %v2899, %v2893
    %v3848 = vpack.c.b16 %v2906, %v2900
    %v3849 = vpack.c.b16 %v2907, %v2901
    %v3850 = vpack.c.b16 %v2908, %v2902
    %v3851 = vpack.c.b16 %v2909, %v2903
    %v3852 = vpack.c.b16 %v2910, %v2904
    %v3853 = vpack.c.b16 %v2911, %v2905
    %v3854 = vpack.c.b16 %v2918, %v2912
    %v3855 = vpack.c.b16 %v2919, %v2913
    %v3856 = vpack.c.b16 %v2920, %v2914
    %v3857 = vpack.c.b16 %v2921, %v2915
    %v3858 = vpack.c.b16 %v2922, %v2916
    %v3859 = vpack.c.b16 %v2923, %v2917
    %v3860 = vpack.c.b16 %v2930, %v2924
    %v3861 = vpack.c.b16 %v2931, %v2925
    %v3862 = vpack.c.b16 %v2932, %v2926
    %v3863 = vpack.c.b16 %v2933, %v2927
    %v3864 = vpack.c.b16 %v2934, %v2928
    %v3865 = vpack.c.b16 %v2935, %v2929
    %v3866 = vpack.c.b16 %v2942, %v2936
    %v3867 = vpack.c.b16 %v2943, %v2937
    %v3868 = vpack.c.b16 %v2944, %v2938
    %v3869 = vpack.c.b16 %v2945, %v2939
    %v3870 = vpack.c.b16 %v2946, %v2940
    %v3871 = vpack.c.b16 %v2947, %v2941
    %v3872 = vpack.c.b16 %v2954, %v2948
    %v3873 = vpack.c.b16 %v2955, %v2949
    %v3874 = vpack.c.b16 %v2956, %v2950
    %v3875 = vpack.c.b16 %v2957, %v2951
    %v3876 = vpack.c.b16 %v2958, %v2952
    %v3877 = vpack.c.b16 %v2959, %v2953
    %v3878 = vpack.c.b16 %v2966, %v2960
    %v3879 = vpack.c.b16 %v2967, %v2961
    %v3880 = vpack.c.b16 %v2968, %v2962
    %v3881 = vpack.c.b16 %v2969, %v2963
    %v3882 = vpack.c.b16 %v2970, %v2964
    %v3883 = vpack.c.b16 %v2971, %v2965
    %v3884 = vpack.c.b16 %v2978, %v2972
    %v3885 = vpack.c.b16 %v2979, %v2973
    %v3886 = vpack.c.b16 %v2980, %v2974
    %v3887 = vpack.c.b16 %v2981, %v2975
    %v3888 = vpack.c.b16 %v2982, %v2976
    %v3889 = vpack.c.b16 %v2983, %v2977
    %v3890 = vpack.c.b16 %v2990, %v2984
    %v3891 = vpack.c.b16 %v2991, %v2985
    %v3892 = vpack.c.b16 %v2992, %v2986
    %v3893 = vpack.c.b16 %v2993, %v2987
    %v3894 = vpack.c.b16 %v2994, %v2988
    %v3895 = vpack.c.b16 %v2995, %v2989
    %v3896 = vpack.c.b16 %v3002, %v2996
    %v3897 = vpack.c.b16 %v3003, %v2997
    %v3898 = vpack.c.b16 %v3004, %v2998
    %v3899 = vpack.c.b16 %v3005, %v2999
    %v3900 = vpack.c.b16 %v3006, %v3000
    %v3901 = vpack.c.b16 %v3007, %v3001
    %v3902 = vpack.c.b16 %v3014, %v3008
    %v3903 = vpack.c.b16 %v3015, %v3009
    %v3904 = vpack.c.b16 %v3016, %v3010
    %v3905 = vpack.c.b16 %v3017, %v3011
    %v3906 = vpack.c.b16 %v3018, %v3012
    %v3907 = vpack.c.b16 %v3019, %v3013
    %v3908 = vpack.c.b16 %v3026, %v3020
    %v3909 = vpack.c.b16 %v3027, %v3021
    %v3910 = vpack.c.b16 %v3028, %v3022
    %v3911 = vpack.c.b16 %v3029, %v3023
    %v3912 = vpack.c.b16 %v3030, %v3024
    %v3913 = vpack.c.b16 %v3031, %v3025
    %v3914 = vpack.c.b16 %v3038, %v3032
    %v3915 = vpack.c.b16 %v3039, %v3033
    %v3916 = vpack.c.b16 %v3040, %v3034
    %v3917 = vpack.c.b16 %v3041, %v3035
    %v3918 = vpack.c.b16 %v3042, %v3036
    %v3919 = vpack.c.b16 %v3043, %v3037
    %v3920 = vpack.c.b16 %v3050, %v3044
    %v3921 = vpack.c.b16 %v3051, %v3045
    %v3922 = vpack.c.b16 %v3052, %v3046
    %v3923 = vpack.c.b16 %v3053, %v3047
    %v3924 = vpack.c.b16 %v3054, %v3048
    %v3925 = vpack.c.b16 %v3055, %v3049
    %v3926 = vpack.c.b16 %v3062, %v3056
    %v3927 = vpack.c.b16 %v3063, %v3057
    %v3928 = vpack.c.b16 %v3064, %v3058
    %v3929 = vpack.c.b16 %v3065, %v3059
    %v3930 = vpack.c.b16 %v3066, %v3060
    %v3931 = vpack.c.b16 %v3067, %v3061
    %v3932 = vpack.c.b16 %v3074, %v3068
    %v3933 = vpack.c.b16 %v3075, %v3069
    %v3934 = vpack.c.b16 %v3076, %v3070
    %v3935 = vpack.c.b16 %v3077, %v3071
    %v3936 = vpack.c.b16 %v3078, %v3072
    %v3937 = vpack.c.b16 %v3079, %v3073
    %v3938 = vpack.c.b16 %v3086, %v3080
    %v3939 = vpack.c.b16 %v3087, %v3081
    %v3940 = vpack.c.b16 %v3088, %v3082
    %v3941 = vpack.c.b16 %v3089, %v3083
    %v3942 = vpack.c.b16 %v3090, %v3084
    %v3943 = vpack.c.b16 %v3091, %v3085
    %v3944 = vpack.c.b16 %v3098, %v3092
    %v3945 = vpack.c.b16 %v3099, %v3093
    %v3946 = vpack.c.b16 %v3100, %v3094
    %v3947 = vpack.c.b16 %v3101, %v3095
    %v3948 = vpack.c.b16 %v3102, %v3096
    %v3949 = vpack.c.b16 %v3103, %v3097
    %v3950 = vpack.c.b16 %v3110, %v3104
    %v3951 = vpack.c.b16 %v3111, %v3105
    %v3952 = vpack.c.b16 %v3112, %v3106
    %v3953 = vpack.c.b16 %v3113, %v3107
    %v3954 = vpack.c.b16 %v3114, %v3108
    %v3955 = vpack.c.b16 %v3115, %v3109
    %v3956 = vpack.c.b16 %v3122, %v3116
    %v3957 = vpack.c.b16 %v3123, %v3117
    %v3958 = vpack.c.b16 %v3124, %v3118
    %v3959 = vpack.c.b16 %v3125, %v3119
    %v3960 = vpack.c.b16 %v3126, %v3120
    %v3961 = vpack.c.b16 %v3127, %v3121
    %v3962 = vpack.c.b16 %v3134, %v3128
    %v3963 = vpack.c.b16 %v3135, %v3129
    %v3964 = vpack.c.b16 %v3136, %v3130
    %v3965 = vpack.c.b16 %v3137, %v3131
    %v3966 = vpack.c.b16 %v3138, %v3132
    %v3967 = vpack.c.b16 %v3139, %v3133
    %v3968 = vpack.c.b16 %v3146, %v3140
    %v3969 = vpack.c.b16 %v3147, %v3141
    %v3970 = vpack.c.b16 %v3148, %v3142
    %v3971 = vpack.c.b16 %v3149, %v3143
    %v3972 = vpack.c.b16 %v3150, %v3144
    %v3973 = vpack.c.b16 %v3151, %v3145
    %v3974 = vpack.c.b16 %v3158, %v3152
    %v3975 = vpack.c.b16 %v3159, %v3153
    %v3976 = vpack.c.b16 %v3160, %v3154
    %v3977 = vpack.c.b16 %v3161, %v3155
    %v3978 = vpack.c.b16 %v3162, %v3156
    %v3979 = vpack.c.b16 %v3163, %v3157
    %v3980 = vpack.c.b16 %v3170, %v3164
    %v3981 = vpack.c.b16 %v3171, %v3165
    %v3982 = vpack.c.b16 %v3172, %v3166
    %v3983 = vpack.c.b16 %v3173, %v3167
    %v3984 = vpack.c.b16 %v3174, %v3168
    %v3985 = vpack.c.b16 %v3175, %v3169
    %v3986 = vpack.c.b16 %v3182, %v3176
    %v3987 = vpack.c.b16 %v3183, %v3177
    %v3988 = vpack.c.b16 %v3184, %v3178
    %v3989 = vpack.c.b16 %v3185, %v3179
    %v3990 = vpack.c.b16 %v3186, %v3180
    %v3991 = vpack.c.b16 %v3187, %v3181
    %v3992 = vpack.c.b16 %v3194, %v3188
    %v3993 = vpack.c.b16 %v3195, %v3189
    %v3994 = vpack.c.b16 %v3196, %v3190
    %v3995 = vpack.c.b16 %v3197, %v3191
    %v3996 = vpack.c.b16 %v3198, %v3192
    %v3997 = vpack.c.b16 %v3199, %v3193
    %v3998 = vpack.c.b16 %v3206, %v3200
    %v3999 = vpack.c.b16 %v3207, %v3201
    %v4000 = vpack.c.b16 %v3208, %v3202
    %v4001 = vpack.c.b16 %v3209, %v3203
    %v4002 = vpack.c.b16 %v3210, %v3204
    %v4003 = vpack.c.b16 %v3211, %v3205
    %v4004 = vpack.c.b16 %v3218, %v3212
    %v4005 = vpack.c.b16 %v3219, %v3213
    %v4006 = vpack.c.b16 %v3220, %v3214
    %v4007 = vpack.c.b16 %v3221, %v3215
    %v4008 = vpack.c.b16 %v3222, %v3216
    %v4009 = vpack.c.b16 %v3223, %v3217
    %v4010 = vpack.c.b16 %v3230, %v3224
    %v4011 = vpack.c.b16 %v3231, %v3225
    %v4012 = vpack.c.b16 %v3232, %v3226
    %v4013 = vpack.c.b16 %v3233, %v3227
    %v4014 = vpack.c.b16 %v3234, %v3228
    %v4015 = vpack.c.b16 %v3235, %v3229
    %v4016 = vpack.c.b16 %v3242, %v3236
    %v4017 = vpack.c.b16 %v3243, %v3237
    %v4018 = vpack.c.b16 %v3244, %v3238
    %v4019 = vpack.c.b16 %v3245, %v3239
    %v4020 = vpack.c.b16 %v3246, %v3240
    %v4021 = vpack.c.b16 %v3247, %v3241
    %v4022 = vpack.c.b16 %v3254, %v3248
    %v4023 = vpack.c.b16 %v3255, %v3249
    %v4024 = vpack.c.b16 %v3256, %v3250
    %v4025 = vpack.c.b16 %v3257, %v3251
    %v4026 = vpack.c.b16 %v3258, %v3252
    %v4027 = vpack.c.b16 %v3259, %v3253
    %v4028 = vpack.c.b16 %v3266, %v3260
    %v4029 = vpack.c.b16 %v3267, %v3261
    %v4030 = vpack.c.b16 %v3268, %v3262
    %v4031 = vpack.c.b16 %v3269, %v3263
    %v4032 = vpack.c.b16 %v3270, %v3264
    %v4033 = vpack.c.b16 %v3271, %v3265
    %v4034 = vpack.c.b16 %v3278, %v3272
    %v4035 = vpack.c.b16 %v3279, %v3273
    %v4036 = vpack.c.b16 %v3280, %v3274
    %v4037 = vpack.c.b16 %v3281, %v3275
    %v4038 = vpack.c.b16 %v3282, %v3276
    %v4039 = vpack.c.b16 %v3283, %v3277
    %v4040 = vpack.c.b16 %v3290, %v3284
    %v4041 = vpack.c.b16 %v3291, %v3285
    %v4042 = vpack.c.b16 %v3292, %v3286
    %v4043 = vpack.c.b16 %v3293, %v3287
    %v4044 = vpack.c.b16 %v3294, %v3288
    %v4045 = vpack.c.b16 %v3295, %v3289
    %v4046 = vpack.c.b16 %v3302, %v3296
    %v4047 = vpack.c.b16 %v3303, %v3297
    %v4048 = vpack.c.b16 %v3304, %v3298
    %v4049 = vpack.c.b16 %v3305, %v3299
    %v4050 = vpack.c.b16 %v3306, %v3300
    %v4051 = vpack.c.b16 %v3307, %v3301
    %v4052 = vpack.c.b16 %v3314, %v3308
    %v4053 = vpack.c.b16 %v3315, %v3309
    %v4054 = vpack.c.b16 %v3316, %v3310
    %v4055 = vpack.c.b16 %v3317, %v3311
    %v4056 = vpack.c.b16 %v3318, %v3312
    %v4057 = vpack.c.b16 %v3319, %v3313
    %v4058 = vpack.c.b16 %v3326, %v3320
    %v4059 = vpack.c.b16 %v3327, %v3321
    %v4060 = vpack.c.b16 %v3328, %v3322
    %v4061 = vpack.c.b16 %v3329, %v3323
    %v4062 = vpack.c.b16 %v3330, %v3324
    %v4063 = vpack.c.b16 %v3331, %v3325
    %v4064 = vpack.c.b16 %v3338, %v3332
    %v4065 = vpack.c.b16 %v3339, %v3333
    %v4066 = vpack.c.b16 %v3340, %v3334
    %v4067 = vpack.c.b16 %v3341, %v3335
    %v4068 = vpack.c.b16 %v3342, %v3336
    %v4069 = vpack.c.b16 %v3343, %v3337
    %v4070 = vpack.c.b16 %v3350, %v3344
    %v4071 = vpack.c.b16 %v3351, %v3345
    %v4072 = vpack.c.b16 %v3352, %v3346
    %v4073 = vpack.c.b16 %v3353, %v3347
    %v4074 = vpack.c.b16 %v3354, %v3348
    %v4075 = vpack.c.b16 %v3355, %v3349
    %v4076 = vpack.c.b16 %v3362, %v3356
    %v4077 = vpack.c.b16 %v3363, %v3357
    %v4078 = vpack.c.b16 %v3364, %v3358
    %v4079 = vpack.c.b16 %v3365, %v3359
    %v4080 = vpack.c.b16 %v3366, %v3360
    %v4081 = vpack.c.b16 %v3367, %v3361
    %v4082 = vpack.c.b16 %v3374, %v3368
    %v4083 = vpack.c.b16 %v3375, %v3369
    %v4084 = vpack.c.b16 %v3376, %v3370
    %v4085 = vpack.c.b16 %v3377, %v3371
    %v4086 = vpack.c.b16 %v3378, %v3372
    %v4087 = vpack.c.b16 %v3379, %v3373
    %v4088 = vpack.c.b16 %v3386, %v3380
    %v4089 = vpack.c.b16 %v3387, %v3381
    %v4090 = vpack.c.b16 %v3388, %v3382
    %v4091 = vpack.c.b16 %v3389, %v3383
    %v4092 = vpack.c.b16 %v3390, %v3384
    %v4093 = vpack.c.b16 %v3391, %v3385
    %v4094 = vpack.c.b16 %v3398, %v3392
    %v4095 = vpack.c.b16 %v3399, %v3393
    %v4096 = vpack.c.b16 %v3400, %v3394
    %v4097 = vpack.c.b16 %v3401, %v3395
    %v4098 = vpack.c.b16 %v3402, %v3396
    %v4099 = vpack.c.b16 %v3403, %v3397
    %v4100 = vpack.c.b16 %v3410, %v3404
    %v4101 = vpack.c.b16 %v3411, %v3405
    %v4102 = vpack.c.b16 %v3412, %v3406
    %v4103 = vpack.c.b16 %v3413, %v3407
    %v4104 = vpack.c.b16 %v3414, %v3408
    %v4105 = vpack.c.b16 %v3415, %v3409
    %v4106 = vpack.c.b16 %v3422, %v3416
    %v4107 = vpack.c.b16 %v3423, %v3417
    %v4108 = vpack.c.b16 %v3424, %v3418
    %v4109 = vpack.c.b16 %v3425, %v3419
    %v4110 = vpack.c.b16 %v3426, %v3420
    %v4111 = vpack.c.b16 %v3427, %v3421
    %v4112 = vpack.c.b16 %v3434, %v3428
    %v4113 = vpack.c.b16 %v3435, %v3429
    %v4114 = vpack.c.b16 %v3436, %v3430
    %v4115 = vpack.c.b16 %v3437, %v3431
    %v4116 = vpack.c.b16 %v3438, %v3432
    %v4117 = vpack.c.b16 %v3439, %v3433
    %v4118 = vpack.c.b16 %v3446, %v3440
    %v4119 = vpack.c.b16 %v3447, %v3441
    %v4120 = vpack.c.b16 %v3448, %v3442
    %v4121 = vpack.c.b16 %v3449, %v3443
    %v4122 = vpack.c.b16 %v3450, %v3444
    %v4123 = vpack.c.b16 %v3451, %v3445
    %v4124 = vpack.c.b16 %v3458, %v3452
    %v4125 = vpack.c.b16 %v3459, %v3453
    %v4126 = vpack.c.b16 %v3460, %v3454
    %v4127 = vpack.c.b16 %v3461, %v3455
    %v4128 = vpack.c.b16 %v3462, %v3456
    %v4129 = vpack.c.b16 %v3463, %v3457
    %v4130 = vpack.c.b16 %v3470, %v3464
    %v4131 = vpack.c.b16 %v3471, %v3465
    %v4132 = vpack.c.b16 %v3472, %v3466
    %v4133 = vpack.c.b16 %v3473, %v3467
    %v4134 = vpack.c.b16 %v3474, %v3468
    %v4135 = vpack.c.b16 %v3475, %v3469
    %v4136 = vpack.c.b16 %v3482, %v3476
    %v4137 = vpack.c.b16 %v3483, %v3477
    %v4138 = vpack.c.b16 %v3484, %v3478
    %v4139 = vpack.c.b16 %v3485, %v3479
    %v4140 = vpack.c.b16 %v3486, %v3480
    %v4141 = vpack.c.b16 %v3487, %v3481
    %v4142 = vpack.c.b16 %v3494, %v3488
    %v4143 = vpack.c.b16 %v3495, %v3489
    %v4144 = vpack.c.b16 %v3496, %v3490
    %v4145 = vpack.c.b16 %v3497, %v3491
    %v4146 = vpack.c.b16 %v3498, %v3492
    %v4147 = vpack.c.b16 %v3499, %v3493
    %v4148 = vpack.c.b16 %v3506, %v3500
    %v4149 = vpack.c.b16 %v3507, %v3501
    %v4150 = vpack.c.b16 %v3508, %v3502
    %v4151 = vpack.c.b16 %v3509, %v3503
    %v4152 = vpack.c.b16 %v3510, %v3504
    %v4153 = vpack.c.b16 %v3511, %v3505
    %v4154 = vpack.c.b16 %v3518, %v3512
    %v4155 = vpack.c.b16 %v3519, %v3513
    %v4156 = vpack.c.b16 %v3520, %v3514
    %v4157 = vpack.c.b16 %v3521, %v3515
    %v4158 = vpack.c.b16 %v3522, %v3516
    %v4159 = vpack.c.b16 %v3523, %v3517
    %v4160 = vpack.c.b16 %v3530, %v3524
    %v4161 = vpack.c.b16 %v3531, %v3525
    %v4162 = vpack.c.b16 %v3532, %v3526
    %v4163 = vpack.c.b16 %v3533, %v3527
    %v4164 = vpack.c.b16 %v3534, %v3528
    %v4165 = vpack.c.b16 %v3535, %v3529
    %v4166 = vpack.c.b16 %v3542, %v3536
    %v4167 = vpack.c.b16 %v3543, %v3537
    %v4168 = vpack.c.b16 %v3544, %v3538
    %v4169 = vpack.c.b16 %v3545, %v3539
    %v4170 = vpack.c.b16 %v3546, %v3540
    %v4171 = vpack.c.b16 %v3547, %v3541
    %v4172 = vpack.c.b16 %v3554, %v3548
    %v4173 = vpack.c.b16 %v3555, %v3549
    %v4174 = vpack.c.b16 %v3556, %v3550
    %v4175 = vpack.c.b16 %v3557, %v3551
    %v4176 = vpack.c.b16 %v3558, %v3552
    %v4177 = vpack.c.b16 %v3559, %v3553
    %v4178 = vpack.c.b16 %v3566, %v3560
    %v4179 = vpack.c.b16 %v3567, %v3561
    %v4180 = vpack.c.b16 %v3568, %v3562
    %v4181 = vpack.c.b16 %v3569, %v3563
    %v4182 = vpack.c.b16 %v3570, %v3564
    %v4183 = vpack.c.b16 %v3571, %v3565
    %v4184 = vpack.c.b16 %v3578, %v3572
    %v4185 = vpack.c.b16 %v3579, %v3573
    %v4186 = vpack.c.b16 %v3580, %v3574
    %v4187 = vpack.c.b16 %v3581, %v3575
    %v4188 = vpack.c.b16 %v3582, %v3576
    %v4189 = vpack.c.b16 %v3583, %v3577
    %v4190 = vpack.c.b16 %v3590, %v3584
    %v4191 = vpack.c.b16 %v3591, %v3585
    %v4192 = vpack.c.b16 %v3592, %v3586
    %v4193 = vpack.c.b16 %v3593, %v3587
    %v4194 = vpack.c.b16 %v3594, %v3588
    %v4195 = vpack.c.b16 %v3595, %v3589
    %v4196 = vpack.c.b16 %v3602, %v3596
    %v4197 = vpack.c.b16 %v3603, %v3597
    %v4198 = vpack.c.b16 %v3604, %v3598
    %v4199 = vpack.c.b16 %v3605, %v3599
    %v4200 = vpack.c.b16 %v3606, %v3600
    %v4201 = vpack.c.b16 %v3607, %v3601
    %v4202 = vpack.c.b16 %v3614, %v3608
    %v4203 = vpack.c.b16 %v3615, %v3609
    %v4204 = vpack.c.b16 %v3616, %v3610
    %v4205 = vpack.c.b16 %v3617, %v3611
    %v4206 = vpack.c.b16 %v3618, %v3612
    %v4207 = vpack.c.b16 %v3619, %v3613
    %v4208 = vpack.c.b16 %v3626, %v3620
    %v4209 = vpack.c.b16 %v3627, %v3621
    %v4210 = vpack.c.b16 %v3628, %v3622
    %v4211 = vpack.c.b16 %v3629, %v3623
    %v4212 = vpack.c.b16 %v3630, %v3624
    %v4213 = vpack.c.b16 %v3631, %v3625
    %v4214 = vpack.c.b16 %v3638, %v3632
    %v4215 = vpack.c.b16 %v3639, %v3633
    %v4216 = vpack.c.b16 %v3640, %v3634
    %v4217 = vpack.c.b16 %v3641, %v3635
    %v4218 = vpack.c.b16 %v3642, %v3636
    %v4219 = vpack.c.b16 %v3643, %v3637
    %v4220 = vpack.c.b16 %v3650, %v3644
    %v4221 = vpack.c.b16 %v3651, %v3645
    %v4222 = vpack.c.b16 %v3652, %v3646
    %v4223 = vpack.c.b16 %v3653, %v3647
    %v4224 = vpack.c.b16 %v3654, %v3648
    %v4225 = vpack.c.b16 %v3655, %v3649
    %v4226 = vpack.c.b16 %v3662, %v3656
    %v4227 = vpack.c.b16 %v3663, %v3657
    %v4228 = vpack.c.b16 %v3664, %v3658
    %v4229 = vpack.c.b16 %v3665, %v3659
    %v4230 = vpack.c.b16 %v3666, %v3660
    %v4231 = vpack.c.b16 %v3667, %v3661
    %v4232 = vpack.c.b16 %v3674, %v3668
    %v4233 = vpack.c.b16 %v3675, %v3669
    %v4234 = vpack.c.b16 %v3676, %v3670
    %v4235 = vpack.c.b16 %v3677, %v3671
    %v4236 = vpack.c.b16 %v3678, %v3672
    %v4237 = vpack.c.b16 %v3679, %v3673
    %v4238 = vpack.c.b16 %v3686, %v3680
    %v4239 = vpack.c.b16 %v3687, %v3681
    %v4240 = vpack.c.b16 %v3688, %v3682
    %v4241 = vpack.c.b16 %v3689, %v3683
    %v4242 = vpack.c.b16 %v3690, %v3684
    %v4243 = vpack.c.b16 %v3691, %v3685
    %v4244 = vpack.c.b16 %v3698, %v3692
    %v4245 = vpack.c.b16 %v3699, %v3693
    %v4246 = vpack.c.b16 %v3700, %v3694
    %v4247 = vpack.c.b16 %v3701, %v3695
    %v4248 = vpack.c.b16 %v3702, %v3696
    %v4249 = vpack.c.b16 %v3703, %v3697
    %v4250 = vpack.c.b16 %v3710, %v3704
    %v4251 = vpack.c.b16 %v3711, %v3705
    %v4252 = vpack.c.b16 %v3712, %v3706
    %v4253 = vpack.c.b16 %v3713, %v3707
    %v4254 = vpack.c.b16 %v3714, %v3708
    %v4255 = vpack.c.b16 %v3715, %v3709
    %v4256 = vpack.c.b16 %v3722, %v3716
    %v4257 = vpack.c.b16 %v3723, %v3717
    %v4258 = vpack.c.b16 %v3724, %v3718
    %v4259 = vpack.c.b16 %v3725, %v3719
    %v4260 = vpack.c.b16 %v3726, %v3720
    %v4261 = vpack.c.b16 %v3727, %v3721
    %v4262 = vpack.c.b16 %v3734, %v3728
    %v4263 = vpack.c.b16 %v3735, %v3729
    %v4264 = vpack.c.b16 %v3736, %v3730
    %v4265 = vpack.c.b16 %v3737, %v3731
    %v4266 = vpack.c.b16 %v3738, %v3732
    %v4267 = vpack.c.b16 %v3739, %v3733
    %4796 = vmatprep.subr.bf16.mxu0 %v3741
    %4797 = vmatpush1.bf16.msra.mxu0 %v3740
    %4798 = vmatprep.subr.bf16.mxu0 %v3747
    %4799 = vmatpush1.bf16.msra.mxu0 %v3746
    %4800 = vmatprep.subr.bf16.mxu0 %v3753
    %4801 = vmatpush1.bf16.msra.mxu0 %v3752
    %4802 = vmatprep.subr.bf16.mxu0 %v3759
    %4803 = vmatpush1.bf16.msra.mxu0 %v3758
    %4804 = vmatprep.subr.bf16.mxu0 %v3765
    %4805 = vmatpush1.bf16.msra.mxu0 %v3764
    %4806 = vmatprep.subr.bf16.mxu0 %v3771
    %4807 = vmatpush1.bf16.msra.mxu0 %v3770
    %4808 = vmatprep.subr.bf16.mxu0 %v3777
    %4809 = vmatpush1.bf16.msra.mxu0 %v3776
    %4810 = vmatprep.subr.bf16.mxu0 %v3783
    %4811 = vmatpush1.bf16.msra.mxu0 %v3782
    %4812 = vmatprep.subr.bf16.mxu0 %v3789
    %4813 = vmatpush1.bf16.msra.mxu0 %v3788
    %4814 = vmatprep.subr.bf16.mxu0 %v3795
    %4815 = vmatpush1.bf16.msra.mxu0 %v3794
    %4816 = vmatprep.subr.bf16.mxu0 %v3801
    %4817 = vmatpush1.bf16.msra.mxu0 %v3800
    %4818 = vmatprep.subr.bf16.mxu0 %v3807
    %4819 = vmatpush1.bf16.msra.mxu0 %v3806
    %4820 = vmatprep.subr.bf16.mxu0 %v3813
    %4821 = vmatpush1.bf16.msra.mxu0 %v3812
    %4822 = vmatprep.subr.bf16.mxu0 %v3819
    %4823 = vmatpush1.bf16.msra.mxu0 %v3818
    %4824 = vmatprep.subr.bf16.mxu0 %v3825
    %4825 = vmatpush1.bf16.msra.mxu0 %v3824
    %4826 = vmatprep.subr.bf16.mxu0 %v3831
    %4827 = vmatpush1.bf16.msra.mxu0 %v3830
    %4828 = vmatprep.mubr.bf16.mxu0 %v1586
    %4829 = vmatmul.mubr.bf16.gmra.mrb[0].mxu0 %v1585
    %v4830 = vpop.f32.mrb[0].mxu0
    %v4831 = vadd.f32 %v2129, %v4830
    %v4832 = vpop.f32.mrb[0].mxu0
    %v4833 = vadd.f32 %v2133, %v4832
    %v4834 = vpop.f32.mrb[0].mxu0
    %v4835 = vadd.f32 %v2129, %v4834
    %v4836 = vpop.f32.mrb[0].mxu0
    %v4837 = vadd.f32 %v2133, %v4836
    %4838 = vdwg.mxu0
    %4839 = vmatprep.subr.bf16.mxu0 %v3837
    %4840 = vmatpush1.bf16.msra.mxu0 %v3836
    %4841 = vmatprep.subr.bf16.mxu0 %v3843
    %4842 = vmatpush1.bf16.msra.mxu0 %v3842
    %4843 = vmatprep.subr.bf16.mxu0 %v3849
    %4844 = vmatpush1.bf16.msra.mxu0 %v3848
    %4845 = vmatprep.subr.bf16.mxu0 %v3855
    %4846 = vmatpush1.bf16.msra.mxu0 %v3854
    %4847 = vmatprep.subr.bf16.mxu0 %v3861
    %4848 = vmatpush1.bf16.msra.mxu0 %v3860
    %4849 = vmatprep.subr.bf16.mxu0 %v3867
    %4850 = vmatpush1.bf16.msra.mxu0 %v3866
    %4851 = vmatprep.subr.bf16.mxu0 %v3873
    %4852 = vmatpush1.bf16.msra.mxu0 %v3872
    %4853 = vmatprep.subr.bf16.mxu0 %v3879
    %4854 = vmatpush1.bf16.msra.mxu0 %v3878
    %4855 = vmatprep.subr.bf16.mxu0 %v3885
    %4856 = vmatpush1.bf16.msra.mxu0 %v3884
    %4857 = vmatprep.subr.bf16.mxu0 %v3891
    %4858 = vmatpush1.bf16.msra.mxu0 %v3890
    %4859 = vmatprep.subr.bf16.mxu0 %v3897
    %4860 = vmatpush1.bf16.msra.mxu0 %v3896
    %4861 = vmatprep.subr.bf16.mxu0 %v3903
    %4862 = vmatpush1.bf16.msra.mxu0 %v3902
    %4863 = vmatprep.subr.bf16.mxu0 %v3909
    %4864 = vmatpush1.bf16.msra.mxu0 %v3908
    %4865 = vmatprep.subr.bf16.mxu0 %v3915
    %4866 = vmatpush1.bf16.msra.mxu0 %v3914
    %4867 = vmatprep.subr.bf16.mxu0 %v3921
    %4868 = vmatpush1.bf16.msra.mxu0 %v3920
    %4869 = vmatprep.subr.bf16.mxu0 %v3927
    %4870 = vmatpush1.bf16.msra.mxu0 %v3926
    %4871 = vmatprep.mubr.bf16.mxu0 %v1588
    %4872 = vmatmul.mubr.bf16.gmra.mrb[0].mxu0 %v1587
    %v4873 = vpop.f32.mrb[0].mxu0
    %v4874 = vadd.f32 %v4831, %v4873
    %v4875 = vpop.f32.mrb[0].mxu0
    %v4876 = vadd.f32 %v4833, %v4875
    %v4877 = vpop.f32.mrb[0].mxu0
    %v4878 = vadd.f32 %v4835, %v4877
    %v4879 = vpop.f32.mrb[0].mxu0
    %v4880 = vadd.f32 %v4837, %v4879
    %4881 = vdwg.mxu0
    %4882 = vmatprep.subr.bf16.mxu0 %v3933
    %4883 = vmatpush1.bf16.msra.mxu0 %v3932
    %4884 = vmatprep.subr.bf16.mxu0 %v3939
    %4885 = vmatpush1.bf16.msra.mxu0 %v3938
    %4886 = vmatprep.subr.bf16.mxu0 %v3945
    %4887 = vmatpush1.bf16.msra.mxu0 %v3944
    %4888 = vmatprep.subr.bf16.mxu0 %v3951
    %4889 = vmatpush1.bf16.msra.mxu0 %v3950
    %4890 = vmatprep.subr.bf16.mxu0 %v3957
    %4891 = vmatpush1.bf16.msra.mxu0 %v3956
    %4892 = vmatprep.subr.bf16.mxu0 %v3963
    %4893 = vmatpush1.bf16.msra.mxu0 %v3962
    %4894 = vmatprep.subr.bf16.mxu0 %v3969
    %4895 = vmatpush1.bf16.msra.mxu0 %v3968
    %4896 = vmatprep.subr.bf16.mxu0 %v3975
    %4897 = vmatpush1.bf16.msra.mxu0 %v3974
    %4898 = vmatprep.subr.bf16.mxu0 %v3981
    %4899 = vmatpush1.bf16.msra.mxu0 %v3980
    %4900 = vmatprep.subr.bf16.mxu0 %v3987
    %4901 = vmatpush1.bf16.msra.mxu0 %v3986
    %4902 = vmatprep.subr.bf16.mxu0 %v3993
    %4903 = vmatpush1.bf16.msra.mxu0 %v3992
    %4904 = vmatprep.subr.bf16.mxu0 %v3999
    %4905 = vmatpush1.bf16.msra.mxu0 %v3998
    %4906 = vmatprep.subr.bf16.mxu0 %v4005
    %4907 = vmatpush1.bf16.msra.mxu0 %v4004
    %4908 = vmatprep.subr.bf16.mxu0 %v4011
    %4909 = vmatpush1.bf16.msra.mxu0 %v4010
    %4910 = vmatprep.subr.bf16.mxu0 %v4017
    %4911 = vmatpush1.bf16.msra.mxu0 %v4016
    %4912 = vmatprep.subr.bf16.mxu0 %v4023
    %4913 = vmatpush1.bf16.msra.mxu0 %v4022
    %4914 = vmatprep.mubr.bf16.mxu0 %v1590
    %4915 = vmatmul.mubr.bf16.gmra.mrb[0].mxu0 %v1589
    %v4916 = vpop.f32.mrb[0].mxu0
    %v4917 = vadd.f32 %v4874, %v4916
    %v4918 = vpop.f32.mrb[0].mxu0
    %v4919 = vadd.f32 %v4876, %v4918
    %v4920 = vpop.f32.mrb[0].mxu0
    %v4921 = vadd.f32 %v4878, %v4920
    %v4922 = vpop.f32.mrb[0].mxu0
    %v4923 = vadd.f32 %v4880, %v4922
    %4924 = vdwg.mxu0
    %4925 = vmatprep.subr.bf16.mxu0 %v4029
    %4926 = vmatpush1.bf16.msra.mxu0 %v4028
    %4927 = vmatprep.subr.bf16.mxu0 %v4035
    %4928 = vmatpush1.bf16.msra.mxu0 %v4034
    %4929 = vmatprep.subr.bf16.mxu0 %v4041
    %4930 = vmatpush1.bf16.msra.mxu0 %v4040
    %4931 = vmatprep.subr.bf16.mxu0 %v4047
    %4932 = vmatpush1.bf16.msra.mxu0 %v4046
    %4933 = vmatprep.subr.bf16.mxu0 %v4053
    %4934 = vmatpush1.bf16.msra.mxu0 %v4052
    %4935 = vmatprep.subr.bf16.mxu0 %v4059
    %4936 = vmatpush1.bf16.msra.mxu0 %v4058
    %4937 = vmatprep.subr.bf16.mxu0 %v4065
    %4938 = vmatpush1.bf16.msra.mxu0 %v4064
    %4939 = vmatprep.subr.bf16.mxu0 %v4071
    %4940 = vmatpush1.bf16.msra.mxu0 %v4070
    %4941 = vmatprep.subr.bf16.mxu0 %v4077
    %4942 = vmatpush1.bf16.msra.mxu0 %v4076
    %4943 = vmatprep.subr.bf16.mxu0 %v4083
    %4944 = vmatpush1.bf16.msra.mxu0 %v4082
    %4945 = vmatprep.subr.bf16.mxu0 %v4089
    %4946 = vmatpush1.bf16.msra.mxu0 %v4088
    %4947 = vmatprep.subr.bf16.mxu0 %v4095
    %4948 = vmatpush1.bf16.msra.mxu0 %v4094
    %4949 = vmatprep.subr.bf16.mxu0 %v4101
    %4950 = vmatpush1.bf16.msra.mxu0 %v4100
    %4951 = vmatprep.subr.bf16.mxu0 %v4107
    %4952 = vmatpush1.bf16.msra.mxu0 %v4106
    %4953 = vmatprep.subr.bf16.mxu0 %v4113
    %4954 = vmatpush1.bf16.msra.mxu0 %v4112
    %4955 = vmatprep.subr.bf16.mxu0 %v4119
    %4956 = vmatpush1.bf16.msra.mxu0 %v4118
    %4957 = vmatprep.mubr.bf16.mxu0 %v1592
    %4958 = vmatmul.mubr.bf16.gmra.mrb[0].mxu0 %v1591
    %v4959 = vpop.f32.mrb[0].mxu0
    %v4960 = vadd.f32 %v4917, %v4959
    %v4961 = vpop.f32.mrb[0].mxu0
    %v4962 = vadd.f32 %v4919, %v4961
    %v4963 = vpop.f32.mrb[0].mxu0
    %v4964 = vadd.f32 %v4921, %v4963
    %v4965 = vpop.f32.mrb[0].mxu0
    %v4966 = vadd.f32 %v4923, %v4965
    %4967 = vdwg.mxu0
    %4968 = vmatprep.subr.bf16.mxu0 %v4125
    %4969 = vmatpush1.bf16.msra.mxu0 %v4124
    %4970 = vmatprep.subr.bf16.mxu0 %v4131
    %4971 = vmatpush1.bf16.msra.mxu0 %v4130
    %4972 = vmatprep.subr.bf16.mxu0 %v4137
    %4973 = vmatpush1.bf16.msra.mxu0 %v4136
    %4974 = vmatprep.subr.bf16.mxu0 %v4143
    %4975 = vmatpush1.bf16.msra.mxu0 %v4142
    %4976 = vmatprep.subr.bf16.mxu0 %v4149
    %4977 = vmatpush1.bf16.msra.mxu0 %v4148
    %4978 = vmatprep.subr.bf16.mxu0 %v4155
    %4979 = vmatpush1.bf16.msra.mxu0 %v4154
    %4980 = vmatprep.subr.bf16.mxu0 %v4161
    %4981 = vmatpush1.bf16.msra.mxu0 %v4160
    %4982 = vmatprep.subr.bf16.mxu0 %v4167
    %4983 = vmatpush1.bf16.msra.mxu0 %v4166
    %4984 = vmatprep.subr.bf16.mxu0 %v4173
    %4985 = vmatpush1.bf16.msra.mxu0 %v4172
    %4986 = vmatprep.subr.bf16.mxu0 %v4179
    %4987 = vmatpush1.bf16.msra.mxu0 %v4178
    %4988 = vmatprep.subr.bf16.mxu0 %v4185
    %4989 = vmatpush1.bf16.msra.mxu0 %v4184
    %4990 = vmatprep.subr.bf16.mxu0 %v4191
    %4991 = vmatpush1.bf16.msra.mxu0 %v4190
    %4992 = vmatprep.subr.bf16.mxu0 %v4197
    %4993 = vmatpush1.bf16.msra.mxu0 %v4196
    %4994 = vmatprep.subr.bf16.mxu0 %v4203
    %4995 = vmatpush1.bf16.msra.mxu0 %v4202
    %4996 = vmatprep.subr.bf16.mxu0 %v4209
    %4997 = vmatpush1.bf16.msra.mxu0 %v4208
    %4998 = vmatprep.subr.bf16.mxu0 %v4215
    %4999 = vmatpush1.bf16.msra.mxu0 %v4214
    %5000 = vmatprep.mubr.bf16.mxu0 %v1594
    %5001 = vmatmul.mubr.bf16.gmra.mrb[0].mxu0 %v1593
    %v5002 = vpop.f32.mrb[0].mxu0
    %v5003 = vadd.f32 %v4960, %v5002
    %v5004 = vpop.f32.mrb[0].mxu0
    %v5005 = vadd.f32 %v4962, %v5004
    %v5006 = vpop.f32.mrb[0].mxu0
    %v5007 = vadd.f32 %v4964, %v5006
    %v5008 = vpop.f32.mrb[0].mxu0
    %v5009 = vadd.f32 %v4966, %v5008
    %5010 = vdwg.mxu0
    %5011 = vmatprep.subr.bf16.mxu0 %v4221
    %5012 = vmatpush1.bf16.msra.mxu0 %v4220
    %5013 = vmatprep.subr.bf16.mxu0 %v4227
    %5014 = vmatpush1.bf16.msra.mxu0 %v4226
    %5015 = vmatprep.subr.bf16.mxu0 %v4233
    %5016 = vmatpush1.bf16.msra.mxu0 %v4232
    %5017 = vmatprep.subr.bf16.mxu0 %v4239
    %5018 = vmatpush1.bf16.msra.mxu0 %v4238
    %5019 = vmatprep.subr.bf16.mxu0 %v4245
    %5020 = vmatpush1.bf16.msra.mxu0 %v4244
    %5021 = vmatprep.subr.bf16.mxu0 %v4251
    %5022 = vmatpush1.bf16.msra.mxu0 %v4250
    %5023 = vmatprep.subr.bf16.mxu0 %v4257
    %5024 = vmatpush1.bf16.msra.mxu0 %v4256
    %5025 = vmatprep.subr.bf16.mxu0 %v4263
    %5026 = vmatpush1.bf16.msra.mxu0 %v4262
    %5027 = vmatprep.subr.bf16.mxu0 0
    %5028 = vmatpush1.bf16.msra.mxu0 0
    %5029 = vmatprep.subr.bf16.mxu0 0
    %5030 = vmatpush1.bf16.msra.mxu0 0
    %5031 = vmatprep.subr.bf16.mxu0 0
    %5032 = vmatpush1.bf16.msra.mxu0 0
    %5033 = vmatprep.subr.bf16.mxu0 0
    %5034 = vmatpush1.bf16.msra.mxu0 0
    %5035 = vmatprep.subr.bf16.mxu0 0
    %5036 = vmatpush1.bf16.msra.mxu0 0
    %5037 = vmatprep.subr.bf16.mxu0 0
    %5038 = vmatpush1.bf16.msra.mxu0 0
    %5039 = vmatprep.subr.bf16.mxu0 0
    %5040 = vmatpush1.bf16.msra.mxu0 0
    %5041 = vmatprep.subr.bf16.mxu0 0
    %5042 = vmatpush1.bf16.msra.mxu0 0
    %5043 = vmatprep.mubr.bf16.mxu0 0
    %5044 = vmatmul.mubr.bf16.gmra.mrb[0].mxu0 %v1595
    %v5045 = vpop.f32.mrb[0].mxu0
    %v5046 = vadd.f32 %v5003, %v5045
    %v5047 = vpop.f32.mrb[0].mxu0
    %v5048 = vadd.f32 %v5005, %v5047
    %v5049 = vpop.f32.mrb[0].mxu0
    %v5050 = vadd.f32 %v5007, %v5049
    %v5051 = vpop.f32.mrb[0].mxu0
    %v5052 = vadd.f32 %v5009, %v5051
    %5053 = vdwg.mxu0
    %5054 = vmatprep.subr.bf16.mxu0 %v3743
    %5055 = vmatpush1.bf16.msra.mxu0 %v3742
    %5056 = vmatprep.subr.bf16.mxu0 %v3749
    %5057 = vmatpush1.bf16.msra.mxu0 %v3748
    %5058 = vmatprep.subr.bf16.mxu0 %v3755
    %5059 = vmatpush1.bf16.msra.mxu0 %v3754
    %5060 = vmatprep.subr.bf16.mxu0 %v3761
    %5061 = vmatpush1.bf16.msra.mxu0 %v3760
    %5062 = vmatprep.subr.bf16.mxu0 %v3767
    %5063 = vmatpush1.bf16.msra.mxu0 %v3766
    %5064 = vmatprep.subr.bf16.mxu0 %v3773
    %5065 = vmatpush1.bf16.msra.mxu0 %v3772
    %5066 = vmatprep.subr.bf16.mxu0 %v3779
    %5067 = vmatpush1.bf16.msra.mxu0 %v3778
    %5068 = vmatprep.subr.bf16.mxu0 %v3785
    %5069 = vmatpush1.bf16.msra.mxu0 %v3784
    %5070 = vmatprep.subr.bf16.mxu0 %v3791
    %5071 = vmatpush1.bf16.msra.mxu0 %v3790
    %5072 = vmatprep.subr.bf16.mxu0 %v3797
    %5073 = vmatpush1.bf16.msra.mxu0 %v3796
    %5074 = vmatprep.subr.bf16.mxu0 %v3803
    %5075 = vmatpush1.bf16.msra.mxu0 %v3802
    %5076 = vmatprep.subr.bf16.mxu0 %v3809
    %5077 = vmatpush1.bf16.msra.mxu0 %v3808
    %5078 = vmatprep.subr.bf16.mxu0 %v3815
    %5079 = vmatpush1.bf16.msra.mxu0 %v3814
    %5080 = vmatprep.subr.bf16.mxu0 %v3821
    %5081 = vmatpush1.bf16.msra.mxu0 %v3820
    %5082 = vmatprep.subr.bf16.mxu0 %v3827
    %5083 = vmatpush1.bf16.msra.mxu0 %v3826
    %5084 = vmatprep.subr.bf16.mxu0 %v3833
    %5085 = vmatpush1.bf16.msra.mxu0 %v3832
    %5086 = vmatprep.mubr.bf16.mxu0 %v1586
    %5087 = vmatmul.mubr.bf16.gmra.mrb[0].mxu0 %v1585
    %v5088 = vpop.f32.mrb[0].mxu0
    %v5089 = vadd.f32 %v2137, %v5088
    %v5090 = vpop.f32.mrb[0].mxu0
    %v5091 = vadd.f32 %v2141, %v5090
    %v5092 = vpop.f32.mrb[0].mxu0
    %v5093 = vadd.f32 %v2137, %v5092
    %v5094 = vpop.f32.mrb[0].mxu0
    %v5095 = vadd.f32 %v2141, %v5094
    %5096 = vdwg.mxu0
    %5097 = vmatprep.subr.bf16.mxu0 %v3839
    %5098 = vmatpush1.bf16.msra.mxu0 %v3838
    %5099 = vmatprep.subr.bf16.mxu0 %v3845
    %5100 = vmatpush1.bf16.msra.mxu0 %v3844
    %5101 = vmatprep.subr.bf16.mxu0 %v3851
    %5102 = vmatpush1.bf16.msra.mxu0 %v3850
    %5103 = vmatprep.subr.bf16.mxu0 %v3857
    %5104 = vmatpush1.bf16.msra.mxu0 %v3856
    %5105 = vmatprep.subr.bf16.mxu0 %v3863
    %5106 = vmatpush1.bf16.msra.mxu0 %v3862
    %5107 = vmatprep.subr.bf16.mxu0 %v3869
    %5108 = vmatpush1.bf16.msra.mxu0 %v3868
    %5109 = vmatprep.subr.bf16.mxu0 %v3875
    %5110 = vmatpush1.bf16.msra.mxu0 %v3874
    %5111 = vmatprep.subr.bf16.mxu0 %v3881
    %5112 = vmatpush1.bf16.msra.mxu0 %v3880
    %5113 = vmatprep.subr.bf16.mxu0 %v3887
    %5114 = vmatpush1.bf16.msra.mxu0 %v3886
    %5115 = vmatprep.subr.bf16.mxu0 %v3893
    %5116 = vmatpush1.bf16.msra.mxu0 %v3892
    %5117 = vmatprep.subr.bf16.mxu0 %v3899
    %5118 = vmatpush1.bf16.msra.mxu0 %v3898
    %5119 = vmatprep.subr.bf16.mxu0 %v3905
    %5120 = vmatpush1.bf16.msra.mxu0 %v3904
    %5121 = vmatprep.subr.bf16.mxu0 %v3911
    %5122 = vmatpush1.bf16.msra.mxu0 %v3910
    %5123 = vmatprep.subr.bf16.mxu0 %v3917
    %5124 = vmatpush1.bf16.msra.mxu0 %v3916
    %5125 = vmatprep.subr.bf16.mxu0 %v3923
    %5126 = vmatpush1.bf16.msra.mxu0 %v3922
    %5127 = vmatprep.subr.bf16.mxu0 %v3929
    %5128 = vmatpush1.bf16.msra.mxu0 %v3928
    %5129 = vmatprep.mubr.bf16.mxu0 %v1588
    %5130 = vmatmul.mubr.bf16.gmra.mrb[0].mxu0 %v1587
    %v5131 = vpop.f32.mrb[0].mxu0
    %v5132 = vadd.f32 %v5089, %v5131
    %v5133 = vpop.f32.mrb[0].mxu0
    %v5134 = vadd.f32 %v5091, %v5133
    %v5135 = vpop.f32.mrb[0].mxu0
    %v5136 = vadd.f32 %v5093, %v5135
    %v5137 = vpop.f32.mrb[0].mxu0
    %v5138 = vadd.f32 %v5095, %v5137
    %5139 = vdwg.mxu0
    %5140 = vmatprep.subr.bf16.mxu0 %v3935
    %5141 = vmatpush1.bf16.msra.mxu0 %v3934
    %5142 = vmatprep.subr.bf16.mxu0 %v3941
    %5143 = vmatpush1.bf16.msra.mxu0 %v3940
    %5144 = vmatprep.subr.bf16.mxu0 %v3947
    %5145 = vmatpush1.bf16.msra.mxu0 %v3946
    %5146 = vmatprep.subr.bf16.mxu0 %v3953
    %5147 = vmatpush1.bf16.msra.mxu0 %v3952
    %5148 = vmatprep.subr.bf16.mxu0 %v3959
    %5149 = vmatpush1.bf16.msra.mxu0 %v3958
    %5150 = vmatprep.subr.bf16.mxu0 %v3965
    %5151 = vmatpush1.bf16.msra.mxu0 %v3964
    %5152 = vmatprep.subr.bf16.mxu0 %v3971
    %5153 = vmatpush1.bf16.msra.mxu0 %v3970
    %5154 = vmatprep.subr.bf16.mxu0 %v3977
    %5155 = vmatpush1.bf16.msra.mxu0 %v3976
    %5156 = vmatprep.subr.bf16.mxu0 %v3983
    %5157 = vmatpush1.bf16.msra.mxu0 %v3982
    %5158 = vmatprep.subr.bf16.mxu0 %v3989
    %5159 = vmatpush1.bf16.msra.mxu0 %v3988
    %5160 = vmatprep.subr.bf16.mxu0 %v3995
    %5161 = vmatpush1.bf16.msra.mxu0 %v3994
    %5162 = vmatprep.subr.bf16.mxu0 %v4001
    %5163 = vmatpush1.bf16.msra.mxu0 %v4000
    %5164 = vmatprep.subr.bf16.mxu0 %v4007
    %5165 = vmatpush1.bf16.msra.mxu0 %v4006
    %5166 = vmatprep.subr.bf16.mxu0 %v4013
    %5167 = vmatpush1.bf16.msra.mxu0 %v4012
    %5168 = vmatprep.subr.bf16.mxu0 %v4019
    %5169 = vmatpush1.bf16.msra.mxu0 %v4018
    %5170 = vmatprep.subr.bf16.mxu0 %v4025
    %5171 = vmatpush1.bf16.msra.mxu0 %v4024
    %5172 = vmatprep.mubr.bf16.mxu0 %v1590
    %5173 = vmatmul.mubr.bf16.gmra.mrb[0].mxu0 %v1589
    %v5174 = vpop.f32.mrb[0].mxu0
    %v5175 = vadd.f32 %v5132, %v5174
    %v5176 = vpop.f32.mrb[0].mxu0
    %v5177 = vadd.f32 %v5134, %v5176
    %v5178 = vpop.f32.mrb[0].mxu0
    %v5179 = vadd.f32 %v5136, %v5178
    %v5180 = vpop.f32.mrb[0].mxu0
    %v5181 = vadd.f32 %v5138, %v5180
    %5182 = vdwg.mxu0
    %5183 = vmatprep.subr.bf16.mxu0 %v4031
    %5184 = vmatpush1.bf16.msra.mxu0 %v4030
    %5185 = vmatprep.subr.bf16.mxu0 %v4037
    %5186 = vmatpush1.bf16.msra.mxu0 %v4036
    %5187 = vmatprep.subr.bf16.mxu0 %v4043
    %5188 = vmatpush1.bf16.msra.mxu0 %v4042
    %5189 = vmatprep.subr.bf16.mxu0 %v4049
    %5190 = vmatpush1.bf16.msra.mxu0 %v4048
    %5191 = vmatprep.subr.bf16.mxu0 %v4055
    %5192 = vmatpush1.bf16.msra.mxu0 %v4054
    %5193 = vmatprep.subr.bf16.mxu0 %v4061
    %5194 = vmatpush1.bf16.msra.mxu0 %v4060
    %5195 = vmatprep.subr.bf16.mxu0 %v4067
    %5196 = vmatpush1.bf16.msra.mxu0 %v4066
    %5197 = vmatprep.subr.bf16.mxu0 %v4073
    %5198 = vmatpush1.bf16.msra.mxu0 %v4072
    %5199 = vmatprep.subr.bf16.mxu0 %v4079
    %5200 = vmatpush1.bf16.msra.mxu0 %v4078
    %5201 = vmatprep.subr.bf16.mxu0 %v4085
    %5202 = vmatpush1.bf16.msra.mxu0 %v4084
    %5203 = vmatprep.subr.bf16.mxu0 %v4091
    %5204 = vmatpush1.bf16.msra.mxu0 %v4090
    %5205 = vmatprep.subr.bf16.mxu0 %v4097
    %5206 = vmatpush1.bf16.msra.mxu0 %v4096
    %5207 = vmatprep.subr.bf16.mxu0 %v4103
    %5208 = vmatpush1.bf16.msra.mxu0 %v4102
    %5209 = vmatprep.subr.bf16.mxu0 %v4109
    %5210 = vmatpush1.bf16.msra.mxu0 %v4108
    %5211 = vmatprep.subr.bf16.mxu0 %v4115
    %5212 = vmatpush1.bf16.msra.mxu0 %v4114
    %5213 = vmatprep.subr.bf16.mxu0 %v4121
    %5214 = vmatpush1.bf16.msra.mxu0 %v4120
    %5215 = vmatprep.mubr.bf16.mxu0 %v1592
    %5216 = vmatmul.mubr.bf16.gmra.mrb[0].mxu0 %v1591
    %v5217 = vpop.f32.mrb[0].mxu0
    %v5218 = vadd.f32 %v5175, %v5217
    %v5219 = vpop.f32.mrb[0].mxu0
    %v5220 = vadd.f32 %v5177, %v5219
    %v5221 = vpop.f32.mrb[0].mxu0
    %v5222 = vadd.f32 %v5179, %v5221
    %v5223 = vpop.f32.mrb[0].mxu0
    %v5224 = vadd.f32 %v5181, %v5223
    %5225 = vdwg.mxu0
    %5226 = vmatprep.subr.bf16.mxu0 %v4127
    %5227 = vmatpush1.bf16.msra.mxu0 %v4126
    %5228 = vmatprep.subr.bf16.mxu0 %v4133
    %5229 = vmatpush1.bf16.msra.mxu0 %v4132
    %5230 = vmatprep.subr.bf16.mxu0 %v4139
    %5231 = vmatpush1.bf16.msra.mxu0 %v4138
    %5232 = vmatprep.subr.bf16.mxu0 %v4145
    %5233 = vmatpush1.bf16.msra.mxu0 %v4144
    %5234 = vmatprep.subr.bf16.mxu0 %v4151
    %5235 = vmatpush1.bf16.msra.mxu0 %v4150
    %5236 = vmatprep.subr.bf16.mxu0 %v4157
    %5237 = vmatpush1.bf16.msra.mxu0 %v4156
    %5238 = vmatprep.subr.bf16.mxu0 %v4163
    %5239 = vmatpush1.bf16.msra.mxu0 %v4162
    %5240 = vmatprep.subr.bf16.mxu0 %v4169
    %5241 = vmatpush1.bf16.msra.mxu0 %v4168
    %5242 = vmatprep.subr.bf16.mxu0 %v4175
    %5243 = vmatpush1.bf16.msra.mxu0 %v4174
    %5244 = vmatprep.subr.bf16.mxu0 %v4181
    %5245 = vmatpush1.bf16.msra.mxu0 %v4180
    %5246 = vmatprep.subr.bf16.mxu0 %v4187
    %5247 = vmatpush1.bf16.msra.mxu0 %v4186
    %5248 = vmatprep.subr.bf16.mxu0 %v4193
    %5249 = vmatpush1.bf16.msra.mxu0 %v4192
    %5250 = vmatprep.subr.bf16.mxu0 %v4199
    %5251 = vmatpush1.bf16.msra.mxu0 %v4198
    %5252 = vmatprep.subr.bf16.mxu0 %v4205
    %5253 = vmatpush1.bf16.msra.mxu0 %v4204
    %5254 = vmatprep.subr.bf16.mxu0 %v4211
    %5255 = vmatpush1.bf16.msra.mxu0 %v4210
    %5256 = vmatprep.subr.bf16.mxu0 %v4217
    %5257 = vmatpush1.bf16.msra.mxu0 %v4216
    %5258 = vmatprep.mubr.bf16.mxu0 %v1594
    %5259 = vmatmul.mubr.bf16.gmra.mrb[0].mxu0 %v1593
    %v5260 = vpop.f32.mrb[0].mxu0
    %v5261 = vadd.f32 %v5218, %v5260
    %v5262 = vpop.f32.mrb[0].mxu0
    %v5263 = vadd.f32 %v5220, %v5262
    %v5264 = vpop.f32.mrb[0].mxu0
    %v5265 = vadd.f32 %v5222, %v5264
    %v5266 = vpop.f32.mrb[0].mxu0
    %v5267 = vadd.f32 %v5224, %v5266
    %5268 = vdwg.mxu0
    %5269 = vmatprep.subr.bf16.mxu0 %v4223
    %5270 = vmatpush1.bf16.msra.mxu0 %v4222
    %5271 = vmatprep.subr.bf16.mxu0 %v4229
    %5272 = vmatpush1.bf16.msra.mxu0 %v4228
    %5273 = vmatprep.subr.bf16.mxu0 %v4235
    %5274 = vmatpush1.bf16.msra.mxu0 %v4234
    %5275 = vmatprep.subr.bf16.mxu0 %v4241
    %5276 = vmatpush1.bf16.msra.mxu0 %v4240
    %5277 = vmatprep.subr.bf16.mxu0 %v4247
    %5278 = vmatpush1.bf16.msra.mxu0 %v4246
    %5279 = vmatprep.subr.bf16.mxu0 %v4253
    %5280 = vmatpush1.bf16.msra.mxu0 %v4252
    %5281 = vmatprep.subr.bf16.mxu0 %v4259
    %5282 = vmatpush1.bf16.msra.mxu0 %v4258
    %5283 = vmatprep.subr.bf16.mxu0 %v4265
    %5284 = vmatpush1.bf16.msra.mxu0 %v4264
    %5285 = vmatprep.subr.bf16.mxu0 0
    %5286 = vmatpush1.bf16.msra.mxu0 0
    %5287 = vmatprep.subr.bf16.mxu0 0
    %5288 = vmatpush1.bf16.msra.mxu0 0
    %5289 = vmatprep.subr.bf16.mxu0 0
    %5290 = vmatpush1.bf16.msra.mxu0 0
    %5291 = vmatprep.subr.bf16.mxu0 0
    %5292 = vmatpush1.bf16.msra.mxu0 0
    %5293 = vmatprep.subr.bf16.mxu0 0
    %5294 = vmatpush1.bf16.msra.mxu0 0
    %5295 = vmatprep.subr.bf16.mxu0 0
    %5296 = vmatpush1.bf16.msra.mxu0 0
    %5297 = vmatprep.subr.bf16.mxu0 0
    %5298 = vmatpush1.bf16.msra.mxu0 0
    %5299 = vmatprep.subr.bf16.mxu0 0
    %5300 = vmatpush1.bf16.msra.mxu0 0
    %5301 = vmatprep.mubr.bf16.mxu0 0
    %5302 = vmatmul.mubr.bf16.gmra.mrb[0].mxu0 %v1595
    %v5303 = vpop.f32.mrb[0].mxu0
    %v5304 = vadd.f32 %v5261, %v5303
    %v5305 = vpop.f32.mrb[0].mxu0
    %v5306 = vadd.f32 %v5263, %v5305
    %v5307 = vpop.f32.mrb[0].mxu0
    %v5308 = vadd.f32 %v5265, %v5307
    %v5309 = vpop.f32.mrb[0].mxu0
    %v5310 = vadd.f32 %v5267, %v5309
    %5311 = vdwg.mxu0
    %5312 = vmatprep.subr.bf16.mxu0 %v3745
    %5313 = vmatpush1.bf16.msra.mxu0 %v3744
    %5314 = vmatprep.subr.bf16.mxu0 %v3751
    %5315 = vmatpush1.bf16.msra.mxu0 %v3750
    %5316 = vmatprep.subr.bf16.mxu0 %v3757
    %5317 = vmatpush1.bf16.msra.mxu0 %v3756
    %5318 = vmatprep.subr.bf16.mxu0 %v3763
    %5319 = vmatpush1.bf16.msra.mxu0 %v3762
    %5320 = vmatprep.subr.bf16.mxu0 %v3769
    %5321 = vmatpush1.bf16.msra.mxu0 %v3768
    %5322 = vmatprep.subr.bf16.mxu0 %v3775
    %5323 = vmatpush1.bf16.msra.mxu0 %v3774
    %5324 = vmatprep.subr.bf16.mxu0 %v3781
    %5325 = vmatpush1.bf16.msra.mxu0 %v3780
    %5326 = vmatprep.subr.bf16.mxu0 %v3787
    %5327 = vmatpush1.bf16.msra.mxu0 %v3786
    %5328 = vmatprep.subr.bf16.mxu0 %v3793
    %5329 = vmatpush1.bf16.msra.mxu0 %v3792
    %5330 = vmatprep.subr.bf16.mxu0 %v3799
    %5331 = vmatpush1.bf16.msra.mxu0 %v3798
    %5332 = vmatprep.subr.bf16.mxu0 %v3805
    %5333 = vmatpush1.bf16.msra.mxu0 %v3804
    %5334 = vmatprep.subr.bf16.mxu0 %v3811
    %5335 = vmatpush1.bf16.msra.mxu0 %v3810
    %5336 = vmatprep.subr.bf16.mxu0 %v3817
    %5337 = vmatpush1.bf16.msra.mxu0 %v3816
    %5338 = vmatprep.subr.bf16.mxu0 %v3823
    %5339 = vmatpush1.bf16.msra.mxu0 %v3822
    %5340 = vmatprep.subr.bf16.mxu0 %v3829
    %5341 = vmatpush1.bf16.msra.mxu0 %v3828
    %5342 = vmatprep.subr.bf16.mxu0 %v3835
    %5343 = vmatpush1.bf16.msra.mxu0 %v3834
    %5344 = vmatprep.mubr.bf16.mxu0 %v1586
    %5345 = vmatmul.mubr.bf16.gmra.mrb[0].mxu0 %v1585
    %v5346 = vpop.f32.mrb[0].mxu0
    %v5347 = vadd.f32 %v2145, %v5346
    %v5348 = vpop.f32.mrb[0].mxu0
    %v5349 = vadd.f32 %v2149, %v5348
    %v5350 = vpop.f32.mrb[0].mxu0
    %v5351 = vadd.f32 %v2145, %v5350
    %v5352 = vpop.f32.mrb[0].mxu0
    %v5353 = vadd.f32 %v2149, %v5352
    %5354 = vdwg.mxu0
    %5355 = vmatprep.subr.bf16.mxu0 %v3841
    %5356 = vmatpush1.bf16.msra.mxu0 %v3840
    %5357 = vmatprep.subr.bf16.mxu0 %v3847
    %5358 = vmatpush1.bf16.msra.mxu0 %v3846
    %5359 = vmatprep.subr.bf16.mxu0 %v3853
    %5360 = vmatpush1.bf16.msra.mxu0 %v3852
    %5361 = vmatprep.subr.bf16.mxu0 %v3859
    %5362 = vmatpush1.bf16.msra.mxu0 %v3858
    %5363 = vmatprep.subr.bf16.mxu0 %v3865
    %5364 = vmatpush1.bf16.msra.mxu0 %v3864
    %5365 = vmatprep.subr.bf16.mxu0 %v3871
    %5366 = vmatpush1.bf16.msra.mxu0 %v3870
    %5367 = vmatprep.subr.bf16.mxu0 %v3877
    %5368 = vmatpush1.bf16.msra.mxu0 %v3876
    %5369 = vmatprep.subr.bf16.mxu0 %v3883
    %5370 = vmatpush1.bf16.msra.mxu0 %v3882
    %5371 = vmatprep.subr.bf16.mxu0 %v3889
    %5372 = vmatpush1.bf16.msra.mxu0 %v3888
    %5373 = vmatprep.subr.bf16.mxu0 %v3895
    %5374 = vmatpush1.bf16.msra.mxu0 %v3894
    %5375 = vmatprep.subr.bf16.mxu0 %v3901
    %5376 = vmatpush1.bf16.msra.mxu0 %v3900
    %5377 = vmatprep.subr.bf16.mxu0 %v3907
    %5378 = vmatpush1.bf16.msra.mxu0 %v3906
    %5379 = vmatprep.subr.bf16.mxu0 %v3913
    %5380 = vmatpush1.bf16.msra.mxu0 %v3912
    %5381 = vmatprep.subr.bf16.mxu0 %v3919
    %5382 = vmatpush1.bf16.msra.mxu0 %v3918
    %5383 = vmatprep.subr.bf16.mxu0 %v3925
    %5384 = vmatpush1.bf16.msra.mxu0 %v3924
    %5385 = vmatprep.subr.bf16.mxu0 %v3931
    %5386 = vmatpush1.bf16.msra.mxu0 %v3930
    %5387 = vmatprep.mubr.bf16.mxu0 %v1588
    %5388 = vmatmul.mubr.bf16.gmra.mrb[0].mxu0 %v1587
    %v5389 = vpop.f32.mrb[0].mxu0
    %v5390 = vadd.f32 %v5347, %v5389
    %v5391 = vpop.f32.mrb[0].mxu0
    %v5392 = vadd.f32 %v5349, %v5391
    %v5393 = vpop.f32.mrb[0].mxu0
    %v5394 = vadd.f32 %v5351, %v5393
    %v5395 = vpop.f32.mrb[0].mxu0
    %v5396 = vadd.f32 %v5353, %v5395
    %5397 = vdwg.mxu0
    %5398 = vmatprep.subr.bf16.mxu0 %v3937
    %5399 = vmatpush1.bf16.msra.mxu0 %v3936
    %5400 = vmatprep.subr.bf16.mxu0 %v3943
    %5401 = vmatpush1.bf16.msra.mxu0 %v3942
    %5402 = vmatprep.subr.bf16.mxu0 %v3949
    %5403 = vmatpush1.bf16.msra.mxu0 %v3948
    %5404 = vmatprep.subr.bf16.mxu0 %v3955
    %5405 = vmatpush1.bf16.msra.mxu0 %v3954
    %5406 = vmatprep.subr.bf16.mxu0 %v3961
    %5407 = vmatpush1.bf16.msra.mxu0 %v3960
    %5408 = vmatprep.subr.bf16.mxu0 %v3967
    %5409 = vmatpush1.bf16.msra.mxu0 %v3966
    %5410 = vmatprep.subr.bf16.mxu0 %v3973
    %5411 = vmatpush1.bf16.msra.mxu0 %v3972
    %5412 = vmatprep.subr.bf16.mxu0 %v3979
    %5413 = vmatpush1.bf16.msra.mxu0 %v3978
    %5414 = vmatprep.subr.bf16.mxu0 %v3985
    %5415 = vmatpush1.bf16.msra.mxu0 %v3984
    %5416 = vmatprep.subr.bf16.mxu0 %v3991
    %5417 = vmatpush1.bf16.msra.mxu0 %v3990
    %5418 = vmatprep.subr.bf16.mxu0 %v3997
    %5419 = vmatpush1.bf16.msra.mxu0 %v3996
    %5420 = vmatprep.subr.bf16.mxu0 %v4003
    %5421 = vmatpush1.bf16.msra.mxu0 %v4002
    %5422 = vmatprep.subr.bf16.mxu0 %v4009
    %5423 = vmatpush1.bf16.msra.mxu0 %v4008
    %5424 = vmatprep.subr.bf16.mxu0 %v4015
    %5425 = vmatpush1.bf16.msra.mxu0 %v4014
    %5426 = vmatprep.subr.bf16.mxu0 %v4021
    %5427 = vmatpush1.bf16.msra.mxu0 %v4020
    %5428 = vmatprep.subr.bf16.mxu0 %v4027
    %5429 = vmatpush1.bf16.msra.mxu0 %v4026
    %5430 = vmatprep.mubr.bf16.mxu0 %v1590
    %5431 = vmatmul.mubr.bf16.gmra.mrb[0].mxu0 %v1589
    %v5432 = vpop.f32.mrb[0].mxu0
    %v5433 = vadd.f32 %v5390, %v5432
    %v5434 = vpop.f32.mrb[0].mxu0
    %v5435 = vadd.f32 %v5392, %v5434
    %v5436 = vpop.f32.mrb[0].mxu0
    %v5437 = vadd.f32 %v5394, %v5436
    %v5438 = vpop.f32.mrb[0].mxu0
    %v5439 = vadd.f32 %v5396, %v5438
    %5440 = vdwg.mxu0
    %5441 = vmatprep.subr.bf16.mxu0 %v4033
    %5442 = vmatpush1.bf16.msra.mxu0 %v4032
    %5443 = vmatprep.subr.bf16.mxu0 %v4039
    %5444 = vmatpush1.bf16.msra.mxu0 %v4038
    %5445 = vmatprep.subr.bf16.mxu0 %v4045
    %5446 = vmatpush1.bf16.msra.mxu0 %v4044
    %5447 = vmatprep.subr.bf16.mxu0 %v4051
    %5448 = vmatpush1.bf16.msra.mxu0 %v4050
    %5449 = vmatprep.subr.bf16.mxu0 %v4057
    %5450 = vmatpush1.bf16.msra.mxu0 %v4056
    %5451 = vmatprep.subr.bf16.mxu0 %v4063
    %5452 = vmatpush1.bf16.msra.mxu0 %v4062
    %5453 = vmatprep.subr.bf16.mxu0 %v4069
    %5454 = vmatpush1.bf16.msra.mxu0 %v4068
    %5455 = vmatprep.subr.bf16.mxu0 %v4075
    %5456 = vmatpush1.bf16.msra.mxu0 %v4074
    %5457 = vmatprep.subr.bf16.mxu0 %v4081
    %5458 = vmatpush1.bf16.msra.mxu0 %v4080
    %5459 = vmatprep.subr.bf16.mxu0 %v4087
    %5460 = vmatpush1.bf16.msra.mxu0 %v4086
    %5461 = vmatprep.subr.bf16.mxu0 %v4093
    %5462 = vmatpush1.bf16.msra.mxu0 %v4092
    %5463 = vmatprep.subr.bf16.mxu0 %v4099
    %5464 = vmatpush1.bf16.msra.mxu0 %v4098
    %5465 = vmatprep.subr.bf16.mxu0 %v4105
    %5466 = vmatpush1.bf16.msra.mxu0 %v4104
    %5467 = vmatprep.subr.bf16.mxu0 %v4111
    %5468 = vmatpush1.bf16.msra.mxu0 %v4110
    %5469 = vmatprep.subr.bf16.mxu0 %v4117
    %5470 = vmatpush1.bf16.msra.mxu0 %v4116
    %5471 = vmatprep.subr.bf16.mxu0 %v4123
    %5472 = vmatpush1.bf16.msra.mxu0 %v4122
    %5473 = vmatprep.mubr.bf16.mxu0 %v1592
    %5474 = vmatmul.mubr.bf16.gmra.mrb[0].mxu0 %v1591
    %v5475 = vpop.f32.mrb[0].mxu0
    %v5476 = vadd.f32 %v5433, %v5475
    %v5477 = vpop.f32.mrb[0].mxu0
    %v5478 = vadd.f32 %v5435, %v5477
    %v5479 = vpop.f32.mrb[0].mxu0
    %v5480 = vadd.f32 %v5437, %v5479
    %v5481 = vpop.f32.mrb[0].mxu0
    %v5482 = vadd.f32 %v5439, %v5481
    %5483 = vdwg.mxu0
    %5484 = vmatprep.subr.bf16.mxu0 %v4129
    %5485 = vmatpush1.bf16.msra.mxu0 %v4128
    %5486 = vmatprep.subr.bf16.mxu0 %v4135
    %5487 = vmatpush1.bf16.msra.mxu0 %v4134
    %5488 = vmatprep.subr.bf16.mxu0 %v4141
    %5489 = vmatpush1.bf16.msra.mxu0 %v4140
    %5490 = vmatprep.subr.bf16.mxu0 %v4147
    %5491 = vmatpush1.bf16.msra.mxu0 %v4146
    %5492 = vmatprep.subr.bf16.mxu0 %v4153
    %5493 = vmatpush1.bf16.msra.mxu0 %v4152
    %5494 = vmatprep.subr.bf16.mxu0 %v4159
    %5495 = vmatpush1.bf16.msra.mxu0 %v4158
    %5496 = vmatprep.subr.bf16.mxu0 %v4165
    %5497 = vmatpush1.bf16.msra.mxu0 %v4164
    %5498 = vmatprep.subr.bf16.mxu0 %v4171
    %5499 = vmatpush1.bf16.msra.mxu0 %v4170
    %5500 = vmatprep.subr.bf16.mxu0 %v4177
    %5501 = vmatpush1.bf16.msra.mxu0 %v4176
    %5502 = vmatprep.subr.bf16.mxu0 %v4183
    %5503 = vmatpush1.bf16.msra.mxu0 %v4182
    %5504 = vmatprep.subr.bf16.mxu0 %v4189
    %5505 = vmatpush1.bf16.msra.mxu0 %v4188
    %5506 = vmatprep.subr.bf16.mxu0 %v4195
    %5507 = vmatpush1.bf16.msra.mxu0 %v4194
    %5508 = vmatprep.subr.bf16.mxu0 %v4201
    %5509 = vmatpush1.bf16.msra.mxu0 %v4200
    %5510 = vmatprep.subr.bf16.mxu0 %v4207
    %5511 = vmatpush1.bf16.msra.mxu0 %v4206
    %5512 = vmatprep.subr.bf16.mxu0 %v4213
    %5513 = vmatpush1.bf16.msra.mxu0 %v4212
    %5514 = vmatprep.subr.bf16.mxu0 %v4219
    %5515 = vmatpush1.bf16.msra.mxu0 %v4218
    %5516 = vmatprep.mubr.bf16.mxu0 %v1594
    %5517 = vmatmul.mubr.bf16.gmra.mrb[0].mxu0 %v1593
    %v5518 = vpop.f32.mrb[0].mxu0
    %v5519 = vadd.f32 %v5476, %v5518
    %v5520 = vpop.f32.mrb[0].mxu0
    %v5521 = vadd.f32 %v5478, %v5520
    %v5522 = vpop.f32.mrb[0].mxu0
    %v5523 = vadd.f32 %v5480, %v5522
    %v5524 = vpop.f32.mrb[0].mxu0
    %v5525 = vadd.f32 %v5482, %v5524
    %5526 = vdwg.mxu0
    %5527 = vmatprep.subr.bf16.mxu0 %v4225
    %5528 = vmatpush1.bf16.msra.mxu0 %v4224
    %5529 = vmatprep.subr.bf16.mxu0 %v4231
    %5530 = vmatpush1.bf16.msra.mxu0 %v4230
    %5531 = vmatprep.subr.bf16.mxu0 %v4237
    %5532 = vmatpush1.bf16.msra.mxu0 %v4236
    %5533 = vmatprep.subr.bf16.mxu0 %v4243
    %5534 = vmatpush1.bf16.msra.mxu0 %v4242
    %5535 = vmatprep.subr.bf16.mxu0 %v4249
    %5536 = vmatpush1.bf16.msra.mxu0 %v4248
    %5537 = vmatprep.subr.bf16.mxu0 %v4255
    %5538 = vmatpush1.bf16.msra.mxu0 %v4254
    %5539 = vmatprep.subr.bf16.mxu0 %v4261
    %5540 = vmatpush1.bf16.msra.mxu0 %v4260
    %5541 = vmatprep.subr.bf16.mxu0 %v4267
    %5542 = vmatpush1.bf16.msra.mxu0 %v4266
    %5543 = vmatprep.subr.bf16.mxu0 0
    %5544 = vmatpush1.bf16.msra.mxu0 0
    %5545 = vmatprep.subr.bf16.mxu0 0
    %5546 = vmatpush1.bf16.msra.mxu0 0
    %5547 = vmatprep.subr.bf16.mxu0 0
    %5548 = vmatpush1.bf16.msra.mxu0 0
    %5549 = vmatprep.subr.bf16.mxu0 0
    %5550 = vmatpush1.bf16.msra.mxu0 0
    %5551 = vmatprep.subr.bf16.mxu0 0
    %5552 = vmatpush1.bf16.msra.mxu0 0
    %5553 = vmatprep.subr.bf16.mxu0 0
    %5554 = vmatpush1.bf16.msra.mxu0 0
    %5555 = vmatprep.subr.bf16.mxu0 0
    %5556 = vmatpush1.bf16.msra.mxu0 0
    %5557 = vmatprep.subr.bf16.mxu0 0
    %5558 = vmatpush1.bf16.msra.mxu0 0
    %5559 = vmatprep.mubr.bf16.mxu0 0
    %5560 = vmatmul.mubr.bf16.gmra.mrb[0].mxu0 %v1595
    %v5561 = vpop.f32.mrb[0].mxu0
    %v5562 = vadd.f32 %v5519, %v5561
    %v5563 = vpop.f32.mrb[0].mxu0
    %v5564 = vadd.f32 %v5521, %v5563
    %v5565 = vpop.f32.mrb[0].mxu0
    %v5566 = vadd.f32 %v5523, %v5565
    %v5567 = vpop.f32.mrb[0].mxu0
    %v5568 = vadd.f32 %v5525, %v5567
    %5569 = vdwg.mxu0
    %v5570 = vmax.f32 %v5046, 0.0
    %v5571 = vmax.f32 %v5048, 0.0
    %v5572 = vmax.f32 %v5304, 0.0
    %v5573 = vmax.f32 %v5306, 0.0
    %v5574 = vmax.f32 %v5562, 0.0
    %v5575 = vmax.f32 %v5564, 0.0
    %v5576 = vmax.f32 %v5050, 0.0
    %v5577 = vmax.f32 %v5052, 0.0
    %v5578 = vmax.f32 %v5308, 0.0
    %v5579 = vmax.f32 %v5310, 0.0
    %v5580 = vmax.f32 %v5566, 0.0
    %v5581 = vmax.f32 %v5568, 0.0
    %v5582 = vpack.c.bf16 %v5576, %v5570
    %v5583 = vpack.c.bf16 %v5577, %v5571
    %v5584 = vpack.c.bf16 %v5578, %v5572
    %v5585 = vpack.c.bf16 %v5579, %v5573
    %v5586 = vpack.c.bf16 %v5580, %v5574
    %v5587 = vpack.c.bf16 %v5581, %v5575
    %v5588 = vld [vmem:[#allocation11] sm:$0xff]
    %v5589 = vld [vmem:[#allocation11 + $0x8] sm:$0xf]
    %v5590 = vld [vmem:[#allocation11 + $0xc] sm:$0xff]
    %v5591 = vld [vmem:[#allocation11 + $0x14] sm:$0xf]
    %v5592 = vld [vmem:[#allocation11 + $0x18] sm:$0xff]
    %v5593 = vld [vmem:[#allocation11 + $0x20] sm:$0xf]
    %v5594 = vld [vmem:[#allocation11 + $0x24] sm:$0xff]
    %v5595 = vld [vmem:[#allocation11 + $0x2c] sm:$0xf]
    %v5596 = vld [vmem:[#allocation11 + $0x30] sm:$0xff]
    %v5597 = vld [vmem:[#allocation11 + $0x38] sm:$0xf]
    %v5598 = vld [vmem:[#allocation11 + $0x3c] sm:$0xff]
    %v5599 = vld [vmem:[#allocation11 + $0x44] sm:$0xf]
    %v5600 = vld [vmem:[#allocation11 + $0x48] sm:$0xff]
    %v5601 = vld [vmem:[#allocation11 + $0x50] sm:$0xf]
    %v5602 = vld [vmem:[#allocation11 + $0x54] sm:$0xff]
    %v5603 = vld [vmem:[#allocation11 + $0x5c] sm:$0xf]
    %v5604 = vld [vmem:[#allocation11 + $0x60] sm:$0xff]
    %v5605 = vld [vmem:[#allocation11 + $0x68] sm:$0xf]
    %v5606 = vld [vmem:[#allocation11 + $0x6c] sm:$0xff]
    %v5607 = vld [vmem:[#allocation11 + $0x74] sm:$0xf]
    %v5608 = vld [vmem:[#allocation11 + $0x78] sm:$0xff]
    %v5609 = vld [vmem:[#allocation11 + $0x80] sm:$0xf]
    %v5610 = vld [vmem:[#allocation11 + $0x84] sm:$0xff]
    %v5611 = vld [vmem:[#allocation11 + $0x8c] sm:$0xf]
    %v5612 = vld [vmem:[#allocation11 + $0x90] sm:$0xff]
    %v5613 = vld [vmem:[#allocation11 + $0x98] sm:$0xf]
    %v5614 = vld [vmem:[#allocation11 + $0x9c] sm:$0xff]
    %v5615 = vld [vmem:[#allocation11 + $0xa4] sm:$0xf]
    %v5616 = vld [vmem:[#allocation11 + $0xa8] sm:$0xff]
    %v5617 = vld [vmem:[#allocation11 + $0xb0] sm:$0xf]
    %v5618 = vld [vmem:[#allocation11 + $0xb4] sm:$0xff]
    %v5619 = vld [vmem:[#allocation11 + $0xbc] sm:$0xf]
    %v5620 = vld [vmem:[#allocation11 + $0xc0] sm:$0xff]
    %v5621 = vld [vmem:[#allocation11 + $0xc8] sm:$0xf]
    %v5622 = vld [vmem:[#allocation11 + $0xcc] sm:$0xff]
    %v5623 = vld [vmem:[#allocation11 + $0xd4] sm:$0xf]
    %v5624 = vld [vmem:[#allocation11 + $0xd8] sm:$0xff]
    %v5625 = vld [vmem:[#allocation11 + $0xe0] sm:$0xf]
    %v5626 = vld [vmem:[#allocation11 + $0xe4] sm:$0xff]
    %v5627 = vld [vmem:[#allocation11 + $0xec] sm:$0xf]
    %v5628 = vld [vmem:[#allocation11 + $0xf0] sm:$0xff]
    %v5629 = vld [vmem:[#allocation11 + $0xf8] sm:$0xf]
    %v5630 = vld [vmem:[#allocation11 + $0xfc] sm:$0xff]
    %v5631 = vld [vmem:[#allocation11 + $0x104] sm:$0xf]
    %v5632 = vld [vmem:[#allocation11 + $0x108] sm:$0xff]
    %v5633 = vld [vmem:[#allocation11 + $0x110] sm:$0xf]
    %v5634 = vld [vmem:[#allocation11 + $0x114] sm:$0xff]
    %v5635 = vld [vmem:[#allocation11 + $0x11c] sm:$0xf]
    %v5636 = vld [vmem:[#allocation11 + $0x120] sm:$0xff]
    %v5637 = vld [vmem:[#allocation11 + $0x128] sm:$0xf]
    %v5638 = vld [vmem:[#allocation11 + $0x12c] sm:$0xff]
    %v5639 = vld [vmem:[#allocation11 + $0x134] sm:$0xf]
    %v5640 = vld [vmem:[#allocation11 + $0x138] sm:$0xff]
    %v5641 = vld [vmem:[#allocation11 + $0x140] sm:$0xf]
    %v5642 = vld [vmem:[#allocation11 + $0x144] sm:$0xff]
    %v5643 = vld [vmem:[#allocation11 + $0x14c] sm:$0xf]
    %v5644 = vld [vmem:[#allocation11 + $0x150] sm:$0xff]
    %v5645 = vld [vmem:[#allocation11 + $0x158] sm:$0xf]
    %v5646 = vld [vmem:[#allocation11 + $0x15c] sm:$0xff]
    %v5647 = vld [vmem:[#allocation11 + $0x164] sm:$0xf]
    %v5648 = vld [vmem:[#allocation11 + $0x168] sm:$0xff]
    %v5649 = vld [vmem:[#allocation11 + $0x170] sm:$0xf]
    %v5650 = vld [vmem:[#allocation11 + $0x174] sm:$0xff]
    %v5651 = vld [vmem:[#allocation11 + $0x17c] sm:$0xf]
    %v5652 = vld [vmem:[#allocation11 + $0x180] sm:$0xff]
    %v5653 = vld [vmem:[#allocation11 + $0x188] sm:$0xf]
    %v5654 = vld [vmem:[#allocation11 + $0x18c] sm:$0xff]
    %v5655 = vld [vmem:[#allocation11 + $0x194] sm:$0xf]
    %v5656 = vld [vmem:[#allocation11 + $0x198] sm:$0xff]
    %v5657 = vld [vmem:[#allocation11 + $0x1a0] sm:$0xf]
    %v5658 = vld [vmem:[#allocation11 + $0x1a4] sm:$0xff]
    %v5659 = vld [vmem:[#allocation11 + $0x1ac] sm:$0xf]
    %v5660 = vld [vmem:[#allocation11 + $0x1b0] sm:$0xff]
    %v5661 = vld [vmem:[#allocation11 + $0x1b8] sm:$0xf]
    %v5662 = vld [vmem:[#allocation11 + $0x1bc] sm:$0xff]
    %v5663 = vld [vmem:[#allocation11 + $0x1c4] sm:$0xf]
    %v5664 = vld [vmem:[#allocation11 + $0x1c8] sm:$0xff]
    %v5665 = vld [vmem:[#allocation11 + $0x1d0] sm:$0xf]
    %v5666 = vld [vmem:[#allocation11 + $0x1d4] sm:$0xff]
    %v5667 = vld [vmem:[#allocation11 + $0x1dc] sm:$0xf]
    %v5668 = vld [vmem:[#allocation11 + $0x1e0] sm:$0xff]
    %v5669 = vld [vmem:[#allocation11 + $0x1e8] sm:$0xf]
    %v5670 = vld [vmem:[#allocation11 + $0x1ec] sm:$0xff]
    %v5671 = vld [vmem:[#allocation11 + $0x1f4] sm:$0xf]
    %v5672 = vld [vmem:[#allocation11 + $0x1f8] sm:$0xff]
    %v5673 = vld [vmem:[#allocation11 + $0x200] sm:$0xf]
    %v5674 = vld [vmem:[#allocation11 + $0x204] sm:$0xff]
    %v5675 = vld [vmem:[#allocation11 + $0x20c] sm:$0xf]
    %v5676 = vld [vmem:[#allocation11 + $0x210] sm:$0xff]
    %v5677 = vld [vmem:[#allocation11 + $0x218] sm:$0xf]
    %v5678 = vld [vmem:[#allocation11 + $0x21c] sm:$0xff]
    %v5679 = vld [vmem:[#allocation11 + $0x224] sm:$0xf]
    %v5680 = vld [vmem:[#allocation11 + $0x228] sm:$0xff]
    %v5681 = vld [vmem:[#allocation11 + $0x230] sm:$0xf]
    %v5682 = vld [vmem:[#allocation11 + $0x234] sm:$0xff]
    %v5683 = vld [vmem:[#allocation11 + $0x23c] sm:$0xf]
    %v5684 = vld [vmem:[#allocation11 + $0x240] sm:$0xff]
    %v5685 = vld [vmem:[#allocation11 + $0x248] sm:$0xf]
    %v5686 = vld [vmem:[#allocation11 + $0x24c] sm:$0xff]
    %v5687 = vld [vmem:[#allocation11 + $0x254] sm:$0xf]
    %v5688 = vld [vmem:[#allocation11 + $0x258] sm:$0xff]
    %v5689 = vld [vmem:[#allocation11 + $0x260] sm:$0xf]
    %v5690 = vld [vmem:[#allocation11 + $0x264] sm:$0xff]
    %v5691 = vld [vmem:[#allocation11 + $0x26c] sm:$0xf]
    %v5692 = vld [vmem:[#allocation11 + $0x270] sm:$0xff]
    %v5693 = vld [vmem:[#allocation11 + $0x278] sm:$0xf]
    %v5694 = vld [vmem:[#allocation11 + $0x27c] sm:$0xff]
    %v5695 = vld [vmem:[#allocation11 + $0x284] sm:$0xf]
    %v5696 = vld [vmem:[#allocation11 + $0x288] sm:$0xff]
    %v5697 = vld [vmem:[#allocation11 + $0x290] sm:$0xf]
    %v5698 = vld [vmem:[#allocation11 + $0x294] sm:$0xff]
    %v5699 = vld [vmem:[#allocation11 + $0x29c] sm:$0xf]
    %v5700 = vld [vmem:[#allocation11 + $0x2a0] sm:$0xff]
    %v5701 = vld [vmem:[#allocation11 + $0x2a8] sm:$0xf]
    %v5702 = vld [vmem:[#allocation11 + $0x2ac] sm:$0xff]
    %v5703 = vld [vmem:[#allocation11 + $0x2b4] sm:$0xf]
    %v5704 = vld [vmem:[#allocation11 + $0x2b8] sm:$0xff]
    %v5705 = vld [vmem:[#allocation11 + $0x2c0] sm:$0xf]
    %v5706 = vld [vmem:[#allocation11 + $0x2c4] sm:$0xff]
    %v5707 = vld [vmem:[#allocation11 + $0x2cc] sm:$0xf]
    %v5708 = vld [vmem:[#allocation11 + $0x2d0] sm:$0xff]
    %v5709 = vld [vmem:[#allocation11 + $0x2d8] sm:$0xf]
    %v5710 = vld [vmem:[#allocation11 + $0x2dc] sm:$0xff]
    %v5711 = vld [vmem:[#allocation11 + $0x2e4] sm:$0xf]
    %v5712 = vld [vmem:[#allocation11 + $0x2e8] sm:$0xff]
    %v5713 = vld [vmem:[#allocation11 + $0x2f0] sm:$0xf]
    %v5714 = vld [vmem:[#allocation11 + $0x2f4] sm:$0xff]
    %v5715 = vld [vmem:[#allocation11 + $0x2fc] sm:$0xf]
    %v5716 = vld [vmem:[#allocation11 + $0x300] sm:$0xff]
    %v5717 = vld [vmem:[#allocation11 + $0x308] sm:$0xf]
    %v5718 = vld [vmem:[#allocation11 + $0x30c] sm:$0xff]
    %v5719 = vld [vmem:[#allocation11 + $0x314] sm:$0xf]
    %v5720 = vld [vmem:[#allocation11 + $0x318] sm:$0xff]
    %v5721 = vld [vmem:[#allocation11 + $0x320] sm:$0xf]
    %v5722 = vld [vmem:[#allocation11 + $0x324] sm:$0xff]
    %v5723 = vld [vmem:[#allocation11 + $0x32c] sm:$0xf]
    %v5724 = vld [vmem:[#allocation11 + $0x330] sm:$0xff]
    %v5725 = vld [vmem:[#allocation11 + $0x338] sm:$0xf]
    %v5726 = vld [vmem:[#allocation11 + $0x33c] sm:$0xff]
    %v5727 = vld [vmem:[#allocation11 + $0x344] sm:$0xf]
    %v5728 = vld [vmem:[#allocation11 + $0x348] sm:$0xff]
    %v5729 = vld [vmem:[#allocation11 + $0x350] sm:$0xf]
    %v5730 = vld [vmem:[#allocation11 + $0x354] sm:$0xff]
    %v5731 = vld [vmem:[#allocation11 + $0x35c] sm:$0xf]
    %v5732 = vld [vmem:[#allocation11 + $0x360] sm:$0xff]
    %v5733 = vld [vmem:[#allocation11 + $0x368] sm:$0xf]
    %v5734 = vld [vmem:[#allocation11 + $0x36c] sm:$0xff]
    %v5735 = vld [vmem:[#allocation11 + $0x374] sm:$0xf]
    %v5736 = vld [vmem:[#allocation11 + $0x378] sm:$0xff]
    %v5737 = vld [vmem:[#allocation11 + $0x380] sm:$0xf]
    %v5738 = vld [vmem:[#allocation11 + $0x384] sm:$0xff]
    %v5739 = vld [vmem:[#allocation11 + $0x38c] sm:$0xf]
    %v5740 = vld [vmem:[#allocation11 + $0x390] sm:$0xff]
    %v5741 = vld [vmem:[#allocation11 + $0x398] sm:$0xf]
    %v5742 = vld [vmem:[#allocation11 + $0x39c] sm:$0xff]
    %v5743 = vld [vmem:[#allocation11 + $0x3a4] sm:$0xf]
    %v5744 = vld [vmem:[#allocation11 + $0x3a8] sm:$0xff]
    %v5745 = vld [vmem:[#allocation11 + $0x3b0] sm:$0xf]
    %v5746 = vld [vmem:[#allocation11 + $0x3b4] sm:$0xff]
    %v5747 = vld [vmem:[#allocation11 + $0x3bc] sm:$0xf]
    %v5748 = vld [vmem:[#allocation11 + $0x3c0] sm:$0xff]
    %v5749 = vld [vmem:[#allocation11 + $0x3c8] sm:$0xf]
    %v5750 = vld [vmem:[#allocation11 + $0x3cc] sm:$0xff]
    %v5751 = vld [vmem:[#allocation11 + $0x3d4] sm:$0xf]
    %v5752 = vld [vmem:[#allocation11 + $0x3d8] sm:$0xff]
    %v5753 = vld [vmem:[#allocation11 + $0x3e0] sm:$0xf]
    %v5754 = vld [vmem:[#allocation11 + $0x3e4] sm:$0xff]
    %v5755 = vld [vmem:[#allocation11 + $0x3ec] sm:$0xf]
    %v5756 = vld [vmem:[#allocation11 + $0x3f0] sm:$0xff]
    %v5757 = vld [vmem:[#allocation11 + $0x3f8] sm:$0xf]
    %v5758 = vld [vmem:[#allocation11 + $0x3fc] sm:$0xff]
    %v5759 = vld [vmem:[#allocation11 + $0x404] sm:$0xf]
    %v5760 = vld [vmem:[#allocation11 + $0x408] sm:$0xff]
    %v5761 = vld [vmem:[#allocation11 + $0x410] sm:$0xf]
    %v5762 = vld [vmem:[#allocation11 + $0x414] sm:$0xff]
    %v5763 = vld [vmem:[#allocation11 + $0x41c] sm:$0xf]
    %v5764 = vld [vmem:[#allocation11 + $0x420] sm:$0xff]
    %v5765 = vld [vmem:[#allocation11 + $0x428] sm:$0xf]
    %v5766 = vld [vmem:[#allocation11 + $0x42c] sm:$0xff]
    %v5767 = vld [vmem:[#allocation11 + $0x434] sm:$0xf]
    %v5768 = vld [vmem:[#allocation11 + $0x438] sm:$0xff]
    %v5769 = vld [vmem:[#allocation11 + $0x440] sm:$0xf]
    %v5770 = vld [vmem:[#allocation11 + $0x444] sm:$0xff]
    %v5771 = vld [vmem:[#allocation11 + $0x44c] sm:$0xf]
    %v5772 = vld [vmem:[#allocation11 + $0x450] sm:$0xff]
    %v5773 = vld [vmem:[#allocation11 + $0x458] sm:$0xf]
    %v5774 = vld [vmem:[#allocation11 + $0x45c] sm:$0xff]
    %v5775 = vld [vmem:[#allocation11 + $0x464] sm:$0xf]
    %v5776 = vld [vmem:[#allocation11 + $0x468] sm:$0xff]
    %v5777 = vld [vmem:[#allocation11 + $0x470] sm:$0xf]
    %v5778 = vld [vmem:[#allocation11 + $0x474] sm:$0xff]
    %v5779 = vld [vmem:[#allocation11 + $0x47c] sm:$0xf]
    %v5780 = vld [vmem:[#allocation13] sm:$0x7]
    %v5782 = vlaneseq
    %v5783 = vshrl.u32 %v5782, 7
    %v5784 = vsub.s32 0, %v5783
    %v5785 = vrot.slane %v5780, %v5784
    %v5786 = vlaneseq
    %v5787 = vshrl.u32 %v5786, 7
    %v5788 = vsub.s32 1, %v5787
    %v5789 = vrot.slane %v5780, %v5788
    %v5790 = vlaneseq
    %v5791 = vshrl.u32 %v5790, 7
    %v5792 = vsub.s32 2, %v5791
    %v5793 = vrot.slane %v5780, %v5792
    %v5989 = vunpack.c.l.b16 %v5588
    %v5990 = vunpack.c.h.b16 %v5588
    %v5991 = vunpack.c.l.b16 %v5589
    %v5992 = vunpack.c.l.b16 %v5590
    %v5993 = vunpack.c.h.b16 %v5590
    %v5994 = vunpack.c.l.b16 %v5591
    %v5995 = vunpack.c.l.b16 %v5592
    %v5996 = vunpack.c.h.b16 %v5592
    %v5997 = vunpack.c.l.b16 %v5593
    %v5998 = vunpack.c.l.b16 %v5594
    %v5999 = vunpack.c.h.b16 %v5594
    %v6000 = vunpack.c.l.b16 %v5595
    %v6001 = vunpack.c.l.b16 %v5596
    %v6002 = vunpack.c.h.b16 %v5596
    %v6003 = vunpack.c.l.b16 %v5597
    %v6004 = vunpack.c.l.b16 %v5598
    %v6005 = vunpack.c.h.b16 %v5598
    %v6006 = vunpack.c.l.b16 %v5599
    %v6007 = vunpack.c.l.b16 %v5600
    %v6008 = vunpack.c.h.b16 %v5600
    %v6009 = vunpack.c.l.b16 %v5601
    %v6010 = vunpack.c.l.b16 %v5602
    %v6011 = vunpack.c.h.b16 %v5602
    %v6012 = vunpack.c.l.b16 %v5603
    %v6013 = vunpack.c.l.b16 %v5604
    %v6014 = vunpack.c.h.b16 %v5604
    %v6015 = vunpack.c.l.b16 %v5605
    %v6016 = vunpack.c.l.b16 %v5606
    %v6017 = vunpack.c.h.b16 %v5606
    %v6018 = vunpack.c.l.b16 %v5607
    %v6019 = vunpack.c.l.b16 %v5608
    %v6020 = vunpack.c.h.b16 %v5608
    %v6021 = vunpack.c.l.b16 %v5609
    %v6022 = vunpack.c.l.b16 %v5610
    %v6023 = vunpack.c.h.b16 %v5610
    %v6024 = vunpack.c.l.b16 %v5611
    %v6025 = vunpack.c.l.b16 %v5612
    %v6026 = vunpack.c.h.b16 %v5612
    %v6027 = vunpack.c.l.b16 %v5613
    %v6028 = vunpack.c.l.b16 %v5614
    %v6029 = vunpack.c.h.b16 %v5614
    %v6030 = vunpack.c.l.b16 %v5615
    %v6031 = vunpack.c.l.b16 %v5616
    %v6032 = vunpack.c.h.b16 %v5616
    %v6033 = vunpack.c.l.b16 %v5617
    %v6034 = vunpack.c.l.b16 %v5618
    %v6035 = vunpack.c.h.b16 %v5618
    %v6036 = vunpack.c.l.b16 %v5619
    %v6037 = vunpack.c.l.b16 %v5620
    %v6038 = vunpack.c.h.b16 %v5620
    %v6039 = vunpack.c.l.b16 %v5621
    %v6040 = vunpack.c.l.b16 %v5622
    %v6041 = vunpack.c.h.b16 %v5622
    %v6042 = vunpack.c.l.b16 %v5623
    %v6043 = vunpack.c.l.b16 %v5624
    %v6044 = vunpack.c.h.b16 %v5624
    %v6045 = vunpack.c.l.b16 %v5625
    %v6046 = vunpack.c.l.b16 %v5626
    %v6047 = vunpack.c.h.b16 %v5626
    %v6048 = vunpack.c.l.b16 %v5627
    %v6049 = vunpack.c.l.b16 %v5628
    %v6050 = vunpack.c.h.b16 %v5628
    %v6051 = vunpack.c.l.b16 %v5629
    %v6052 = vunpack.c.l.b16 %v5630
    %v6053 = vunpack.c.h.b16 %v5630
    %v6054 = vunpack.c.l.b16 %v5631
    %v6055 = vunpack.c.l.b16 %v5632
    %v6056 = vunpack.c.h.b16 %v5632
    %v6057 = vunpack.c.l.b16 %v5633
    %v6058 = vunpack.c.l.b16 %v5634
    %v6059 = vunpack.c.h.b16 %v5634
    %v6060 = vunpack.c.l.b16 %v5635
    %v6061 = vunpack.c.l.b16 %v5636
    %v6062 = vunpack.c.h.b16 %v5636
    %v6063 = vunpack.c.l.b16 %v5637
    %v6064 = vunpack.c.l.b16 %v5638
    %v6065 = vunpack.c.h.b16 %v5638
    %v6066 = vunpack.c.l.b16 %v5639
    %v6067 = vunpack.c.l.b16 %v5640
    %v6068 = vunpack.c.h.b16 %v5640
    %v6069 = vunpack.c.l.b16 %v5641
    %v6070 = vunpack.c.l.b16 %v5642
    %v6071 = vunpack.c.h.b16 %v5642
    %v6072 = vunpack.c.l.b16 %v5643
    %v6073 = vunpack.c.l.b16 %v5644
    %v6074 = vunpack.c.h.b16 %v5644
    %v6075 = vunpack.c.l.b16 %v5645
    %v6076 = vunpack.c.l.b16 %v5646
    %v6077 = vunpack.c.h.b16 %v5646
    %v6078 = vunpack.c.l.b16 %v5647
    %v6079 = vunpack.c.l.b16 %v5648
    %v6080 = vunpack.c.h.b16 %v5648
    %v6081 = vunpack.c.l.b16 %v5649
    %v6082 = vunpack.c.l.b16 %v5650
    %v6083 = vunpack.c.h.b16 %v5650
    %v6084 = vunpack.c.l.b16 %v5651
    %v6085 = vunpack.c.l.b16 %v5652
    %v6086 = vunpack.c.h.b16 %v5652
    %v6087 = vunpack.c.l.b16 %v5653
    %v6088 = vunpack.c.l.b16 %v5654
    %v6089 = vunpack.c.h.b16 %v5654
    %v6090 = vunpack.c.l.b16 %v5655
    %v6091 = vunpack.c.l.b16 %v5656
    %v6092 = vunpack.c.h.b16 %v5656
    %v6093 = vunpack.c.l.b16 %v5657
    %v6094 = vunpack.c.l.b16 %v5658
    %v6095 = vunpack.c.h.b16 %v5658
    %v6096 = vunpack.c.l.b16 %v5659
    %v6097 = vunpack.c.l.b16 %v5660
    %v6098 = vunpack.c.h.b16 %v5660
    %v6099 = vunpack.c.l.b16 %v5661
    %v6100 = vunpack.c.l.b16 %v5662
    %v6101 = vunpack.c.h.b16 %v5662
    %v6102 = vunpack.c.l.b16 %v5663
    %v6103 = vunpack.c.l.b16 %v5664
    %v6104 = vunpack.c.h.b16 %v5664
    %v6105 = vunpack.c.l.b16 %v5665
    %v6106 = vunpack.c.l.b16 %v5666
    %v6107 = vunpack.c.h.b16 %v5666
    %v6108 = vunpack.c.l.b16 %v5667
    %v6109 = vunpack.c.l.b16 %v5668
    %v6110 = vunpack.c.h.b16 %v5668
    %v6111 = vunpack.c.l.b16 %v5669
    %v6112 = vunpack.c.l.b16 %v5670
    %v6113 = vunpack.c.h.b16 %v5670
    %v6114 = vunpack.c.l.b16 %v5671
    %v6115 = vunpack.c.l.b16 %v5672
    %v6116 = vunpack.c.h.b16 %v5672
    %v6117 = vunpack.c.l.b16 %v5673
    %v6118 = vunpack.c.l.b16 %v5674
    %v6119 = vunpack.c.h.b16 %v5674
    %v6120 = vunpack.c.l.b16 %v5675
    %v6121 = vunpack.c.l.b16 %v5676
    %v6122 = vunpack.c.h.b16 %v5676
    %v6123 = vunpack.c.l.b16 %v5677
    %v6124 = vunpack.c.l.b16 %v5678
    %v6125 = vunpack.c.h.b16 %v5678
    %v6126 = vunpack.c.l.b16 %v5679
    %v6127 = vunpack.c.l.b16 %v5680
    %v6128 = vunpack.c.h.b16 %v5680
    %v6129 = vunpack.c.l.b16 %v5681
    %v6130 = vunpack.c.l.b16 %v5682
    %v6131 = vunpack.c.h.b16 %v5682
    %v6132 = vunpack.c.l.b16 %v5683
    %v6133 = vunpack.c.l.b16 %v5684
    %v6134 = vunpack.c.h.b16 %v5684
    %v6135 = vunpack.c.l.b16 %v5685
    %v6136 = vunpack.c.l.b16 %v5686
    %v6137 = vunpack.c.h.b16 %v5686
    %v6138 = vunpack.c.l.b16 %v5687
    %v6139 = vunpack.c.l.b16 %v5688
    %v6140 = vunpack.c.h.b16 %v5688
    %v6141 = vunpack.c.l.b16 %v5689
    %v6142 = vunpack.c.l.b16 %v5690
    %v6143 = vunpack.c.h.b16 %v5690
    %v6144 = vunpack.c.l.b16 %v5691
    %v6145 = vunpack.c.l.b16 %v5692
    %v6146 = vunpack.c.h.b16 %v5692
    %v6147 = vunpack.c.l.b16 %v5693
    %v6148 = vunpack.c.l.b16 %v5694
    %v6149 = vunpack.c.h.b16 %v5694
    %v6150 = vunpack.c.l.b16 %v5695
    %v6151 = vunpack.c.l.b16 %v5696
    %v6152 = vunpack.c.h.b16 %v5696
    %v6153 = vunpack.c.l.b16 %v5697
    %v6154 = vunpack.c.l.b16 %v5698
    %v6155 = vunpack.c.h.b16 %v5698
    %v6156 = vunpack.c.l.b16 %v5699
    %v6157 = vunpack.c.l.b16 %v5700
    %v6158 = vunpack.c.h.b16 %v5700
    %v6159 = vunpack.c.l.b16 %v5701
    %v6160 = vunpack.c.l.b16 %v5702
    %v6161 = vunpack.c.h.b16 %v5702
    %v6162 = vunpack.c.l.b16 %v5703
    %v6163 = vunpack.c.l.b16 %v5704
    %v6164 = vunpack.c.h.b16 %v5704
    %v6165 = vunpack.c.l.b16 %v5705
    %v6166 = vunpack.c.l.b16 %v5706
    %v6167 = vunpack.c.h.b16 %v5706
    %v6168 = vunpack.c.l.b16 %v5707
    %v6169 = vunpack.c.l.b16 %v5708
    %v6170 = vunpack.c.h.b16 %v5708
    %v6171 = vunpack.c.l.b16 %v5709
    %v6172 = vunpack.c.l.b16 %v5710
    %v6173 = vunpack.c.h.b16 %v5710
    %v6174 = vunpack.c.l.b16 %v5711
    %v6175 = vunpack.c.l.b16 %v5712
    %v6176 = vunpack.c.h.b16 %v5712
    %v6177 = vunpack.c.l.b16 %v5713
    %v6178 = vunpack.c.l.b16 %v5714
    %v6179 = vunpack.c.h.b16 %v5714
    %v6180 = vunpack.c.l.b16 %v5715
    %v6181 = vunpack.c.l.b16 %v5716
    %v6182 = vunpack.c.h.b16 %v5716
    %v6183 = vunpack.c.l.b16 %v5717
    %v6184 = vunpack.c.l.b16 %v5718
    %v6185 = vunpack.c.h.b16 %v5718
    %v6186 = vunpack.c.l.b16 %v5719
    %v6187 = vunpack.c.l.b16 %v5720
    %v6188 = vunpack.c.h.b16 %v5720
    %v6189 = vunpack.c.l.b16 %v5721
    %v6190 = vunpack.c.l.b16 %v5722
    %v6191 = vunpack.c.h.b16 %v5722
    %v6192 = vunpack.c.l.b16 %v5723
    %v6193 = vunpack.c.l.b16 %v5724
    %v6194 = vunpack.c.h.b16 %v5724
    %v6195 = vunpack.c.l.b16 %v5725
    %v6196 = vunpack.c.l.b16 %v5726
    %v6197 = vunpack.c.h.b16 %v5726
    %v6198 = vunpack.c.l.b16 %v5727
    %v6199 = vunpack.c.l.b16 %v5728
    %v6200 = vunpack.c.h.b16 %v5728
    %v6201 = vunpack.c.l.b16 %v5729
    %v6202 = vunpack.c.l.b16 %v5730
    %v6203 = vunpack.c.h.b16 %v5730
    %v6204 = vunpack.c.l.b16 %v5731
    %v6205 = vunpack.c.l.b16 %v5732
    %v6206 = vunpack.c.h.b16 %v5732
    %v6207 = vunpack.c.l.b16 %v5733
    %v6208 = vunpack.c.l.b16 %v5734
    %v6209 = vunpack.c.h.b16 %v5734
    %v6210 = vunpack.c.l.b16 %v5735
    %v6211 = vunpack.c.l.b16 %v5736
    %v6212 = vunpack.c.h.b16 %v5736
    %v6213 = vunpack.c.l.b16 %v5737
    %v6214 = vunpack.c.l.b16 %v5738
    %v6215 = vunpack.c.h.b16 %v5738
    %v6216 = vunpack.c.l.b16 %v5739
    %v6217 = vunpack.c.l.b16 %v5740
    %v6218 = vunpack.c.h.b16 %v5740
    %v6219 = vunpack.c.l.b16 %v5741
    %v6220 = vunpack.c.l.b16 %v5742
    %v6221 = vunpack.c.h.b16 %v5742
    %v6222 = vunpack.c.l.b16 %v5743
    %v6223 = vunpack.c.l.b16 %v5744
    %v6224 = vunpack.c.h.b16 %v5744
    %v6225 = vunpack.c.l.b16 %v5745
    %v6226 = vunpack.c.l.b16 %v5746
    %v6227 = vunpack.c.h.b16 %v5746
    %v6228 = vunpack.c.l.b16 %v5747
    %v6229 = vunpack.c.l.b16 %v5748
    %v6230 = vunpack.c.h.b16 %v5748
    %v6231 = vunpack.c.l.b16 %v5749
    %v6232 = vunpack.c.l.b16 %v5750
    %v6233 = vunpack.c.h.b16 %v5750
    %v6234 = vunpack.c.l.b16 %v5751
    %v6235 = vunpack.c.l.b16 %v5752
    %v6236 = vunpack.c.h.b16 %v5752
    %v6237 = vunpack.c.l.b16 %v5753
    %v6238 = vunpack.c.l.b16 %v5754
    %v6239 = vunpack.c.h.b16 %v5754
    %v6240 = vunpack.c.l.b16 %v5755
    %v6241 = vunpack.c.l.b16 %v5756
    %v6242 = vunpack.c.h.b16 %v5756
    %v6243 = vunpack.c.l.b16 %v5757
    %v6244 = vunpack.c.l.b16 %v5758
    %v6245 = vunpack.c.h.b16 %v5758
    %v6246 = vunpack.c.l.b16 %v5759
    %v6247 = vunpack.c.l.b16 %v5760
    %v6248 = vunpack.c.h.b16 %v5760
    %v6249 = vunpack.c.l.b16 %v5761
    %v6250 = vunpack.c.l.b16 %v5762
    %v6251 = vunpack.c.h.b16 %v5762
    %v6252 = vunpack.c.l.b16 %v5763
    %v6253 = vunpack.c.l.b16 %v5764
    %v6254 = vunpack.c.h.b16 %v5764
    %v6255 = vunpack.c.l.b16 %v5765
    %v6256 = vunpack.c.l.b16 %v5766
    %v6257 = vunpack.c.h.b16 %v5766
    %v6258 = vunpack.c.l.b16 %v5767
    %v6259 = vunpack.c.l.b16 %v5768
    %v6260 = vunpack.c.h.b16 %v5768
    %v6261 = vunpack.c.l.b16 %v5769
    %v6262 = vunpack.c.l.b16 %v5770
    %v6263 = vunpack.c.h.b16 %v5770
    %v6264 = vunpack.c.l.b16 %v5771
    %v6265 = vunpack.c.l.b16 %v5772
    %v6266 = vunpack.c.h.b16 %v5772
    %v6267 = vunpack.c.l.b16 %v5773
    %v6268 = vunpack.c.l.b16 %v5774
    %v6269 = vunpack.c.h.b16 %v5774
    %v6270 = vunpack.c.l.b16 %v5775
    %v6271 = vunpack.c.l.b16 %v5776
    %v6272 = vunpack.c.h.b16 %v5776
    %v6273 = vunpack.c.l.b16 %v5777
    %v6274 = vunpack.c.l.b16 %v5778
    %v6275 = vunpack.c.h.b16 %v5778
    %v6276 = vunpack.c.l.b16 %v5779
    %v6277 = vpack.c.b16 %v5992, %v5989
    %v6278 = vpack.c.b16 %v5993, %v5990
    %v6279 = vpack.c.b16 %v5994, %v5991
    %v6280 = vpack.c.b16 %v5998, %v5995
    %v6281 = vpack.c.b16 %v5999, %v5996
    %v6282 = vpack.c.b16 %v6000, %v5997
    %v6283 = vpack.c.b16 %v6004, %v6001
    %v6284 = vpack.c.b16 %v6005, %v6002
    %v6285 = vpack.c.b16 %v6006, %v6003
    %v6286 = vpack.c.b16 %v6010, %v6007
    %v6287 = vpack.c.b16 %v6011, %v6008
    %v6288 = vpack.c.b16 %v6012, %v6009
    %v6289 = vpack.c.b16 %v6016, %v6013
    %v6290 = vpack.c.b16 %v6017, %v6014
    %v6291 = vpack.c.b16 %v6018, %v6015
    %v6292 = vpack.c.b16 %v6022, %v6019
    %v6293 = vpack.c.b16 %v6023, %v6020
    %v6294 = vpack.c.b16 %v6024, %v6021
    %v6295 = vpack.c.b16 %v6028, %v6025
    %v6296 = vpack.c.b16 %v6029, %v6026
    %v6297 = vpack.c.b16 %v6030, %v6027
    %v6298 = vpack.c.b16 %v6034, %v6031
    %v6299 = vpack.c.b16 %v6035, %v6032
    %v6300 = vpack.c.b16 %v6036, %v6033
    %v6301 = vpack.c.b16 %v6040, %v6037
    %v6302 = vpack.c.b16 %v6041, %v6038
    %v6303 = vpack.c.b16 %v6042, %v6039
    %v6304 = vpack.c.b16 %v6046, %v6043
    %v6305 = vpack.c.b16 %v6047, %v6044
    %v6306 = vpack.c.b16 %v6048, %v6045
    %v6307 = vpack.c.b16 %v6052, %v6049
    %v6308 = vpack.c.b16 %v6053, %v6050
    %v6309 = vpack.c.b16 %v6054, %v6051
    %v6310 = vpack.c.b16 %v6058, %v6055
    %v6311 = vpack.c.b16 %v6059, %v6056
    %v6312 = vpack.c.b16 %v6060, %v6057
    %v6313 = vpack.c.b16 %v6064, %v6061
    %v6314 = vpack.c.b16 %v6065, %v6062
    %v6315 = vpack.c.b16 %v6066, %v6063
    %v6316 = vpack.c.b16 %v6070, %v6067
    %v6317 = vpack.c.b16 %v6071, %v6068
    %v6318 = vpack.c.b16 %v6072, %v6069
    %v6319 = vpack.c.b16 %v6076, %v6073
    %v6320 = vpack.c.b16 %v6077, %v6074
    %v6321 = vpack.c.b16 %v6078, %v6075
    %v6322 = vpack.c.b16 %v6082, %v6079
    %v6323 = vpack.c.b16 %v6083, %v6080
    %v6324 = vpack.c.b16 %v6084, %v6081
    %v6325 = vpack.c.b16 %v6088, %v6085
    %v6326 = vpack.c.b16 %v6089, %v6086
    %v6327 = vpack.c.b16 %v6090, %v6087
    %v6328 = vpack.c.b16 %v6094, %v6091
    %v6329 = vpack.c.b16 %v6095, %v6092
    %v6330 = vpack.c.b16 %v6096, %v6093
    %v6331 = vpack.c.b16 %v6100, %v6097
    %v6332 = vpack.c.b16 %v6101, %v6098
    %v6333 = vpack.c.b16 %v6102, %v6099
    %v6334 = vpack.c.b16 %v6106, %v6103
    %v6335 = vpack.c.b16 %v6107, %v6104
    %v6336 = vpack.c.b16 %v6108, %v6105
    %v6337 = vpack.c.b16 %v6112, %v6109
    %v6338 = vpack.c.b16 %v6113, %v6110
    %v6339 = vpack.c.b16 %v6114, %v6111
    %v6340 = vpack.c.b16 %v6118, %v6115
    %v6341 = vpack.c.b16 %v6119, %v6116
    %v6342 = vpack.c.b16 %v6120, %v6117
    %v6343 = vpack.c.b16 %v6124, %v6121
    %v6344 = vpack.c.b16 %v6125, %v6122
    %v6345 = vpack.c.b16 %v6126, %v6123
    %v6346 = vpack.c.b16 %v6130, %v6127
    %v6347 = vpack.c.b16 %v6131, %v6128
    %v6348 = vpack.c.b16 %v6132, %v6129
    %v6349 = vpack.c.b16 %v6136, %v6133
    %v6350 = vpack.c.b16 %v6137, %v6134
    %v6351 = vpack.c.b16 %v6138, %v6135
    %v6352 = vpack.c.b16 %v6142, %v6139
    %v6353 = vpack.c.b16 %v6143, %v6140
    %v6354 = vpack.c.b16 %v6144, %v6141
    %v6355 = vpack.c.b16 %v6148, %v6145
    %v6356 = vpack.c.b16 %v6149, %v6146
    %v6357 = vpack.c.b16 %v6150, %v6147
    %v6358 = vpack.c.b16 %v6154, %v6151
    %v6359 = vpack.c.b16 %v6155, %v6152
    %v6360 = vpack.c.b16 %v6156, %v6153
    %v6361 = vpack.c.b16 %v6160, %v6157
    %v6362 = vpack.c.b16 %v6161, %v6158
    %v6363 = vpack.c.b16 %v6162, %v6159
    %v6364 = vpack.c.b16 %v6166, %v6163
    %v6365 = vpack.c.b16 %v6167, %v6164
    %v6366 = vpack.c.b16 %v6168, %v6165
    %v6367 = vpack.c.b16 %v6172, %v6169
    %v6368 = vpack.c.b16 %v6173, %v6170
    %v6369 = vpack.c.b16 %v6174, %v6171
    %v6370 = vpack.c.b16 %v6178, %v6175
    %v6371 = vpack.c.b16 %v6179, %v6176
    %v6372 = vpack.c.b16 %v6180, %v6177
    %v6373 = vpack.c.b16 %v6184, %v6181
    %v6374 = vpack.c.b16 %v6185, %v6182
    %v6375 = vpack.c.b16 %v6186, %v6183
    %v6376 = vpack.c.b16 %v6190, %v6187
    %v6377 = vpack.c.b16 %v6191, %v6188
    %v6378 = vpack.c.b16 %v6192, %v6189
    %v6379 = vpack.c.b16 %v6196, %v6193
    %v6380 = vpack.c.b16 %v6197, %v6194
    %v6381 = vpack.c.b16 %v6198, %v6195
    %v6382 = vpack.c.b16 %v6202, %v6199
    %v6383 = vpack.c.b16 %v6203, %v6200
    %v6384 = vpack.c.b16 %v6204, %v6201
    %v6385 = vpack.c.b16 %v6208, %v6205
    %v6386 = vpack.c.b16 %v6209, %v6206
    %v6387 = vpack.c.b16 %v6210, %v6207
    %v6388 = vpack.c.b16 %v6214, %v6211
    %v6389 = vpack.c.b16 %v6215, %v6212
    %v6390 = vpack.c.b16 %v6216, %v6213
    %v6391 = vpack.c.b16 %v6220, %v6217
    %v6392 = vpack.c.b16 %v6221, %v6218
    %v6393 = vpack.c.b16 %v6222, %v6219
    %v6394 = vpack.c.b16 %v6226, %v6223
    %v6395 = vpack.c.b16 %v6227, %v6224
    %v6396 = vpack.c.b16 %v6228, %v6225
    %v6397 = vpack.c.b16 %v6232, %v6229
    %v6398 = vpack.c.b16 %v6233, %v6230
    %v6399 = vpack.c.b16 %v6234, %v6231
    %v6400 = vpack.c.b16 %v6238, %v6235
    %v6401 = vpack.c.b16 %v6239, %v6236
    %v6402 = vpack.c.b16 %v6240, %v6237
    %v6403 = vpack.c.b16 %v6244, %v6241
    %v6404 = vpack.c.b16 %v6245, %v6242
    %v6405 = vpack.c.b16 %v6246, %v6243
    %v6406 = vpack.c.b16 %v6250, %v6247
    %v6407 = vpack.c.b16 %v6251, %v6248
    %v6408 = vpack.c.b16 %v6252, %v6249
    %v6409 = vpack.c.b16 %v6256, %v6253
    %v6410 = vpack.c.b16 %v6257, %v6254
    %v6411 = vpack.c.b16 %v6258, %v6255
    %v6412 = vpack.c.b16 %v6262, %v6259
    %v6413 = vpack.c.b16 %v6263, %v6260
    %v6414 = vpack.c.b16 %v6264, %v6261
    %v6415 = vpack.c.b16 %v6268, %v6265
    %v6416 = vpack.c.b16 %v6269, %v6266
    %v6417 = vpack.c.b16 %v6270, %v6267
    %v6418 = vpack.c.b16 %v6274, %v6271
    %v6419 = vpack.c.b16 %v6275, %v6272
    %v6420 = vpack.c.b16 %v6276, %v6273
    %6565 = vmatprep.subr.bf16.mxu0 %v6278
    %6566 = vmatpush1.bf16.msra.mxu0 %v6277
    %6567 = vmatprep.subr.bf16.mxu0 %v6281
    %6568 = vmatpush1.bf16.msra.mxu0 %v6280
    %6569 = vmatprep.subr.bf16.mxu0 %v6284
    %6570 = vmatpush1.bf16.msra.mxu0 %v6283
    %6571 = vmatprep.subr.bf16.mxu0 %v6287
    %6572 = vmatpush1.bf16.msra.mxu0 %v6286
    %6573 = vmatprep.subr.bf16.mxu0 %v6290
    %6574 = vmatpush1.bf16.msra.mxu0 %v6289
    %6575 = vmatprep.subr.bf16.mxu0 %v6293
    %6576 = vmatpush1.bf16.msra.mxu0 %v6292
    %6577 = vmatprep.subr.bf16.mxu0 %v6296
    %6578 = vmatpush1.bf16.msra.mxu0 %v6295
    %6579 = vmatprep.subr.bf16.mxu0 %v6299
    %6580 = vmatpush1.bf16.msra.mxu0 %v6298
    %6581 = vmatprep.subr.bf16.mxu0 %v6302
    %6582 = vmatpush1.bf16.msra.mxu0 %v6301
    %6583 = vmatprep.subr.bf16.mxu0 %v6305
    %6584 = vmatpush1.bf16.msra.mxu0 %v6304
    %6585 = vmatprep.subr.bf16.mxu0 %v6308
    %6586 = vmatpush1.bf16.msra.mxu0 %v6307
    %6587 = vmatprep.subr.bf16.mxu0 %v6311
    %6588 = vmatpush1.bf16.msra.mxu0 %v6310
    %6589 = vmatprep.subr.bf16.mxu0 %v6314
    %6590 = vmatpush1.bf16.msra.mxu0 %v6313
    %6591 = vmatprep.subr.bf16.mxu0 %v6317
    %6592 = vmatpush1.bf16.msra.mxu0 %v6316
    %6593 = vmatprep.subr.bf16.mxu0 %v6320
    %6594 = vmatpush1.bf16.msra.mxu0 %v6319
    %6595 = vmatprep.subr.bf16.mxu0 %v6323
    %6596 = vmatpush1.bf16.msra.mxu0 %v6322
    %6597 = vmatprep.mubr.bf16.mxu0 %v5583
    %6598 = vmatmul.mubr.bf16.gmra.mrb[0].mxu0 %v5582
    %v6599 = vpop.f32.mrb[0].mxu0
    %v6600 = vadd.f32 %v5785, %v6599
    %v6601 = vpop.f32.mrb[0].mxu0
    %v6602 = vadd.f32 %v5789, %v6601
    %v6603 = vpop.f32.mrb[0].mxu0
    %v6604 = vadd.f32 %v5785, %v6603
    %v6605 = vpop.f32.mrb[0].mxu0
    %v6606 = vadd.f32 %v5789, %v6605
    %6607 = vdwg.mxu0
    %6608 = vmatprep.subr.bf16.mxu0 %v6326
    %6609 = vmatpush1.bf16.msra.mxu0 %v6325
    %6610 = vmatprep.subr.bf16.mxu0 %v6329
    %6611 = vmatpush1.bf16.msra.mxu0 %v6328
    %6612 = vmatprep.subr.bf16.mxu0 %v6332
    %6613 = vmatpush1.bf16.msra.mxu0 %v6331
    %6614 = vmatprep.subr.bf16.mxu0 %v6335
    %6615 = vmatpush1.bf16.msra.mxu0 %v6334
    %6616 = vmatprep.subr.bf16.mxu0 %v6338
    %6617 = vmatpush1.bf16.msra.mxu0 %v6337
    %6618 = vmatprep.subr.bf16.mxu0 %v6341
    %6619 = vmatpush1.bf16.msra.mxu0 %v6340
    %6620 = vmatprep.subr.bf16.mxu0 %v6344
    %6621 = vmatpush1.bf16.msra.mxu0 %v6343
    %6622 = vmatprep.subr.bf16.mxu0 %v6347
    %6623 = vmatpush1.bf16.msra.mxu0 %v6346
    %6624 = vmatprep.subr.bf16.mxu0 %v6350
    %6625 = vmatpush1.bf16.msra.mxu0 %v6349
    %6626 = vmatprep.subr.bf16.mxu0 %v6353
    %6627 = vmatpush1.bf16.msra.mxu0 %v6352
    %6628 = vmatprep.subr.bf16.mxu0 %v6356
    %6629 = vmatpush1.bf16.msra.mxu0 %v6355
    %6630 = vmatprep.subr.bf16.mxu0 %v6359
    %6631 = vmatpush1.bf16.msra.mxu0 %v6358
    %6632 = vmatprep.subr.bf16.mxu0 %v6362
    %6633 = vmatpush1.bf16.msra.mxu0 %v6361
    %6634 = vmatprep.subr.bf16.mxu0 %v6365
    %6635 = vmatpush1.bf16.msra.mxu0 %v6364
    %6636 = vmatprep.subr.bf16.mxu0 %v6368
    %6637 = vmatpush1.bf16.msra.mxu0 %v6367
    %6638 = vmatprep.subr.bf16.mxu0 %v6371
    %6639 = vmatpush1.bf16.msra.mxu0 %v6370
    %6640 = vmatprep.mubr.bf16.mxu0 %v5585
    %6641 = vmatmul.mubr.bf16.gmra.mrb[0].mxu0 %v5584
    %v6642 = vpop.f32.mrb[0].mxu0
    %v6643 = vadd.f32 %v6600, %v6642
    %v6644 = vpop.f32.mrb[0].mxu0
    %v6645 = vadd.f32 %v6602, %v6644
    %v6646 = vpop.f32.mrb[0].mxu0
    %v6647 = vadd.f32 %v6604, %v6646
    %v6648 = vpop.f32.mrb[0].mxu0
    %v6649 = vadd.f32 %v6606, %v6648
    %6650 = vdwg.mxu0
    %6651 = vmatprep.subr.bf16.mxu0 %v6374
    %6652 = vmatpush1.bf16.msra.mxu0 %v6373
    %6653 = vmatprep.subr.bf16.mxu0 %v6377
    %6654 = vmatpush1.bf16.msra.mxu0 %v6376
    %6655 = vmatprep.subr.bf16.mxu0 %v6380
    %6656 = vmatpush1.bf16.msra.mxu0 %v6379
    %6657 = vmatprep.subr.bf16.mxu0 %v6383
    %6658 = vmatpush1.bf16.msra.mxu0 %v6382
    %6659 = vmatprep.subr.bf16.mxu0 %v6386
    %6660 = vmatpush1.bf16.msra.mxu0 %v6385
    %6661 = vmatprep.subr.bf16.mxu0 %v6389
    %6662 = vmatpush1.bf16.msra.mxu0 %v6388
    %6663 = vmatprep.subr.bf16.mxu0 %v6392
    %6664 = vmatpush1.bf16.msra.mxu0 %v6391
    %6665 = vmatprep.subr.bf16.mxu0 %v6395
    %6666 = vmatpush1.bf16.msra.mxu0 %v6394
    %6667 = vmatprep.subr.bf16.mxu0 %v6398
    %6668 = vmatpush1.bf16.msra.mxu0 %v6397
    %6669 = vmatprep.subr.bf16.mxu0 %v6401
    %6670 = vmatpush1.bf16.msra.mxu0 %v6400
    %6671 = vmatprep.subr.bf16.mxu0 %v6404
    %6672 = vmatpush1.bf16.msra.mxu0 %v6403
    %6673 = vmatprep.subr.bf16.mxu0 %v6407
    %6674 = vmatpush1.bf16.msra.mxu0 %v6406
    %6675 = vmatprep.subr.bf16.mxu0 %v6410
    %6676 = vmatpush1.bf16.msra.mxu0 %v6409
    %6677 = vmatprep.subr.bf16.mxu0 %v6413
    %6678 = vmatpush1.bf16.msra.mxu0 %v6412
    %6679 = vmatprep.subr.bf16.mxu0 %v6416
    %6680 = vmatpush1.bf16.msra.mxu0 %v6415
    %6681 = vmatprep.subr.bf16.mxu0 %v6419
    %6682 = vmatpush1.bf16.msra.mxu0 %v6418
    %6683 = vmatprep.mubr.bf16.mxu0 %v5587
    %6684 = vmatmul.mubr.bf16.gmra.mrb[0].mxu0 %v5586
    %v6685 = vpop.f32.mrb[0].mxu0
    %v6686 = vadd.f32 %v6643, %v6685
    %v6687 = vpop.f32.mrb[0].mxu0
    %v6688 = vadd.f32 %v6645, %v6687
    %v6689 = vpop.f32.mrb[0].mxu0
    %v6690 = vadd.f32 %v6647, %v6689
    %v6691 = vpop.f32.mrb[0].mxu0
    %v6692 = vadd.f32 %v6649, %v6691
    %6693 = vdwg.mxu0
    %6694 = vmatprep.subr.bf16.mxu0 0
    %6695 = vmatpush1.bf16.msra.mxu0 %v6279
    %6696 = vmatprep.subr.bf16.mxu0 0
    %6697 = vmatpush1.bf16.msra.mxu0 %v6282
    %6698 = vmatprep.subr.bf16.mxu0 0
    %6699 = vmatpush1.bf16.msra.mxu0 %v6285
    %6700 = vmatprep.subr.bf16.mxu0 0
    %6701 = vmatpush1.bf16.msra.mxu0 %v6288
    %6702 = vmatprep.subr.bf16.mxu0 0
    %6703 = vmatpush1.bf16.msra.mxu0 %v6291
    %6704 = vmatprep.subr.bf16.mxu0 0
    %6705 = vmatpush1.bf16.msra.mxu0 %v6294
    %6706 = vmatprep.subr.bf16.mxu0 0
    %6707 = vmatpush1.bf16.msra.mxu0 %v6297
    %6708 = vmatprep.subr.bf16.mxu0 0
    %6709 = vmatpush1.bf16.msra.mxu0 %v6300
    %6710 = vmatprep.subr.bf16.mxu0 0
    %6711 = vmatpush1.bf16.msra.mxu0 %v6303
    %6712 = vmatprep.subr.bf16.mxu0 0
    %6713 = vmatpush1.bf16.msra.mxu0 %v6306
    %6714 = vmatprep.subr.bf16.mxu0 0
    %6715 = vmatpush1.bf16.msra.mxu0 %v6309
    %6716 = vmatprep.subr.bf16.mxu0 0
    %6717 = vmatpush1.bf16.msra.mxu0 %v6312
    %6718 = vmatprep.subr.bf16.mxu0 0
    %6719 = vmatpush1.bf16.msra.mxu0 %v6315
    %6720 = vmatprep.subr.bf16.mxu0 0
    %6721 = vmatpush1.bf16.msra.mxu0 %v6318
    %6722 = vmatprep.subr.bf16.mxu0 0
    %6723 = vmatpush1.bf16.msra.mxu0 %v6321
    %6724 = vmatprep.subr.bf16.mxu0 0
    %6725 = vmatpush1.bf16.msra.mxu0 %v6324
    %6726 = vmatprep.mubr.bf16.mxu0 %v5583
    %6727 = vmatmul.mubr.bf16.gmra.mrb[0].mxu0 %v5582
    %v6728 = vpop.f32.mrb[0].mxu0
    %v6729 = vadd.f32 %v5793, %v6728
    %v6730 = vpop.f32.mrb[0].mxu0
    %v6731 = vpop.f32.mrb[0].mxu0
    %v6732 = vadd.f32 %v5793, %v6731
    %v6733 = vpop.f32.mrb[0].mxu0
    %6734 = vdwg.mxu0
    %6735 = vmatprep.subr.bf16.mxu0 0
    %6736 = vmatpush1.bf16.msra.mxu0 %v6327
    %6737 = vmatprep.subr.bf16.mxu0 0
    %6738 = vmatpush1.bf16.msra.mxu0 %v6330
    %6739 = vmatprep.subr.bf16.mxu0 0
    %6740 = vmatpush1.bf16.msra.mxu0 %v6333
    %6741 = vmatprep.subr.bf16.mxu0 0
    %6742 = vmatpush1.bf16.msra.mxu0 %v6336
    %6743 = vmatprep.subr.bf16.mxu0 0
    %6744 = vmatpush1.bf16.msra.mxu0 %v6339
    %6745 = vmatprep.subr.bf16.mxu0 0
    %6746 = vmatpush1.bf16.msra.mxu0 %v6342
    %6747 = vmatprep.subr.bf16.mxu0 0
    %6748 = vmatpush1.bf16.msra.mxu0 %v6345
    %6749 = vmatprep.subr.bf16.mxu0 0
    %6750 = vmatpush1.bf16.msra.mxu0 %v6348
    %6751 = vmatprep.subr.bf16.mxu0 0
    %6752 = vmatpush1.bf16.msra.mxu0 %v6351
    %6753 = vmatprep.subr.bf16.mxu0 0
    %6754 = vmatpush1.bf16.msra.mxu0 %v6354
    %6755 = vmatprep.subr.bf16.mxu0 0
    %6756 = vmatpush1.bf16.msra.mxu0 %v6357
    %6757 = vmatprep.subr.bf16.mxu0 0
    %6758 = vmatpush1.bf16.msra.mxu0 %v6360
    %6759 = vmatprep.subr.bf16.mxu0 0
    %6760 = vmatpush1.bf16.msra.mxu0 %v6363
    %6761 = vmatprep.subr.bf16.mxu0 0
    %6762 = vmatpush1.bf16.msra.mxu0 %v6366
    %6763 = vmatprep.subr.bf16.mxu0 0
    %6764 = vmatpush1.bf16.msra.mxu0 %v6369
    %6765 = vmatprep.subr.bf16.mxu0 0
    %6766 = vmatpush1.bf16.msra.mxu0 %v6372
    %6767 = vmatprep.mubr.bf16.mxu0 %v5585
    %6768 = vmatmul.mubr.bf16.gmra.mrb[0].mxu0 %v5584
    %v6769 = vpop.f32.mrb[0].mxu0
    %v6770 = vadd.f32 %v6729, %v6769
    %v6771 = vpop.f32.mrb[0].mxu0
    %v6772 = vpop.f32.mrb[0].mxu0
    %v6773 = vadd.f32 %v6732, %v6772
    %v6774 = vpop.f32.mrb[0].mxu0
    %6775 = vdwg.mxu0
    %6776 = vmatprep.subr.bf16.mxu0 0
    %6777 = vmatpush1.bf16.msra.mxu0 %v6375
    %6778 = vmatprep.subr.bf16.mxu0 0
    %6779 = vmatpush1.bf16.msra.mxu0 %v6378
    %6780 = vmatprep.subr.bf16.mxu0 0
    %6781 = vmatpush1.bf16.msra.mxu0 %v6381
    %6782 = vmatprep.subr.bf16.mxu0 0
    %6783 = vmatpush1.bf16.msra.mxu0 %v6384
    %6784 = vmatprep.subr.bf16.mxu0 0
    %6785 = vmatpush1.bf16.msra.mxu0 %v6387
    %6786 = vmatprep.subr.bf16.mxu0 0
    %6787 = vmatpush1.bf16.msra.mxu0 %v6390
    %6788 = vmatprep.subr.bf16.mxu0 0
    %6789 = vmatpush1.bf16.msra.mxu0 %v6393
    %6790 = vmatprep.subr.bf16.mxu0 0
    %6791 = vmatpush1.bf16.msra.mxu0 %v6396
    %6792 = vmatprep.subr.bf16.mxu0 0
    %6793 = vmatpush1.bf16.msra.mxu0 %v6399
    %6794 = vmatprep.subr.bf16.mxu0 0
    %6795 = vmatpush1.bf16.msra.mxu0 %v6402
    %6796 = vmatprep.subr.bf16.mxu0 0
    %6797 = vmatpush1.bf16.msra.mxu0 %v6405
    %6798 = vmatprep.subr.bf16.mxu0 0
    %6799 = vmatpush1.bf16.msra.mxu0 %v6408
    %6800 = vmatprep.subr.bf16.mxu0 0
    %6801 = vmatpush1.bf16.msra.mxu0 %v6411
    %6802 = vmatprep.subr.bf16.mxu0 0
    %6803 = vmatpush1.bf16.msra.mxu0 %v6414
    %6804 = vmatprep.subr.bf16.mxu0 0
    %6805 = vmatpush1.bf16.msra.mxu0 %v6417
    %6806 = vmatprep.subr.bf16.mxu0 0
    %6807 = vmatpush1.bf16.msra.mxu0 %v6420
    %6808 = vmatprep.mubr.bf16.mxu0 %v5587
    %6809 = vmatmul.mubr.bf16.gmra.mrb[0].mxu0 %v5586
    %v6810 = vpop.f32.mrb[0].mxu0
    %v6811 = vadd.f32 %v6770, %v6810
    %v6812 = vpop.f32.mrb[0].mxu0
    %v6813 = vpop.f32.mrb[0].mxu0
    %v6814 = vadd.f32 %v6773, %v6813
    %v6815 = vpop.f32.mrb[0].mxu0
    %6816 = vdwg.mxu0
    %v6817 = vmax.f32 %v6686, 0.0
    %v6818 = vmax.f32 %v6688, 0.0
    %v6819 = vmax.f32 %v6811, 0.0
    %v6820 = vmax.f32 %v6690, 0.0
    %v6821 = vmax.f32 %v6692, 0.0
    %v6822 = vmax.f32 %v6814, 0.0
    %v6823 = vpack.c.bf16 %v6820, %v6817
    %v6824 = vpack.c.bf16 %v6821, %v6818
    %v6825 = vpack.c.bf16 %v6822, %v6819
    %v6826 = vld [vmem:[#allocation14] sm:$0xf]
    %v6827 = vld [vmem:[#allocation14 + $0x4] sm:$0xf]
    %v6828 = vld [vmem:[#allocation14 + $0x8] sm:$0xf]
    %v6829 = vld [vmem:[#allocation14 + $0xc] sm:$0xf]
    %v6830 = vld [vmem:[#allocation14 + $0x10] sm:$0xf]
    %v6831 = vld [vmem:[#allocation14 + $0x14] sm:$0xf]
    %v6832 = vld [vmem:[#allocation14 + $0x18] sm:$0xf]
    %v6833 = vld [vmem:[#allocation14 + $0x1c] sm:$0xf]
    %v6834 = vld [vmem:[#allocation14 + $0x20] sm:$0xf]
    %v6835 = vld [vmem:[#allocation14 + $0x24] sm:$0xf]
    %v6836 = vld [vmem:[#allocation14 + $0x28] sm:$0xf]
    %v6837 = vld [vmem:[#allocation14 + $0x2c] sm:$0xf]
    %v6838 = vld [vmem:[#allocation14 + $0x30] sm:$0xf]
    %v6839 = vld [vmem:[#allocation14 + $0x34] sm:$0xf]
    %v6840 = vld [vmem:[#allocation14 + $0x38] sm:$0xf]
    %v6841 = vld [vmem:[#allocation14 + $0x3c] sm:$0xf]
    %v6842 = vld [vmem:[#allocation14 + $0x40] sm:$0xf]
    %v6843 = vld [vmem:[#allocation14 + $0x44] sm:$0xf]
    %v6844 = vld [vmem:[#allocation14 + $0x48] sm:$0xf]
    %v6845 = vld [vmem:[#allocation14 + $0x4c] sm:$0xf]
    %v6846 = vld [vmem:[#allocation14 + $0x50] sm:$0xf]
    %v6847 = vld [vmem:[#allocation14 + $0x54] sm:$0xf]
    %v6848 = vld [vmem:[#allocation14 + $0x58] sm:$0xf]
    %v6849 = vld [vmem:[#allocation14 + $0x5c] sm:$0xf]
    %v6850 = vld [vmem:[#allocation14 + $0x60] sm:$0xf]
    %v6851 = vld [vmem:[#allocation14 + $0x64] sm:$0xf]
    %v6852 = vld [vmem:[#allocation14 + $0x68] sm:$0xf]
    %v6853 = vld [vmem:[#allocation14 + $0x6c] sm:$0xf]
    %v6854 = vld [vmem:[#allocation14 + $0x70] sm:$0xf]
    %v6855 = vld [vmem:[#allocation14 + $0x74] sm:$0xf]
    %v6856 = vld [vmem:[#allocation14 + $0x78] sm:$0xf]
    %v6857 = vld [vmem:[#allocation14 + $0x7c] sm:$0xf]
    %v6858 = vld [vmem:[#allocation14 + $0x80] sm:$0xf]
    %v6859 = vld [vmem:[#allocation14 + $0x84] sm:$0xf]
    %v6860 = vld [vmem:[#allocation14 + $0x88] sm:$0xf]
    %v6861 = vld [vmem:[#allocation14 + $0x8c] sm:$0xf]
    %v6862 = vld [vmem:[#allocation14 + $0x90] sm:$0xf]
    %v6863 = vld [vmem:[#allocation14 + $0x94] sm:$0xf]
    %v6864 = vld [vmem:[#allocation14 + $0x98] sm:$0xf]
    %v6865 = vld [vmem:[#allocation14 + $0x9c] sm:$0xf]
    %v6866 = vld [vmem:[#allocation14 + $0xa0] sm:$0xf]
    %v6867 = vld [vmem:[#allocation14 + $0xa4] sm:$0xf]
    %v6868 = vld [vmem:[#allocation14 + $0xa8] sm:$0xf]
    %v6869 = vld [vmem:[#allocation14 + $0xac] sm:$0xf]
    %v6870 = vld [vmem:[#allocation14 + $0xb0] sm:$0xf]
    %v6871 = vld [vmem:[#allocation14 + $0xb4] sm:$0xf]
    %v6872 = vld [vmem:[#allocation14 + $0xb8] sm:$0xf]
    %v6873 = vld [vmem:[#allocation14 + $0xbc] sm:$0xf]
    %v6874 = vld [vmem:[#allocation16] sm:$0x1]
    %v6876 = vlaneseq
    %v6877 = vshrl.u32 %v6876, 7
    %v6878 = vsub.s32 0, %v6877
    %v6879 = vrot.slane %v6874, %v6878
    %v6929 = vunpack.c.l.b16 %v6826
    %v6930 = vunpack.c.l.b16 %v6827
    %v6931 = vunpack.c.l.b16 %v6828
    %v6932 = vunpack.c.l.b16 %v6829
    %v6933 = vunpack.c.l.b16 %v6830
    %v6934 = vunpack.c.l.b16 %v6831
    %v6935 = vunpack.c.l.b16 %v6832
    %v6936 = vunpack.c.l.b16 %v6833
    %v6937 = vunpack.c.l.b16 %v6834
    %v6938 = vunpack.c.l.b16 %v6835
    %v6939 = vunpack.c.l.b16 %v6836
    %v6940 = vunpack.c.l.b16 %v6837
    %v6941 = vunpack.c.l.b16 %v6838
    %v6942 = vunpack.c.l.b16 %v6839
    %v6943 = vunpack.c.l.b16 %v6840
    %v6944 = vunpack.c.l.b16 %v6841
    %v6945 = vunpack.c.l.b16 %v6842
    %v6946 = vunpack.c.l.b16 %v6843
    %v6947 = vunpack.c.l.b16 %v6844
    %v6948 = vunpack.c.l.b16 %v6845
    %v6949 = vunpack.c.l.b16 %v6846
    %v6950 = vunpack.c.l.b16 %v6847
    %v6951 = vunpack.c.l.b16 %v6848
    %v6952 = vunpack.c.l.b16 %v6849
    %v6953 = vunpack.c.l.b16 %v6850
    %v6954 = vunpack.c.l.b16 %v6851
    %v6955 = vunpack.c.l.b16 %v6852
    %v6956 = vunpack.c.l.b16 %v6853
    %v6957 = vunpack.c.l.b16 %v6854
    %v6958 = vunpack.c.l.b16 %v6855
    %v6959 = vunpack.c.l.b16 %v6856
    %v6960 = vunpack.c.l.b16 %v6857
    %v6961 = vunpack.c.l.b16 %v6858
    %v6962 = vunpack.c.l.b16 %v6859
    %v6963 = vunpack.c.l.b16 %v6860
    %v6964 = vunpack.c.l.b16 %v6861
    %v6965 = vunpack.c.l.b16 %v6862
    %v6966 = vunpack.c.l.b16 %v6863
    %v6967 = vunpack.c.l.b16 %v6864
    %v6968 = vunpack.c.l.b16 %v6865
    %v6969 = vunpack.c.l.b16 %v6866
    %v6970 = vunpack.c.l.b16 %v6867
    %v6971 = vunpack.c.l.b16 %v6868
    %v6972 = vunpack.c.l.b16 %v6869
    %v6973 = vunpack.c.l.b16 %v6870
    %v6974 = vunpack.c.l.b16 %v6871
    %v6975 = vunpack.c.l.b16 %v6872
    %v6976 = vunpack.c.l.b16 %v6873
    %v6977 = vpack.c.b16 %v6930, %v6929
    %v6978 = vpack.c.b16 %v6932, %v6931
    %v6979 = vpack.c.b16 %v6934, %v6933
    %v6980 = vpack.c.b16 %v6936, %v6935
    %v6981 = vpack.c.b16 %v6938, %v6937
    %v6982 = vpack.c.b16 %v6940, %v6939
    %v6983 = vpack.c.b16 %v6942, %v6941
    %v6984 = vpack.c.b16 %v6944, %v6943
    %v6985 = vpack.c.b16 %v6946, %v6945
    %v6986 = vpack.c.b16 %v6948, %v6947
    %v6987 = vpack.c.b16 %v6950, %v6949
    %v6988 = vpack.c.b16 %v6952, %v6951
    %v6989 = vpack.c.b16 %v6954, %v6953
    %v6990 = vpack.c.b16 %v6956, %v6955
    %v6991 = vpack.c.b16 %v6958, %v6957
    %v6992 = vpack.c.b16 %v6960, %v6959
    %v6993 = vpack.c.b16 %v6962, %v6961
    %v6994 = vpack.c.b16 %v6964, %v6963
    %v6995 = vpack.c.b16 %v6966, %v6965
    %v6996 = vpack.c.b16 %v6968, %v6967
    %v6997 = vpack.c.b16 %v6970, %v6969
    %v6998 = vpack.c.b16 %v6972, %v6971
    %v6999 = vpack.c.b16 %v6974, %v6973
    %v7000 = vpack.c.b16 %v6976, %v6975
    %7025 = vmatprep.subr.bf16.mxu0 0
    %7026 = vmatpush1.bf16.msra.mxu0 %v6977
    %7027 = vmatprep.subr.bf16.mxu0 0
    %7028 = vmatpush1.bf16.msra.mxu0 %v6978
    %7029 = vmatprep.subr.bf16.mxu0 0
    %7030 = vmatpush1.bf16.msra.mxu0 %v6979
    %7031 = vmatprep.subr.bf16.mxu0 0
    %7032 = vmatpush1.bf16.msra.mxu0 %v6980
    %7033 = vmatprep.subr.bf16.mxu0 0
    %7034 = vmatpush1.bf16.msra.mxu0 %v6981
    %7035 = vmatprep.subr.bf16.mxu0 0
    %7036 = vmatpush1.bf16.msra.mxu0 %v6982
    %7037 = vmatprep.subr.bf16.mxu0 0
    %7038 = vmatpush1.bf16.msra.mxu0 %v6983
    %7039 = vmatprep.subr.bf16.mxu0 0
    %7040 = vmatpush1.bf16.msra.mxu0 %v6984
    %7041 = vmatprep.subr.bf16.mxu0 0
    %7042 = vmatpush1.bf16.msra.mxu0 %v6985
    %7043 = vmatprep.subr.bf16.mxu0 0
    %7044 = vmatpush1.bf16.msra.mxu0 %v6986
    %7045 = vmatprep.subr.bf16.mxu0 0
    %7046 = vmatpush1.bf16.msra.mxu0 %v6987
    %7047 = vmatprep.subr.bf16.mxu0 0
    %7048 = vmatpush1.bf16.msra.mxu0 %v6988
    %7049 = vmatprep.subr.bf16.mxu0 0
    %7050 = vmatpush1.bf16.msra.mxu0 %v6989
    %7051 = vmatprep.subr.bf16.mxu0 0
    %7052 = vmatpush1.bf16.msra.mxu0 %v6990
    %7053 = vmatprep.subr.bf16.mxu0 0
    %7054 = vmatpush1.bf16.msra.mxu0 %v6991
    %7055 = vmatprep.subr.bf16.mxu0 0
    %7056 = vmatpush1.bf16.msra.mxu0 %v6992
    %7057 = vmatprep.mubr.bf16.mxu0 %v6824
    %7058 = vmatmul.mubr.bf16.gmra.mrb[0].mxu0 %v6823
    %v7059 = vpop.f32.mrb[0].mxu0
    %v7060 = vadd.f32 %v6879, %v7059
    %v7061 = vpop.f32.mrb[0].mxu0
    %v7062 = vpop.f32.mrb[0].mxu0
    %v7063 = vadd.f32 %v6879, %v7062
    %v7064 = vpop.f32.mrb[0].mxu0
    %7065 = vdwg.mxu0
    %7066 = vmatprep.subr.bf16.mxu0 0
    %7067 = vmatpush1.bf16.msra.mxu0 %v6993
    %7068 = vmatprep.subr.bf16.mxu0 0
    %7069 = vmatpush1.bf16.msra.mxu0 %v6994
    %7070 = vmatprep.subr.bf16.mxu0 0
    %7071 = vmatpush1.bf16.msra.mxu0 %v6995
    %7072 = vmatprep.subr.bf16.mxu0 0
    %7073 = vmatpush1.bf16.msra.mxu0 %v6996
    %7074 = vmatprep.subr.bf16.mxu0 0
    %7075 = vmatpush1.bf16.msra.mxu0 %v6997
    %7076 = vmatprep.subr.bf16.mxu0 0
    %7077 = vmatpush1.bf16.msra.mxu0 %v6998
    %7078 = vmatprep.subr.bf16.mxu0 0
    %7079 = vmatpush1.bf16.msra.mxu0 %v6999
    %7080 = vmatprep.subr.bf16.mxu0 0
    %7081 = vmatpush1.bf16.msra.mxu0 %v7000
    %7082 = vmatprep.subr.bf16.mxu0 0
    %7083 = vmatpush1.bf16.msra.mxu0 0
    %7084 = vmatprep.subr.bf16.mxu0 0
    %7085 = vmatpush1.bf16.msra.mxu0 0
    %7086 = vmatprep.subr.bf16.mxu0 0
    %7087 = vmatpush1.bf16.msra.mxu0 0
    %7088 = vmatprep.subr.bf16.mxu0 0
    %7089 = vmatpush1.bf16.msra.mxu0 0
    %7090 = vmatprep.subr.bf16.mxu0 0
    %7091 = vmatpush1.bf16.msra.mxu0 0
    %7092 = vmatprep.subr.bf16.mxu0 0
    %7093 = vmatpush1.bf16.msra.mxu0 0
    %7094 = vmatprep.subr.bf16.mxu0 0
    %7095 = vmatpush1.bf16.msra.mxu0 0
    %7096 = vmatprep.subr.bf16.mxu0 0
    %7097 = vmatpush1.bf16.msra.mxu0 0
    %7098 = vmatprep.mubr.bf16.mxu0 0
    %7099 = vmatmul.mubr.bf16.gmra.mrb[0].mxu0 %v6825
    %v7100 = vpop.f32.mrb[0].mxu0
    %v7101 = vadd.f32 %v7060, %v7100
    %v7102 = vpop.f32.mrb[0].mxu0
    %v7103 = vpop.f32.mrb[0].mxu0
    %v7104 = vadd.f32 %v7063, %v7103
    %v7105 = vpop.f32.mrb[0].mxu0
    %7106 = vdwg.mxu0
    %v7107 = vmax.f32 %v7101, 0.0
    %v7108 = vmax.f32 %v7104, 0.0
    %7109 = vst [vmem:[#allocation17] sm:$0xff] %v7107
    %7110 = vst [vmem:[#allocation17 + $0x8] sm:$0xff] %v7108
    // Predicated region
    $region74: #{tpu_custom_call.1} parent=1 // pred_check
      _
    $region75: #{tpu_custom_call.1} parent=1 // pred_check_branch
      %7112 = sbr.rel (0) target = $region77
    $region76: #{tpu_custom_call.1} parent=1 // pred_region
      %s7114 = ssub.s32 256, 256
      %7115 = vsyncadd [#allocation4], %s7114
      %s7116 = sshll.u32 [#allocation17], 4
      %s7117 = int_to_ptr.vmem [resolvable:$true] %s7116
      %7122 = dma.vmem_to_hbm [thread:$0]  %s7117, 256, %s9, [#allocation4], 128, 128, 8
    $region77: #{tpu_custom_call.1} parent=1 // pred_fallthru
      _
    // Predicated region
    $region78: #{tpu_custom_call.1} parent=1 // pred_check
      _
    $region79: #{tpu_custom_call.1} parent=1 // pred_check_branch
      %7124 = sbr.rel (0) target = $region81
    $region80: #{tpu_custom_call.1} parent=1 // pred_region
      %7125 = dma.done [#allocation4], 256
    $region81: #{tpu_custom_call.1} parent=1 // pred_fallthru
      _
    %7126 = vsyncpa [#allocation3], 1
    %7127 = vsyncpa [#allocation6], 1
    %7128 = vsyncpa [#allocation9], 1
    %7129 = vsyncpa [#allocation12], 1
    %7130 = vsyncpa [#allocation15], 1
    %7131 = vsyncpa [#allocation4], 1

// kernel: tpu_custom_call.1
$region0: #{tpu_custom_call.1}
  #allocation0 [shape = 'u32[]', space=smem, size = 0x4, offset = 0x4, fixed_abs, tag = 'smem constant byte address 0x4 - core index']
  #allocation1 [shape = 'u32[144,128]{1,0:T(1,128)}', space=vmem, size = 0x12000, scoped, tag = 'internal scratch']
  %s0 = inlined_call_operand.hbm [shape: bf16[16,256], index: 0, kind: input, shape index: {}]
  %s1 = inlined_call_operand.hbm [shape: bf16[256,1408], index: 1, kind: input, shape index: {}]
  %s2 = inlined_call_operand.hbm [shape: f32[1,1408], index: 2, kind: input, shape index: {}]
  %s3 = inlined_call_operand.hbm [shape: bf16[1408,768], index: 3, kind: input, shape index: {}]
  %s4 = inlined_call_operand.hbm [shape: f32[1,768], index: 4, kind: input, shape index: {}]
  %s5 = inlined_call_operand.hbm [shape: bf16[768,384], index: 5, kind: input, shape index: {}]
  %s6 = inlined_call_operand.hbm [shape: f32[1,384], index: 6, kind: input, shape index: {}]
  %s7 = inlined_call_operand.hbm [shape: bf16[384,128], index: 7, kind: input, shape index: {}]
  %s8 = inlined_call_operand.hbm [shape: f32[1,128], index: 8, kind: input, shape index: {}]
  %s9 = inlined_call_operand.hbm [shape: f32[16,128], index: 9, kind: output, shape index: {}]
  %s10 = sld [smem:[#allocation0]]
  $region82: #{tpu_custom_call.1} parent=0
    _
  %s12 = ssub.s32 1, %s10
  %s13 = scalar_select 0, %s12, %s10
  $region1: #{tpu_custom_call.1} parent=0
    #allocation2 [shape = 'u8[8192]{0}', space=vmem, size = 0x2000, scoped, tag = 'input window, operand 0, single buffered']
    #allocation3 [shape = 's32[1]{0}', space=sflag, size = 0x4, scoped, tag = 'scoped memory for tpu_custom_call.1']
    #allocation4 [shape = 's32[1]{0}', space=sflag, size = 0x4, scoped, tag = 'scoped memory for tpu_custom_call.1']
    #allocation5 [shape = 'u8[720896]{0}', space=vmem, size = 0xb0000, scoped, tag = 'input window, operand 1, single buffered']
    #allocation6 [shape = 's32[1]{0}', space=sflag, size = 0x4, scoped, tag = 'scoped memory for tpu_custom_call.1']
    #allocation7 [shape = 'u8[5632]{0}', space=vmem, size = 0x1800, scoped, tag = 'input window, operand 2, single buffered']
    #allocation8 [shape = 'u8[2162688]{0}', space=vmem, size = 0x210000, scoped, tag = 'input window, operand 3, single buffered']
    #allocation9 [shape = 's32[1]{0}', space=sflag, size = 0x4, scoped, tag = 'scoped memory for tpu_custom_call.1']
    #allocation10 [shape = 'u8[3072]{0}', space=vmem, size = 0xc00, scoped, tag = 'input window, operand 4, single buffered']
    #allocation11 [shape = 'u8[589824]{0}', space=vmem, size = 0x90000, scoped, tag = 'input window, operand 5, single buffered']
    #allocation12 [shape = 's32[1]{0}', space=sflag, size = 0x4, scoped, tag = 'scoped memory for tpu_custom_call.1']
    #allocation13 [shape = 'u8[1536]{0}', space=vmem, size = 0x800, scoped, tag = 'input window, operand 6, single buffered']
    #allocation14 [shape = 'u8[98304]{0}', space=vmem, size = 0x18000, scoped, tag = 'input window, operand 7, single buffered']
    #allocation15 [shape = 's32[1]{0}', space=sflag, size = 0x4, scoped, tag = 'scoped memory for tpu_custom_call.1']
    #allocation16 [shape = 'u8[512]{0}', space=vmem, size = 0x400, scoped, tag = 'input window, operand 8, single buffered']
    #allocation17 [shape = 'u8[8192]{0}', space=vmem, size = 0x2000, scoped, tag = 'output window, operand 0, single buffered']
    %14 = vsyncpa [#allocation3], 0
    %15 = vsyncpa [#allocation6], 0
    %16 = vsyncpa [#allocation9], 0
    %17 = vsyncpa [#allocation12], 0
    %18 = vsyncpa [#allocation15], 0
    %19 = vsyncpa [#allocation4], 0
    // Predicated region
    $region2: #{tpu_custom_call.1} parent=1 // pred_check
      _
    $region3: #{tpu_custom_call.1} parent=1 // pred_check_branch
      %21 = sbr.rel (0) target = $region5
    $region4: #{tpu_custom_call.1} parent=1 // pred_region
      %s23 = ssub.s32 256, 256
      %24 = vsyncadd [#allocation3], %s23
      %s25 = sshll.u32 [#allocation2], 4
      %s26 = int_to_ptr.vmem [resolvable:$true] %s25
      %31 = dma.hbm_to_vmem [thread:$0]  %s0, 256, %s26, [#allocation3], 128, 128, 8
    $region5: #{tpu_custom_call.1} parent=1 // pred_fallthru
      _
    // Predicated region
    $region6: #{tpu_custom_call.1} parent=1 // pred_check
      _
    $region7: #{tpu_custom_call.1} parent=1 // pred_check_branch
      %33 = sbr.rel (0) target = $region9
    $region8: #{tpu_custom_call.1} parent=1 // pred_region
      %s35 = ssub.s32 22528, 22528
      %36 = vsyncadd [#allocation6], %s35
      %s37 = sshll.u32 [#allocation5], 4
      %s38 = int_to_ptr.vmem [resolvable:$true] %s37
      %43 = dma.hbm_to_vmem [thread:$0]  %s1, 22528, %s38, [#allocation6], 704, 704, 44
    $region9: #{tpu_custom_call.1} parent=1 // pred_fallthru
      _
    // Predicated region
    $region10: #{tpu_custom_call.1} parent=1 // pred_check
      _
    $region11: #{tpu_custom_call.1} parent=1 // pred_check_branch
      %45 = sbr.rel (0) target = $region13
    $region12: #{tpu_custom_call.1} parent=1 // pred_region
      %s47 = ssub.s32 176, 176
      %48 = vsyncadd [#allocation6], %s47
      %s50 = sshll.u32 [#allocation7], 4
      %s51 = int_to_ptr.vmem [resolvable:$true] %s50
      %53 = dma.hbm_to_vmem [thread:$0]  %s2, 176, %s51, [#allocation6]
    $region13: #{tpu_custom_call.1} parent=1 // pred_fallthru
      _
    // Predicated region
    $region14: #{tpu_custom_call.1} parent=1 // pred_check
      _
    $region15: #{tpu_custom_call.1} parent=1 // pred_check_branch
      %55 = sbr.rel (0) target = $region17
    $region16: #{tpu_custom_call.1} parent=1 // pred_region
      %s57 = ssub.s32 67584, 67584
      %58 = vsyncadd [#allocation9], %s57
      %s59 = sshll.u32 [#allocation8], 4
      %s60 = int_to_ptr.vmem [resolvable:$true] %s59
      %65 = dma.hbm_to_vmem [thread:$0]  %s3, 67584, %s60, [#allocation9], 384, 384, 24
    $region17: #{tpu_custom_call.1} parent=1 // pred_fallthru
      _
    // Predicated region
    $region18: #{tpu_custom_call.1} parent=1 // pred_check
      _
    $region19: #{tpu_custom_call.1} parent=1 // pred_check_branch
      %67 = sbr.rel (0) target = $region21
    $region20: #{tpu_custom_call.1} parent=1 // pred_region
      %s69 = ssub.s32 96, 96
      %70 = vsyncadd [#allocation9], %s69
      %s72 = sshll.u32 [#allocation10], 4
      %s73 = int_to_ptr.vmem [resolvable:$true] %s72
      %75 = dma.hbm_to_vmem [thread:$0]  %s4, 96, %s73, [#allocation9]
    $region21: #{tpu_custom_call.1} parent=1 // pred_fallthru
      _
    // Predicated region
    $region22: #{tpu_custom_call.1} parent=1 // pred_check
      _
    $region23: #{tpu_custom_call.1} parent=1 // pred_check_branch
      %77 = sbr.rel (0) target = $region25
    $region24: #{tpu_custom_call.1} parent=1 // pred_region
      %s79 = ssub.s32 18432, 18432
      %80 = vsyncadd [#allocation12], %s79
      %s81 = sshll.u32 [#allocation11], 4
      %s82 = int_to_ptr.vmem [resolvable:$true] %s81
      %87 = dma.hbm_to_vmem [thread:$0]  %s5, 18432, %s82, [#allocation12], 192, 192, 12
    $region25: #{tpu_custom_call.1} parent=1 // pred_fallthru
      _
    // Predicated region
    $region26: #{tpu_custom_call.1} parent=1 // pred_check
      _
    $region27: #{tpu_custom_call.1} parent=1 // pred_check_branch
      %89 = sbr.rel (0) target = $region29
    $region28: #{tpu_custom_call.1} parent=1 // pred_region
      %s91 = ssub.s32 48, 48
      %92 = vsyncadd [#allocation12], %s91
      %s94 = sshll.u32 [#allocation13], 4
      %s95 = int_to_ptr.vmem [resolvable:$true] %s94
      %97 = dma.hbm_to_vmem [thread:$0]  %s6, 48, %s95, [#allocation12]
    $region29: #{tpu_custom_call.1} parent=1 // pred_fallthru
      _
    // Predicated region
    $region30: #{tpu_custom_call.1} parent=1 // pred_check
      _
    $region31: #{tpu_custom_call.1} parent=1 // pred_check_branch
      %99 = sbr.rel (0) target = $region33
    $region32: #{tpu_custom_call.1} parent=1 // pred_region
      %s101 = ssub.s32 3072, 3072
      %102 = vsyncadd [#allocation15], %s101
      %s103 = sshll.u32 [#allocation14], 4
      %s104 = int_to_ptr.vmem [resolvable:$true] %s103
      %109 = dma.hbm_to_vmem [thread:$0]  %s7, 3072, %s104, [#allocation15], 64, 64, 4
    $region33: #{tpu_custom_call.1} parent=1 // pred_fallthru
      _
    // Predicated region
    $region34: #{tpu_custom_call.1} parent=1 // pred_check
      _
    $region35: #{tpu_custom_call.1} parent=1 // pred_check_branch
      %111 = sbr.rel (0) target = $region37
    $region36: #{tpu_custom_call.1} parent=1 // pred_region
      %s113 = ssub.s32 16, 16
      %114 = vsyncadd [#allocation15], %s113
      %s116 = sshll.u32 [#allocation16], 4
      %s117 = int_to_ptr.vmem [resolvable:$true] %s116
      %119 = dma.hbm_to_vmem [thread:$0]  %s8, 16, %s117, [#allocation15]
    $region37: #{tpu_custom_call.1} parent=1 // pred_fallthru
      _
    // Predicated region
    $region38: #{tpu_custom_call.1} parent=1 // pred_check
      _
    $region39: #{tpu_custom_call.1} parent=1 // pred_check_branch
      %121 = sbr.rel (0) target = $region41
    $region40: #{tpu_custom_call.1} parent=1 // pred_region
      %122 = dma.done [#allocation3], 256
    $region41: #{tpu_custom_call.1} parent=1 // pred_fallthru
      _
    // Predicated region
    $region42: #{tpu_custom_call.1} parent=1 // pred_check
      _
    $region43: #{tpu_custom_call.1} parent=1 // pred_check_branch
      %124 = sbr.rel (0) target = $region45
    $region44: #{tpu_custom_call.1} parent=1 // pred_region
      %125 = dma.done [#allocation6], 22528
    $region45: #{tpu_custom_call.1} parent=1 // pred_fallthru
      _
    // Predicated region
    $region46: #{tpu_custom_call.1} parent=1 // pred_check
      _
    $region47: #{tpu_custom_call.1} parent=1 // pred_check_branch
      %127 = sbr.rel (0) target = $region49
    $region48: #{tpu_custom_call.1} parent=1 // pred_region
      %128 = dma.done [#allocation6], 176
    $region49: #{tpu_custom_call.1} parent=1 // pred_fallthru
      _
    // Predicated region
    $region50: #{tpu_custom_call.1} parent=1 // pred_check
      _
    $region51: #{tpu_custom_call.1} parent=1 // pred_check_branch
      %130 = sbr.rel (0) target = $region53
    $region52: #{tpu_custom_call.1} parent=1 // pred_region
      %131 = dma.done [#allocation9], 67584
    $region53: #{tpu_custom_call.1} parent=1 // pred_fallthru
      _
    // Predicated region
    $region54: #{tpu_custom_call.1} parent=1 // pred_check
      _
    $region55: #{tpu_custom_call.1} parent=1 // pred_check_branch
      %133 = sbr.rel (0) target = $region57
    $region56: #{tpu_custom_call.1} parent=1 // pred_region
      %134 = dma.done [#allocation9], 96
    $region57: #{tpu_custom_call.1} parent=1 // pred_fallthru
      _
    // Predicated region
    $region58: #{tpu_custom_call.1} parent=1 // pred_check
      _
    $region59: #{tpu_custom_call.1} parent=1 // pred_check_branch
      %136 = sbr.rel (0) target = $region61
    $region60: #{tpu_custom_call.1} parent=1 // pred_region
      %137 = dma.done [#allocation12], 18432
    $region61: #{tpu_custom_call.1} parent=1 // pred_fallthru
      _
    // Predicated region
    $region62: #{tpu_custom_call.1} parent=1 // pred_check
      _
    $region63: #{tpu_custom_call.1} parent=1 // pred_check_branch
      %139 = sbr.rel (0) target = $region65
    $region64: #{tpu_custom_call.1} parent=1 // pred_region
      %140 = dma.done [#allocation12], 48
    $region65: #{tpu_custom_call.1} parent=1 // pred_fallthru
      _
    // Predicated region
    $region66: #{tpu_custom_call.1} parent=1 // pred_check
      _
    $region67: #{tpu_custom_call.1} parent=1 // pred_check_branch
      %142 = sbr.rel (0) target = $region69
    $region68: #{tpu_custom_call.1} parent=1 // pred_region
      %143 = dma.done [#allocation15], 3072
    $region69: #{tpu_custom_call.1} parent=1 // pred_fallthru
      _
    // Predicated region
    $region70: #{tpu_custom_call.1} parent=1 // pred_check
      _
    $region71: #{tpu_custom_call.1} parent=1 // pred_check_branch
      %145 = sbr.rel (0) target = $region73
    $region72: #{tpu_custom_call.1} parent=1 // pred_region
      %146 = dma.done [#allocation15], 16
    $region73: #{tpu_custom_call.1} parent=1 // pred_fallthru
      _
    %v148 = vld [vmem:[#allocation2] sm:$0xff]
    %v149 = vld [vmem:[#allocation2 + $0x8] sm:$0xff]
    %v150 = vld [vmem:[#allocation5] sm:$0xff]
    %v151 = vld [vmem:[#allocation5 + $0x8] sm:$0xff]
    %v152 = vld [vmem:[#allocation5 + $0x10] sm:$0xff]
    %v153 = vld [vmem:[#allocation5 + $0x18] sm:$0xff]
    %v154 = vld [vmem:[#allocation5 + $0x20] sm:$0xff]
    %v155 = vld [vmem:[#allocation5 + $0x28] sm:$0xf]
    %v156 = vld [vmem:[#allocation5 + $0x2c] sm:$0xff]
    %v157 = vld [vmem:[#allocation5 + $0x34] sm:$0xff]
    %v158 = vld [vmem:[#allocation5 + $0x3c] sm:$0xff]
    %v159 = vld [vmem:[#allocation5 + $0x44] sm:$0xff]
    %v160 = vld [vmem:[#allocation5 + $0x4c] sm:$0xff]
    %v161 = vld [vmem:[#allocation5 + $0x54] sm:$0xf]
    %v162 = vld [vmem:[#allocation5 + $0x58] sm:$0xff]
    %v163 = vld [vmem:[#allocation5 + $0x60] sm:$0xff]
    %v164 = vld [vmem:[#allocation5 + $0x68] sm:$0xff]
    %v165 = vld [vmem:[#allocation5 + $0x70] sm:$0xff]
    %v166 = vld [vmem:[#allocation5 + $0x78] sm:$0xff]
    %v167 = vld [vmem:[#allocation5 + $0x80] sm:$0xf]
    %v168 = vld [vmem:[#allocation5 + $0x84] sm:$0xff]
    %v169 = vld [vmem:[#allocation5 + $0x8c] sm:$0xff]
    %v170 = vld [vmem:[#allocation5 + $0x94] sm:$0xff]
    %v171 = vld [vmem:[#allocation5 + $0x9c] sm:$0xff]
    %v172 = vld [vmem:[#allocation5 + $0xa4] sm:$0xff]
    %v173 = vld [vmem:[#allocation5 + $0xac] sm:$0xf]
    %v174 = vld [vmem:[#allocation5 + $0xb0] sm:$0xff]
    %v175 = vld [vmem:[#allocation5 + $0xb8] sm:$0xff]
    %v176 = vld [vmem:[#allocation5 + $0xc0] sm:$0xff]
    %v177 = vld [vmem:[#allocation5 + $0xc8] sm:$0xff]
    %v178 = vld [vmem:[#allocation5 + $0xd0] sm:$0xff]
    %v179 = vld [vmem:[#allocation5 + $0xd8] sm:$0xf]
    %v180 = vld [vmem:[#allocation5 + $0xdc] sm:$0xff]
    %v181 = vld [vmem:[#allocation5 + $0xe4] sm:$0xff]
    %v182 = vld [vmem:[#allocation5 + $0xec] sm:$0xff]
    %v183 = vld [vmem:[#allocation5 + $0xf4] sm:$0xff]
    %v184 = vld [vmem:[#allocation5 + $0xfc] sm:$0xff]
    %v185 = vld [vmem:[#allocation5 + $0x104] sm:$0xf]
    %v186 = vld [vmem:[#allocation5 + $0x108] sm:$0xff]
    %v187 = vld [vmem:[#allocation5 + $0x110] sm:$0xff]
    %v188 = vld [vmem:[#allocation5 + $0x118] sm:$0xff]
    %v189 = vld [vmem:[#allocation5 + $0x120] sm:$0xff]
    %v190 = vld [vmem:[#allocation5 + $0x128] sm:$0xff]
    %v191 = vld [vmem:[#allocation5 + $0x130] sm:$0xf]
    %v192 = vld [vmem:[#allocation5 + $0x134] sm:$0xff]
    %v193 = vld [vmem:[#allocation5 + $0x13c] sm:$0xff]
    %v194 = vld [vmem:[#allocation5 + $0x144] sm:$0xff]
    %v195 = vld [vmem:[#allocation5 + $0x14c] sm:$0xff]
    %v196 = vld [vmem:[#allocation5 + $0x154] sm:$0xff]
    %v197 = vld [vmem:[#allocation5 + $0x15c] sm:$0xf]
    %v198 = vld [vmem:[#allocation5 + $0x160] sm:$0xff]
    %v199 = vld [vmem:[#allocation5 + $0x168] sm:$0xff]
    %v200 = vld [vmem:[#allocation5 + $0x170] sm:$0xff]
    %v201 = vld [vmem:[#allocation5 + $0x178] sm:$0xff]
    %v202 = vld [vmem:[#allocation5 + $0x180] sm:$0xff]
    %v203 = vld [vmem:[#allocation5 + $0x188] sm:$0xf]
    %v204 = vld [vmem:[#allocation5 + $0x18c] sm:$0xff]
    %v205 = vld [vmem:[#allocation5 + $0x194] sm:$0xff]
    %v206 = vld [vmem:[#allocation5 + $0x19c] sm:$0xff]
    %v207 = vld [vmem:[#allocation5 + $0x1a4] sm:$0xff]
    %v208 = vld [vmem:[#allocation5 + $0x1ac] sm:$0xff]
    %v209 = vld [vmem:[#allocation5 + $0x1b4] sm:$0xf]
    %v210 = vld [vmem:[#allocation5 + $0x1b8] sm:$0xff]
    %v211 = vld [vmem:[#allocation5 + $0x1c0] sm:$0xff]
    %v212 = vld [vmem:[#allocation5 + $0x1c8] sm:$0xff]
    %v213 = vld [vmem:[#allocation5 + $0x1d0] sm:$0xff]
    %v214 = vld [vmem:[#allocation5 + $0x1d8] sm:$0xff]
    %v215 = vld [vmem:[#allocation5 + $0x1e0] sm:$0xf]
    %v216 = vld [vmem:[#allocation5 + $0x1e4] sm:$0xff]
    %v217 = vld [vmem:[#allocation5 + $0x1ec] sm:$0xff]
    %v218 = vld [vmem:[#allocation5 + $0x1f4] sm:$0xff]
    %v219 = vld [vmem:[#allocation5 + $0x1fc] sm:$0xff]
    %v220 = vld [vmem:[#allocation5 + $0x204] sm:$0xff]
    %v221 = vld [vmem:[#allocation5 + $0x20c] sm:$0xf]
    %v222 = vld [vmem:[#allocation5 + $0x210] sm:$0xff]
    %v223 = vld [vmem:[#allocation5 + $0x218] sm:$0xff]
    %v224 = vld [vmem:[#allocation5 + $0x220] sm:$0xff]
    %v225 = vld [vmem:[#allocation5 + $0x228] sm:$0xff]
    %v226 = vld [vmem:[#allocation5 + $0x230] sm:$0xff]
    %v227 = vld [vmem:[#allocation5 + $0x238] sm:$0xf]
    %v228 = vld [vmem:[#allocation5 + $0x23c] sm:$0xff]
    %v229 = vld [vmem:[#allocation5 + $0x244] sm:$0xff]
    %v230 = vld [vmem:[#allocation5 + $0x24c] sm:$0xff]
    %v231 = vld [vmem:[#allocation5 + $0x254] sm:$0xff]
    %v232 = vld [vmem:[#allocation5 + $0x25c] sm:$0xff]
    %v233 = vld [vmem:[#allocation5 + $0x264] sm:$0xf]
    %v234 = vld [vmem:[#allocation5 + $0x268] sm:$0xff]
    %v235 = vld [vmem:[#allocation5 + $0x270] sm:$0xff]
    %v236 = vld [vmem:[#allocation5 + $0x278] sm:$0xff]
    %v237 = vld [vmem:[#allocation5 + $0x280] sm:$0xff]
    %v238 = vld [vmem:[#allocation5 + $0x288] sm:$0xff]
    %v239 = vld [vmem:[#allocation5 + $0x290] sm:$0xf]
    %v240 = vld [vmem:[#allocation5 + $0x294] sm:$0xff]
    %v241 = vld [vmem:[#allocation5 + $0x29c] sm:$0xff]
    %v242 = vld [vmem:[#allocation5 + $0x2a4] sm:$0xff]
    %v243 = vld [vmem:[#allocation5 + $0x2ac] sm:$0xff]
    %v244 = vld [vmem:[#allocation5 + $0x2b4] sm:$0xff]
    %v245 = vld [vmem:[#allocation5 + $0x2bc] sm:$0xf]
    %v246 = vld [vmem:[#allocation5 + $0x2c0] sm:$0xff]
    %v247 = vld [vmem:[#allocation5 + $0x2c8] sm:$0xff]
    %v248 = vld [vmem:[#allocation5 + $0x2d0] sm:$0xff]
    %v249 = vld [vmem:[#allocation5 + $0x2d8] sm:$0xff]
    %v250 = vld [vmem:[#allocation5 + $0x2e0] sm:$0xff]
    %v251 = vld [vmem:[#allocation5 + $0x2e8] sm:$0xf]
    %v252 = vld [vmem:[#allocation5 + $0x2ec] sm:$0xff]
    %v253 = vld [vmem:[#allocation5 + $0x2f4] sm:$0xff]
    %v254 = vld [vmem:[#allocation5 + $0x2fc] sm:$0xff]
    %v255 = vld [vmem:[#allocation5 + $0x304] sm:$0xff]
    %v256 = vld [vmem:[#allocation5 + $0x30c] sm:$0xff]
    %v257 = vld [vmem:[#allocation5 + $0x314] sm:$0xf]
    %v258 = vld [vmem:[#allocation5 + $0x318] sm:$0xff]
    %v259 = vld [vmem:[#allocation5 + $0x320] sm:$0xff]
    %v260 = vld [vmem:[#allocation5 + $0x328] sm:$0xff]
    %v261 = vld [vmem:[#allocation5 + $0x330] sm:$0xff]
    %v262 = vld [vmem:[#allocation5 + $0x338] sm:$0xff]
    %v263 = vld [vmem:[#allocation5 + $0x340] sm:$0xf]
    %v264 = vld [vmem:[#allocation5 + $0x344] sm:$0xff]
    %v265 = vld [vmem:[#allocation5 + $0x34c] sm:$0xff]
    %v266 = vld [vmem:[#allocation5 + $0x354] sm:$0xff]
    %v267 = vld [vmem:[#allocation5 + $0x35c] sm:$0xff]
    %v268 = vld [vmem:[#allocation5 + $0x364] sm:$0xff]
    %v269 = vld [vmem:[#allocation5 + $0x36c] sm:$0xf]
    %v270 = vld [vmem:[#allocation5 + $0x370] sm:$0xff]
    %v271 = vld [vmem:[#allocation5 + $0x378] sm:$0xff]
    %v272 = vld [vmem:[#allocation5 + $0x380] sm:$0xff]
    %v273 = vld [vmem:[#allocation5 + $0x388] sm:$0xff]
    %v274 = vld [vmem:[#allocation5 + $0x390] sm:$0xff]
    %v275 = vld [vmem:[#allocation5 + $0x398] sm:$0xf]
    %v276 = vld [vmem:[#allocation5 + $0x39c] sm:$0xff]
    %v277 = vld [vmem:[#allocation5 + $0x3a4] sm:$0xff]
    %v278 = vld [vmem:[#allocation5 + $0x3ac] sm:$0xff]
    %v279 = vld [vmem:[#allocation5 + $0x3b4] sm:$0xff]
    %v280 = vld [vmem:[#allocation5 + $0x3bc] sm:$0xff]
    %v281 = vld [vmem:[#allocation5 + $0x3c4] sm:$0xf]
    %v282 = vld [vmem:[#allocation5 + $0x3c8] sm:$0xff]
    %v283 = vld [vmem:[#allocation5 + $0x3d0] sm:$0xff]
    %v284 = vld [vmem:[#allocation5 + $0x3d8] sm:$0xff]
    %v285 = vld [vmem:[#allocation5 + $0x3e0] sm:$0xff]
    %v286 = vld [vmem:[#allocation5 + $0x3e8] sm:$0xff]
    %v287 = vld [vmem:[#allocation5 + $0x3f0] sm:$0xf]
    %v288 = vld [vmem:[#allocation5 + $0x3f4] sm:$0xff]
    %v289 = vld [vmem:[#allocation5 + $0x3fc] sm:$0xff]
    %v290 = vld [vmem:[#allocation5 + $0x404] sm:$0xff]
    %v291 = vld [vmem:[#allocation5 + $0x40c] sm:$0xff]
    %v292 = vld [vmem:[#allocation5 + $0x414] sm:$0xff]
    %v293 = vld [vmem:[#allocation5 + $0x41c] sm:$0xf]
    %v294 = vld [vmem:[#allocation5 + $0x420] sm:$0xff]
    %v295 = vld [vmem:[#allocation5 + $0x428] sm:$0xff]
    %v296 = vld [vmem:[#allocation5 + $0x430] sm:$0xff]
    %v297 = vld [vmem:[#allocation5 + $0x438] sm:$0xff]
    %v298 = vld [vmem:[#allocation5 + $0x440] sm:$0xff]
    %v299 = vld [vmem:[#allocation5 + $0x448] sm:$0xf]
    %v300 = vld [vmem:[#allocation5 + $0x44c] sm:$0xff]
    %v301 = vld [vmem:[#allocation5 + $0x454] sm:$0xff]
    %v302 = vld [vmem:[#allocation5 + $0x45c] sm:$0xff]
    %v303 = vld [vmem:[#allocation5 + $0x464] sm:$0xff]
    %v304 = vld [vmem:[#allocation5 + $0x46c] sm:$0xff]
    %v305 = vld [vmem:[#allocation5 + $0x474] sm:$0xf]
    %v306 = vld [vmem:[#allocation5 + $0x478] sm:$0xff]
    %v307 = vld [vmem:[#allocation5 + $0x480] sm:$0xff]
    %v308 = vld [vmem:[#allocation5 + $0x488] sm:$0xff]
    %v309 = vld [vmem:[#allocation5 + $0x490] sm:$0xff]
    %v310 = vld [vmem:[#allocation5 + $0x498] sm:$0xff]
    %v311 = vld [vmem:[#allocation5 + $0x4a0] sm:$0xf]
    %v312 = vld [vmem:[#allocation5 + $0x4a4] sm:$0xff]
    %v313 = vld [vmem:[#allocation5 + $0x4ac] sm:$0xff]
    %v314 = vld [vmem:[#allocation5 + $0x4b4] sm:$0xff]
    %v315 = vld [vmem:[#allocation5 + $0x4bc] sm:$0xff]
    %v316 = vld [vmem:[#allocation5 + $0x4c4] sm:$0xff]
    %v317 = vld [vmem:[#allocation5 + $0x4cc] sm:$0xf]
    %v318 = vld [vmem:[#allocation5 + $0x4d0] sm:$0xff]
    %v319 = vld [vmem:[#allocation5 + $0x4d8] sm:$0xff]
    %v320 = vld [vmem:[#allocation5 + $0x4e0] sm:$0xff]
    %v321 = vld [vmem:[#allocation5 + $0x4e8] sm:$0xff]
    %v322 = vld [vmem:[#allocation5 + $0x4f0] sm:$0xff]
    %v323 = vld [vmem:[#allocation5 + $0x4f8] sm:$0xf]
    %v324 = vld [vmem:[#allocation5 + $0x4fc] sm:$0xff]
    %v325 = vld [vmem:[#allocation5 + $0x504] sm:$0xff]
    %v326 = vld [vmem:[#allocation5 + $0x50c] sm:$0xff]
    %v327 = vld [vmem:[#allocation5 + $0x514] sm:$0xff]
    %v328 = vld [vmem:[#allocation5 + $0x51c] sm:$0xff]
    %v329 = vld [vmem:[#allocation5 + $0x524] sm:$0xf]
    %v330 = vld [vmem:[#allocation5 + $0x528] sm:$0xff]
    %v331 = vld [vmem:[#allocation5 + $0x530] sm:$0xff]
    %v332 = vld [vmem:[#allocation5 + $0x538] sm:$0xff]
    %v333 = vld [vmem:[#allocation5 + $0x540] sm:$0xff]
    %v334 = vld [vmem:[#allocation5 + $0x548] sm:$0xff]
    %v335 = vld [vmem:[#allocation5 + $0x550] sm:$0xf]
    %v336 = vld [vmem:[#allocation5 + $0x554] sm:$0xff]
    %v337 = vld [vmem:[#allocation5 + $0x55c] sm:$0xff]
    %v338 = vld [vmem:[#allocation5 + $0x564] sm:$0xff]
    %v339 = vld [vmem:[#allocation5 + $0x56c] sm:$0xff]
    %v340 = vld [vmem:[#allocation5 + $0x574] sm:$0xff]
    %v341 = vld [vmem:[#allocation5 + $0x57c] sm:$0xf]
    %v342 = vld [vmem:[#allocation7] sm:$0xff]
    %v343 = vld [vmem:[#allocation7 + $0x8] sm:$0x7]
    %v346 = vlaneseq
    %v347 = vshrl.u32 %v346, 7
    %v348 = vsub.s32 0, %v347
    %v349 = vrot.slane %v342, %v348
    %v350 = vlaneseq
    %v351 = vshrl.u32 %v350, 7
    %v352 = vsub.s32 1, %v351
    %v353 = vrot.slane %v342, %v352
    %v354 = vlaneseq
    %v355 = vshrl.u32 %v354, 7
    %v356 = vsub.s32 2, %v355
    %v357 = vrot.slane %v342, %v356
    %v358 = vlaneseq
    %v359 = vshrl.u32 %v358, 7
    %v360 = vsub.s32 3, %v359
    %v361 = vrot.slane %v342, %v360
    %v362 = vlaneseq
    %v363 = vshrl.u32 %v362, 7
    %v364 = vsub.s32 4, %v363
    %v365 = vrot.slane %v342, %v364
    %v366 = vlaneseq
    %v367 = vshrl.u32 %v366, 7
    %v368 = vsub.s32 5, %v367
    %v369 = vrot.slane %v342, %v368
    %v370 = vlaneseq
    %v371 = vshrl.u32 %v370, 7
    %v372 = vsub.s32 6, %v371
    %v373 = vrot.slane %v342, %v372
    %v374 = vlaneseq
    %v375 = vshrl.u32 %v374, 7
    %v376 = vsub.s32 7, %v375
    %v377 = vrot.slane %v342, %v376
    %v378 = vlaneseq
    %v379 = vshrl.u32 %v378, 7
    %v380 = vsub.s32 0, %v379
    %v381 = vrot.slane %v343, %v380
    %v382 = vlaneseq
    %v383 = vshrl.u32 %v382, 7
    %v384 = vsub.s32 1, %v383
    %v385 = vrot.slane %v343, %v384
    %v386 = vlaneseq
    %v387 = vshrl.u32 %v386, 7
    %v388 = vsub.s32 2, %v387
    %v389 = vrot.slane %v343, %v388
    %v403 = vunpack.c.l.b16 %v148
    %v404 = vunpack.c.h.b16 %v148
    %v405 = vunpack.c.l.b16 %v149
    %v406 = vunpack.c.h.b16 %v149
    %v407 = vpack.c.b16 %v405, %v403
    %v408 = vpack.c.b16 %v406, %v404
    %v603 = vunpack.c.l.b16 %v150
    %v604 = vunpack.c.h.b16 %v150
    %v605 = vunpack.c.l.b16 %v151
    %v606 = vunpack.c.h.b16 %v151
    %v607 = vunpack.c.l.b16 %v152
    %v608 = vunpack.c.h.b16 %v152
    %v609 = vunpack.c.l.b16 %v153
    %v610 = vunpack.c.h.b16 %v153
    %v611 = vunpack.c.l.b16 %v154
    %v612 = vunpack.c.h.b16 %v154
    %v613 = vunpack.c.l.b16 %v155
    %v614 = vunpack.c.l.b16 %v156
    %v615 = vunpack.c.h.b16 %v156
    %v616 = vunpack.c.l.b16 %v157
    %v617 = vunpack.c.h.b16 %v157
    %v618 = vunpack.c.l.b16 %v158
    %v619 = vunpack.c.h.b16 %v158
    %v620 = vunpack.c.l.b16 %v159
    %v621 = vunpack.c.h.b16 %v159
    %v622 = vunpack.c.l.b16 %v160
    %v623 = vunpack.c.h.b16 %v160
    %v624 = vunpack.c.l.b16 %v161
    %v625 = vunpack.c.l.b16 %v162
    %v626 = vunpack.c.h.b16 %v162
    %v627 = vunpack.c.l.b16 %v163
    %v628 = vunpack.c.h.b16 %v163
    %v629 = vunpack.c.l.b16 %v164
    %v630 = vunpack.c.h.b16 %v164
    %v631 = vunpack.c.l.b16 %v165
    %v632 = vunpack.c.h.b16 %v165
    %v633 = vunpack.c.l.b16 %v166
    %v634 = vunpack.c.h.b16 %v166
    %v635 = vunpack.c.l.b16 %v167
    %v636 = vunpack.c.l.b16 %v168
    %v637 = vunpack.c.h.b16 %v168
    %v638 = vunpack.c.l.b16 %v169
    %v639 = vunpack.c.h.b16 %v169
    %v640 = vunpack.c.l.b16 %v170
    %v641 = vunpack.c.h.b16 %v170
    %v642 = vunpack.c.l.b16 %v171
    %v643 = vunpack.c.h.b16 %v171
    %v644 = vunpack.c.l.b16 %v172
    %v645 = vunpack.c.h.b16 %v172
    %v646 = vunpack.c.l.b16 %v173
    %v647 = vunpack.c.l.b16 %v174
    %v648 = vunpack.c.h.b16 %v174
    %v649 = vunpack.c.l.b16 %v175
    %v650 = vunpack.c.h.b16 %v175
    %v651 = vunpack.c.l.b16 %v176
    %v652 = vunpack.c.h.b16 %v176
    %v653 = vunpack.c.l.b16 %v177
    %v654 = vunpack.c.h.b16 %v177
    %v655 = vunpack.c.l.b16 %v178
    %v656 = vunpack.c.h.b16 %v178
    %v657 = vunpack.c.l.b16 %v179
    %v658 = vunpack.c.l.b16 %v180
    %v659 = vunpack.c.h.b16 %v180
    %v660 = vunpack.c.l.b16 %v181
    %v661 = vunpack.c.h.b16 %v181
    %v662 = vunpack.c.l.b16 %v182
    %v663 = vunpack.c.h.b16 %v182
    %v664 = vunpack.c.l.b16 %v183
    %v665 = vunpack.c.h.b16 %v183
    %v666 = vunpack.c.l.b16 %v184
    %v667 = vunpack.c.h.b16 %v184
    %v668 = vunpack.c.l.b16 %v185
    %v669 = vunpack.c.l.b16 %v186
    %v670 = vunpack.c.h.b16 %v186
    %v671 = vunpack.c.l.b16 %v187
    %v672 = vunpack.c.h.b16 %v187
    %v673 = vunpack.c.l.b16 %v188
    %v674 = vunpack.c.h.b16 %v188
    %v675 = vunpack.c.l.b16 %v189
    %v676 = vunpack.c.h.b16 %v189
    %v677 = vunpack.c.l.b16 %v190
    %v678 = vunpack.c.h.b16 %v190
    %v679 = vunpack.c.l.b16 %v191
    %v680 = vunpack.c.l.b16 %v192
    %v681 = vunpack.c.h.b16 %v192
    %v682 = vunpack.c.l.b16 %v193
    %v683 = vunpack.c.h.b16 %v193
    %v684 = vunpack.c.l.b16 %v194
    %v685 = vunpack.c.h.b16 %v194
    %v686 = vunpack.c.l.b16 %v195
    %v687 = vunpack.c.h.b16 %v195
    %v688 = vunpack.c.l.b16 %v196
    %v689 = vunpack.c.h.b16 %v196
    %v690 = vunpack.c.l.b16 %v197
    %v691 = vunpack.c.l.b16 %v198
    %v692 = vunpack.c.h.b16 %v198
    %v693 = vunpack.c.l.b16 %v199
    %v694 = vunpack.c.h.b16 %v199
    %v695 = vunpack.c.l.b16 %v200
    %v696 = vunpack.c.h.b16 %v200
    %v697 = vunpack.c.l.b16 %v201
    %v698 = vunpack.c.h.b16 %v201
    %v699 = vunpack.c.l.b16 %v202
    %v700 = vunpack.c.h.b16 %v202
    %v701 = vunpack.c.l.b16 %v203
    %v702 = vunpack.c.l.b16 %v204
    %v703 = vunpack.c.h.b16 %v204
    %v704 = vunpack.c.l.b16 %v205
    %v705 = vunpack.c.h.b16 %v205
    %v706 = vunpack.c.l.b16 %v206
    %v707 = vunpack.c.h.b16 %v206
    %v708 = vunpack.c.l.b16 %v207
    %v709 = vunpack.c.h.b16 %v207
    %v710 = vunpack.c.l.b16 %v208
    %v711 = vunpack.c.h.b16 %v208
    %v712 = vunpack.c.l.b16 %v209
    %v713 = vunpack.c.l.b16 %v210
    %v714 = vunpack.c.h.b16 %v210
    %v715 = vunpack.c.l.b16 %v211
    %v716 = vunpack.c.h.b16 %v211
    %v717 = vunpack.c.l.b16 %v212
    %v718 = vunpack.c.h.b16 %v212
    %v719 = vunpack.c.l.b16 %v213
    %v720 = vunpack.c.h.b16 %v213
    %v721 = vunpack.c.l.b16 %v214
    %v722 = vunpack.c.h.b16 %v214
    %v723 = vunpack.c.l.b16 %v215
    %v724 = vunpack.c.l.b16 %v216
    %v725 = vunpack.c.h.b16 %v216
    %v726 = vunpack.c.l.b16 %v217
    %v727 = vunpack.c.h.b16 %v217
    %v728 = vunpack.c.l.b16 %v218
    %v729 = vunpack.c.h.b16 %v218
    %v730 = vunpack.c.l.b16 %v219
    %v731 = vunpack.c.h.b16 %v219
    %v732 = vunpack.c.l.b16 %v220
    %v733 = vunpack.c.h.b16 %v220
    %v734 = vunpack.c.l.b16 %v221
    %v735 = vunpack.c.l.b16 %v222
    %v736 = vunpack.c.h.b16 %v222
    %v737 = vunpack.c.l.b16 %v223
    %v738 = vunpack.c.h.b16 %v223
    %v739 = vunpack.c.l.b16 %v224
    %v740 = vunpack.c.h.b16 %v224
    %v741 = vunpack.c.l.b16 %v225
    %v742 = vunpack.c.h.b16 %v225
    %v743 = vunpack.c.l.b16 %v226
    %v744 = vunpack.c.h.b16 %v226
    %v745 = vunpack.c.l.b16 %v227
    %v746 = vunpack.c.l.b16 %v228
    %v747 = vunpack.c.h.b16 %v228
    %v748 = vunpack.c.l.b16 %v229
    %v749 = vunpack.c.h.b16 %v229
    %v750 = vunpack.c.l.b16 %v230
    %v751 = vunpack.c.h.b16 %v230
    %v752 = vunpack.c.l.b16 %v231
    %v753 = vunpack.c.h.b16 %v231
    %v754 = vunpack.c.l.b16 %v232
    %v755 = vunpack.c.h.b16 %v232
    %v756 = vunpack.c.l.b16 %v233
    %v757 = vunpack.c.l.b16 %v234
    %v758 = vunpack.c.h.b16 %v234
    %v759 = vunpack.c.l.b16 %v235
    %v760 = vunpack.c.h.b16 %v235
    %v761 = vunpack.c.l.b16 %v236
    %v762 = vunpack.c.h.b16 %v236
    %v763 = vunpack.c.l.b16 %v237
    %v764 = vunpack.c.h.b16 %v237
    %v765 = vunpack.c.l.b16 %v238
    %v766 = vunpack.c.h.b16 %v238
    %v767 = vunpack.c.l.b16 %v239
    %v768 = vunpack.c.l.b16 %v240
    %v769 = vunpack.c.h.b16 %v240
    %v770 = vunpack.c.l.b16 %v241
    %v771 = vunpack.c.h.b16 %v241
    %v772 = vunpack.c.l.b16 %v242
    %v773 = vunpack.c.h.b16 %v242
    %v774 = vunpack.c.l.b16 %v243
    %v775 = vunpack.c.h.b16 %v243
    %v776 = vunpack.c.l.b16 %v244
    %v777 = vunpack.c.h.b16 %v244
    %v778 = vunpack.c.l.b16 %v245
    %v779 = vunpack.c.l.b16 %v246
    %v780 = vunpack.c.h.b16 %v246
    %v781 = vunpack.c.l.b16 %v247
    %v782 = vunpack.c.h.b16 %v247
    %v783 = vunpack.c.l.b16 %v248
    %v784 = vunpack.c.h.b16 %v248
    %v785 = vunpack.c.l.b16 %v249
    %v786 = vunpack.c.h.b16 %v249
    %v787 = vunpack.c.l.b16 %v250
    %v788 = vunpack.c.h.b16 %v250
    %v789 = vunpack.c.l.b16 %v251
    %v790 = vunpack.c.l.b16 %v252
    %v791 = vunpack.c.h.b16 %v252
    %v792 = vunpack.c.l.b16 %v253
    %v793 = vunpack.c.h.b16 %v253
    %v794 = vunpack.c.l.b16 %v254
    %v795 = vunpack.c.h.b16 %v254
    %v796 = vunpack.c.l.b16 %v255
    %v797 = vunpack.c.h.b16 %v255
    %v798 = vunpack.c.l.b16 %v256
    %v799 = vunpack.c.h.b16 %v256
    %v800 = vunpack.c.l.b16 %v257
    %v801 = vunpack.c.l.b16 %v258
    %v802 = vunpack.c.h.b16 %v258
    %v803 = vunpack.c.l.b16 %v259
    %v804 = vunpack.c.h.b16 %v259
    %v805 = vunpack.c.l.b16 %v260
    %v806 = vunpack.c.h.b16 %v260
    %v807 = vunpack.c.l.b16 %v261
    %v808 = vunpack.c.h.b16 %v261
    %v809 = vunpack.c.l.b16 %v262
    %v810 = vunpack.c.h.b16 %v262
    %v811 = vunpack.c.l.b16 %v263
    %v812 = vunpack.c.l.b16 %v264
    %v813 = vunpack.c.h.b16 %v264
    %v814 = vunpack.c.l.b16 %v265
    %v815 = vunpack.c.h.b16 %v265
    %v816 = vunpack.c.l.b16 %v266
    %v817 = vunpack.c.h.b16 %v266
    %v818 = vunpack.c.l.b16 %v267
    %v819 = vunpack.c.h.b16 %v267
    %v820 = vunpack.c.l.b16 %v268
    %v821 = vunpack.c.h.b16 %v268
    %v822 = vunpack.c.l.b16 %v269
    %v823 = vunpack.c.l.b16 %v270
    %v824 = vunpack.c.h.b16 %v270
    %v825 = vunpack.c.l.b16 %v271
    %v826 = vunpack.c.h.b16 %v271
    %v827 = vunpack.c.l.b16 %v272
    %v828 = vunpack.c.h.b16 %v272
    %v829 = vunpack.c.l.b16 %v273
    %v830 = vunpack.c.h.b16 %v273
    %v831 = vunpack.c.l.b16 %v274
    %v832 = vunpack.c.h.b16 %v274
    %v833 = vunpack.c.l.b16 %v275
    %v834 = vunpack.c.l.b16 %v276
    %v835 = vunpack.c.h.b16 %v276
    %v836 = vunpack.c.l.b16 %v277
    %v837 = vunpack.c.h.b16 %v277
    %v838 = vunpack.c.l.b16 %v278
    %v839 = vunpack.c.h.b16 %v278
    %v840 = vunpack.c.l.b16 %v279
    %v841 = vunpack.c.h.b16 %v279
    %v842 = vunpack.c.l.b16 %v280
    %v843 = vunpack.c.h.b16 %v280
    %v844 = vunpack.c.l.b16 %v281
    %v845 = vunpack.c.l.b16 %v282
    %v846 = vunpack.c.h.b16 %v282
    %v847 = vunpack.c.l.b16 %v283
    %v848 = vunpack.c.h.b16 %v283
    %v849 = vunpack.c.l.b16 %v284
    %v850 = vunpack.c.h.b16 %v284
    %v851 = vunpack.c.l.b16 %v285
    %v852 = vunpack.c.h.b16 %v285
    %v853 = vunpack.c.l.b16 %v286
    %v854 = vunpack.c.h.b16 %v286
    %v855 = vunpack.c.l.b16 %v287
    %v856 = vunpack.c.l.b16 %v288
    %v857 = vunpack.c.h.b16 %v288
    %v858 = vunpack.c.l.b16 %v289
    %v859 = vunpack.c.h.b16 %v289
    %v860 = vunpack.c.l.b16 %v290
    %v861 = vunpack.c.h.b16 %v290
    %v862 = vunpack.c.l.b16 %v291
    %v863 = vunpack.c.h.b16 %v291
    %v864 = vunpack.c.l.b16 %v292
    %v865 = vunpack.c.h.b16 %v292
    %v866 = vunpack.c.l.b16 %v293
    %v867 = vunpack.c.l.b16 %v294
    %v868 = vunpack.c.h.b16 %v294
    %v869 = vunpack.c.l.b16 %v295
    %v870 = vunpack.c.h.b16 %v295
    %v871 = vunpack.c.l.b16 %v296
    %v872 = vunpack.c.h.b16 %v296
    %v873 = vunpack.c.l.b16 %v297
    %v874 = vunpack.c.h.b16 %v297
    %v875 = vunpack.c.l.b16 %v298
    %v876 = vunpack.c.h.b16 %v298
    %v877 = vunpack.c.l.b16 %v299
    %v878 = vunpack.c.l.b16 %v300
    %v879 = vunpack.c.h.b16 %v300
    %v880 = vunpack.c.l.b16 %v301
    %v881 = vunpack.c.h.b16 %v301
    %v882 = vunpack.c.l.b16 %v302
    %v883 = vunpack.c.h.b16 %v302
    %v884 = vunpack.c.l.b16 %v303
    %v885 = vunpack.c.h.b16 %v303
    %v886 = vunpack.c.l.b16 %v304
    %v887 = vunpack.c.h.b16 %v304
    %v888 = vunpack.c.l.b16 %v305
    %v889 = vunpack.c.l.b16 %v306
    %v890 = vunpack.c.h.b16 %v306
    %v891 = vunpack.c.l.b16 %v307
    %v892 = vunpack.c.h.b16 %v307
    %v893 = vunpack.c.l.b16 %v308
    %v894 = vunpack.c.h.b16 %v308
    %v895 = vunpack.c.l.b16 %v309
    %v896 = vunpack.c.h.b16 %v309
    %v897 = vunpack.c.l.b16 %v310
    %v898 = vunpack.c.h.b16 %v310
    %v899 = vunpack.c.l.b16 %v311
    %v900 = vunpack.c.l.b16 %v312
    %v901 = vunpack.c.h.b16 %v312
    %v902 = vunpack.c.l.b16 %v313
    %v903 = vunpack.c.h.b16 %v313
    %v904 = vunpack.c.l.b16 %v314
    %v905 = vunpack.c.h.b16 %v314
    %v906 = vunpack.c.l.b16 %v315
    %v907 = vunpack.c.h.b16 %v315
    %v908 = vunpack.c.l.b16 %v316
    %v909 = vunpack.c.h.b16 %v316
    %v910 = vunpack.c.l.b16 %v317
    %v911 = vunpack.c.l.b16 %v318
    %v912 = vunpack.c.h.b16 %v318
    %v913 = vunpack.c.l.b16 %v319
    %v914 = vunpack.c.h.b16 %v319
    %v915 = vunpack.c.l.b16 %v320
    %v916 = vunpack.c.h.b16 %v320
    %v917 = vunpack.c.l.b16 %v321
    %v918 = vunpack.c.h.b16 %v321
    %v919 = vunpack.c.l.b16 %v322
    %v920 = vunpack.c.h.b16 %v322
    %v921 = vunpack.c.l.b16 %v323
    %v922 = vunpack.c.l.b16 %v324
    %v923 = vunpack.c.h.b16 %v324
    %v924 = vunpack.c.l.b16 %v325
    %v925 = vunpack.c.h.b16 %v325
    %v926 = vunpack.c.l.b16 %v326
    %v927 = vunpack.c.h.b16 %v326
    %v928 = vunpack.c.l.b16 %v327
    %v929 = vunpack.c.h.b16 %v327
    %v930 = vunpack.c.l.b16 %v328
    %v931 = vunpack.c.h.b16 %v328
    %v932 = vunpack.c.l.b16 %v329
    %v933 = vunpack.c.l.b16 %v330
    %v934 = vunpack.c.h.b16 %v330
    %v935 = vunpack.c.l.b16 %v331
    %v936 = vunpack.c.h.b16 %v331
    %v937 = vunpack.c.l.b16 %v332
    %v938 = vunpack.c.h.b16 %v332
    %v939 = vunpack.c.l.b16 %v333
    %v940 = vunpack.c.h.b16 %v333
    %v941 = vunpack.c.l.b16 %v334
    %v942 = vunpack.c.h.b16 %v334
    %v943 = vunpack.c.l.b16 %v335
    %v944 = vunpack.c.l.b16 %v336
    %v945 = vunpack.c.h.b16 %v336
    %v946 = vunpack.c.l.b16 %v337
    %v947 = vunpack.c.h.b16 %v337
    %v948 = vunpack.c.l.b16 %v338
    %v949 = vunpack.c.h.b16 %v338
    %v950 = vunpack.c.l.b16 %v339
    %v951 = vunpack.c.h.b16 %v339
    %v952 = vunpack.c.l.b16 %v340
    %v953 = vunpack.c.h.b16 %v340
    %v954 = vunpack.c.l.b16 %v341
    %v955 = vpack.c.b16 %v614, %v603
    %v956 = vpack.c.b16 %v615, %v604
    %v957 = vpack.c.b16 %v616, %v605
    %v958 = vpack.c.b16 %v617, %v606
    %v959 = vpack.c.b16 %v618, %v607
    %v960 = vpack.c.b16 %v619, %v608
    %v961 = vpack.c.b16 %v620, %v609
    %v962 = vpack.c.b16 %v621, %v610
    %v963 = vpack.c.b16 %v622, %v611
    %v964 = vpack.c.b16 %v623, %v612
    %v965 = vpack.c.b16 %v624, %v613
    %v966 = vpack.c.b16 %v636, %v625
    %v967 = vpack.c.b16 %v637, %v626
    %v968 = vpack.c.b16 %v638, %v627
    %v969 = vpack.c.b16 %v639, %v628
    %v970 = vpack.c.b16 %v640, %v629
    %v971 = vpack.c.b16 %v641, %v630
    %v972 = vpack.c.b16 %v642, %v631
    %v973 = vpack.c.b16 %v643, %v632
    %v974 = vpack.c.b16 %v644, %v633
    %v975 = vpack.c.b16 %v645, %v634
    %v976 = vpack.c.b16 %v646, %v635
    %v977 = vpack.c.b16 %v658, %v647
    %v978 = vpack.c.b16 %v659, %v648
    %v979 = vpack.c.b16 %v660, %v649
    %v980 = vpack.c.b16 %v661, %v650
    %v981 = vpack.c.b16 %v662, %v651
    %v982 = vpack.c.b16 %v663, %v652
    %v983 = vpack.c.b16 %v664, %v653
    %v984 = vpack.c.b16 %v665, %v654
    %v985 = vpack.c.b16 %v666, %v655
    %v986 = vpack.c.b16 %v667, %v656
    %v987 = vpack.c.b16 %v668, %v657
    %v988 = vpack.c.b16 %v680, %v669
    %v989 = vpack.c.b16 %v681, %v670
    %v990 = vpack.c.b16 %v682, %v671
    %v991 = vpack.c.b16 %v683, %v672
    %v992 = vpack.c.b16 %v684, %v673
    %v993 = vpack.c.b16 %v685, %v674
    %v994 = vpack.c.b16 %v686, %v675
    %v995 = vpack.c.b16 %v687, %v676
    %v996 = vpack.c.b16 %v688, %v677
    %v997 = vpack.c.b16 %v689, %v678
    %v998 = vpack.c.b16 %v690, %v679
    %v999 = vpack.c.b16 %v702, %v691
    %v1000 = vpack.c.b16 %v703, %v692
    %v1001 = vpack.c.b16 %v704, %v693
    %v1002 = vpack.c.b16 %v705, %v694
    %v1003 = vpack.c.b16 %v706, %v695
    %v1004 = vpack.c.b16 %v707, %v696
    %v1005 = vpack.c.b16 %v708, %v697
    %v1006 = vpack.c.b16 %v709, %v698
    %v1007 = vpack.c.b16 %v710, %v699
    %v1008 = vpack.c.b16 %v711, %v700
    %v1009 = vpack.c.b16 %v712, %v701
    %v1010 = vpack.c.b16 %v724, %v713
    %v1011 = vpack.c.b16 %v725, %v714
    %v1012 = vpack.c.b16 %v726, %v715
    %v1013 = vpack.c.b16 %v727, %v716
    %v1014 = vpack.c.b16 %v728, %v717
    %v1015 = vpack.c.b16 %v729, %v718
    %v1016 = vpack.c.b16 %v730, %v719
    %v1017 = vpack.c.b16 %v731, %v720
    %v1018 = vpack.c.b16 %v732, %v721
    %v1019 = vpack.c.b16 %v733, %v722
    %v1020 = vpack.c.b16 %v734, %v723
    %v1021 = vpack.c.b16 %v746, %v735
    %v1022 = vpack.c.b16 %v747, %v736
    %v1023 = vpack.c.b16 %v748, %v737
    %v1024 = vpack.c.b16 %v749, %v738
    %v1025 = vpack.c.b16 %v750, %v739
    %v1026 = vpack.c.b16 %v751, %v740
    %v1027 = vpack.c.b16 %v752, %v741
    %v1028 = vpack.c.b16 %v753, %v742
    %v1029 = vpack.c.b16 %v754, %v743
    %v1030 = vpack.c.b16 %v755, %v744
    %v1031 = vpack.c.b16 %v756, %v745
    %v1032 = vpack.c.b16 %v768, %v757
    %v1033 = vpack.c.b16 %v769, %v758
    %v1034 = vpack.c.b16 %v770, %v759
    %v1035 = vpack.c.b16 %v771, %v760
    %v1036 = vpack.c.b16 %v772, %v761
    %v1037 = vpack.c.b16 %v773, %v762
    %v1038 = vpack.c.b16 %v774, %v763
    %v1039 = vpack.c.b16 %v775, %v764
    %v1040 = vpack.c.b16 %v776, %v765
    %v1041 = vpack.c.b16 %v777, %v766
    %v1042 = vpack.c.b16 %v778, %v767
    %v1043 = vpack.c.b16 %v790, %v779
    %v1044 = vpack.c.b16 %v791, %v780
    %v1045 = vpack.c.b16 %v792, %v781
    %v1046 = vpack.c.b16 %v793, %v782
    %v1047 = vpack.c.b16 %v794, %v783
    %v1048 = vpack.c.b16 %v795, %v784
    %v1049 = vpack.c.b16 %v796, %v785
    %v1050 = vpack.c.b16 %v797, %v786
    %v1051 = vpack.c.b16 %v798, %v787
    %v1052 = vpack.c.b16 %v799, %v788
    %v1053 = vpack.c.b16 %v800, %v789
    %v1054 = vpack.c.b16 %v812, %v801
    %v1055 = vpack.c.b16 %v813, %v802
    %v1056 = vpack.c.b16 %v814, %v803
    %v1057 = vpack.c.b16 %v815, %v804
    %v1058 = vpack.c.b16 %v816, %v805
    %v1059 = vpack.c.b16 %v817, %v806
    %v1060 = vpack.c.b16 %v818, %v807
    %v1061 = vpack.c.b16 %v819, %v808
    %v1062 = vpack.c.b16 %v820, %v809
    %v1063 = vpack.c.b16 %v821, %v810
    %v1064 = vpack.c.b16 %v822, %v811
    %v1065 = vpack.c.b16 %v834, %v823
    %v1066 = vpack.c.b16 %v835, %v824
    %v1067 = vpack.c.b16 %v836, %v825
    %v1068 = vpack.c.b16 %v837, %v826
    %v1069 = vpack.c.b16 %v838, %v827
    %v1070 = vpack.c.b16 %v839, %v828
    %v1071 = vpack.c.b16 %v840, %v829
    %v1072 = vpack.c.b16 %v841, %v830
    %v1073 = vpack.c.b16 %v842, %v831
    %v1074 = vpack.c.b16 %v843, %v832
    %v1075 = vpack.c.b16 %v844, %v833
    %v1076 = vpack.c.b16 %v856, %v845
    %v1077 = vpack.c.b16 %v857, %v846
    %v1078 = vpack.c.b16 %v858, %v847
    %v1079 = vpack.c.b16 %v859, %v848
    %v1080 = vpack.c.b16 %v860, %v849
    %v1081 = vpack.c.b16 %v861, %v850
    %v1082 = vpack.c.b16 %v862, %v851
    %v1083 = vpack.c.b16 %v863, %v852
    %v1084 = vpack.c.b16 %v864, %v853
    %v1085 = vpack.c.b16 %v865, %v854
    %v1086 = vpack.c.b16 %v866, %v855
    %v1087 = vpack.c.b16 %v878, %v867
    %v1088 = vpack.c.b16 %v879, %v868
    %v1089 = vpack.c.b16 %v880, %v869
    %v1090 = vpack.c.b16 %v881, %v870
    %v1091 = vpack.c.b16 %v882, %v871
    %v1092 = vpack.c.b16 %v883, %v872
    %v1093 = vpack.c.b16 %v884, %v873
    %v1094 = vpack.c.b16 %v885, %v874
    %v1095 = vpack.c.b16 %v886, %v875
    %v1096 = vpack.c.b16 %v887, %v876
    %v1097 = vpack.c.b16 %v888, %v877
    %v1098 = vpack.c.b16 %v900, %v889
    %v1099 = vpack.c.b16 %v901, %v890
    %v1100 = vpack.c.b16 %v902, %v891
    %v1101 = vpack.c.b16 %v903, %v892
    %v1102 = vpack.c.b16 %v904, %v893
    %v1103 = vpack.c.b16 %v905, %v894
    %v1104 = vpack.c.b16 %v906, %v895
    %v1105 = vpack.c.b16 %v907, %v896
    %v1106 = vpack.c.b16 %v908, %v897
    %v1107 = vpack.c.b16 %v909, %v898
    %v1108 = vpack.c.b16 %v910, %v899
    %v1109 = vpack.c.b16 %v922, %v911
    %v1110 = vpack.c.b16 %v923, %v912
    %v1111 = vpack.c.b16 %v924, %v913
    %v1112 = vpack.c.b16 %v925, %v914
    %v1113 = vpack.c.b16 %v926, %v915
    %v1114 = vpack.c.b16 %v927, %v916
    %v1115 = vpack.c.b16 %v928, %v917
    %v1116 = vpack.c.b16 %v929, %v918
    %v1117 = vpack.c.b16 %v930, %v919
    %v1118 = vpack.c.b16 %v931, %v920
    %v1119 = vpack.c.b16 %v932, %v921
    %v1120 = vpack.c.b16 %v944, %v933
    %v1121 = vpack.c.b16 %v945, %v934
    %v1122 = vpack.c.b16 %v946, %v935
    %v1123 = vpack.c.b16 %v947, %v936
    %v1124 = vpack.c.b16 %v948, %v937
    %v1125 = vpack.c.b16 %v949, %v938
    %v1126 = vpack.c.b16 %v950, %v939
    %v1127 = vpack.c.b16 %v951, %v940
    %v1128 = vpack.c.b16 %v952, %v941
    %v1129 = vpack.c.b16 %v953, %v942
    %v1130 = vpack.c.b16 %v954, %v943
    %1307 = vmatprep.subr.bf16.mxu0 %v956
    %1308 = vmatpush1.bf16.msra.mxu0 %v955
    %1309 = vmatprep.subr.bf16.mxu0 %v967
    %1310 = vmatpush1.bf16.msra.mxu0 %v966
    %1311 = vmatprep.subr.bf16.mxu0 %v978
    %1312 = vmatpush1.bf16.msra.mxu0 %v977
    %1313 = vmatprep.subr.bf16.mxu0 %v989
    %1314 = vmatpush1.bf16.msra.mxu0 %v988
    %1315 = vmatprep.subr.bf16.mxu0 %v1000
    %1316 = vmatpush1.bf16.msra.mxu0 %v999
    %1317 = vmatprep.subr.bf16.mxu0 %v1011
    %1318 = vmatpush1.bf16.msra.mxu0 %v1010
    %1319 = vmatprep.subr.bf16.mxu0 %v1022
    %1320 = vmatpush1.bf16.msra.mxu0 %v1021
    %1321 = vmatprep.subr.bf16.mxu0 %v1033
    %1322 = vmatpush1.bf16.msra.mxu0 %v1032
    %1323 = vmatprep.subr.bf16.mxu0 %v1044
    %1324 = vmatpush1.bf16.msra.mxu0 %v1043
    %1325 = vmatprep.subr.bf16.mxu0 %v1055
    %1326 = vmatpush1.bf16.msra.mxu0 %v1054
    %1327 = vmatprep.subr.bf16.mxu0 %v1066
    %1328 = vmatpush1.bf16.msra.mxu0 %v1065
    %1329 = vmatprep.subr.bf16.mxu0 %v1077
    %1330 = vmatpush1.bf16.msra.mxu0 %v1076
    %1331 = vmatprep.subr.bf16.mxu0 %v1088
    %1332 = vmatpush1.bf16.msra.mxu0 %v1087
    %1333 = vmatprep.subr.bf16.mxu0 %v1099
    %1334 = vmatpush1.bf16.msra.mxu0 %v1098
    %1335 = vmatprep.subr.bf16.mxu0 %v1110
    %1336 = vmatpush1.bf16.msra.mxu0 %v1109
    %1337 = vmatprep.subr.bf16.mxu0 %v1121
    %1338 = vmatpush1.bf16.msra.mxu0 %v1120
    %1339 = vmatprep.mubr.bf16.mxu0 %v408
    %1340 = vmatmul.mubr.bf16.gmra.mrb[0].mxu0 %v407
    %v1341 = vpop.f32.mrb[0].mxu0
    %v1342 = vadd.f32 %v349, %v1341
    %v1343 = vpop.f32.mrb[0].mxu0
    %v1344 = vadd.f32 %v353, %v1343
    %v1345 = vpop.f32.mrb[0].mxu0
    %v1346 = vadd.f32 %v349, %v1345
    %v1347 = vpop.f32.mrb[0].mxu0
    %v1348 = vadd.f32 %v353, %v1347
    %1349 = vdwg.mxu0
    %1350 = vmatprep.subr.bf16.mxu0 %v958
    %1351 = vmatpush1.bf16.msra.mxu0 %v957
    %1352 = vmatprep.subr.bf16.mxu0 %v969
    %1353 = vmatpush1.bf16.msra.mxu0 %v968
    %1354 = vmatprep.subr.bf16.mxu0 %v980
    %1355 = vmatpush1.bf16.msra.mxu0 %v979
    %1356 = vmatprep.subr.bf16.mxu0 %v991
    %1357 = vmatpush1.bf16.msra.mxu0 %v990
    %1358 = vmatprep.subr.bf16.mxu0 %v1002
    %1359 = vmatpush1.bf16.msra.mxu0 %v1001
    %1360 = vmatprep.subr.bf16.mxu0 %v1013
    %1361 = vmatpush1.bf16.msra.mxu0 %v1012
    %1362 = vmatprep.subr.bf16.mxu0 %v1024
    %1363 = vmatpush1.bf16.msra.mxu0 %v1023
    %1364 = vmatprep.subr.bf16.mxu0 %v1035
    %1365 = vmatpush1.bf16.msra.mxu0 %v1034
    %1366 = vmatprep.subr.bf16.mxu0 %v1046
    %1367 = vmatpush1.bf16.msra.mxu0 %v1045
    %1368 = vmatprep.subr.bf16.mxu0 %v1057
    %1369 = vmatpush1.bf16.msra.mxu0 %v1056
    %1370 = vmatprep.subr.bf16.mxu0 %v1068
    %1371 = vmatpush1.bf16.msra.mxu0 %v1067
    %1372 = vmatprep.subr.bf16.mxu0 %v1079
    %1373 = vmatpush1.bf16.msra.mxu0 %v1078
    %1374 = vmatprep.subr.bf16.mxu0 %v1090
    %1375 = vmatpush1.bf16.msra.mxu0 %v1089
    %1376 = vmatprep.subr.bf16.mxu0 %v1101
    %1377 = vmatpush1.bf16.msra.mxu0 %v1100
    %1378 = vmatprep.subr.bf16.mxu0 %v1112
    %1379 = vmatpush1.bf16.msra.mxu0 %v1111
    %1380 = vmatprep.subr.bf16.mxu0 %v1123
    %1381 = vmatpush1.bf16.msra.mxu0 %v1122
    %1382 = vmatprep.mubr.bf16.mxu0 %v408
    %1383 = vmatmul.mubr.bf16.gmra.mrb[0].mxu0 %v407
    %v1384 = vpop.f32.mrb[0].mxu0
    %v1385 = vadd.f32 %v357, %v1384
    %v1386 = vpop.f32.mrb[0].mxu0
    %v1387 = vadd.f32 %v361, %v1386
    %v1388 = vpop.f32.mrb[0].mxu0
    %v1389 = vadd.f32 %v357, %v1388
    %v1390 = vpop.f32.mrb[0].mxu0
    %v1391 = vadd.f32 %v361, %v1390
    %1392 = vdwg.mxu0
    %1393 = vmatprep.subr.bf16.mxu0 %v960
    %1394 = vmatpush1.bf16.msra.mxu0 %v959
    %1395 = vmatprep.subr.bf16.mxu0 %v971
    %1396 = vmatpush1.bf16.msra.mxu0 %v970
    %1397 = vmatprep.subr.bf16.mxu0 %v982
    %1398 = vmatpush1.bf16.msra.mxu0 %v981
    %1399 = vmatprep.subr.bf16.mxu0 %v993
    %1400 = vmatpush1.bf16.msra.mxu0 %v992
    %1401 = vmatprep.subr.bf16.mxu0 %v1004
    %1402 = vmatpush1.bf16.msra.mxu0 %v1003
    %1403 = vmatprep.subr.bf16.mxu0 %v1015
    %1404 = vmatpush1.bf16.msra.mxu0 %v1014
    %1405 = vmatprep.subr.bf16.mxu0 %v1026
    %1406 = vmatpush1.bf16.msra.mxu0 %v1025
    %1407 = vmatprep.subr.bf16.mxu0 %v1037
    %1408 = vmatpush1.bf16.msra.mxu0 %v1036
    %1409 = vmatprep.subr.bf16.mxu0 %v1048
    %1410 = vmatpush1.bf16.msra.mxu0 %v1047
    %1411 = vmatprep.subr.bf16.mxu0 %v1059
    %1412 = vmatpush1.bf16.msra.mxu0 %v1058
    %1413 = vmatprep.subr.bf16.mxu0 %v1070
    %1414 = vmatpush1.bf16.msra.mxu0 %v1069
    %1415 = vmatprep.subr.bf16.mxu0 %v1081
    %1416 = vmatpush1.bf16.msra.mxu0 %v1080
    %1417 = vmatprep.subr.bf16.mxu0 %v1092
    %1418 = vmatpush1.bf16.msra.mxu0 %v1091
    %1419 = vmatprep.subr.bf16.mxu0 %v1103
    %1420 = vmatpush1.bf16.msra.mxu0 %v1102
    %1421 = vmatprep.subr.bf16.mxu0 %v1114
    %1422 = vmatpush1.bf16.msra.mxu0 %v1113
    %1423 = vmatprep.subr.bf16.mxu0 %v1125
    %1424 = vmatpush1.bf16.msra.mxu0 %v1124
    %1425 = vmatprep.mubr.bf16.mxu0 %v408
    %1426 = vmatmul.mubr.bf16.gmra.mrb[0].mxu0 %v407
    %v1427 = vpop.f32.mrb[0].mxu0
    %v1428 = vadd.f32 %v365, %v1427
    %v1429 = vpop.f32.mrb[0].mxu0
    %v1430 = vadd.f32 %v369, %v1429
    %v1431 = vpop.f32.mrb[0].mxu0
    %v1432 = vadd.f32 %v365, %v1431
    %v1433 = vpop.f32.mrb[0].mxu0
    %v1434 = vadd.f32 %v369, %v1433
    %1435 = vdwg.mxu0
    %1436 = vmatprep.subr.bf16.mxu0 %v962
    %1437 = vmatpush1.bf16.msra.mxu0 %v961
    %1438 = vmatprep.subr.bf16.mxu0 %v973
    %1439 = vmatpush1.bf16.msra.mxu0 %v972
    %1440 = vmatprep.subr.bf16.mxu0 %v984
    %1441 = vmatpush1.bf16.msra.mxu0 %v983
    %1442 = vmatprep.subr.bf16.mxu0 %v995
    %1443 = vmatpush1.bf16.msra.mxu0 %v994
    %1444 = vmatprep.subr.bf16.mxu0 %v1006
    %1445 = vmatpush1.bf16.msra.mxu0 %v1005
    %1446 = vmatprep.subr.bf16.mxu0 %v1017
    %1447 = vmatpush1.bf16.msra.mxu0 %v1016
    %1448 = vmatprep.subr.bf16.mxu0 %v1028
    %1449 = vmatpush1.bf16.msra.mxu0 %v1027
    %1450 = vmatprep.subr.bf16.mxu0 %v1039
    %1451 = vmatpush1.bf16.msra.mxu0 %v1038
    %1452 = vmatprep.subr.bf16.mxu0 %v1050
    %1453 = vmatpush1.bf16.msra.mxu0 %v1049
    %1454 = vmatprep.subr.bf16.mxu0 %v1061
    %1455 = vmatpush1.bf16.msra.mxu0 %v1060
    %1456 = vmatprep.subr.bf16.mxu0 %v1072
    %1457 = vmatpush1.bf16.msra.mxu0 %v1071
    %1458 = vmatprep.subr.bf16.mxu0 %v1083
    %1459 = vmatpush1.bf16.msra.mxu0 %v1082
    %1460 = vmatprep.subr.bf16.mxu0 %v1094
    %1461 = vmatpush1.bf16.msra.mxu0 %v1093
    %1462 = vmatprep.subr.bf16.mxu0 %v1105
    %1463 = vmatpush1.bf16.msra.mxu0 %v1104
    %1464 = vmatprep.subr.bf16.mxu0 %v1116
    %1465 = vmatpush1.bf16.msra.mxu0 %v1115
    %1466 = vmatprep.subr.bf16.mxu0 %v1127
    %1467 = vmatpush1.bf16.msra.mxu0 %v1126
    %1468 = vmatprep.mubr.bf16.mxu0 %v408
    %1469 = vmatmul.mubr.bf16.gmra.mrb[0].mxu0 %v407
    %v1470 = vpop.f32.mrb[0].mxu0
    %v1471 = vadd.f32 %v373, %v1470
    %v1472 = vpop.f32.mrb[0].mxu0
    %v1473 = vadd.f32 %v377, %v1472
    %v1474 = vpop.f32.mrb[0].mxu0
    %v1475 = vadd.f32 %v373, %v1474
    %v1476 = vpop.f32.mrb[0].mxu0
    %v1477 = vadd.f32 %v377, %v1476
    %1478 = vdwg.mxu0
    %1479 = vmatprep.subr.bf16.mxu0 %v964
    %1480 = vmatpush1.bf16.msra.mxu0 %v963
    %1481 = vmatprep.subr.bf16.mxu0 %v975
    %1482 = vmatpush1.bf16.msra.mxu0 %v974
    %1483 = vmatprep.subr.bf16.mxu0 %v986
    %1484 = vmatpush1.bf16.msra.mxu0 %v985
    %1485 = vmatprep.subr.bf16.mxu0 %v997
    %1486 = vmatpush1.bf16.msra.mxu0 %v996
    %1487 = vmatprep.subr.bf16.mxu0 %v1008
    %1488 = vmatpush1.bf16.msra.mxu0 %v1007
    %1489 = vmatprep.subr.bf16.mxu0 %v1019
    %1490 = vmatpush1.bf16.msra.mxu0 %v1018
    %1491 = vmatprep.subr.bf16.mxu0 %v1030
    %1492 = vmatpush1.bf16.msra.mxu0 %v1029
    %1493 = vmatprep.subr.bf16.mxu0 %v1041
    %1494 = vmatpush1.bf16.msra.mxu0 %v1040
    %1495 = vmatprep.subr.bf16.mxu0 %v1052
    %1496 = vmatpush1.bf16.msra.mxu0 %v1051
    %1497 = vmatprep.subr.bf16.mxu0 %v1063
    %1498 = vmatpush1.bf16.msra.mxu0 %v1062
    %1499 = vmatprep.subr.bf16.mxu0 %v1074
    %1500 = vmatpush1.bf16.msra.mxu0 %v1073
    %1501 = vmatprep.subr.bf16.mxu0 %v1085
    %1502 = vmatpush1.bf16.msra.mxu0 %v1084
    %1503 = vmatprep.subr.bf16.mxu0 %v1096
    %1504 = vmatpush1.bf16.msra.mxu0 %v1095
    %1505 = vmatprep.subr.bf16.mxu0 %v1107
    %1506 = vmatpush1.bf16.msra.mxu0 %v1106
    %1507 = vmatprep.subr.bf16.mxu0 %v1118
    %1508 = vmatpush1.bf16.msra.mxu0 %v1117
    %1509 = vmatprep.subr.bf16.mxu0 %v1129
    %1510 = vmatpush1.bf16.msra.mxu0 %v1128
    %1511 = vmatprep.mubr.bf16.mxu0 %v408
    %1512 = vmatmul.mubr.bf16.gmra.mrb[0].mxu0 %v407
    %v1513 = vpop.f32.mrb[0].mxu0
    %v1514 = vadd.f32 %v381, %v1513
    %v1515 = vpop.f32.mrb[0].mxu0
    %v1516 = vadd.f32 %v385, %v1515
    %v1517 = vpop.f32.mrb[0].mxu0
    %v1518 = vadd.f32 %v381, %v1517
    %v1519 = vpop.f32.mrb[0].mxu0
    %v1520 = vadd.f32 %v385, %v1519
    %1521 = vdwg.mxu0
    %1522 = vmatprep.subr.bf16.mxu0 0
    %1523 = vmatpush1.bf16.msra.mxu0 %v965
    %1524 = vmatprep.subr.bf16.mxu0 0
    %1525 = vmatpush1.bf16.msra.mxu0 %v976
    %1526 = vmatprep.subr.bf16.mxu0 0
    %1527 = vmatpush1.bf16.msra.mxu0 %v987
    %1528 = vmatprep.subr.bf16.mxu0 0
    %1529 = vmatpush1.bf16.msra.mxu0 %v998
    %1530 = vmatprep.subr.bf16.mxu0 0
    %1531 = vmatpush1.bf16.msra.mxu0 %v1009
    %1532 = vmatprep.subr.bf16.mxu0 0
    %1533 = vmatpush1.bf16.msra.mxu0 %v1020
    %1534 = vmatprep.subr.bf16.mxu0 0
    %1535 = vmatpush1.bf16.msra.mxu0 %v1031
    %1536 = vmatprep.subr.bf16.mxu0 0
    %1537 = vmatpush1.bf16.msra.mxu0 %v1042
    %1538 = vmatprep.subr.bf16.mxu0 0
    %1539 = vmatpush1.bf16.msra.mxu0 %v1053
    %1540 = vmatprep.subr.bf16.mxu0 0
    %1541 = vmatpush1.bf16.msra.mxu0 %v1064
    %1542 = vmatprep.subr.bf16.mxu0 0
    %1543 = vmatpush1.bf16.msra.mxu0 %v1075
    %1544 = vmatprep.subr.bf16.mxu0 0
    %1545 = vmatpush1.bf16.msra.mxu0 %v1086
    %1546 = vmatprep.subr.bf16.mxu0 0
    %1547 = vmatpush1.bf16.msra.mxu0 %v1097
    %1548 = vmatprep.subr.bf16.mxu0 0
    %1549 = vmatpush1.bf16.msra.mxu0 %v1108
    %1550 = vmatprep.subr.bf16.mxu0 0
    %1551 = vmatpush1.bf16.msra.mxu0 %v1119
    %1552 = vmatprep.subr.bf16.mxu0 0
    %1553 = vmatpush1.bf16.msra.mxu0 %v1130
    %1554 = vmatprep.mubr.bf16.mxu0 %v408
    %1555 = vmatmul.mubr.bf16.gmra.mrb[0].mxu0 %v407
    %v1556 = vpop.f32.mrb[0].mxu0
    %v1557 = vadd.f32 %v389, %v1556
    %v1558 = vpop.f32.mrb[0].mxu0
    %v1559 = vpop.f32.mrb[0].mxu0
    %v1560 = vadd.f32 %v389, %v1559
    %v1561 = vpop.f32.mrb[0].mxu0
    %1562 = vdwg.mxu0
    %v1563 = vmax.f32 %v1342, 0.0
    %v1564 = vmax.f32 %v1344, 0.0
    %v1565 = vmax.f32 %v1385, 0.0
    %v1566 = vmax.f32 %v1387, 0.0
    %v1567 = vmax.f32 %v1428, 0.0
    %v1568 = vmax.f32 %v1430, 0.0
    %v1569 = vmax.f32 %v1471, 0.0
    %v1570 = vmax.f32 %v1473, 0.0
    %v1571 = vmax.f32 %v1514, 0.0
    %v1572 = vmax.f32 %v1516, 0.0
    %v1573 = vmax.f32 %v1557, 0.0
    %v1574 = vmax.f32 %v1346, 0.0
    %v1575 = vmax.f32 %v1348, 0.0
    %v1576 = vmax.f32 %v1389, 0.0
    %v1577 = vmax.f32 %v1391, 0.0
    %v1578 = vmax.f32 %v1432, 0.0
    %v1579 = vmax.f32 %v1434, 0.0
    %v1580 = vmax.f32 %v1475, 0.0
    %v1581 = vmax.f32 %v1477, 0.0
    %v1582 = vmax.f32 %v1518, 0.0
    %v1583 = vmax.f32 %v1520, 0.0
    %v1584 = vmax.f32 %v1560, 0.0
    %v1585 = vpack.c.bf16 %v1574, %v1563
    %v1586 = vpack.c.bf16 %v1575, %v1564
    %v1587 = vpack.c.bf16 %v1576, %v1565
    %v1588 = vpack.c.bf16 %v1577, %v1566
    %v1589 = vpack.c.bf16 %v1578, %v1567
    %v1590 = vpack.c.bf16 %v1579, %v1568
    %v1591 = vpack.c.bf16 %v1580, %v1569
    %v1592 = vpack.c.bf16 %v1581, %v1570
    %v1593 = vpack.c.bf16 %v1582, %v1571
    %v1594 = vpack.c.bf16 %v1583, %v1572
    %v1595 = vpack.c.bf16 %v1584, %v1573
    %v1596 = vld [vmem:[#allocation8] sm:$0xff]
    %v1597 = vld [vmem:[#allocation8 + $0x8] sm:$0xff]
    %v1598 = vld [vmem:[#allocation8 + $0x10] sm:$0xff]
    %v1599 = vld [vmem:[#allocation8 + $0x18] sm:$0xff]
    %v1600 = vld [vmem:[#allocation8 + $0x20] sm:$0xff]
    %v1601 = vld [vmem:[#allocation8 + $0x28] sm:$0xff]
    %v1602 = vld [vmem:[#allocation8 + $0x30] sm:$0xff]
    %v1603 = vld [vmem:[#allocation8 + $0x38] sm:$0xff]
    %v1604 = vld [vmem:[#allocation8 + $0x40] sm:$0xff]
    %v1605 = vld [vmem:[#allocation8 + $0x48] sm:$0xff]
    %v1606 = vld [vmem:[#allocation8 + $0x50] sm:$0xff]
    %v1607 = vld [vmem:[#allocation8 + $0x58] sm:$0xff]
    %v1608 = vld [vmem:[#allocation8 + $0x60] sm:$0xff]
    %v1609 = vld [vmem:[#allocation8 + $0x68] sm:$0xff]
    %v1610 = vld [vmem:[#allocation8 + $0x70] sm:$0xff]
    %v1611 = vld [vmem:[#allocation8 + $0x78] sm:$0xff]
    %v1612 = vld [vmem:[#allocation8 + $0x80] sm:$0xff]
    %v1613 = vld [vmem:[#allocation8 + $0x88] sm:$0xff]
    %v1614 = vld [vmem:[#allocation8 + $0x90] sm:$0xff]
    %v1615 = vld [vmem:[#allocation8 + $0x98] sm:$0xff]
    %v1616 = vld [vmem:[#allocation8 + $0xa0] sm:$0xff]
    %v1617 = vld [vmem:[#allocation8 + $0xa8] sm:$0xff]
    %v1618 = vld [vmem:[#allocation8 + $0xb0] sm:$0xff]
    %v1619 = vld [vmem:[#allocation8 + $0xb8] sm:$0xff]
    %v1620 = vld [vmem:[#allocation8 + $0xc0] sm:$0xff]
    %v1621 = vld [vmem:[#allocation8 + $0xc8] sm:$0xff]
    %v1622 = vld [vmem:[#allocation8 + $0xd0] sm:$0xff]
    %v1623 = vld [vmem:[#allocation8 + $0xd8] sm:$0xff]
    %v1624 = vld [vmem:[#allocation8 + $0xe0] sm:$0xff]
    %v1625 = vld [vmem:[#allocation8 + $0xe8] sm:$0xff]
    %v1626 = vld [vmem:[#allocation8 + $0xf0] sm:$0xff]
    %v1627 = vld [vmem:[#allocation8 + $0xf8] sm:$0xff]
    %v1628 = vld [vmem:[#allocation8 + $0x100] sm:$0xff]
    %v1629 = vld [vmem:[#allocation8 + $0x108] sm:$0xff]
    %v1630 = vld [vmem:[#allocation8 + $0x110] sm:$0xff]
    %v1631 = vld [vmem:[#allocation8 + $0x118] sm:$0xff]
    %v1632 = vld [vmem:[#allocation8 + $0x120] sm:$0xff]
    %v1633 = vld [vmem:[#allocation8 + $0x128] sm:$0xff]
    %v1634 = vld [vmem:[#allocation8 + $0x130] sm:$0xff]
    %v1635 = vld [vmem:[#allocation8 + $0x138] sm:$0xff]
    %v1636 = vld [vmem:[#allocation8 + $0x140] sm:$0xff]
    %v1637 = vld [vmem:[#allocation8 + $0x148] sm:$0xff]
    %v1638 = vld [vmem:[#allocation8 + $0x150] sm:$0xff]
    %v1639 = vld [vmem:[#allocation8 + $0x158] sm:$0xff]
    %v1640 = vld [vmem:[#allocation8 + $0x160] sm:$0xff]
    %v1641 = vld [vmem:[#allocation8 + $0x168] sm:$0xff]
    %v1642 = vld [vmem:[#allocation8 + $0x170] sm:$0xff]
    %v1643 = vld [vmem:[#allocation8 + $0x178] sm:$0xff]
    %v1644 = vld [vmem:[#allocation8 + $0x180] sm:$0xff]
    %v1645 = vld [vmem:[#allocation8 + $0x188] sm:$0xff]
    %v1646 = vld [vmem:[#allocation8 + $0x190] sm:$0xff]
    %v1647 = vld [vmem:[#allocation8 + $0x198] sm:$0xff]
    %v1648 = vld [vmem:[#allocation8 + $0x1a0] sm:$0xff]
    %v1649 = vld [vmem:[#allocation8 + $0x1a8] sm:$0xff]
    %v1650 = vld [vmem:[#allocation8 + $0x1b0] sm:$0xff]
    %v1651 = vld [vmem:[#allocation8 + $0x1b8] sm:$0xff]
    %v1652 = vld [vmem:[#allocation8 + $0x1c0] sm:$0xff]
    %v1653 = vld [vmem:[#allocation8 + $0x1c8] sm:$0xff]
    %v1654 = vld [vmem:[#allocation8 + $0x1d0] sm:$0xff]
    %v1655 = vld [vmem:[#allocation8 + $0x1d8] sm:$0xff]
    %v1656 = vld [vmem:[#allocation8 + $0x1e0] sm:$0xff]
    %v1657 = vld [vmem:[#allocation8 + $0x1e8] sm:$0xff]
    %v1658 = vld [vmem:[#allocation8 + $0x1f0] sm:$0xff]
    %v1659 = vld [vmem:[#allocation8 + $0x1f8] sm:$0xff]
    %v1660 = vld [vmem:[#allocation8 + $0x200] sm:$0xff]
    %v1661 = vld [vmem:[#allocation8 + $0x208] sm:$0xff]
    %v1662 = vld [vmem:[#allocation8 + $0x210] sm:$0xff]
    %v1663 = vld [vmem:[#allocation8 + $0x218] sm:$0xff]
    %v1664 = vld [vmem:[#allocation8 + $0x220] sm:$0xff]
    %v1665 = vld [vmem:[#allocation8 + $0x228] sm:$0xff]
    %v1666 = vld [vmem:[#allocation8 + $0x230] sm:$0xff]
    %v1667 = vld [vmem:[#allocation8 + $0x238] sm:$0xff]
    %v1668 = vld [vmem:[#allocation8 + $0x240] sm:$0xff]
    %v1669 = vld [vmem:[#allocation8 + $0x248] sm:$0xff]
    %v1670 = vld [vmem:[#allocation8 + $0x250] sm:$0xff]
    %v1671 = vld [vmem:[#allocation8 + $0x258] sm:$0xff]
    %v1672 = vld [vmem:[#allocation8 + $0x260] sm:$0xff]
    %v1673 = vld [vmem:[#allocation8 + $0x268] sm:$0xff]
    %v1674 = vld [vmem:[#allocation8 + $0x270] sm:$0xff]
    %v1675 = vld [vmem:[#allocation8 + $0x278] sm:$0xff]
    %v1676 = vld [vmem:[#allocation8 + $0x280] sm:$0xff]
    %v1677 = vld [vmem:[#allocation8 + $0x288] sm:$0xff]
    %v1678 = vld [vmem:[#allocation8 + $0x290] sm:$0xff]
    %v1679 = vld [vmem:[#allocation8 + $0x298] sm:$0xff]
    %v1680 = vld [vmem:[#allocation8 + $0x2a0] sm:$0xff]
    %v1681 = vld [vmem:[#allocation8 + $0x2a8] sm:$0xff]
    %v1682 = vld [vmem:[#allocation8 + $0x2b0] sm:$0xff]
    %v1683 = vld [vmem:[#allocation8 + $0x2b8] sm:$0xff]
    %v1684 = vld [vmem:[#allocation8 + $0x2c0] sm:$0xff]
    %v1685 = vld [vmem:[#allocation8 + $0x2c8] sm:$0xff]
    %v1686 = vld [vmem:[#allocation8 + $0x2d0] sm:$0xff]
    %v1687 = vld [vmem:[#allocation8 + $0x2d8] sm:$0xff]
    %v1688 = vld [vmem:[#allocation8 + $0x2e0] sm:$0xff]
    %v1689 = vld [vmem:[#allocation8 + $0x2e8] sm:$0xff]
    %v1690 = vld [vmem:[#allocation8 + $0x2f0] sm:$0xff]
    %v1691 = vld [vmem:[#allocation8 + $0x2f8] sm:$0xff]
    %v1692 = vld [vmem:[#allocation8 + $0x300] sm:$0xff]
    %v1693 = vld [vmem:[#allocation8 + $0x308] sm:$0xff]
    %v1694 = vld [vmem:[#allocation8 + $0x310] sm:$0xff]
    %v1695 = vld [vmem:[#allocation8 + $0x318] sm:$0xff]
    %v1696 = vld [vmem:[#allocation8 + $0x320] sm:$0xff]
    %v1697 = vld [vmem:[#allocation8 + $0x328] sm:$0xff]
    %v1698 = vld [vmem:[#allocation8 + $0x330] sm:$0xff]
    %v1699 = vld [vmem:[#allocation8 + $0x338] sm:$0xff]
    %v1700 = vld [vmem:[#allocation8 + $0x340] sm:$0xff]
    %v1701 = vld [vmem:[#allocation8 + $0x348] sm:$0xff]
    %v1702 = vld [vmem:[#allocation8 + $0x350] sm:$0xff]
    %v1703 = vld [vmem:[#allocation8 + $0x358] sm:$0xff]
    %v1704 = vld [vmem:[#allocation8 + $0x360] sm:$0xff]
    %v1705 = vld [vmem:[#allocation8 + $0x368] sm:$0xff]
    %v1706 = vld [vmem:[#allocation8 + $0x370] sm:$0xff]
    %v1707 = vld [vmem:[#allocation8 + $0x378] sm:$0xff]
    %v1708 = vld [vmem:[#allocation8 + $0x380] sm:$0xff]
    %v1709 = vld [vmem:[#allocation8 + $0x388] sm:$0xff]
    %v1710 = vld [vmem:[#allocation8 + $0x390] sm:$0xff]
    %v1711 = vld [vmem:[#allocation8 + $0x398] sm:$0xff]
    %v1712 = vld [vmem:[#allocation8 + $0x3a0] sm:$0xff]
    %v1713 = vld [vmem:[#allocation8 + $0x3a8] sm:$0xff]
    %v1714 = vld [vmem:[#allocation8 + $0x3b0] sm:$0xff]
    %v1715 = vld [vmem:[#allocation8 + $0x3b8] sm:$0xff]
    %v1716 = vld [vmem:[#allocation8 + $0x3c0] sm:$0xff]
    %v1717 = vld [vmem:[#allocation8 + $0x3c8] sm:$0xff]
    %v1718 = vld [vmem:[#allocation8 + $0x3d0] sm:$0xff]
    %v1719 = vld [vmem:[#allocation8 + $0x3d8] sm:$0xff]
    %v1720 = vld [vmem:[#allocation8 + $0x3e0] sm:$0xff]
    %v1721 = vld [vmem:[#allocation8 + $0x3e8] sm:$0xff]
    %v1722 = vld [vmem:[#allocation8 + $0x3f0] sm:$0xff]
    %v1723 = vld [vmem:[#allocation8 + $0x3f8] sm:$0xff]
    %v1724 = vld [vmem:[#allocation8 + $0x400] sm:$0xff]
    %v1725 = vld [vmem:[#allocation8 + $0x408] sm:$0xff]
    %v1726 = vld [vmem:[#allocation8 + $0x410] sm:$0xff]
    %v1727 = vld [vmem:[#allocation8 + $0x418] sm:$0xff]
    %v1728 = vld [vmem:[#allocation8 + $0x420] sm:$0xff]
    %v1729 = vld [vmem:[#allocation8 + $0x428] sm:$0xff]
    %v1730 = vld [vmem:[#allocation8 + $0x430] sm:$0xff]
    %v1731 = vld [vmem:[#allocation8 + $0x438] sm:$0xff]
    %v1732 = vld [vmem:[#allocation8 + $0x440] sm:$0xff]
    %v1733 = vld [vmem:[#allocation8 + $0x448] sm:$0xff]
    %v1734 = vld [vmem:[#allocation8 + $0x450] sm:$0xff]
    %v1735 = vld [vmem:[#allocation8 + $0x458] sm:$0xff]
    %v1736 = vld [vmem:[#allocation8 + $0x460] sm:$0xff]
    %v1737 = vld [vmem:[#allocation8 + $0x468] sm:$0xff]
    %v1738 = vld [vmem:[#allocation8 + $0x470] sm:$0xff]
    %v1739 = vld [vmem:[#allocation8 + $0x478] sm:$0xff]
    %v1740 = vld [vmem:[#allocation8 + $0x480] sm:$0xff]
    %v1741 = vld [vmem:[#allocation8 + $0x488] sm:$0xff]
    %v1742 = vld [vmem:[#allocation8 + $0x490] sm:$0xff]
    %v1743 = vld [vmem:[#allocation8 + $0x498] sm:$0xff]
    %v1744 = vld [vmem:[#allocation8 + $0x4a0] sm:$0xff]
    %v1745 = vld [vmem:[#allocation8 + $0x4a8] sm:$0xff]
    %v1746 = vld [vmem:[#allocation8 + $0x4b0] sm:$0xff]
    %v1747 = vld [vmem:[#allocation8 + $0x4b8] sm:$0xff]
    %v1748 = vld [vmem:[#allocation8 + $0x4c0] sm:$0xff]
    %v1749 = vld [vmem:[#allocation8 + $0x4c8] sm:$0xff]
    %v1750 = vld [vmem:[#allocation8 + $0x4d0] sm:$0xff]
    %v1751 = vld [vmem:[#allocation8 + $0x4d8] sm:$0xff]
    %v1752 = vld [vmem:[#allocation8 + $0x4e0] sm:$0xff]
    %v1753 = vld [vmem:[#allocation8 + $0x4e8] sm:$0xff]
    %v1754 = vld [vmem:[#allocation8 + $0x4f0] sm:$0xff]
    %v1755 = vld [vmem:[#allocation8 + $0x4f8] sm:$0xff]
    %v1756 = vld [vmem:[#allocation8 + $0x500] sm:$0xff]
    %v1757 = vld [vmem:[#allocation8 + $0x508] sm:$0xff]
    %v1758 = vld [vmem:[#allocation8 + $0x510] sm:$0xff]
    %v1759 = vld [vmem:[#allocation8 + $0x518] sm:$0xff]
    %v1760 = vld [vmem:[#allocation8 + $0x520] sm:$0xff]
    %v1761 = vld [vmem:[#allocation8 + $0x528] sm:$0xff]
    %v1762 = vld [vmem:[#allocation8 + $0x530] sm:$0xff]
    %v1763 = vld [vmem:[#allocation8 + $0x538] sm:$0xff]
    %v1764 = vld [vmem:[#allocation8 + $0x540] sm:$0xff]
    %v1765 = vld [vmem:[#allocation8 + $0x548] sm:$0xff]
    %v1766 = vld [vmem:[#allocation8 + $0x550] sm:$0xff]
    %v1767 = vld [vmem:[#allocation8 + $0x558] sm:$0xff]
    %v1768 = vld [vmem:[#allocation8 + $0x560] sm:$0xff]
    %v1769 = vld [vmem:[#allocation8 + $0x568] sm:$0xff]
    %v1770 = vld [vmem:[#allocation8 + $0x570] sm:$0xff]
    %v1771 = vld [vmem:[#allocation8 + $0x578] sm:$0xff]
    %v1772 = vld [vmem:[#allocation8 + $0x580] sm:$0xff]
    %v1773 = vld [vmem:[#allocation8 + $0x588] sm:$0xff]
    %v1774 = vld [vmem:[#allocation8 + $0x590] sm:$0xff]
    %v1775 = vld [vmem:[#allocation8 + $0x598] sm:$0xff]
    %v1776 = vld [vmem:[#allocation8 + $0x5a0] sm:$0xff]
    %v1777 = vld [vmem:[#allocation8 + $0x5a8] sm:$0xff]
    %v1778 = vld [vmem:[#allocation8 + $0x5b0] sm:$0xff]
    %v1779 = vld [vmem:[#allocation8 + $0x5b8] sm:$0xff]
    %v1780 = vld [vmem:[#allocation8 + $0x5c0] sm:$0xff]
    %v1781 = vld [vmem:[#allocation8 + $0x5c8] sm:$0xff]
    %v1782 = vld [vmem:[#allocation8 + $0x5d0] sm:$0xff]
    %v1783 = vld [vmem:[#allocation8 + $0x5d8] sm:$0xff]
    %v1784 = vld [vmem:[#allocation8 + $0x5e0] sm:$0xff]
    %v1785 = vld [vmem:[#allocation8 + $0x5e8] sm:$0xff]
    %v1786 = vld [vmem:[#allocation8 + $0x5f0] sm:$0xff]
    %v1787 = vld [vmem:[#allocation8 + $0x5f8] sm:$0xff]
    %v1788 = vld [vmem:[#allocation8 + $0x600] sm:$0xff]
    %v1789 = vld [vmem:[#allocation8 + $0x608] sm:$0xff]
    %v1790 = vld [vmem:[#allocation8 + $0x610] sm:$0xff]
    %v1791 = vld [vmem:[#allocation8 + $0x618] sm:$0xff]
    %v1792 = vld [vmem:[#allocation8 + $0x620] sm:$0xff]
    %v1793 = vld [vmem:[#allocation8 + $0x628] sm:$0xff]
    %v1794 = vld [vmem:[#allocation8 + $0x630] sm:$0xff]
    %v1795 = vld [vmem:[#allocation8 + $0x638] sm:$0xff]
    %v1796 = vld [vmem:[#allocation8 + $0x640] sm:$0xff]
    %v1797 = vld [vmem:[#allocation8 + $0x648] sm:$0xff]
    %v1798 = vld [vmem:[#allocation8 + $0x650] sm:$0xff]
    %v1799 = vld [vmem:[#allocation8 + $0x658] sm:$0xff]
    %v1800 = vld [vmem:[#allocation8 + $0x660] sm:$0xff]
    %v1801 = vld [vmem:[#allocation8 + $0x668] sm:$0xff]
    %v1802 = vld [vmem:[#allocation8 + $0x670] sm:$0xff]
    %v1803 = vld [vmem:[#allocation8 + $0x678] sm:$0xff]
    %v1804 = vld [vmem:[#allocation8 + $0x680] sm:$0xff]
    %v1805 = vld [vmem:[#allocation8 + $0x688] sm:$0xff]
    %v1806 = vld [vmem:[#allocation8 + $0x690] sm:$0xff]
    %v1807 = vld [vmem:[#allocation8 + $0x698] sm:$0xff]
    %v1808 = vld [vmem:[#allocation8 + $0x6a0] sm:$0xff]
    %v1809 = vld [vmem:[#allocation8 + $0x6a8] sm:$0xff]
    %v1810 = vld [vmem:[#allocation8 + $0x6b0] sm:$0xff]
    %v1811 = vld [vmem:[#allocation8 + $0x6b8] sm:$0xff]
    %v1812 = vld [vmem:[#allocation8 + $0x6c0] sm:$0xff]
    %v1813 = vld [vmem:[#allocation8 + $0x6c8] sm:$0xff]
    %v1814 = vld [vmem:[#allocation8 + $0x6d0] sm:$0xff]
    %v1815 = vld [vmem:[#allocation8 + $0x6d8] sm:$0xff]
    %v1816 = vld [vmem:[#allocation8 + $0x6e0] sm:$0xff]
    %v1817 = vld [vmem:[#allocation8 + $0x6e8] sm:$0xff]
    %v1818 = vld [vmem:[#allocation8 + $0x6f0] sm:$0xff]
    %v1819 = vld [vmem:[#allocation8 + $0x6f8] sm:$0xff]
    %v1820 = vld [vmem:[#allocation8 + $0x700] sm:$0xff]
    %v1821 = vld [vmem:[#allocation8 + $0x708] sm:$0xff]
    %v1822 = vld [vmem:[#allocation8 + $0x710] sm:$0xff]
    %v1823 = vld [vmem:[#allocation8 + $0x718] sm:$0xff]
    %v1824 = vld [vmem:[#allocation8 + $0x720] sm:$0xff]
    %v1825 = vld [vmem:[#allocation8 + $0x728] sm:$0xff]
    %v1826 = vld [vmem:[#allocation8 + $0x730] sm:$0xff]
    %v1827 = vld [vmem:[#allocation8 + $0x738] sm:$0xff]
    %v1828 = vld [vmem:[#allocation8 + $0x740] sm:$0xff]
    %v1829 = vld [vmem:[#allocation8 + $0x748] sm:$0xff]
    %v1830 = vld [vmem:[#allocation8 + $0x750] sm:$0xff]
    %v1831 = vld [vmem:[#allocation8 + $0x758] sm:$0xff]
    %v1832 = vld [vmem:[#allocation8 + $0x760] sm:$0xff]
    %v1833 = vld [vmem:[#allocation8 + $0x768] sm:$0xff]
    %v1834 = vld [vmem:[#allocation8 + $0x770] sm:$0xff]
    %v1835 = vld [vmem:[#allocation8 + $0x778] sm:$0xff]
    %v1836 = vld [vmem:[#allocation8 + $0x780] sm:$0xff]
    %v1837 = vld [vmem:[#allocation8 + $0x788] sm:$0xff]
    %v1838 = vld [vmem:[#allocation8 + $0x790] sm:$0xff]
    %v1839 = vld [vmem:[#allocation8 + $0x798] sm:$0xff]
    %v1840 = vld [vmem:[#allocation8 + $0x7a0] sm:$0xff]
    %v1841 = vld [vmem:[#allocation8 + $0x7a8] sm:$0xff]
    %v1842 = vld [vmem:[#allocation8 + $0x7b0] sm:$0xff]
    %v1843 = vld [vmem:[#allocation8 + $0x7b8] sm:$0xff]
    %v1844 = vld [vmem:[#allocation8 + $0x7c0] sm:$0xff]
    %v1845 = vld [vmem:[#allocation8 + $0x7c8] sm:$0xff]
    %v1846 = vld [vmem:[#allocation8 + $0x7d0] sm:$0xff]
    %v1847 = vld [vmem:[#allocation8 + $0x7d8] sm:$0xff]
    %v1848 = vld [vmem:[#allocation8 + $0x7e0] sm:$0xff]
    %v1849 = vld [vmem:[#allocation8 + $0x7e8] sm:$0xff]
    %v1850 = vld [vmem:[#allocation8 + $0x7f0] sm:$0xff]
    %v1851 = vld [vmem:[#allocation8 + $0x7f8] sm:$0xff]
    %v1852 = vld [vmem:[#allocation8 + $0x800] sm:$0xff]
    %v1853 = vld [vmem:[#allocation8 + $0x808] sm:$0xff]
    %v1854 = vld [vmem:[#allocation8 + $0x810] sm:$0xff]
    %v1855 = vld [vmem:[#allocation8 + $0x818] sm:$0xff]
    %v1856 = vld [vmem:[#allocation8 + $0x820] sm:$0xff]
    %v1857 = vld [vmem:[#allocation8 + $0x828] sm:$0xff]
    %v1858 = vld [vmem:[#allocation8 + $0x830] sm:$0xff]
    %v1859 = vld [vmem:[#allocation8 + $0x838] sm:$0xff]
    %v1860 = vld [vmem:[#allocation8 + $0x840] sm:$0xff]
    %v1861 = vld [vmem:[#allocation8 + $0x848] sm:$0xff]
    %v1862 = vld [vmem:[#allocation8 + $0x850] sm:$0xff]
    %v1863 = vld [vmem:[#allocation8 + $0x858] sm:$0xff]
    %v1864 = vld [vmem:[#allocation8 + $0x860] sm:$0xff]
    %v1865 = vld [vmem:[#allocation8 + $0x868] sm:$0xff]
    %v1866 = vld [vmem:[#allocation8 + $0x870] sm:$0xff]
    %v1867 = vld [vmem:[#allocation8 + $0x878] sm:$0xff]
    %v1868 = vld [vmem:[#allocation8 + $0x880] sm:$0xff]
    %v1869 = vld [vmem:[#allocation8 + $0x888] sm:$0xff]
    %v1870 = vld [vmem:[#allocation8 + $0x890] sm:$0xff]
    %v1871 = vld [vmem:[#allocation8 + $0x898] sm:$0xff]
    %v1872 = vld [vmem:[#allocation8 + $0x8a0] sm:$0xff]
    %v1873 = vld [vmem:[#allocation8 + $0x8a8] sm:$0xff]
    %v1874 = vld [vmem:[#allocation8 + $0x8b0] sm:$0xff]
    %v1875 = vld [vmem:[#allocation8 + $0x8b8] sm:$0xff]
    %v1876 = vld [vmem:[#allocation8 + $0x8c0] sm:$0xff]
    %v1877 = vld [vmem:[#allocation8 + $0x8c8] sm:$0xff]
    %v1878 = vld [vmem:[#allocation8 + $0x8d0] sm:$0xff]
    %v1879 = vld [vmem:[#allocation8 + $0x8d8] sm:$0xff]
    %v1880 = vld [vmem:[#allocation8 + $0x8e0] sm:$0xff]
    %v1881 = vld [vmem:[#allocation8 + $0x8e8] sm:$0xff]
    %v1882 = vld [vmem:[#allocation8 + $0x8f0] sm:$0xff]
    %v1883 = vld [vmem:[#allocation8 + $0x8f8] sm:$0xff]
    %v1884 = vld [vmem:[#allocation8 + $0x900] sm:$0xff]
    %v1885 = vld [vmem:[#allocation8 + $0x908] sm:$0xff]
    %v1886 = vld [vmem:[#allocation8 + $0x910] sm:$0xff]
    %v1887 = vld [vmem:[#allocation8 + $0x918] sm:$0xff]
    %v1888 = vld [vmem:[#allocation8 + $0x920] sm:$0xff]
    %v1889 = vld [vmem:[#allocation8 + $0x928] sm:$0xff]
    %v1890 = vld [vmem:[#allocation8 + $0x930] sm:$0xff]
    %v1891 = vld [vmem:[#allocation8 + $0x938] sm:$0xff]
    %v1892 = vld [vmem:[#allocation8 + $0x940] sm:$0xff]
    %v1893 = vld [vmem:[#allocation8 + $0x948] sm:$0xff]
    %v1894 = vld [vmem:[#allocation8 + $0x950] sm:$0xff]
    %v1895 = vld [vmem:[#allocation8 + $0x958] sm:$0xff]
    %v1896 = vld [vmem:[#allocation8 + $0x960] sm:$0xff]
    %v1897 = vld [vmem:[#allocation8 + $0x968] sm:$0xff]
    %v1898 = vld [vmem:[#allocation8 + $0x970] sm:$0xff]
    %v1899 = vld [vmem:[#allocation8 + $0x978] sm:$0xff]
    %v1900 = vld [vmem:[#allocation8 + $0x980] sm:$0xff]
    %v1901 = vld [vmem:[#allocation8 + $0x988] sm:$0xff]
    %v1902 = vld [vmem:[#allocation8 + $0x990] sm:$0xff]
    %v1903 = vld [vmem:[#allocation8 + $0x998] sm:$0xff]
    %v1904 = vld [vmem:[#allocation8 + $0x9a0] sm:$0xff]
    %v1905 = vld [vmem:[#allocation8 + $0x9a8] sm:$0xff]
    %v1906 = vld [vmem:[#allocation8 + $0x9b0] sm:$0xff]
    %v1907 = vld [vmem:[#allocation8 + $0x9b8] sm:$0xff]
    %v1908 = vld [vmem:[#allocation8 + $0x9c0] sm:$0xff]
    %v1909 = vld [vmem:[#allocation8 + $0x9c8] sm:$0xff]
    %v1910 = vld [vmem:[#allocation8 + $0x9d0] sm:$0xff]
    %v1911 = vld [vmem:[#allocation8 + $0x9d8] sm:$0xff]
    %v1912 = vld [vmem:[#allocation8 + $0x9e0] sm:$0xff]
    %v1913 = vld [vmem:[#allocation8 + $0x9e8] sm:$0xff]
    %v1914 = vld [vmem:[#allocation8 + $0x9f0] sm:$0xff]
    %v1915 = vld [vmem:[#allocation8 + $0x9f8] sm:$0xff]
    %v1916 = vld [vmem:[#allocation8 + $0xa00] sm:$0xff]
    %v1917 = vld [vmem:[#allocation8 + $0xa08] sm:$0xff]
    %v1918 = vld [vmem:[#allocation8 + $0xa10] sm:$0xff]
    %v1919 = vld [vmem:[#allocation8 + $0xa18] sm:$0xff]
    %v1920 = vld [vmem:[#allocation8 + $0xa20] sm:$0xff]
    %v1921 = vld [vmem:[#allocation8 + $0xa28] sm:$0xff]
    %v1922 = vld [vmem:[#allocation8 + $0xa30] sm:$0xff]
    %v1923 = vld [vmem:[#allocation8 + $0xa38] sm:$0xff]
    %v1924 = vld [vmem:[#allocation8 + $0xa40] sm:$0xff]
    %v1925 = vld [vmem:[#allocation8 + $0xa48] sm:$0xff]
    %v1926 = vld [vmem:[#allocation8 + $0xa50] sm:$0xff]
    %v1927 = vld [vmem:[#allocation8 + $0xa58] sm:$0xff]
    %v1928 = vld [vmem:[#allocation8 + $0xa60] sm:$0xff]
    %v1929 = vld [vmem:[#allocation8 + $0xa68] sm:$0xff]
    %v1930 = vld [vmem:[#allocation8 + $0xa70] sm:$0xff]
    %v1931 = vld [vmem:[#allocation8 + $0xa78] sm:$0xff]
    %v1932 = vld [vmem:[#allocation8 + $0xa80] sm:$0xff]
    %v1933 = vld [vmem:[#allocation8 + $0xa88] sm:$0xff]
    %v1934 = vld [vmem:[#allocation8 + $0xa90] sm:$0xff]
    %v1935 = vld [vmem:[#allocation8 + $0xa98] sm:$0xff]
    %v1936 = vld [vmem:[#allocation8 + $0xaa0] sm:$0xff]
    %v1937 = vld [vmem:[#allocation8 + $0xaa8] sm:$0xff]
    %v1938 = vld [vmem:[#allocation8 + $0xab0] sm:$0xff]
    %v1939 = vld [vmem:[#allocation8 + $0xab8] sm:$0xff]
    %v1940 = vld [vmem:[#allocation8 + $0xac0] sm:$0xff]
    %v1941 = vld [vmem:[#allocation8 + $0xac8] sm:$0xff]
    %v1942 = vld [vmem:[#allocation8 + $0xad0] sm:$0xff]
    %v1943 = vld [vmem:[#allocation8 + $0xad8] sm:$0xff]
    %v1944 = vld [vmem:[#allocation8 + $0xae0] sm:$0xff]
    %v1945 = vld [vmem:[#allocation8 + $0xae8] sm:$0xff]
    %v1946 = vld [vmem:[#allocation8 + $0xaf0] sm:$0xff]
    %v1947 = vld [vmem:[#allocation8 + $0xaf8] sm:$0xff]
    %v1948 = vld [vmem:[#allocation8 + $0xb00] sm:$0xff]
    %v1949 = vld [vmem:[#allocation8 + $0xb08] sm:$0xff]
    %v1950 = vld [vmem:[#allocation8 + $0xb10] sm:$0xff]
    %v1951 = vld [vmem:[#allocation8 + $0xb18] sm:$0xff]
    %v1952 = vld [vmem:[#allocation8 + $0xb20] sm:$0xff]
    %v1953 = vld [vmem:[#allocation8 + $0xb28] sm:$0xff]
    %v1954 = vld [vmem:[#allocation8 + $0xb30] sm:$0xff]
    %v1955 = vld [vmem:[#allocation8 + $0xb38] sm:$0xff]
    %v1956 = vld [vmem:[#allocation8 + $0xb40] sm:$0xff]
    %v1957 = vld [vmem:[#allocation8 + $0xb48] sm:$0xff]
    %v1958 = vld [vmem:[#allocation8 + $0xb50] sm:$0xff]
    %v1959 = vld [vmem:[#allocation8 + $0xb58] sm:$0xff]
    %v1960 = vld [vmem:[#allocation8 + $0xb60] sm:$0xff]
    %v1961 = vld [vmem:[#allocation8 + $0xb68] sm:$0xff]
    %v1962 = vld [vmem:[#allocation8 + $0xb70] sm:$0xff]
    %v1963 = vld [vmem:[#allocation8 + $0xb78] sm:$0xff]
    %v1964 = vld [vmem:[#allocation8 + $0xb80] sm:$0xff]
    %v1965 = vld [vmem:[#allocation8 + $0xb88] sm:$0xff]
    %v1966 = vld [vmem:[#allocation8 + $0xb90] sm:$0xff]
    %v1967 = vld [vmem:[#allocation8 + $0xb98] sm:$0xff]
    %v1968 = vld [vmem:[#allocation8 + $0xba0] sm:$0xff]
    %v1969 = vld [vmem:[#allocation8 + $0xba8] sm:$0xff]
    %v1970 = vld [vmem:[#allocation8 + $0xbb0] sm:$0xff]
    %v1971 = vld [vmem:[#allocation8 + $0xbb8] sm:$0xff]
    %v1972 = vld [vmem:[#allocation8 + $0xbc0] sm:$0xff]
    %v1973 = vld [vmem:[#allocation8 + $0xbc8] sm:$0xff]
    %v1974 = vld [vmem:[#allocation8 + $0xbd0] sm:$0xff]
    %v1975 = vld [vmem:[#allocation8 + $0xbd8] sm:$0xff]
    %v1976 = vld [vmem:[#allocation8 + $0xbe0] sm:$0xff]
    %v1977 = vld [vmem:[#allocation8 + $0xbe8] sm:$0xff]
    %v1978 = vld [vmem:[#allocation8 + $0xbf0] sm:$0xff]
    %v1979 = vld [vmem:[#allocation8 + $0xbf8] sm:$0xff]
    %v1980 = vld [vmem:[#allocation8 + $0xc00] sm:$0xff]
    %v1981 = vld [vmem:[#allocation8 + $0xc08] sm:$0xff]
    %v1982 = vld [vmem:[#allocation8 + $0xc10] sm:$0xff]
    %v1983 = vld [vmem:[#allocation8 + $0xc18] sm:$0xff]
    %v1984 = vld [vmem:[#allocation8 + $0xc20] sm:$0xff]
    %v1985 = vld [vmem:[#allocation8 + $0xc28] sm:$0xff]
    %v1986 = vld [vmem:[#allocation8 + $0xc30] sm:$0xff]
    %v1987 = vld [vmem:[#allocation8 + $0xc38] sm:$0xff]
    %v1988 = vld [vmem:[#allocation8 + $0xc40] sm:$0xff]
    %v1989 = vld [vmem:[#allocation8 + $0xc48] sm:$0xff]
    %v1990 = vld [vmem:[#allocation8 + $0xc50] sm:$0xff]
    %v1991 = vld [vmem:[#allocation8 + $0xc58] sm:$0xff]
    %v1992 = vld [vmem:[#allocation8 + $0xc60] sm:$0xff]
    %v1993 = vld [vmem:[#allocation8 + $0xc68] sm:$0xff]
    %v1994 = vld [vmem:[#allocation8 + $0xc70] sm:$0xff]
    %v1995 = vld [vmem:[#allocation8 + $0xc78] sm:$0xff]
    %v1996 = vld [vmem:[#allocation8 + $0xc80] sm:$0xff]
    %v1997 = vld [vmem:[#allocation8 + $0xc88] sm:$0xff]
    %v1998 = vld [vmem:[#allocation8 + $0xc90] sm:$0xff]
    %v1999 = vld [vmem:[#allocation8 + $0xc98] sm:$0xff]
    %v2000 = vld [vmem:[#allocation8 + $0xca0] sm:$0xff]
    %v2001 = vld [vmem:[#allocation8 + $0xca8] sm:$0xff]
    %v2002 = vld [vmem:[#allocation8 + $0xcb0] sm:$0xff]
    %v2003 = vld [vmem:[#allocation8 + $0xcb8] sm:$0xff]
    %v2004 = vld [vmem:[#allocation8 + $0xcc0] sm:$0xff]
    %v2005 = vld [vmem:[#allocation8 + $0xcc8] sm:$0xff]
    %v2006 = vld [vmem:[#allocation8 + $0xcd0] sm:$0xff]
    %v2007 = vld [vmem:[#allocation8 + $0xcd8] sm:$0xff]
    %v2008 = vld [vmem:[#allocation8 + $0xce0] sm:$0xff]
    %v2009 = vld [vmem:[#allocation8 + $0xce8] sm:$0xff]
    %v2010 = vld [vmem:[#allocation8 + $0xcf0] sm:$0xff]
    %v2011 = vld [vmem:[#allocation8 + $0xcf8] sm:$0xff]
    %v2012 = vld [vmem:[#allocation8 + $0xd00] sm:$0xff]
    %v2013 = vld [vmem:[#allocation8 + $0xd08] sm:$0xff]
    %v2014 = vld [vmem:[#allocation8 + $0xd10] sm:$0xff]
    %v2015 = vld [vmem:[#allocation8 + $0xd18] sm:$0xff]
    %v2016 = vld [vmem:[#allocation8 + $0xd20] sm:$0xff]
    %v2017 = vld [vmem:[#allocation8 + $0xd28] sm:$0xff]
    %v2018 = vld [vmem:[#allocation8 + $0xd30] sm:$0xff]
    %v2019 = vld [vmem:[#allocation8 + $0xd38] sm:$0xff]
    %v2020 = vld [vmem:[#allocation8 + $0xd40] sm:$0xff]
    %v2021 = vld [vmem:[#allocation8 + $0xd48] sm:$0xff]
    %v2022 = vld [vmem:[#allocation8 + $0xd50] sm:$0xff]
    %v2023 = vld [vmem:[#allocation8 + $0xd58] sm:$0xff]
    %v2024 = vld [vmem:[#allocation8 + $0xd60] sm:$0xff]
    %v2025 = vld [vmem:[#allocation8 + $0xd68] sm:$0xff]
    %v2026 = vld [vmem:[#allocation8 + $0xd70] sm:$0xff]
    %v2027 = vld [vmem:[#allocation8 + $0xd78] sm:$0xff]
    %v2028 = vld [vmem:[#allocation8 + $0xd80] sm:$0xff]
    %v2029 = vld [vmem:[#allocation8 + $0xd88] sm:$0xff]
    %v2030 = vld [vmem:[#allocation8 + $0xd90] sm:$0xff]
    %v2031 = vld [vmem:[#allocation8 + $0xd98] sm:$0xff]
    %v2032 = vld [vmem:[#allocation8 + $0xda0] sm:$0xff]
    %v2033 = vld [vmem:[#allocation8 + $0xda8] sm:$0xff]
    %v2034 = vld [vmem:[#allocation8 + $0xdb0] sm:$0xff]
    %v2035 = vld [vmem:[#allocation8 + $0xdb8] sm:$0xff]
    %v2036 = vld [vmem:[#allocation8 + $0xdc0] sm:$0xff]
    %v2037 = vld [vmem:[#allocation8 + $0xdc8] sm:$0xff]
    %v2038 = vld [vmem:[#allocation8 + $0xdd0] sm:$0xff]
    %v2039 = vld [vmem:[#allocation8 + $0xdd8] sm:$0xff]
    %v2040 = vld [vmem:[#allocation8 + $0xde0] sm:$0xff]
    %v2041 = vld [vmem:[#allocation8 + $0xde8] sm:$0xff]
    %v2042 = vld [vmem:[#allocation8 + $0xdf0] sm:$0xff]
    %v2043 = vld [vmem:[#allocation8 + $0xdf8] sm:$0xff]
    %v2044 = vld [vmem:[#allocation8 + $0xe00] sm:$0xff]
    %v2045 = vld [vmem:[#allocation8 + $0xe08] sm:$0xff]
    %v2046 = vld [vmem:[#allocation8 + $0xe10] sm:$0xff]
    %v2047 = vld [vmem:[#allocation8 + $0xe18] sm:$0xff]
    %v2048 = vld [vmem:[#allocation8 + $0xe20] sm:$0xff]
    %v2049 = vld [vmem:[#allocation8 + $0xe28] sm:$0xff]
    %v2050 = vld [vmem:[#allocation8 + $0xe30] sm:$0xff]
    %v2051 = vld [vmem:[#allocation8 + $0xe38] sm:$0xff]
    %v2052 = vld [vmem:[#allocation8 + $0xe40] sm:$0xff]
    %v2053 = vld [vmem:[#allocation8 + $0xe48] sm:$0xff]
    %v2054 = vld [vmem:[#allocation8 + $0xe50] sm:$0xff]
    %v2055 = vld [vmem:[#allocation8 + $0xe58] sm:$0xff]
    %v2056 = vld [vmem:[#allocation8 + $0xe60] sm:$0xff]
    %v2057 = vld [vmem:[#allocation8 + $0xe68] sm:$0xff]
    %v2058 = vld [vmem:[#allocation8 + $0xe70] sm:$0xff]
    %v2059 = vld [vmem:[#allocation8 + $0xe78] sm:$0xff]
    %v2060 = vld [vmem:[#allocation8 + $0xe80] sm:$0xff]
    %v2061 = vld [vmem:[#allocation8 + $0xe88] sm:$0xff]
    %v2062 = vld [vmem:[#allocation8 + $0xe90] sm:$0xff]
    %v2063 = vld [vmem:[#allocation8 + $0xe98] sm:$0xff]
    %v2064 = vld [vmem:[#allocation8 + $0xea0] sm:$0xff]
    %v2065 = vld [vmem:[#allocation8 + $0xea8] sm:$0xff]
    %v2066 = vld [vmem:[#allocation8 + $0xeb0] sm:$0xff]
    %v2067 = vld [vmem:[#allocation8 + $0xeb8] sm:$0xff]
    %v2068 = vld [vmem:[#allocation8 + $0xec0] sm:$0xff]
    %v2069 = vld [vmem:[#allocation8 + $0xec8] sm:$0xff]
    %v2070 = vld [vmem:[#allocation8 + $0xed0] sm:$0xff]
    %v2071 = vld [vmem:[#allocation8 + $0xed8] sm:$0xff]
    %v2072 = vld [vmem:[#allocation8 + $0xee0] sm:$0xff]
    %v2073 = vld [vmem:[#allocation8 + $0xee8] sm:$0xff]
    %v2074 = vld [vmem:[#allocation8 + $0xef0] sm:$0xff]
    %v2075 = vld [vmem:[#allocation8 + $0xef8] sm:$0xff]
    %v2076 = vld [vmem:[#allocation8 + $0xf00] sm:$0xff]
    %v2077 = vld [vmem:[#allocation8 + $0xf08] sm:$0xff]
    %v2078 = vld [vmem:[#allocation8 + $0xf10] sm:$0xff]
    %v2079 = vld [vmem:[#allocation8 + $0xf18] sm:$0xff]
    %v2080 = vld [vmem:[#allocation8 + $0xf20] sm:$0xff]
    %v2081 = vld [vmem:[#allocation8 + $0xf28] sm:$0xff]
    %v2082 = vld [vmem:[#allocation8 + $0xf30] sm:$0xff]
    %v2083 = vld [vmem:[#allocation8 + $0xf38] sm:$0xff]
    %v2084 = vld [vmem:[#allocation8 + $0xf40] sm:$0xff]
    %v2085 = vld [vmem:[#allocation8 + $0xf48] sm:$0xff]
    %v2086 = vld [vmem:[#allocation8 + $0xf50] sm:$0xff]
    %v2087 = vld [vmem:[#allocation8 + $0xf58] sm:$0xff]
    %v2088 = vld [vmem:[#allocation8 + $0xf60] sm:$0xff]
    %v2089 = vld [vmem:[#allocation8 + $0xf68] sm:$0xff]
    %v2090 = vld [vmem:[#allocation8 + $0xf70] sm:$0xff]
    %v2091 = vld [vmem:[#allocation8 + $0xf78] sm:$0xff]
    %v2092 = vld [vmem:[#allocation8 + $0xf80] sm:$0xff]
    %v2093 = vld [vmem:[#allocation8 + $0xf88] sm:$0xff]
    %v2094 = vld [vmem:[#allocation8 + $0xf90] sm:$0xff]
    %v2095 = vld [vmem:[#allocation8 + $0xf98] sm:$0xff]
    %v2096 = vld [vmem:[#allocation8 + $0xfa0] sm:$0xff]
    %v2097 = vld [vmem:[#allocation8 + $0xfa8] sm:$0xff]
    %v2098 = vld [vmem:[#allocation8 + $0xfb0] sm:$0xff]
    %v2099 = vld [vmem:[#allocation8 + $0xfb8] sm:$0xff]
    %v2100 = vld [vmem:[#allocation8 + $0xfc0] sm:$0xff]
    %v2101 = vld [vmem:[#allocation8 + $0xfc8] sm:$0xff]
    %v2102 = vld [vmem:[#allocation8 + $0xfd0] sm:$0xff]
    %v2103 = vld [vmem:[#allocation8 + $0xfd8] sm:$0xff]
    %v2104 = vld [vmem:[#allocation8 + $0xfe0] sm:$0xff]
    %v2105 = vld [vmem:[#allocation8 + $0xfe8] sm:$0xff]
    %v2106 = vld [vmem:[#allocation8 + $0xff0] sm:$0xff]
    %v2107 = vld [vmem:[#allocation8 + $0xff8] sm:$0xff]
    %v2108 = vld [vmem:[#allocation8 + $0x1000] sm:$0xff]
    %v2109 = vld [vmem:[#allocation8 + $0x1008] sm:$0xff]
    %v2110 = vld [vmem:[#allocation8 + $0x1010] sm:$0xff]
    %v2111 = vld [vmem:[#allocation8 + $0x1018] sm:$0xff]
    %v2112 = vld [vmem:[#allocation8 + $0x1020] sm:$0xff]
    %v2113 = vld [vmem:[#allocation8 + $0x1028] sm:$0xff]
    %v2114 = vld [vmem:[#allocation8 + $0x1030] sm:$0xff]
    %v2115 = vld [vmem:[#allocation8 + $0x1038] sm:$0xff]
    %v2116 = vld [vmem:[#allocation8 + $0x1040] sm:$0xff]
    %v2117 = vld [vmem:[#allocation8 + $0x1048] sm:$0xff]
    %v2118 = vld [vmem:[#allocation8 + $0x1050] sm:$0xff]
    %v2119 = vld [vmem:[#allocation8 + $0x1058] sm:$0xff]
    %v2120 = vld [vmem:[#allocation8 + $0x1060] sm:$0xff]
    %v2121 = vld [vmem:[#allocation8 + $0x1068] sm:$0xff]
    %v2122 = vld [vmem:[#allocation8 + $0x1070] sm:$0xff]
    %v2123 = vld [vmem:[#allocation8 + $0x1078] sm:$0xff]
    %v2124 = vld [vmem:[#allocation10] sm:$0x3f]
    %v2126 = vlaneseq
    %v2127 = vshrl.u32 %v2126, 7
    %v2128 = vsub.s32 0, %v2127
    %v2129 = vrot.slane %v2124, %v2128
    %v2130 = vlaneseq
    %v2131 = vshrl.u32 %v2130, 7
    %v2132 = vsub.s32 1, %v2131
    %v2133 = vrot.slane %v2124, %v2132
    %v2134 = vlaneseq
    %v2135 = vshrl.u32 %v2134, 7
    %v2136 = vsub.s32 2, %v2135
    %v2137 = vrot.slane %v2124, %v2136
    %v2138 = vlaneseq
    %v2139 = vshrl.u32 %v2138, 7
    %v2140 = vsub.s32 3, %v2139
    %v2141 = vrot.slane %v2124, %v2140
    %v2142 = vlaneseq
    %v2143 = vshrl.u32 %v2142, 7
    %v2144 = vsub.s32 4, %v2143
    %v2145 = vrot.slane %v2124, %v2144
    %v2146 = vlaneseq
    %v2147 = vshrl.u32 %v2146, 7
    %v2148 = vsub.s32 5, %v2147
    %v2149 = vrot.slane %v2124, %v2148
    %v2684 = vunpack.c.l.b16 %v1596
    %v2685 = vunpack.c.h.b16 %v1596
    %v2686 = vunpack.c.l.b16 %v1597
    %v2687 = vunpack.c.h.b16 %v1597
    %v2688 = vunpack.c.l.b16 %v1598
    %v2689 = vunpack.c.h.b16 %v1598
    %v2690 = vunpack.c.l.b16 %v1599
    %v2691 = vunpack.c.h.b16 %v1599
    %v2692 = vunpack.c.l.b16 %v1600
    %v2693 = vunpack.c.h.b16 %v1600
    %v2694 = vunpack.c.l.b16 %v1601
    %v2695 = vunpack.c.h.b16 %v1601
    %v2696 = vunpack.c.l.b16 %v1602
    %v2697 = vunpack.c.h.b16 %v1602
    %v2698 = vunpack.c.l.b16 %v1603
    %v2699 = vunpack.c.h.b16 %v1603
    %v2700 = vunpack.c.l.b16 %v1604
    %v2701 = vunpack.c.h.b16 %v1604
    %v2702 = vunpack.c.l.b16 %v1605
    %v2703 = vunpack.c.h.b16 %v1605
    %v2704 = vunpack.c.l.b16 %v1606
    %v2705 = vunpack.c.h.b16 %v1606
    %v2706 = vunpack.c.l.b16 %v1607
    %v2707 = vunpack.c.h.b16 %v1607
    %v2708 = vunpack.c.l.b16 %v1608
    %v2709 = vunpack.c.h.b16 %v1608
    %v2710 = vunpack.c.l.b16 %v1609
    %v2711 = vunpack.c.h.b16 %v1609
    %v2712 = vunpack.c.l.b16 %v1610
    %v2713 = vunpack.c.h.b16 %v1610
    %v2714 = vunpack.c.l.b16 %v1611
    %v2715 = vunpack.c.h.b16 %v1611
    %v2716 = vunpack.c.l.b16 %v1612
    %v2717 = vunpack.c.h.b16 %v1612
    %v2718 = vunpack.c.l.b16 %v1613
    %v2719 = vunpack.c.h.b16 %v1613
    %v2720 = vunpack.c.l.b16 %v1614
    %v2721 = vunpack.c.h.b16 %v1614
    %v2722 = vunpack.c.l.b16 %v1615
    %v2723 = vunpack.c.h.b16 %v1615
    %v2724 = vunpack.c.l.b16 %v1616
    %v2725 = vunpack.c.h.b16 %v1616
    %v2726 = vunpack.c.l.b16 %v1617
    %v2727 = vunpack.c.h.b16 %v1617
    %v2728 = vunpack.c.l.b16 %v1618
    %v2729 = vunpack.c.h.b16 %v1618
    %v2730 = vunpack.c.l.b16 %v1619
    %v2731 = vunpack.c.h.b16 %v1619
    %v2732 = vunpack.c.l.b16 %v1620
    %v2733 = vunpack.c.h.b16 %v1620
    %v2734 = vunpack.c.l.b16 %v1621
    %v2735 = vunpack.c.h.b16 %v1621
    %v2736 = vunpack.c.l.b16 %v1622
    %v2737 = vunpack.c.h.b16 %v1622
    %v2738 = vunpack.c.l.b16 %v1623
    %v2739 = vunpack.c.h.b16 %v1623
    %v2740 = vunpack.c.l.b16 %v1624
    %v2741 = vunpack.c.h.b16 %v1624
    %v2742 = vunpack.c.l.b16 %v1625
    %v2743 = vunpack.c.h.b16 %v1625
    %v2744 = vunpack.c.l.b16 %v1626
    %v2745 = vunpack.c.h.b16 %v1626
    %v2746 = vunpack.c.l.b16 %v1627
    %v2747 = vunpack.c.h.b16 %v1627
    %v2748 = vunpack.c.l.b16 %v1628
    %v2749 = vunpack.c.h.b16 %v1628
    %v2750 = vunpack.c.l.b16 %v1629
    %v2751 = vunpack.c.h.b16 %v1629
    %v2752 = vunpack.c.l.b16 %v1630
    %v2753 = vunpack.c.h.b16 %v1630
    %v2754 = vunpack.c.l.b16 %v1631
    %v2755 = vunpack.c.h.b16 %v1631
    %v2756 = vunpack.c.l.b16 %v1632
    %v2757 = vunpack.c.h.b16 %v1632
    %v2758 = vunpack.c.l.b16 %v1633
    %v2759 = vunpack.c.h.b16 %v1633
    %v2760 = vunpack.c.l.b16 %v1634
    %v2761 = vunpack.c.h.b16 %v1634
    %v2762 = vunpack.c.l.b16 %v1635
    %v2763 = vunpack.c.h.b16 %v1635
    %v2764 = vunpack.c.l.b16 %v1636
    %v2765 = vunpack.c.h.b16 %v1636
    %v2766 = vunpack.c.l.b16 %v1637
    %v2767 = vunpack.c.h.b16 %v1637
    %v2768 = vunpack.c.l.b16 %v1638
    %v2769 = vunpack.c.h.b16 %v1638
    %v2770 = vunpack.c.l.b16 %v1639
    %v2771 = vunpack.c.h.b16 %v1639
    %v2772 = vunpack.c.l.b16 %v1640
    %v2773 = vunpack.c.h.b16 %v1640
    %v2774 = vunpack.c.l.b16 %v1641
    %v2775 = vunpack.c.h.b16 %v1641
    %v2776 = vunpack.c.l.b16 %v1642
    %v2777 = vunpack.c.h.b16 %v1642
    %v2778 = vunpack.c.l.b16 %v1643
    %v2779 = vunpack.c.h.b16 %v1643
    %v2780 = vunpack.c.l.b16 %v1644
    %v2781 = vunpack.c.h.b16 %v1644
    %v2782 = vunpack.c.l.b16 %v1645
    %v2783 = vunpack.c.h.b16 %v1645
    %v2784 = vunpack.c.l.b16 %v1646
    %v2785 = vunpack.c.h.b16 %v1646
    %v2786 = vunpack.c.l.b16 %v1647
    %v2787 = vunpack.c.h.b16 %v1647
    %v2788 = vunpack.c.l.b16 %v1648
    %v2789 = vunpack.c.h.b16 %v1648
    %v2790 = vunpack.c.l.b16 %v1649
    %v2791 = vunpack.c.h.b16 %v1649
    %v2792 = vunpack.c.l.b16 %v1650
    %v2793 = vunpack.c.h.b16 %v1650
    %v2794 = vunpack.c.l.b16 %v1651
    %v2795 = vunpack.c.h.b16 %v1651
    %v2796 = vunpack.c.l.b16 %v1652
    %v2797 = vunpack.c.h.b16 %v1652
    %v2798 = vunpack.c.l.b16 %v1653
    %v2799 = vunpack.c.h.b16 %v1653
    %v2800 = vunpack.c.l.b16 %v1654
    %v2801 = vunpack.c.h.b16 %v1654
    %v2802 = vunpack.c.l.b16 %v1655
    %v2803 = vunpack.c.h.b16 %v1655
    %v2804 = vunpack.c.l.b16 %v1656
    %v2805 = vunpack.c.h.b16 %v1656
    %v2806 = vunpack.c.l.b16 %v1657
    %v2807 = vunpack.c.h.b16 %v1657
    %v2808 = vunpack.c.l.b16 %v1658
    %v2809 = vunpack.c.h.b16 %v1658
    %v2810 = vunpack.c.l.b16 %v1659
    %v2811 = vunpack.c.h.b16 %v1659
    %v2812 = vunpack.c.l.b16 %v1660
    %v2813 = vunpack.c.h.b16 %v1660
    %v2814 = vunpack.c.l.b16 %v1661
    %v2815 = vunpack.c.h.b16 %v1661
    %v2816 = vunpack.c.l.b16 %v1662
    %v2817 = vunpack.c.h.b16 %v1662
    %v2818 = vunpack.c.l.b16 %v1663
    %v2819 = vunpack.c.h.b16 %v1663
    %v2820 = vunpack.c.l.b16 %v1664
    %v2821 = vunpack.c.h.b16 %v1664
    %v2822 = vunpack.c.l.b16 %v1665
    %v2823 = vunpack.c.h.b16 %v1665
    %v2824 = vunpack.c.l.b16 %v1666
    %v2825 = vunpack.c.h.b16 %v1666
    %v2826 = vunpack.c.l.b16 %v1667
    %v2827 = vunpack.c.h.b16 %v1667
    %v2828 = vunpack.c.l.b16 %v1668
    %v2829 = vunpack.c.h.b16 %v1668
    %v2830 = vunpack.c.l.b16 %v1669
    %v2831 = vunpack.c.h.b16 %v1669
    %v2832 = vunpack.c.l.b16 %v1670
    %v2833 = vunpack.c.h.b16 %v1670
    %v2834 = vunpack.c.l.b16 %v1671
    %v2835 = vunpack.c.h.b16 %v1671
    %v2836 = vunpack.c.l.b16 %v1672
    %v2837 = vunpack.c.h.b16 %v1672
    %v2838 = vunpack.c.l.b16 %v1673
    %v2839 = vunpack.c.h.b16 %v1673
    %v2840 = vunpack.c.l.b16 %v1674
    %v2841 = vunpack.c.h.b16 %v1674
    %v2842 = vunpack.c.l.b16 %v1675
    %v2843 = vunpack.c.h.b16 %v1675
    %v2844 = vunpack.c.l.b16 %v1676
    %v2845 = vunpack.c.h.b16 %v1676
    %v2846 = vunpack.c.l.b16 %v1677
    %v2847 = vunpack.c.h.b16 %v1677
    %v2848 = vunpack.c.l.b16 %v1678
    %v2849 = vunpack.c.h.b16 %v1678
    %v2850 = vunpack.c.l.b16 %v1679
    %v2851 = vunpack.c.h.b16 %v1679
    %v2852 = vunpack.c.l.b16 %v1680
    %v2853 = vunpack.c.h.b16 %v1680
    %v2854 = vunpack.c.l.b16 %v1681
    %v2855 = vunpack.c.h.b16 %v1681
    %v2856 = vunpack.c.l.b16 %v1682
    %v2857 = vunpack.c.h.b16 %v1682
    %v2858 = vunpack.c.l.b16 %v1683
    %v2859 = vunpack.c.h.b16 %v1683
    %v2860 = vunpack.c.l.b16 %v1684
    %v2861 = vunpack.c.h.b16 %v1684
    %v2862 = vunpack.c.l.b16 %v1685
    %v2863 = vunpack.c.h.b16 %v1685
    %v2864 = vunpack.c.l.b16 %v1686
    %v2865 = vunpack.c.h.b16 %v1686
    %v2866 = vunpack.c.l.b16 %v1687
    %v2867 = vunpack.c.h.b16 %v1687
    %v2868 = vunpack.c.l.b16 %v1688
    %v2869 = vunpack.c.h.b16 %v1688
    %v2870 = vunpack.c.l.b16 %v1689
    %v2871 = vunpack.c.h.b16 %v1689
    %v2872 = vunpack.c.l.b16 %v1690
    %v2873 = vunpack.c.h.b16 %v1690
    %v2874 = vunpack.c.l.b16 %v1691
    %v2875 = vunpack.c.h.b16 %v1691
    %v2876 = vunpack.c.l.b16 %v1692
    %v2877 = vunpack.c.h.b16 %v1692
    %v2878 = vunpack.c.l.b16 %v1693
    %v2879 = vunpack.c.h.b16 %v1693
    %v2880 = vunpack.c.l.b16 %v1694
    %v2881 = vunpack.c.h.b16 %v1694
    %v2882 = vunpack.c.l.b16 %v1695
    %v2883 = vunpack.c.h.b16 %v1695
    %v2884 = vunpack.c.l.b16 %v1696
    %v2885 = vunpack.c.h.b16 %v1696
    %v2886 = vunpack.c.l.b16 %v1697
    %v2887 = vunpack.c.h.b16 %v1697
    %v2888 = vunpack.c.l.b16 %v1698
    %v2889 = vunpack.c.h.b16 %v1698
    %v2890 = vunpack.c.l.b16 %v1699
    %v2891 = vunpack.c.h.b16 %v1699
    %v2892 = vunpack.c.l.b16 %v1700
    %v2893 = vunpack.c.h.b16 %v1700
    %v2894 = vunpack.c.l.b16 %v1701
    %v2895 = vunpack.c.h.b16 %v1701
    %v2896 = vunpack.c.l.b16 %v1702
    %v2897 = vunpack.c.h.b16 %v1702
    %v2898 = vunpack.c.l.b16 %v1703
    %v2899 = vunpack.c.h.b16 %v1703
    %v2900 = vunpack.c.l.b16 %v1704
    %v2901 = vunpack.c.h.b16 %v1704
    %v2902 = vunpack.c.l.b16 %v1705
    %v2903 = vunpack.c.h.b16 %v1705
    %v2904 = vunpack.c.l.b16 %v1706
    %v2905 = vunpack.c.h.b16 %v1706
    %v2906 = vunpack.c.l.b16 %v1707
    %v2907 = vunpack.c.h.b16 %v1707
    %v2908 = vunpack.c.l.b16 %v1708
    %v2909 = vunpack.c.h.b16 %v1708
    %v2910 = vunpack.c.l.b16 %v1709
    %v2911 = vunpack.c.h.b16 %v1709
    %v2912 = vunpack.c.l.b16 %v1710
    %v2913 = vunpack.c.h.b16 %v1710
    %v2914 = vunpack.c.l.b16 %v1711
    %v2915 = vunpack.c.h.b16 %v1711
    %v2916 = vunpack.c.l.b16 %v1712
    %v2917 = vunpack.c.h.b16 %v1712
    %v2918 = vunpack.c.l.b16 %v1713
    %v2919 = vunpack.c.h.b16 %v1713
    %v2920 = vunpack.c.l.b16 %v1714
    %v2921 = vunpack.c.h.b16 %v1714
    %v2922 = vunpack.c.l.b16 %v1715
    %v2923 = vunpack.c.h.b16 %v1715
    %v2924 = vunpack.c.l.b16 %v1716
    %v2925 = vunpack.c.h.b16 %v1716
    %v2926 = vunpack.c.l.b16 %v1717
    %v2927 = vunpack.c.h.b16 %v1717
    %v2928 = vunpack.c.l.b16 %v1718
    %v2929 = vunpack.c.h.b16 %v1718
    %v2930 = vunpack.c.l.b16 %v1719
    %v2931 = vunpack.c.h.b16 %v1719
    %v2932 = vunpack.c.l.b16 %v1720
    %v2933 = vunpack.c.h.b16 %v1720
    %v2934 = vunpack.c.l.b16 %v1721
    %v2935 = vunpack.c.h.b16 %v1721
    %v2936 = vunpack.c.l.b16 %v1722
    %v2937 = vunpack.c.h.b16 %v1722
    %v2938 = vunpack.c.l.b16 %v1723
    %v2939 = vunpack.c.h.b16 %v1723
    %v2940 = vunpack.c.l.b16 %v1724
    %v2941 = vunpack.c.h.b16 %v1724
    %v2942 = vunpack.c.l.b16 %v1725
    %v2943 = vunpack.c.h.b16 %v1725
    %v2944 = vunpack.c.l.b16 %v1726
    %v2945 = vunpack.c.h.b16 %v1726
    %v2946 = vunpack.c.l.b16 %v1727
    %v2947 = vunpack.c.h.b16 %v1727
    %v2948 = vunpack.c.l.b16 %v1728
    %v2949 = vunpack.c.h.b16 %v1728
    %v2950 = vunpack.c.l.b16 %v1729
    %v2951 = vunpack.c.h.b16 %v1729
    %v2952 = vunpack.c.l.b16 %v1730
    %v2953 = vunpack.c.h.b16 %v1730
    %v2954 = vunpack.c.l.b16 %v1731
    %v2955 = vunpack.c.h.b16 %v1731
    %v2956 = vunpack.c.l.b16 %v1732
    %v2957 = vunpack.c.h.b16 %v1732
    %v2958 = vunpack.c.l.b16 %v1733
    %v2959 = vunpack.c.h.b16 %v1733
    %v2960 = vunpack.c.l.b16 %v1734
    %v2961 = vunpack.c.h.b16 %v1734
    %v2962 = vunpack.c.l.b16 %v1735
    %v2963 = vunpack.c.h.b16 %v1735
    %v2964 = vunpack.c.l.b16 %v1736
    %v2965 = vunpack.c.h.b16 %v1736
    %v2966 = vunpack.c.l.b16 %v1737
    %v2967 = vunpack.c.h.b16 %v1737
    %v2968 = vunpack.c.l.b16 %v1738
    %v2969 = vunpack.c.h.b16 %v1738
    %v2970 = vunpack.c.l.b16 %v1739
    %v2971 = vunpack.c.h.b16 %v1739
    %v2972 = vunpack.c.l.b16 %v1740
    %v2973 = vunpack.c.h.b16 %v1740
    %v2974 = vunpack.c.l.b16 %v1741
    %v2975 = vunpack.c.h.b16 %v1741
    %v2976 = vunpack.c.l.b16 %v1742
    %v2977 = vunpack.c.h.b16 %v1742
    %v2978 = vunpack.c.l.b16 %v1743
    %v2979 = vunpack.c.h.b16 %v1743
    %v2980 = vunpack.c.l.b16 %v1744
    %v2981 = vunpack.c.h.b16 %v1744
    %v2982 = vunpack.c.l.b16 %v1745
    %v2983 = vunpack.c.h.b16 %v1745
    %v2984 = vunpack.c.l.b16 %v1746
    %v2985 = vunpack.c.h.b16 %v1746
    %v2986 = vunpack.c.l.b16 %v1747
    %v2987 = vunpack.c.h.b16 %v1747
    %v2988 = vunpack.c.l.b16 %v1748
    %v2989 = vunpack.c.h.b16 %v1748
    %v2990 = vunpack.c.l.b16 %v1749
    %v2991 = vunpack.c.h.b16 %v1749
    %v2992 = vunpack.c.l.b16 %v1750
    %v2993 = vunpack.c.h.b16 %v1750
    %v2994 = vunpack.c.l.b16 %v1751
    %v2995 = vunpack.c.h.b16 %v1751
    %v2996 = vunpack.c.l.b16 %v1752
    %v2997 = vunpack.c.h.b16 %v1752
    %v2998 = vunpack.c.l.b16 %v1753
    %v2999 = vunpack.c.h.b16 %v1753
    %v3000 = vunpack.c.l.b16 %v1754
    %v3001 = vunpack.c.h.b16 %v1754
    %v3002 = vunpack.c.l.b16 %v1755
    %v3003 = vunpack.c.h.b16 %v1755
    %v3004 = vunpack.c.l.b16 %v1756
    %v3005 = vunpack.c.h.b16 %v1756
    %v3006 = vunpack.c.l.b16 %v1757
    %v3007 = vunpack.c.h.b16 %v1757
    %v3008 = vunpack.c.l.b16 %v1758
    %v3009 = vunpack.c.h.b16 %v1758
    %v3010 = vunpack.c.l.b16 %v1759
    %v3011 = vunpack.c.h.b16 %v1759
    %v3012 = vunpack.c.l.b16 %v1760
    %v3013 = vunpack.c.h.b16 %v1760
    %v3014 = vunpack.c.l.b16 %v1761
    %v3015 = vunpack.c.h.b16 %v1761
    %v3016 = vunpack.c.l.b16 %v1762
    %v3017 = vunpack.c.h.b16 %v1762
    %v3018 = vunpack.c.l.b16 %v1763
    %v3019 = vunpack.c.h.b16 %v1763
    %v3020 = vunpack.c.l.b16 %v1764
    %v3021 = vunpack.c.h.b16 %v1764
    %v3022 = vunpack.c.l.b16 %v1765
    %v3023 = vunpack.c.h.b16 %v1765
    %v3024 = vunpack.c.l.b16 %v1766
    %v3025 = vunpack.c.h.b16 %v1766
    %v3026 = vunpack.c.l.b16 %v1767
    %v3027 = vunpack.c.h.b16 %v1767
    %v3028 = vunpack.c.l.b16 %v1768
    %v3029 = vunpack.c.h.b16 %v1768
    %v3030 = vunpack.c.l.b16 %v1769
    %v3031 = vunpack.c.h.b16 %v1769
    %v3032 = vunpack.c.l.b16 %v1770
    %v3033 = vunpack.c.h.b16 %v1770
    %v3034 = vunpack.c.l.b16 %v1771
    %v3035 = vunpack.c.h.b16 %v1771
    %v3036 = vunpack.c.l.b16 %v1772
    %v3037 = vunpack.c.h.b16 %v1772
    %v3038 = vunpack.c.l.b16 %v1773
    %v3039 = vunpack.c.h.b16 %v1773
    %v3040 = vunpack.c.l.b16 %v1774
    %v3041 = vunpack.c.h.b16 %v1774
    %v3042 = vunpack.c.l.b16 %v1775
    %v3043 = vunpack.c.h.b16 %v1775
    %v3044 = vunpack.c.l.b16 %v1776
    %v3045 = vunpack.c.h.b16 %v1776
    %v3046 = vunpack.c.l.b16 %v1777
    %v3047 = vunpack.c.h.b16 %v1777
    %v3048 = vunpack.c.l.b16 %v1778
    %v3049 = vunpack.c.h.b16 %v1778
    %v3050 = vunpack.c.l.b16 %v1779
    %v3051 = vunpack.c.h.b16 %v1779
    %v3052 = vunpack.c.l.b16 %v1780
    %v3053 = vunpack.c.h.b16 %v1780
    %v3054 = vunpack.c.l.b16 %v1781
    %v3055 = vunpack.c.h.b16 %v1781
    %v3056 = vunpack.c.l.b16 %v1782
    %v3057 = vunpack.c.h.b16 %v1782
    %v3058 = vunpack.c.l.b16 %v1783
    %v3059 = vunpack.c.h.b16 %v1783
    %v3060 = vunpack.c.l.b16 %v1784
    %v3061 = vunpack.c.h.b16 %v1784
    %v3062 = vunpack.c.l.b16 %v1785
    %v3063 = vunpack.c.h.b16 %v1785
    %v3064 = vunpack.c.l.b16 %v1786
    %v3065 = vunpack.c.h.b16 %v1786
    %v3066 = vunpack.c.l.b16 %v1787
    %v3067 = vunpack.c.h.b16 %v1787
    %v3068 = vunpack.c.l.b16 %v1788
    %v3069 = vunpack.c.h.b16 %v1788
    %v3070 = vunpack.c.l.b16 %v1789
    %v3071 = vunpack.c.h.b16 %v1789
    %v3072 = vunpack.c.l.b16 %v1790
    %v3073 = vunpack.c.h.b16 %v1790
    %v3074 = vunpack.c.l.b16 %v1791
    %v3075 = vunpack.c.h.b16 %v1791
    %v3076 = vunpack.c.l.b16 %v1792
    %v3077 = vunpack.c.h.b16 %v1792
    %v3078 = vunpack.c.l.b16 %v1793
    %v3079 = vunpack.c.h.b16 %v1793
    %v3080 = vunpack.c.l.b16 %v1794
    %v3081 = vunpack.c.h.b16 %v1794
    %v3082 = vunpack.c.l.b16 %v1795
    %v3083 = vunpack.c.h.b16 %v1795
    %v3084 = vunpack.c.l.b16 %v1796
    %v3085 = vunpack.c.h.b16 %v1796
    %v3086 = vunpack.c.l.b16 %v1797
    %v3087 = vunpack.c.h.b16 %v1797
    %v3088 = vunpack.c.l.b16 %v1798
    %v3089 = vunpack.c.h.b16 %v1798
    %v3090 = vunpack.c.l.b16 %v1799
    %v3091 = vunpack.c.h.b16 %v1799
    %v3092 = vunpack.c.l.b16 %v1800
    %v3093 = vunpack.c.h.b16 %v1800
    %v3094 = vunpack.c.l.b16 %v1801
    %v3095 = vunpack.c.h.b16 %v1801
    %v3096 = vunpack.c.l.b16 %v1802
    %v3097 = vunpack.c.h.b16 %v1802
    %v3098 = vunpack.c.l.b16 %v1803
    %v3099 = vunpack.c.h.b16 %v1803
    %v3100 = vunpack.c.l.b16 %v1804
    %v3101 = vunpack.c.h.b16 %v1804
    %v3102 = vunpack.c.l.b16 %v1805
    %v3103 = vunpack.c.h.b16 %v1805
    %v3104 = vunpack.c.l.b16 %v1806
    %v3105 = vunpack.c.h.b16 %v1806
    %v3106 = vunpack.c.l.b16 %v1807
    %v3107 = vunpack.c.h.b16 %v1807
    %v3108 = vunpack.c.l.b16 %v1808
    %v3109 = vunpack.c.h.b16 %v1808
    %v3110 = vunpack.c.l.b16 %v1809
    %v3111 = vunpack.c.h.b16 %v1809
    %v3112 = vunpack.c.l.b16 %v1810
    %v3113 = vunpack.c.h.b16 %v1810
    %v3114 = vunpack.c.l.b16 %v1811
    %v3115 = vunpack.c.h.b16 %v1811
    %v3116 = vunpack.c.l.b16 %v1812
    %v3117 = vunpack.c.h.b16 %v1812
    %v3118 = vunpack.c.l.b16 %v1813
    %v3119 = vunpack.c.h.b16 %v1813
    %v3120 = vunpack.c.l.b16 %v1814
    %v3121 = vunpack.c.h.b16 %v1814
    %v3122 = vunpack.c.l.b16 %v1815
    %v3123 = vunpack.c.h.b16 %v1815
    %v3124 = vunpack.c.l.b16 %v1816
    %v3125 = vunpack.c.h.b16 %v1816
    %v3126 = vunpack.c.l.b16 %v1817
    %v3127 = vunpack.c.h.b16 %v1817
    %v3128 = vunpack.c.l.b16 %v1818
    %v3129 = vunpack.c.h.b16 %v1818
    %v3130 = vunpack.c.l.b16 %v1819
    %v3131 = vunpack.c.h.b16 %v1819
    %v3132 = vunpack.c.l.b16 %v1820
    %v3133 = vunpack.c.h.b16 %v1820
    %v3134 = vunpack.c.l.b16 %v1821
    %v3135 = vunpack.c.h.b16 %v1821
    %v3136 = vunpack.c.l.b16 %v1822
    %v3137 = vunpack.c.h.b16 %v1822
    %v3138 = vunpack.c.l.b16 %v1823
    %v3139 = vunpack.c.h.b16 %v1823
    %v3140 = vunpack.c.l.b16 %v1824
    %v3141 = vunpack.c.h.b16 %v1824
    %v3142 = vunpack.c.l.b16 %v1825
    %v3143 = vunpack.c.h.b16 %v1825
    %v3144 = vunpack.c.l.b16 %v1826
    %v3145 = vunpack.c.h.b16 %v1826
    %v3146 = vunpack.c.l.b16 %v1827
    %v3147 = vunpack.c.h.b16 %v1827
    %v3148 = vunpack.c.l.b16 %v1828
    %v3149 = vunpack.c.h.b16 %v1828
    %v3150 = vunpack.c.l.b16 %v1829
    %v3151 = vunpack.c.h.b16 %v1829
    %v3152 = vunpack.c.l.b16 %v1830
    %v3153 = vunpack.c.h.b16 %v1830
    %v3154 = vunpack.c.l.b16 %v1831
    %v3155 = vunpack.c.h.b16 %v1831
    %v3156 = vunpack.c.l.b16 %v1832
    %v3157 = vunpack.c.h.b16 %v1832
    %v3158 = vunpack.c.l.b16 %v1833
    %v3159 = vunpack.c.h.b16 %v1833
    %v3160 = vunpack.c.l.b16 %v1834
    %v3161 = vunpack.c.h.b16 %v1834
    %v3162 = vunpack.c.l.b16 %v1835
    %v3163 = vunpack.c.h.b16 %v1835
    %v3164 = vunpack.c.l.b16 %v1836
    %v3165 = vunpack.c.h.b16 %v1836
    %v3166 = vunpack.c.l.b16 %v1837
    %v3167 = vunpack.c.h.b16 %v1837
    %v3168 = vunpack.c.l.b16 %v1838
    %v3169 = vunpack.c.h.b16 %v1838
    %v3170 = vunpack.c.l.b16 %v1839
    %v3171 = vunpack.c.h.b16 %v1839
    %v3172 = vunpack.c.l.b16 %v1840
    %v3173 = vunpack.c.h.b16 %v1840
    %v3174 = vunpack.c.l.b16 %v1841
    %v3175 = vunpack.c.h.b16 %v1841
    %v3176 = vunpack.c.l.b16 %v1842
    %v3177 = vunpack.c.h.b16 %v1842
    %v3178 = vunpack.c.l.b16 %v1843
    %v3179 = vunpack.c.h.b16 %v1843
    %v3180 = vunpack.c.l.b16 %v1844
    %v3181 = vunpack.c.h.b16 %v1844
    %v3182 = vunpack.c.l.b16 %v1845
    %v3183 = vunpack.c.h.b16 %v1845
    %v3184 = vunpack.c.l.b16 %v1846
    %v3185 = vunpack.c.h.b16 %v1846
    %v3186 = vunpack.c.l.b16 %v1847
    %v3187 = vunpack.c.h.b16 %v1847
    %v3188 = vunpack.c.l.b16 %v1848
    %v3189 = vunpack.c.h.b16 %v1848
    %v3190 = vunpack.c.l.b16 %v1849
    %v3191 = vunpack.c.h.b16 %v1849
    %v3192 = vunpack.c.l.b16 %v1850
    %v3193 = vunpack.c.h.b16 %v1850
    %v3194 = vunpack.c.l.b16 %v1851
    %v3195 = vunpack.c.h.b16 %v1851
    %v3196 = vunpack.c.l.b16 %v1852
    %v3197 = vunpack.c.h.b16 %v1852
    %v3198 = vunpack.c.l.b16 %v1853
    %v3199 = vunpack.c.h.b16 %v1853
    %v3200 = vunpack.c.l.b16 %v1854
    %v3201 = vunpack.c.h.b16 %v1854
    %v3202 = vunpack.c.l.b16 %v1855
    %v3203 = vunpack.c.h.b16 %v1855
    %v3204 = vunpack.c.l.b16 %v1856
    %v3205 = vunpack.c.h.b16 %v1856
    %v3206 = vunpack.c.l.b16 %v1857
    %v3207 = vunpack.c.h.b16 %v1857
    %v3208 = vunpack.c.l.b16 %v1858
    %v3209 = vunpack.c.h.b16 %v1858
    %v3210 = vunpack.c.l.b16 %v1859
    %v3211 = vunpack.c.h.b16 %v1859
    %v3212 = vunpack.c.l.b16 %v1860
    %v3213 = vunpack.c.h.b16 %v1860
    %v3214 = vunpack.c.l.b16 %v1861
    %v3215 = vunpack.c.h.b16 %v1861
    %v3216 = vunpack.c.l.b16 %v1862
    %v3217 = vunpack.c.h.b16 %v1862
    %v3218 = vunpack.c.l.b16 %v1863
    %v3219 = vunpack.c.h.b16 %v1863
    %v3220 = vunpack.c.l.b16 %v1864
    %v3221 = vunpack.c.h.b16 %v1864
    %v3222 = vunpack.c.l.b16 %v1865
    %v3223 = vunpack.c.h.b16 %v1865
    %v3224 = vunpack.c.l.b16 %v1866
    %v3225 = vunpack.c.h.b16 %v1866
    %v3226 = vunpack.c.l.b16 %v1867
    %v3227 = vunpack.c.h.b16 %v1867
    %v3228 = vunpack.c.l.b16 %v1868
    %v3229 = vunpack.c.h.b16 %v1868
    %v3230 = vunpack.c.l.b16 %v1869
    %v3231 = vunpack.c.h.b16 %v1869
    %v3232 = vunpack.c.l.b16 %v1870
    %v3233 = vunpack.c.h.b16 %v1870
    %v3234 = vunpack.c.l.b16 %v1871
    %v3235 = vunpack.c.h.b16 %v1871
    %v3236 = vunpack.c.l.b16 %v1872
    %v3237 = vunpack.c.h.b16 %v1872
    %v3238 = vunpack.c.l.b16 %v1873
    %v3239 = vunpack.c.h.b16 %v1873
    %v3240 = vunpack.c.l.b16 %v1874
    %v3241 = vunpack.c.h.b16 %v1874
    %v3242 = vunpack.c.l.b16 %v1875
    %v3243 = vunpack.c.h.b16 %v1875
    %v3244 = vunpack.c.l.b16 %v1876
    %v3245 = vunpack.c.h.b16 %v1876
    %v3246 = vunpack.c.l.b16 %v1877
    %v3247 = vunpack.c.h.b16 %v1877
    %v3248 = vunpack.c.l.b16 %v1878
    %v3249 = vunpack.c.h.b16 %v1878
    %v3250 = vunpack.c.l.b16 %v1879
    %v3251 = vunpack.c.h.b16 %v1879
    %v3252 = vunpack.c.l.b16 %v1880
    %v3253 = vunpack.c.h.b16 %v1880
    %v3254 = vunpack.c.l.b16 %v1881
    %v3255 = vunpack.c.h.b16 %v1881
    %v3256 = vunpack.c.l.b16 %v1882
    %v3257 = vunpack.c.h.b16 %v1882
    %v3258 = vunpack.c.l.b16 %v1883
    %v3259 = vunpack.c.h.b16 %v1883
    %v3260 = vunpack.c.l.b16 %v1884
    %v3261 = vunpack.c.h.b16 %v1884
    %v3262 = vunpack.c.l.b16 %v1885
    %v3263 = vunpack.c.h.b16 %v1885
    %v3264 = vunpack.c.l.b16 %v1886
    %v3265 = vunpack.c.h.b16 %v1886
    %v3266 = vunpack.c.l.b16 %v1887
    %v3267 = vunpack.c.h.b16 %v1887
    %v3268 = vunpack.c.l.b16 %v1888
    %v3269 = vunpack.c.h.b16 %v1888
    %v3270 = vunpack.c.l.b16 %v1889
    %v3271 = vunpack.c.h.b16 %v1889
    %v3272 = vunpack.c.l.b16 %v1890
    %v3273 = vunpack.c.h.b16 %v1890
    %v3274 = vunpack.c.l.b16 %v1891
    %v3275 = vunpack.c.h.b16 %v1891
    %v3276 = vunpack.c.l.b16 %v1892
    %v3277 = vunpack.c.h.b16 %v1892
    %v3278 = vunpack.c.l.b16 %v1893
    %v3279 = vunpack.c.h.b16 %v1893
    %v3280 = vunpack.c.l.b16 %v1894
    %v3281 = vunpack.c.h.b16 %v1894
    %v3282 = vunpack.c.l.b16 %v1895
    %v3283 = vunpack.c.h.b16 %v1895
    %v3284 = vunpack.c.l.b16 %v1896
    %v3285 = vunpack.c.h.b16 %v1896
    %v3286 = vunpack.c.l.b16 %v1897
    %v3287 = vunpack.c.h.b16 %v1897
    %v3288 = vunpack.c.l.b16 %v1898
    %v3289 = vunpack.c.h.b16 %v1898
    %v3290 = vunpack.c.l.b16 %v1899
    %v3291 = vunpack.c.h.b16 %v1899
    %v3292 = vunpack.c.l.b16 %v1900
    %v3293 = vunpack.c.h.b16 %v1900
    %v3294 = vunpack.c.l.b16 %v1901
    %v3295 = vunpack.c.h.b16 %v1901
    %v3296 = vunpack.c.l.b16 %v1902
    %v3297 = vunpack.c.h.b16 %v1902
    %v3298 = vunpack.c.l.b16 %v1903
    %v3299 = vunpack.c.h.b16 %v1903
    %v3300 = vunpack.c.l.b16 %v1904
    %v3301 = vunpack.c.h.b16 %v1904
    %v3302 = vunpack.c.l.b16 %v1905
    %v3303 = vunpack.c.h.b16 %v1905
    %v3304 = vunpack.c.l.b16 %v1906
    %v3305 = vunpack.c.h.b16 %v1906
    %v3306 = vunpack.c.l.b16 %v1907
    %v3307 = vunpack.c.h.b16 %v1907
    %v3308 = vunpack.c.l.b16 %v1908
    %v3309 = vunpack.c.h.b16 %v1908
    %v3310 = vunpack.c.l.b16 %v1909
    %v3311 = vunpack.c.h.b16 %v1909
    %v3312 = vunpack.c.l.b16 %v1910
    %v3313 = vunpack.c.h.b16 %v1910
    %v3314 = vunpack.c.l.b16 %v1911
    %v3315 = vunpack.c.h.b16 %v1911
    %v3316 = vunpack.c.l.b16 %v1912
    %v3317 = vunpack.c.h.b16 %v1912
    %v3318 = vunpack.c.l.b16 %v1913
    %v3319 = vunpack.c.h.b16 %v1913
    %v3320 = vunpack.c.l.b16 %v1914
    %v3321 = vunpack.c.h.b16 %v1914
    %v3322 = vunpack.c.l.b16 %v1915
    %v3323 = vunpack.c.h.b16 %v1915
    %v3324 = vunpack.c.l.b16 %v1916
    %v3325 = vunpack.c.h.b16 %v1916
    %v3326 = vunpack.c.l.b16 %v1917
    %v3327 = vunpack.c.h.b16 %v1917
    %v3328 = vunpack.c.l.b16 %v1918
    %v3329 = vunpack.c.h.b16 %v1918
    %v3330 = vunpack.c.l.b16 %v1919
    %v3331 = vunpack.c.h.b16 %v1919
    %v3332 = vunpack.c.l.b16 %v1920
    %v3333 = vunpack.c.h.b16 %v1920
    %v3334 = vunpack.c.l.b16 %v1921
    %v3335 = vunpack.c.h.b16 %v1921
    %v3336 = vunpack.c.l.b16 %v1922
    %v3337 = vunpack.c.h.b16 %v1922
    %v3338 = vunpack.c.l.b16 %v1923
    %v3339 = vunpack.c.h.b16 %v1923
    %v3340 = vunpack.c.l.b16 %v1924
    %v3341 = vunpack.c.h.b16 %v1924
    %v3342 = vunpack.c.l.b16 %v1925
    %v3343 = vunpack.c.h.b16 %v1925
    %v3344 = vunpack.c.l.b16 %v1926
    %v3345 = vunpack.c.h.b16 %v1926
    %v3346 = vunpack.c.l.b16 %v1927
    %v3347 = vunpack.c.h.b16 %v1927
    %v3348 = vunpack.c.l.b16 %v1928
    %v3349 = vunpack.c.h.b16 %v1928
    %v3350 = vunpack.c.l.b16 %v1929
    %v3351 = vunpack.c.h.b16 %v1929
    %v3352 = vunpack.c.l.b16 %v1930
    %v3353 = vunpack.c.h.b16 %v1930
    %v3354 = vunpack.c.l.b16 %v1931
    %v3355 = vunpack.c.h.b16 %v1931
    %v3356 = vunpack.c.l.b16 %v1932
    %v3357 = vunpack.c.h.b16 %v1932
    %v3358 = vunpack.c.l.b16 %v1933
    %v3359 = vunpack.c.h.b16 %v1933
    %v3360 = vunpack.c.l.b16 %v1934
    %v3361 = vunpack.c.h.b16 %v1934
    %v3362 = vunpack.c.l.b16 %v1935
    %v3363 = vunpack.c.h.b16 %v1935
    %v3364 = vunpack.c.l.b16 %v1936
    %v3365 = vunpack.c.h.b16 %v1936
    %v3366 = vunpack.c.l.b16 %v1937
    %v3367 = vunpack.c.h.b16 %v1937
    %v3368 = vunpack.c.l.b16 %v1938
    %v3369 = vunpack.c.h.b16 %v1938
    %v3370 = vunpack.c.l.b16 %v1939
    %v3371 = vunpack.c.h.b16 %v1939
    %v3372 = vunpack.c.l.b16 %v1940
    %v3373 = vunpack.c.h.b16 %v1940
    %v3374 = vunpack.c.l.b16 %v1941
    %v3375 = vunpack.c.h.b16 %v1941
    %v3376 = vunpack.c.l.b16 %v1942
    %v3377 = vunpack.c.h.b16 %v1942
    %v3378 = vunpack.c.l.b16 %v1943
    %v3379 = vunpack.c.h.b16 %v1943
    %v3380 = vunpack.c.l.b16 %v1944
    %v3381 = vunpack.c.h.b16 %v1944
    %v3382 = vunpack.c.l.b16 %v1945
    %v3383 = vunpack.c.h.b16 %v1945
    %v3384 = vunpack.c.l.b16 %v1946
    %v3385 = vunpack.c.h.b16 %v1946
    %v3386 = vunpack.c.l.b16 %v1947
    %v3387 = vunpack.c.h.b16 %v1947
    %v3388 = vunpack.c.l.b16 %v1948
    %v3389 = vunpack.c.h.b16 %v1948
    %v3390 = vunpack.c.l.b16 %v1949
    %v3391 = vunpack.c.h.b16 %v1949
    %v3392 = vunpack.c.l.b16 %v1950
    %v3393 = vunpack.c.h.b16 %v1950
    %v3394 = vunpack.c.l.b16 %v1951
    %v3395 = vunpack.c.h.b16 %v1951
    %v3396 = vunpack.c.l.b16 %v1952
    %v3397 = vunpack.c.h.b16 %v1952
    %v3398 = vunpack.c.l.b16 %v1953
    %v3399 = vunpack.c.h.b16 %v1953
    %v3400 = vunpack.c.l.b16 %v1954
    %v3401 = vunpack.c.h.b16 %v1954
    %v3402 = vunpack.c.l.b16 %v1955
    %v3403 = vunpack.c.h.b16 %v1955
    %v3404 = vunpack.c.l.b16 %v1956
    %v3405 = vunpack.c.h.b16 %v1956
    %v3406 = vunpack.c.l.b16 %v1957
    %v3407 = vunpack.c.h.b16 %v1957
    %v3408 = vunpack.c.l.b16 %v1958
    %v3409 = vunpack.c.h.b16 %v1958
    %v3410 = vunpack.c.l.b16 %v1959
    %v3411 = vunpack.c.h.b16 %v1959
    %v3412 = vunpack.c.l.b16 %v1960
    %v3413 = vunpack.c.h.b16 %v1960
    %v3414 = vunpack.c.l.b16 %v1961
    %v3415 = vunpack.c.h.b16 %v1961
    %v3416 = vunpack.c.l.b16 %v1962
    %v3417 = vunpack.c.h.b16 %v1962
    %v3418 = vunpack.c.l.b16 %v1963
    %v3419 = vunpack.c.h.b16 %v1963
    %v3420 = vunpack.c.l.b16 %v1964
    %v3421 = vunpack.c.h.b16 %v1964
    %v3422 = vunpack.c.l.b16 %v1965
    %v3423 = vunpack.c.h.b16 %v1965
    %v3424 = vunpack.c.l.b16 %v1966
    %v3425 = vunpack.c.h.b16 %v1966
    %v3426 = vunpack.c.l.b16 %v1967
    %v3427 = vunpack.c.h.b16 %v1967
    %v3428 = vunpack.c.l.b16 %v1968
    %v3429 = vunpack.c.h.b16 %v1968
    %v3430 = vunpack.c.l.b16 %v1969
    %v3431 = vunpack.c.h.b16 %v1969
    %v3432 = vunpack.c.l.b16 %v1970
    %v3433 = vunpack.c.h.b16 %v1970
    %v3434 = vunpack.c.l.b16 %v1971
    %v3435 = vunpack.c.h.b16 %v1971
    %v3436 = vunpack.c.l.b16 %v1972
    %v3437 = vunpack.c.h.b16 %v1972
    %v3438 = vunpack.c.l.b16 %v1973
    %v3439 = vunpack.c.h.b16 %v1973
    %v3440 = vunpack.c.l.b16 %v1974
    %v3441 = vunpack.c.h.b16 %v1974
    %v3442 = vunpack.c.l.b16 %v1975
    %v3443 = vunpack.c.h.b16 %v1975
    %v3444 = vunpack.c.l.b16 %v1976
    %v3445 = vunpack.c.h.b16 %v1976
    %v3446 = vunpack.c.l.b16 %v1977
    %v3447 = vunpack.c.h.b16 %v1977
    %v3448 = vunpack.c.l.b16 %v1978
    %v3449 = vunpack.c.h.b16 %v1978
    %v3450 = vunpack.c.l.b16 %v1979
    %v3451 = vunpack.c.h.b16 %v1979
    %v3452 = vunpack.c.l.b16 %v1980
    %v3453 = vunpack.c.h.b16 %v1980
    %v3454 = vunpack.c.l.b16 %v1981
    %v3455 = vunpack.c.h.b16 %v1981
    %v3456 = vunpack.c.l.b16 %v1982
    %v3457 = vunpack.c.h.b16 %v1982
    %v3458 = vunpack.c.l.b16 %v1983
    %v3459 = vunpack.c.h.b16 %v1983
    %v3460 = vunpack.c.l.b16 %v1984
    %v3461 = vunpack.c.h.b16 %v1984
    %v3462 = vunpack.c.l.b16 %v1985
    %v3463 = vunpack.c.h.b16 %v1985
    %v3464 = vunpack.c.l.b16 %v1986
    %v3465 = vunpack.c.h.b16 %v1986
    %v3466 = vunpack.c.l.b16 %v1987
    %v3467 = vunpack.c.h.b16 %v1987
    %v3468 = vunpack.c.l.b16 %v1988
    %v3469 = vunpack.c.h.b16 %v1988
    %v3470 = vunpack.c.l.b16 %v1989
    %v3471 = vunpack.c.h.b16 %v1989
    %v3472 = vunpack.c.l.b16 %v1990
    %v3473 = vunpack.c.h.b16 %v1990
    %v3474 = vunpack.c.l.b16 %v1991
    %v3475 = vunpack.c.h.b16 %v1991
    %v3476 = vunpack.c.l.b16 %v1992
    %v3477 = vunpack.c.h.b16 %v1992
    %v3478 = vunpack.c.l.b16 %v1993
    %v3479 = vunpack.c.h.b16 %v1993
    %v3480 = vunpack.c.l.b16 %v1994
    %v3481 = vunpack.c.h.b16 %v1994
    %v3482 = vunpack.c.l.b16 %v1995
    %v3483 = vunpack.c.h.b16 %v1995
    %v3484 = vunpack.c.l.b16 %v1996
    %v3485 = vunpack.c.h.b16 %v1996
    %v3486 = vunpack.c.l.b16 %v1997
    %v3487 = vunpack.c.h.b16 %v1997
    %v3488 = vunpack.c.l.b16 %v1998
    %v3489 = vunpack.c.h.b16 %v1998
    %v3490 = vunpack.c.l.b16 %v1999
    %v3491 = vunpack.c.h.b16 %v1999
    %v3492 = vunpack.c.l.b16 %v2000
    %v3493 = vunpack.c.h.b16 %v2000
    %v3494 = vunpack.c.l.b16 %v2001
    %v3495 = vunpack.c.h.b16 %v2001
    %v3496 = vunpack.c.l.b16 %v2002
    %v3497 = vunpack.c.h.b16 %v2002
    %v3498 = vunpack.c.l.b16 %v2003
    %v3499 = vunpack.c.h.b16 %v2003
    %v3500 = vunpack.c.l.b16 %v2004
    %v3501 = vunpack.c.h.b16 %v2004
    %v3502 = vunpack.c.l.b16 %v2005
    %v3503 = vunpack.c.h.b16 %v2005
    %v3504 = vunpack.c.l.b16 %v2006
    %v3505 = vunpack.c.h.b16 %v2006
    %v3506 = vunpack.c.l.b16 %v2007
    %v3507 = vunpack.c.h.b16 %v2007
    %v3508 = vunpack.c.l.b16 %v2008
    %v3509 = vunpack.c.h.b16 %v2008
    %v3510 = vunpack.c.l.b16 %v2009
    %v3511 = vunpack.c.h.b16 %v2009
    %v3512 = vunpack.c.l.b16 %v2010
    %v3513 = vunpack.c.h.b16 %v2010
    %v3514 = vunpack.c.l.b16 %v2011
    %v3515 = vunpack.c.h.b16 %v2011
    %v3516 = vunpack.c.l.b16 %v2012
    %v3517 = vunpack.c.h.b16 %v2012
    %v3518 = vunpack.c.l.b16 %v2013
    %v3519 = vunpack.c.h.b16 %v2013
    %v3520 = vunpack.c.l.b16 %v2014
    %v3521 = vunpack.c.h.b16 %v2014
    %v3522 = vunpack.c.l.b16 %v2015
    %v3523 = vunpack.c.h.b16 %v2015
    %v3524 = vunpack.c.l.b16 %v2016
    %v3525 = vunpack.c.h.b16 %v2016
    %v3526 = vunpack.c.l.b16 %v2017
    %v3527 = vunpack.c.h.b16 %v2017
    %v3528 = vunpack.c.l.b16 %v2018
    %v3529 = vunpack.c.h.b16 %v2018
    %v3530 = vunpack.c.l.b16 %v2019
    %v3531 = vunpack.c.h.b16 %v2019
    %v3532 = vunpack.c.l.b16 %v2020
    %v3533 = vunpack.c.h.b16 %v2020
    %v3534 = vunpack.c.l.b16 %v2021
    %v3535 = vunpack.c.h.b16 %v2021
    %v3536 = vunpack.c.l.b16 %v2022
    %v3537 = vunpack.c.h.b16 %v2022
    %v3538 = vunpack.c.l.b16 %v2023
    %v3539 = vunpack.c.h.b16 %v2023
    %v3540 = vunpack.c.l.b16 %v2024
    %v3541 = vunpack.c.h.b16 %v2024
    %v3542 = vunpack.c.l.b16 %v2025
    %v3543 = vunpack.c.h.b16 %v2025
    %v3544 = vunpack.c.l.b16 %v2026
    %v3545 = vunpack.c.h.b16 %v2026
    %v3546 = vunpack.c.l.b16 %v2027
    %v3547 = vunpack.c.h.b16 %v2027
    %v3548 = vunpack.c.l.b16 %v2028
    %v3549 = vunpack.c.h.b16 %v2028
    %v3550 = vunpack.c.l.b16 %v2029
    %v3551 = vunpack.c.h.b16 %v2029
    %v3552 = vunpack.c.l.b16 %v2030
    %v3553 = vunpack.c.h.b16 %v2030
    %v3554 = vunpack.c.l.b16 %v2031
    %v3555 = vunpack.c.h.b16 %v2031
    %v3556 = vunpack.c.l.b16 %v2032
    %v3557 = vunpack.c.h.b16 %v2032
    %v3558 = vunpack.c.l.b16 %v2033
    %v3559 = vunpack.c.h.b16 %v2033
    %v3560 = vunpack.c.l.b16 %v2034
    %v3561 = vunpack.c.h.b16 %v2034
    %v3562 = vunpack.c.l.b16 %v2035
    %v3563 = vunpack.c.h.b16 %v2035
    %v3564 = vunpack.c.l.b16 %v2036
    %v3565 = vunpack.c.h.b16 %v2036
    %v3566 = vunpack.c.l.b16 %v2037
    %v3567 = vunpack.c.h.b16 %v2037
    %v3568 = vunpack.c.l.b16 %v2038
    %v3569 = vunpack.c.h.b16 %v2038
    %v3570 = vunpack.c.l.b16 %v2039
    %v3571 = vunpack.c.h.b16 %v2039
    %v3572 = vunpack.c.l.b16 %v2040
    %v3573 = vunpack.c.h.b16 %v2040
    %v3574 = vunpack.c.l.b16 %v2041
    %v3575 = vunpack.c.h.b16 %v2041
    %v3576 = vunpack.c.l.b16 %v2042
    %v3577 = vunpack.c.h.b16 %v2042
    %v3578 = vunpack.c.l.b16 %v2043
    %v3579 = vunpack.c.h.b16 %v2043
    %v3580 = vunpack.c.l.b16 %v2044
    %v3581 = vunpack.c.h.b16 %v2044
    %v3582 = vunpack.c.l.b16 %v2045
    %v3583 = vunpack.c.h.b16 %v2045
    %v3584 = vunpack.c.l.b16 %v2046
    %v3585 = vunpack.c.h.b16 %v2046
    %v3586 = vunpack.c.l.b16 %v2047
    %v3587 = vunpack.c.h.b16 %v2047
    %v3588 = vunpack.c.l.b16 %v2048
    %v3589 = vunpack.c.h.b16 %v2048
    %v3590 = vunpack.c.l.b16 %v2049
    %v3591 = vunpack.c.h.b16 %v2049
    %v3592 = vunpack.c.l.b16 %v2050
    %v3593 = vunpack.c.h.b16 %v2050
    %v3594 = vunpack.c.l.b16 %v2051
    %v3595 = vunpack.c.h.b16 %v2051
    %v3596 = vunpack.c.l.b16 %v2052
    %v3597 = vunpack.c.h.b16 %v2052
    %v3598 = vunpack.c.l.b16 %v2053
    %v3599 = vunpack.c.h.b16 %v2053
    %v3600 = vunpack.c.l.b16 %v2054
    %v3601 = vunpack.c.h.b16 %v2054
    %v3602 = vunpack.c.l.b16 %v2055
    %v3603 = vunpack.c.h.b16 %v2055
    %v3604 = vunpack.c.l.b16 %v2056
    %v3605 = vunpack.c.h.b16 %v2056
    %v3606 = vunpack.c.l.b16 %v2057
    %v3607 = vunpack.c.h.b16 %v2057
    %v3608 = vunpack.c.l.b16 %v2058
    %v3609 = vunpack.c.h.b16 %v2058
    %v3610 = vunpack.c.l.b16 %v2059
    %v3611 = vunpack.c.h.b16 %v2059
    %v3612 = vunpack.c.l.b16 %v2060
    %v3613 = vunpack.c.h.b16 %v2060
    %v3614 = vunpack.c.l.b16 %v2061
    %v3615 = vunpack.c.h.b16 %v2061
    %v3616 = vunpack.c.l.b16 %v2062
    %v3617 = vunpack.c.h.b16 %v2062
    %v3618 = vunpack.c.l.b16 %v2063
    %v3619 = vunpack.c.h.b16 %v2063
    %v3620 = vunpack.c.l.b16 %v2064
    %v3621 = vunpack.c.h.b16 %v2064
    %v3622 = vunpack.c.l.b16 %v2065
    %v3623 = vunpack.c.h.b16 %v2065
    %v3624 = vunpack.c.l.b16 %v2066
    %v3625 = vunpack.c.h.b16 %v2066
    %v3626 = vunpack.c.l.b16 %v2067
    %v3627 = vunpack.c.h.b16 %v2067
    %v3628 = vunpack.c.l.b16 %v2068
    %v3629 = vunpack.c.h.b16 %v2068
    %v3630 = vunpack.c.l.b16 %v2069
    %v3631 = vunpack.c.h.b16 %v2069
    %v3632 = vunpack.c.l.b16 %v2070
    %v3633 = vunpack.c.h.b16 %v2070
    %v3634 = vunpack.c.l.b16 %v2071
    %v3635 = vunpack.c.h.b16 %v2071
    %v3636 = vunpack.c.l.b16 %v2072
    %v3637 = vunpack.c.h.b16 %v2072
    %v3638 = vunpack.c.l.b16 %v2073
    %v3639 = vunpack.c.h.b16 %v2073
    %v3640 = vunpack.c.l.b16 %v2074
    %v3641 = vunpack.c.h.b16 %v2074
    %v3642 = vunpack.c.l.b16 %v2075
    %v3643 = vunpack.c.h.b16 %v2075
    %v3644 = vunpack.c.l.b16 %v2076
    %v3645 = vunpack.c.h.b16 %v2076
    %v3646 = vunpack.c.l.b16 %v2077
    %v3647 = vunpack.c.h.b16 %v2077
    %v3648 = vunpack.c.l.b16 %v2078
    %v3649 = vunpack.c.h.b16 %v2078
    %v3650 = vunpack.c.l.b16 %v2079
    %v3651 = vunpack.c.h.b16 %v2079
    %v3652 = vunpack.c.l.b16 %v2080
    %v3653 = vunpack.c.h.b16 %v2080
    %v3654 = vunpack.c.l.b16 %v2081
    %v3655 = vunpack.c.h.b16 %v2081
    %v3656 = vunpack.c.l.b16 %v2082
    %v3657 = vunpack.c.h.b16 %v2082
    %v3658 = vunpack.c.l.b16 %v2083
    %v3659 = vunpack.c.h.b16 %v2083
    %v3660 = vunpack.c.l.b16 %v2084
    %v3661 = vunpack.c.h.b16 %v2084
    %v3662 = vunpack.c.l.b16 %v2085
    %v3663 = vunpack.c.h.b16 %v2085
    %v3664 = vunpack.c.l.b16 %v2086
    %v3665 = vunpack.c.h.b16 %v2086
    %v3666 = vunpack.c.l.b16 %v2087
    %v3667 = vunpack.c.h.b16 %v2087
    %v3668 = vunpack.c.l.b16 %v2088
    %v3669 = vunpack.c.h.b16 %v2088
    %v3670 = vunpack.c.l.b16 %v2089
    %v3671 = vunpack.c.h.b16 %v2089
    %v3672 = vunpack.c.l.b16 %v2090
    %v3673 = vunpack.c.h.b16 %v2090
    %v3674 = vunpack.c.l.b16 %v2091
    %v3675 = vunpack.c.h.b16 %v2091
    %v3676 = vunpack.c.l.b16 %v2092
    %v3677 = vunpack.c.h.b16 %v2092
    %v3678 = vunpack.c.l.b16 %v2093
    %v3679 = vunpack.c.h.b16 %v2093
    %v3680 = vunpack.c.l.b16 %v2094
    %v3681 = vunpack.c.h.b16 %v2094
    %v3682 = vunpack.c.l.b16 %v2095
    %v3683 = vunpack.c.h.b16 %v2095
    %v3684 = vunpack.c.l.b16 %v2096
    %v3685 = vunpack.c.h.b16 %v2096
    %v3686 = vunpack.c.l.b16 %v2097
    %v3687 = vunpack.c.h.b16 %v2097
    %v3688 = vunpack.c.l.b16 %v2098
    %v3689 = vunpack.c.h.b16 %v2098
    %v3690 = vunpack.c.l.b16 %v2099
    %v3691 = vunpack.c.h.b16 %v2099
    %v3692 = vunpack.c.l.b16 %v2100
    %v3693 = vunpack.c.h.b16 %v2100
    %v3694 = vunpack.c.l.b16 %v2101
    %v3695 = vunpack.c.h.b16 %v2101
    %v3696 = vunpack.c.l.b16 %v2102
    %v3697 = vunpack.c.h.b16 %v2102
    %v3698 = vunpack.c.l.b16 %v2103
    %v3699 = vunpack.c.h.b16 %v2103
    %v3700 = vunpack.c.l.b16 %v2104
    %v3701 = vunpack.c.h.b16 %v2104
    %v3702 = vunpack.c.l.b16 %v2105
    %v3703 = vunpack.c.h.b16 %v2105
    %v3704 = vunpack.c.l.b16 %v2106
    %v3705 = vunpack.c.h.b16 %v2106
    %v3706 = vunpack.c.l.b16 %v2107
    %v3707 = vunpack.c.h.b16 %v2107
    %v3708 = vunpack.c.l.b16 %v2108
    %v3709 = vunpack.c.h.b16 %v2108
    %v3710 = vunpack.c.l.b16 %v2109
    %v3711 = vunpack.c.h.b16 %v2109
    %v3712 = vunpack.c.l.b16 %v2110
    %v3713 = vunpack.c.h.b16 %v2110
    %v3714 = vunpack.c.l.b16 %v2111
    %v3715 = vunpack.c.h.b16 %v2111
    %v3716 = vunpack.c.l.b16 %v2112
    %v3717 = vunpack.c.h.b16 %v2112
    %v3718 = vunpack.c.l.b16 %v2113
    %v3719 = vunpack.c.h.b16 %v2113
    %v3720 = vunpack.c.l.b16 %v2114
    %v3721 = vunpack.c.h.b16 %v2114
    %v3722 = vunpack.c.l.b16 %v2115
    %v3723 = vunpack.c.h.b16 %v2115
    %v3724 = vunpack.c.l.b16 %v2116
    %v3725 = vunpack.c.h.b16 %v2116
    %v3726 = vunpack.c.l.b16 %v2117
    %v3727 = vunpack.c.h.b16 %v2117
    %v3728 = vunpack.c.l.b16 %v2118
    %v3729 = vunpack.c.h.b16 %v2118
    %v3730 = vunpack.c.l.b16 %v2119
    %v3731 = vunpack.c.h.b16 %v2119
    %v3732 = vunpack.c.l.b16 %v2120
    %v3733 = vunpack.c.h.b16 %v2120
    %v3734 = vunpack.c.l.b16 %v2121
    %v3735 = vunpack.c.h.b16 %v2121
    %v3736 = vunpack.c.l.b16 %v2122
    %v3737 = vunpack.c.h.b16 %v2122
    %v3738 = vunpack.c.l.b16 %v2123
    %v3739 = vunpack.c.h.b16 %v2123
    %v3740 = vpack.c.b16 %v2690, %v2684
    %v3741 = vpack.c.b16 %v2691, %v2685
    %v3742 = vpack.c.b16 %v2692, %v2686
    %v3743 = vpack.c.b16 %v2693, %v2687
    %v3744 = vpack.c.b16 %v2694, %v2688
    %v3745 = vpack.c.b16 %v2695, %v2689
    %v3746 = vpack.c.b16 %v2702, %v2696
    %v3747 = vpack.c.b16 %v2703, %v2697
    %v3748 = vpack.c.b16 %v2704, %v2698
    %v3749 = vpack.c.b16 %v2705, %v2699
    %v3750 = vpack.c.b16 %v2706, %v2700
    %v3751 = vpack.c.b16 %v2707, %v2701
    %v3752 = vpack.c.b16 %v2714, %v2708
    %v3753 = vpack.c.b16 %v2715, %v2709
    %v3754 = vpack.c.b16 %v2716, %v2710
    %v3755 = vpack.c.b16 %v2717, %v2711
    %v3756 = vpack.c.b16 %v2718, %v2712
    %v3757 = vpack.c.b16 %v2719, %v2713
    %v3758 = vpack.c.b16 %v2726, %v2720
    %v3759 = vpack.c.b16 %v2727, %v2721
    %v3760 = vpack.c.b16 %v2728, %v2722
    %v3761 = vpack.c.b16 %v2729, %v2723
    %v3762 = vpack.c.b16 %v2730, %v2724
    %v3763 = vpack.c.b16 %v2731, %v2725
    %v3764 = vpack.c.b16 %v2738, %v2732
    %v3765 = vpack.c.b16 %v2739, %v2733
    %v3766 = vpack.c.b16 %v2740, %v2734
    %v3767 = vpack.c.b16 %v2741, %v2735
    %v3768 = vpack.c.b16 %v2742, %v2736
    %v3769 = vpack.c.b16 %v2743, %v2737
    %v3770 = vpack.c.b16 %v2750, %v2744
    %v3771 = vpack.c.b16 %v2751, %v2745
    %v3772 = vpack.c.b16 %v2752, %v2746
    %v3773 = vpack.c.b16 %v2753, %v2747
    %v3774 = vpack.c.b16 %v2754, %v2748
    %v3775 = vpack.c.b16 %v2755, %v2749
    %v3776 = vpack.c.b16 %v2762, %v2756
    %v3777 = vpack.c.b16 %v2763, %v2757
    %v3778 = vpack.c.b16 %v2764, %v2758
    %v3779 = vpack.c.b16 %v2765, %v2759
    %v3780 = vpack.c.b16 %v2766, %v2760
    %v3781 = vpack.c.b16 %v2767, %v2761
    %v3782 = vpack.c.b16 %v2774, %v2768
    %v3783 = vpack.c.b16 %v2775, %v2769
    %v3784 = vpack.c.b16 %v2776, %v2770
    %v3785 = vpack.c.b16 %v2777, %v2771
    %v3786 = vpack.c.b16 %v2778, %v2772
    %v3787 = vpack.c.b16 %v2779, %v2773
    %v3788 = vpack.c.b16 %v2786, %v2780
    %v3789 = vpack.c.b16 %v2787, %v2781
    %v3790 = vpack.c.b16 %v2788, %v2782
    %v3791 = vpack.c.b16 %v2789, %v2783
    %v3792 = vpack.c.b16 %v2790, %v2784
    %v3793 = vpack.c.b16 %v2791, %v2785
    %v3794 = vpack.c.b16 %v2798, %v2792
    %v3795 = vpack.c.b16 %v2799, %v2793
    %v3796 = vpack.c.b16 %v2800, %v2794
    %v3797 = vpack.c.b16 %v2801, %v2795
    %v3798 = vpack.c.b16 %v2802, %v2796
    %v3799 = vpack.c.b16 %v2803, %v2797
    %v3800 = vpack.c.b16 %v2810, %v2804
    %v3801 = vpack.c.b16 %v2811, %v2805
    %v3802 = vpack.c.b16 %v2812, %v2806
    %v3803 = vpack.c.b16 %v2813, %v2807
    %v3804 = vpack.c.b16 %v2814, %v2808
    %v3805 = vpack.c.b16 %v2815, %v2809
    %v3806 = vpack.c.b16 %v2822, %v2816
    %v3807 = vpack.c.b16 %v2823, %v2817
    %v3808 = vpack.c.b16 %v2824, %v2818
    %v3809 = vpack.c.b16 %v2825, %v2819
    %v3810 = vpack.c.b16 %v2826, %v2820
    %v3811 = vpack.c.b16 %v2827, %v2821
    %v3812 = vpack.c.b16 %v2834, %v2828
    %v3813 = vpack.c.b16 %v2835, %v2829
    %v3814 = vpack.c.b16 %v2836, %v2830
    %v3815 = vpack.c.b16 %v2837, %v2831
    %v3816 = vpack.c.b16 %v2838, %v2832
    %v3817 = vpack.c.b16 %v2839, %v2833
    %v3818 = vpack.c.b16 %v2846, %v2840
    %v3819 = vpack.c.b16 %v2847, %v2841
    %v3820 = vpack.c.b16 %v2848, %v2842
    %v3821 = vpack.c.b16 %v2849, %v2843
    %v3822 = vpack.c.b16 %v2850, %v2844
    %v3823 = vpack.c.b16 %v2851, %v2845
    %v3824 = vpack.c.b16 %v2858, %v2852
    %v3825 = vpack.c.b16 %v2859, %v2853
    %v3826 = vpack.c.b16 %v2860, %v2854
    %v3827 = vpack.c.b16 %v2861, %v2855
    %v3828 = vpack.c.b16 %v2862, %v2856
    %v3829 = vpack.c.b16 %v2863, %v2857
    %v3830 = vpack.c.b16 %v2870, %v2864
    %v3831 = vpack.c.b16 %v2871, %v2865
    %v3832 = vpack.c.b16 %v2872, %v2866
    %v3833 = vpack.c.b16 %v2873, %v2867
    %v3834 = vpack.c.b16 %v2874, %v2868
    %v3835 = vpack.c.b16 %v2875, %v2869
    %v3836 = vpack.c.b16 %v2882, %v2876
    %v3837 = vpack.c.b16 %v2883, %v2877
    %v3838 = vpack.c.b16 %v2884, %v2878
    %v3839 = vpack.c.b16 %v2885, %v2879
    %v3840 = vpack.c.b16 %v2886, %v2880
    %v3841 = vpack.c.b16 %v2887, %v2881
    %v3842 = vpack.c.b16 %v2894, %v2888
    %v3843 = vpack.c.b16 %v2895, %v2889
    %v3844 = vpack.c.b16 %v2896, %v2890
    %v3845 = vpack.c.b16 %v2897, %v2891
    %v3846 = vpack.c.b16 %v2898, %v2892
    %v3847 = vpack.c.b16 %v2899, %v2893
    %v3848 = vpack.c.b16 %v2906, %v2900
    %v3849 = vpack.c.b16 %v2907, %v2901
    %v3850 = vpack.c.b16 %v2908, %v2902
    %v3851 = vpack.c.b16 %v2909, %v2903
    %v3852 = vpack.c.b16 %v2910, %v2904
    %v3853 = vpack.c.b16 %v2911, %v2905
    %v3854 = vpack.c.b16 %v2918, %v2912
    %v3855 = vpack.c.b16 %v2919, %v2913
    %v3856 = vpack.c.b16 %v2920, %v2914
    %v3857 = vpack.c.b16 %v2921, %v2915
    %v3858 = vpack.c.b16 %v2922, %v2916
    %v3859 = vpack.c.b16 %v2923, %v2917
    %v3860 = vpack.c.b16 %v2930, %v2924
    %v3861 = vpack.c.b16 %v2931, %v2925
    %v3862 = vpack.c.b16 %v2932, %v2926
    %v3863 = vpack.c.b16 %v2933, %v2927
    %v3864 = vpack.c.b16 %v2934, %v2928
    %v3865 = vpack.c.b16 %v2935, %v2929
    %v3866 = vpack.c.b16 %v2942, %v2936
    %v3867 = vpack.c.b16 %v2943, %v2937
    %v3868 = vpack.c.b16 %v2944, %v2938
    %v3869 = vpack.c.b16 %v2945, %v2939
    %v3870 = vpack.c.b16 %v2946, %v2940
    %v3871 = vpack.c.b16 %v2947, %v2941
    %v3872 = vpack.c.b16 %v2954, %v2948
    %v3873 = vpack.c.b16 %v2955, %v2949
    %v3874 = vpack.c.b16 %v2956, %v2950
    %v3875 = vpack.c.b16 %v2957, %v2951
    %v3876 = vpack.c.b16 %v2958, %v2952
    %v3877 = vpack.c.b16 %v2959, %v2953
    %v3878 = vpack.c.b16 %v2966, %v2960
    %v3879 = vpack.c.b16 %v2967, %v2961
    %v3880 = vpack.c.b16 %v2968, %v2962
    %v3881 = vpack.c.b16 %v2969, %v2963
    %v3882 = vpack.c.b16 %v2970, %v2964
    %v3883 = vpack.c.b16 %v2971, %v2965
    %v3884 = vpack.c.b16 %v2978, %v2972
    %v3885 = vpack.c.b16 %v2979, %v2973
    %v3886 = vpack.c.b16 %v2980, %v2974
    %v3887 = vpack.c.b16 %v2981, %v2975
    %v3888 = vpack.c.b16 %v2982, %v2976
    %v3889 = vpack.c.b16 %v2983, %v2977
    %v3890 = vpack.c.b16 %v2990, %v2984
    %v3891 = vpack.c.b16 %v2991, %v2985
    %v3892 = vpack.c.b16 %v2992, %v2986
    %v3893 = vpack.c.b16 %v2993, %v2987
    %v3894 = vpack.c.b16 %v2994, %v2988
    %v3895 = vpack.c.b16 %v2995, %v2989
    %v3896 = vpack.c.b16 %v3002, %v2996
    %v3897 = vpack.c.b16 %v3003, %v2997
    %v3898 = vpack.c.b16 %v3004, %v2998
    %v3899 = vpack.c.b16 %v3005, %v2999
    %v3900 = vpack.c.b16 %v3006, %v3000
    %v3901 = vpack.c.b16 %v3007, %v3001
    %v3902 = vpack.c.b16 %v3014, %v3008
    %v3903 = vpack.c.b16 %v3015, %v3009
    %v3904 = vpack.c.b16 %v3016, %v3010
    %v3905 = vpack.c.b16 %v3017, %v3011
    %v3906 = vpack.c.b16 %v3018, %v3012
    %v3907 = vpack.c.b16 %v3019, %v3013
    %v3908 = vpack.c.b16 %v3026, %v3020
    %v3909 = vpack.c.b16 %v3027, %v3021
    %v3910 = vpack.c.b16 %v3028, %v3022
    %v3911 = vpack.c.b16 %v3029, %v3023
    %v3912 = vpack.c.b16 %v3030, %v3024
    %v3913 = vpack.c.b16 %v3031, %v3025
    %v3914 = vpack.c.b16 %v3038, %v3032
    %v3915 = vpack.c.b16 %v3039, %v3033
    %v3916 = vpack.c.b16 %v3040, %v3034
    %v3917 = vpack.c.b16 %v3041, %v3035
    %v3918 = vpack.c.b16 %v3042, %v3036
    %v3919 = vpack.c.b16 %v3043, %v3037
    %v3920 = vpack.c.b16 %v3050, %v3044
    %v3921 = vpack.c.b16 %v3051, %v3045
    %v3922 = vpack.c.b16 %v3052, %v3046
    %v3923 = vpack.c.b16 %v3053, %v3047
    %v3924 = vpack.c.b16 %v3054, %v3048
    %v3925 = vpack.c.b16 %v3055, %v3049
    %v3926 = vpack.c.b16 %v3062, %v3056
    %v3927 = vpack.c.b16 %v3063, %v3057
    %v3928 = vpack.c.b16 %v3064, %v3058
    %v3929 = vpack.c.b16 %v3065, %v3059
    %v3930 = vpack.c.b16 %v3066, %v3060
    %v3931 = vpack.c.b16 %v3067, %v3061
    %v3932 = vpack.c.b16 %v3074, %v3068
    %v3933 = vpack.c.b16 %v3075, %v3069
    %v3934 = vpack.c.b16 %v3076, %v3070
    %v3935 = vpack.c.b16 %v3077, %v3071
    %v3936 = vpack.c.b16 %v3078, %v3072
    %v3937 = vpack.c.b16 %v3079, %v3073
    %v3938 = vpack.c.b16 %v3086, %v3080
    %v3939 = vpack.c.b16 %v3087, %v3081
    %v3940 = vpack.c.b16 %v3088, %v3082
    %v3941 = vpack.c.b16 %v3089, %v3083
    %v3942 = vpack.c.b16 %v3090, %v3084
    %v3943 = vpack.c.b16 %v3091, %v3085
    %v3944 = vpack.c.b16 %v3098, %v3092
    %v3945 = vpack.c.b16 %v3099, %v3093
    %v3946 = vpack.c.b16 %v3100, %v3094
    %v3947 = vpack.c.b16 %v3101, %v3095
    %v3948 = vpack.c.b16 %v3102, %v3096
    %v3949 = vpack.c.b16 %v3103, %v3097
    %v3950 = vpack.c.b16 %v3110, %v3104
    %v3951 = vpack.c.b16 %v3111, %v3105
    %v3952 = vpack.c.b16 %v3112, %v3106
    %v3953 = vpack.c.b16 %v3113, %v3107
    %v3954 = vpack.c.b16 %v3114, %v3108
    %v3955 = vpack.c.b16 %v3115, %v3109
    %v3956 = vpack.c.b16 %v3122, %v3116
    %v3957 = vpack.c.b16 %v3123, %v3117
    %v3958 = vpack.c.b16 %v3124, %v3118
    %v3959 = vpack.c.b16 %v3125, %v3119
    %v3960 = vpack.c.b16 %v3126, %v3120
    %v3961 = vpack.c.b16 %v3127, %v3121
    %v3962 = vpack.c.b16 %v3134, %v3128
    %v3963 = vpack.c.b16 %v3135, %v3129
    %v3964 = vpack.c.b16 %v3136, %v3130
    %v3965 = vpack.c.b16 %v3137, %v3131
    %v3966 = vpack.c.b16 %v3138, %v3132
    %v3967 = vpack.c.b16 %v3139, %v3133
    %v3968 = vpack.c.b16 %v3146, %v3140
    %v3969 = vpack.c.b16 %v3147, %v3141
    %v3970 = vpack.c.b16 %v3148, %v3142
    %v3971 = vpack.c.b16 %v3149, %v3143
    %v3972 = vpack.c.b16 %v3150, %v3144
    %v3973 = vpack.c.b16 %v3151, %v3145
    %v3974 = vpack.c.b16 %v3158, %v3152
    %v3975 = vpack.c.b16 %v3159, %v3153
    %v3976 = vpack.c.b16 %v3160, %v3154
    %v3977 = vpack.c.b16 %v3161, %v3155
    %v3978 = vpack.c.b16 %v3162, %v3156
    %v3979 = vpack.c.b16 %v3163, %v3157
    %v3980 = vpack.c.b16 %v3170, %v3164
    %v3981 = vpack.c.b16 %v3171, %v3165
    %v3982 = vpack.c.b16 %v3172, %v3166
    %v3983 = vpack.c.b16 %v3173, %v3167
    %v3984 = vpack.c.b16 %v3174, %v3168
    %v3985 = vpack.c.b16 %v3175, %v3169
    %v3986 = vpack.c.b16 %v3182, %v3176
    %v3987 = vpack.c.b16 %v3183, %v3177
    %v3988 = vpack.c.b16 %v3184, %v3178
    %v3989 = vpack.c.b16 %v3185, %v3179
    %v3990 = vpack.c.b16 %v3186, %v3180
    %v3991 = vpack.c.b16 %v3187, %v3181
    %v3992 = vpack.c.b16 %v3194, %v3188
    %v3993 = vpack.c.b16 %v3195, %v3189
    %v3994 = vpack.c.b16 %v3196, %v3190
    %v3995 = vpack.c.b16 %v3197, %v3191
    %v3996 = vpack.c.b16 %v3198, %v3192
    %v3997 = vpack.c.b16 %v3199, %v3193
    %v3998 = vpack.c.b16 %v3206, %v3200
    %v3999 = vpack.c.b16 %v3207, %v3201
    %v4000 = vpack.c.b16 %v3208, %v3202
    %v4001 = vpack.c.b16 %v3209, %v3203
    %v4002 = vpack.c.b16 %v3210, %v3204
    %v4003 = vpack.c.b16 %v3211, %v3205
    %v4004 = vpack.c.b16 %v3218, %v3212
    %v4005 = vpack.c.b16 %v3219, %v3213
    %v4006 = vpack.c.b16 %v3220, %v3214
    %v4007 = vpack.c.b16 %v3221, %v3215
    %v4008 = vpack.c.b16 %v3222, %v3216
    %v4009 = vpack.c.b16 %v3223, %v3217
    %v4010 = vpack.c.b16 %v3230, %v3224
    %v4011 = vpack.c.b16 %v3231, %v3225
    %v4012 = vpack.c.b16 %v3232, %v3226
    %v4013 = vpack.c.b16 %v3233, %v3227
    %v4014 = vpack.c.b16 %v3234, %v3228
    %v4015 = vpack.c.b16 %v3235, %v3229
    %v4016 = vpack.c.b16 %v3242, %v3236
    %v4017 = vpack.c.b16 %v3243, %v3237
    %v4018 = vpack.c.b16 %v3244, %v3238
    %v4019 = vpack.c.b16 %v3245, %v3239
    %v4020 = vpack.c.b16 %v3246, %v3240
    %v4021 = vpack.c.b16 %v3247, %v3241
    %v4022 = vpack.c.b16 %v3254, %v3248
    %v4023 = vpack.c.b16 %v3255, %v3249
    %v4024 = vpack.c.b16 %v3256, %v3250
    %v4025 = vpack.c.b16 %v3257, %v3251
    %v4026 = vpack.c.b16 %v3258, %v3252
    %v4027 = vpack.c.b16 %v3259, %v3253
    %v4028 = vpack.c.b16 %v3266, %v3260
    %v4029 = vpack.c.b16 %v3267, %v3261
    %v4030 = vpack.c.b16 %v3268, %v3262
    %v4031 = vpack.c.b16 %v3269, %v3263
    %v4032 = vpack.c.b16 %v3270, %v3264
    %v4033 = vpack.c.b16 %v3271, %v3265
    %v4034 = vpack.c.b16 %v3278, %v3272
    %v4035 = vpack.c.b16 %v3279, %v3273
    %v4036 = vpack.c.b16 %v3280, %v3274
    %v4037 = vpack.c.b16 %v3281, %v3275
    %v4038 = vpack.c.b16 %v3282, %v3276
    %v4039 = vpack.c.b16 %v3283, %v3277
    %v4040 = vpack.c.b16 %v3290, %v3284
    %v4041 = vpack.c.b16 %v3291, %v3285
    %v4042 = vpack.c.b16 %v3292, %v3286
    %v4043 = vpack.c.b16 %v3293, %v3287
    %v4044 = vpack.c.b16 %v3294, %v3288
    %v4045 = vpack.c.b16 %v3295, %v3289
    %v4046 = vpack.c.b16 %v3302, %v3296
    %v4047 = vpack.c.b16 %v3303, %v3297
    %v4048 = vpack.c.b16 %v3304, %v3298
    %v4049 = vpack.c.b16 %v3305, %v3299
    %v4050 = vpack.c.b16 %v3306, %v3300
    %v4051 = vpack.c.b16 %v3307, %v3301
    %v4052 = vpack.c.b16 %v3314, %v3308
    %v4053 = vpack.c.b16 %v3315, %v3309
    %v4054 = vpack.c.b16 %v3316, %v3310
    %v4055 = vpack.c.b16 %v3317, %v3311
    %v4056 = vpack.c.b16 %v3318, %v3312
    %v4057 = vpack.c.b16 %v3319, %v3313
    %v4058 = vpack.c.b16 %v3326, %v3320
    %v4059 = vpack.c.b16 %v3327, %v3321
    %v4060 = vpack.c.b16 %v3328, %v3322
    %v4061 = vpack.c.b16 %v3329, %v3323
    %v4062 = vpack.c.b16 %v3330, %v3324
    %v4063 = vpack.c.b16 %v3331, %v3325
    %v4064 = vpack.c.b16 %v3338, %v3332
    %v4065 = vpack.c.b16 %v3339, %v3333
    %v4066 = vpack.c.b16 %v3340, %v3334
    %v4067 = vpack.c.b16 %v3341, %v3335
    %v4068 = vpack.c.b16 %v3342, %v3336
    %v4069 = vpack.c.b16 %v3343, %v3337
    %v4070 = vpack.c.b16 %v3350, %v3344
    %v4071 = vpack.c.b16 %v3351, %v3345
    %v4072 = vpack.c.b16 %v3352, %v3346
    %v4073 = vpack.c.b16 %v3353, %v3347
    %v4074 = vpack.c.b16 %v3354, %v3348
    %v4075 = vpack.c.b16 %v3355, %v3349
    %v4076 = vpack.c.b16 %v3362, %v3356
    %v4077 = vpack.c.b16 %v3363, %v3357
    %v4078 = vpack.c.b16 %v3364, %v3358
    %v4079 = vpack.c.b16 %v3365, %v3359
    %v4080 = vpack.c.b16 %v3366, %v3360
    %v4081 = vpack.c.b16 %v3367, %v3361
    %v4082 = vpack.c.b16 %v3374, %v3368
    %v4083 = vpack.c.b16 %v3375, %v3369
    %v4084 = vpack.c.b16 %v3376, %v3370
    %v4085 = vpack.c.b16 %v3377, %v3371
    %v4086 = vpack.c.b16 %v3378, %v3372
    %v4087 = vpack.c.b16 %v3379, %v3373
    %v4088 = vpack.c.b16 %v3386, %v3380
    %v4089 = vpack.c.b16 %v3387, %v3381
    %v4090 = vpack.c.b16 %v3388, %v3382
    %v4091 = vpack.c.b16 %v3389, %v3383
    %v4092 = vpack.c.b16 %v3390, %v3384
    %v4093 = vpack.c.b16 %v3391, %v3385
    %v4094 = vpack.c.b16 %v3398, %v3392
    %v4095 = vpack.c.b16 %v3399, %v3393
    %v4096 = vpack.c.b16 %v3400, %v3394
    %v4097 = vpack.c.b16 %v3401, %v3395
    %v4098 = vpack.c.b16 %v3402, %v3396
    %v4099 = vpack.c.b16 %v3403, %v3397
    %v4100 = vpack.c.b16 %v3410, %v3404
    %v4101 = vpack.c.b16 %v3411, %v3405
    %v4102 = vpack.c.b16 %v3412, %v3406
    %v4103 = vpack.c.b16 %v3413, %v3407
    %v4104 = vpack.c.b16 %v3414, %v3408
    %v4105 = vpack.c.b16 %v3415, %v3409
    %v4106 = vpack.c.b16 %v3422, %v3416
    %v4107 = vpack.c.b16 %v3423, %v3417
    %v4108 = vpack.c.b16 %v3424, %v3418
    %v4109 = vpack.c.b16 %v3425, %v3419
    %v4110 = vpack.c.b16 %v3426, %v3420
    %v4111 = vpack.c.b16 %v3427, %v3421
    %v4112 = vpack.c.b16 %v3434, %v3428
    %v4113 = vpack.c.b16 %v3435, %v3429
    %v4114 = vpack.c.b16 %v3436, %v3430
    %v4115 = vpack.c.b16 %v3437, %v3431
    %v4116 = vpack.c.b16 %v3438, %v3432
    %v4117 = vpack.c.b16 %v3439, %v3433
    %v4118 = vpack.c.b16 %v3446, %v3440
    %v4119 = vpack.c.b16 %v3447, %v3441
    %v4120 = vpack.c.b16 %v3448, %v3442
    %v4121 = vpack.c.b16 %v3449, %v3443
    %v4122 = vpack.c.b16 %v3450, %v3444
    %v4123 = vpack.c.b16 %v3451, %v3445
    %v4124 = vpack.c.b16 %v3458, %v3452
    %v4125 = vpack.c.b16 %v3459, %v3453
    %v4126 = vpack.c.b16 %v3460, %v3454
    %v4127 = vpack.c.b16 %v3461, %v3455
    %v4128 = vpack.c.b16 %v3462, %v3456
    %v4129 = vpack.c.b16 %v3463, %v3457
    %v4130 = vpack.c.b16 %v3470, %v3464
    %v4131 = vpack.c.b16 %v3471, %v3465
    %v4132 = vpack.c.b16 %v3472, %v3466
    %v4133 = vpack.c.b16 %v3473, %v3467
    %v4134 = vpack.c.b16 %v3474, %v3468
    %v4135 = vpack.c.b16 %v3475, %v3469
    %v4136 = vpack.c.b16 %v3482, %v3476
    %v4137 = vpack.c.b16 %v3483, %v3477
    %v4138 = vpack.c.b16 %v3484, %v3478
    %v4139 = vpack.c.b16 %v3485, %v3479
    %v4140 = vpack.c.b16 %v3486, %v3480
    %v4141 = vpack.c.b16 %v3487, %v3481
    %v4142 = vpack.c.b16 %v3494, %v3488
    %v4143 = vpack.c.b16 %v3495, %v3489
    %v4144 = vpack.c.b16 %v3496, %v3490
    %v4145 = vpack.c.b16 %v3497, %v3491
    %v4146 = vpack.c.b16 %v3498, %v3492
    %v4147 = vpack.c.b16 %v3499, %v3493
    %v4148 = vpack.c.b16 %v3506, %v3500
    %v4149 = vpack.c.b16 %v3507, %v3501
    %v4150 = vpack.c.b16 %v3508, %v3502
    %v4151 = vpack.c.b16 %v3509, %v3503
    %v4152 = vpack.c.b16 %v3510, %v3504
    %v4153 = vpack.c.b16 %v3511, %v3505
    %v4154 = vpack.c.b16 %v3518, %v3512
    %v4155 = vpack.c.b16 %v3519, %v3513
    %v4156 = vpack.c.b16 %v3520, %v3514
    %v4157 = vpack.c.b16 %v3521, %v3515
    %v4158 = vpack.c.b16 %v3522, %v3516
    %v4159 = vpack.c.b16 %v3523, %v3517
    %v4160 = vpack.c.b16 %v3530, %v3524
    %v4161 = vpack.c.b16 %v3531, %v3525
    %v4162 = vpack.c.b16 %v3532, %v3526
    %v4163 = vpack.c.b16 %v3533, %v3527
    %v4164 = vpack.c.b16 %v3534, %v3528
    %v4165 = vpack.c.b16 %v3535, %v3529
    %v4166 = vpack.c.b16 %v3542, %v3536
    %v4167 = vpack.c.b16 %v3543, %v3537
    %v4168 = vpack.c.b16 %v3544, %v3538
    %v4169 = vpack.c.b16 %v3545, %v3539
    %v4170 = vpack.c.b16 %v3546, %v3540
    %v4171 = vpack.c.b16 %v3547, %v3541
    %v4172 = vpack.c.b16 %v3554, %v3548
    %v4173 = vpack.c.b16 %v3555, %v3549
    %v4174 = vpack.c.b16 %v3556, %v3550
    %v4175 = vpack.c.b16 %v3557, %v3551
    %v4176 = vpack.c.b16 %v3558, %v3552
    %v4177 = vpack.c.b16 %v3559, %v3553
    %v4178 = vpack.c.b16 %v3566, %v3560
    %v4179 = vpack.c.b16 %v3567, %v3561
    %v4180 = vpack.c.b16 %v3568, %v3562
    %v4181 = vpack.c.b16 %v3569, %v3563
    %v4182 = vpack.c.b16 %v3570, %v3564
    %v4183 = vpack.c.b16 %v3571, %v3565
    %v4184 = vpack.c.b16 %v3578, %v3572
    %v4185 = vpack.c.b16 %v3579, %v3573
    %v4186 = vpack.c.b16 %v3580, %v3574
    %v4187 = vpack.c.b16 %v3581, %v3575
    %v4188 = vpack.c.b16 %v3582, %v3576
    %v4189 = vpack.c.b16 %v3583, %v3577
    %v4190 = vpack.c.b16 %v3590, %v3584
    %v4191 = vpack.c.b16 %v3591, %v3585
    %v4192 = vpack.c.b16 %v3592, %v3586
    %v4193 = vpack.c.b16 %v3593, %v3587
    %v4194 = vpack.c.b16 %v3594, %v3588
    %v4195 = vpack.c.b16 %v3595, %v3589
    %v4196 = vpack.c.b16 %v3602, %v3596
    %v4197 = vpack.c.b16 %v3603, %v3597
    %v4198 = vpack.c.b16 %v3604, %v3598
    %v4199 = vpack.c.b16 %v3605, %v3599
    %v4200 = vpack.c.b16 %v3606, %v3600
    %v4201 = vpack.c.b16 %v3607, %v3601
    %v4202 = vpack.c.b16 %v3614, %v3608
    %v4203 = vpack.c.b16 %v3615, %v3609
    %v4204 = vpack.c.b16 %v3616, %v3610
    %v4205 = vpack.c.b16 %v3617, %v3611
    %v4206 = vpack.c.b16 %v3618, %v3612
    %v4207 = vpack.c.b16 %v3619, %v3613
    %v4208 = vpack.c.b16 %v3626, %v3620
    %v4209 = vpack.c.b16 %v3627, %v3621
    %v4210 = vpack.c.b16 %v3628, %v3622
    %v4211 = vpack.c.b16 %v3629, %v3623
    %v4212 = vpack.c.b16 %v3630, %v3624
    %v4213 = vpack.c.b16 %v3631, %v3625
    %v4214 = vpack.c.b16 %v3638, %v3632
    %v4215 = vpack.c.b16 %v3639, %v3633
    %v4216 = vpack.c.b16 %v3640, %v3634
    %v4217 = vpack.c.b16 %v3641, %v3635
    %v4218 = vpack.c.b16 %v3642, %v3636
    %v4219 = vpack.c.b16 %v3643, %v3637
    %v4220 = vpack.c.b16 %v3650, %v3644
    %v4221 = vpack.c.b16 %v3651, %v3645
    %v4222 = vpack.c.b16 %v3652, %v3646
    %v4223 = vpack.c.b16 %v3653, %v3647
    %v4224 = vpack.c.b16 %v3654, %v3648
    %v4225 = vpack.c.b16 %v3655, %v3649
    %v4226 = vpack.c.b16 %v3662, %v3656
    %v4227 = vpack.c.b16 %v3663, %v3657
    %v4228 = vpack.c.b16 %v3664, %v3658
    %v4229 = vpack.c.b16 %v3665, %v3659
    %v4230 = vpack.c.b16 %v3666, %v3660
    %v4231 = vpack.c.b16 %v3667, %v3661
    %v4232 = vpack.c.b16 %v3674, %v3668
    %v4233 = vpack.c.b16 %v3675, %v3669
    %v4234 = vpack.c.b16 %v3676, %v3670
    %v4235 = vpack.c.b16 %v3677, %v3671
    %v4236 = vpack.c.b16 %v3678, %v3672
    %v4237 = vpack.c.b16 %v3679, %v3673
    %v4238 = vpack.c.b16 %v3686, %v3680
    %v4239 = vpack.c.b16 %v3687, %v3681
    %v4240 = vpack.c.b16 %v3688, %v3682
    %v4241 = vpack.c.b16 %v3689, %v3683
    %v4242 = vpack.c.b16 %v3690, %v3684
    %v4243 = vpack.c.b16 %v3691, %v3685
    %v4244 = vpack.c.b16 %v3698, %v3692
    %v4245 = vpack.c.b16 %v3699, %v3693
    %v4246 = vpack.c.b16 %v3700, %v3694
    %v4247 = vpack.c.b16 %v3701, %v3695
    %v4248 = vpack.c.b16 %v3702, %v3696
    %v4249 = vpack.c.b16 %v3703, %v3697
    %v4250 = vpack.c.b16 %v3710, %v3704
    %v4251 = vpack.c.b16 %v3711, %v3705
    %v4252 = vpack.c.b16 %v3712, %v3706
    %v4253 = vpack.c.b16 %v3713, %v3707
    %v4254 = vpack.c.b16 %v3714, %v3708
    %v4255 = vpack.c.b16 %v3715, %v3709
    %v4256 = vpack.c.b16 %v3722, %v3716
    %v4257 = vpack.c.b16 %v3723, %v3717
    %v4258 = vpack.c.b16 %v3724, %v3718
    %v4259 = vpack.c.b16 %v3725, %v3719
    %v4260 = vpack.c.b16 %v3726, %v3720
    %v4261 = vpack.c.b16 %v3727, %v3721
    %v4262 = vpack.c.b16 %v3734, %v3728
    %v4263 = vpack.c.b16 %v3735, %v3729
    %v4264 = vpack.c.b16 %v3736, %v3730
    %v4265 = vpack.c.b16 %v3737, %v3731
    %v4266 = vpack.c.b16 %v3738, %v3732
    %v4267 = vpack.c.b16 %v3739, %v3733
    %4796 = vmatprep.subr.bf16.mxu0 %v3741
    %4797 = vmatpush1.bf16.msra.mxu0 %v3740
    %4798 = vmatprep.subr.bf16.mxu0 %v3747
    %4799 = vmatpush1.bf16.msra.mxu0 %v3746
    %4800 = vmatprep.subr.bf16.mxu0 %v3753
    %4801 = vmatpush1.bf16.msra.mxu0 %v3752
    %4802 = vmatprep.subr.bf16.mxu0 %v3759
    %4803 = vmatpush1.bf16.msra.mxu0 %v3758
    %4804 = vmatprep.subr.bf16.mxu0 %v3765
    %4805 = vmatpush1.bf16.msra.mxu0 %v3764
    %4806 = vmatprep.subr.bf16.mxu0 %v3771
    %4807 = vmatpush1.bf16.msra.mxu0 %v3770
    %4808 = vmatprep.subr.bf16.mxu0 %v3777
    %4809 = vmatpush1.bf16.msra.mxu0 %v3776
    %4810 = vmatprep.subr.bf16.mxu0 %v3783
    %4811 = vmatpush1.bf16.msra.mxu0 %v3782
    %4812 = vmatprep.subr.bf16.mxu0 %v3789
    %4813 = vmatpush1.bf16.msra.mxu0 %v3788
    %4814 = vmatprep.subr.bf16.mxu0 %v3795
    %4815 = vmatpush1.bf16.msra.mxu0 %v3794
    %4816 = vmatprep.subr.bf16.mxu0 %v3801
    %4817 = vmatpush1.bf16.msra.mxu0 %v3800
    %4818 = vmatprep.subr.bf16.mxu0 %v3807
    %4819 = vmatpush1.bf16.msra.mxu0 %v3806
    %4820 = vmatprep.subr.bf16.mxu0 %v3813
    %4821 = vmatpush1.bf16.msra.mxu0 %v3812
    %4822 = vmatprep.subr.bf16.mxu0 %v3819
    %4823 = vmatpush1.bf16.msra.mxu0 %v3818
    %4824 = vmatprep.subr.bf16.mxu0 %v3825
    %4825 = vmatpush1.bf16.msra.mxu0 %v3824
    %4826 = vmatprep.subr.bf16.mxu0 %v3831
    %4827 = vmatpush1.bf16.msra.mxu0 %v3830
    %4828 = vmatprep.mubr.bf16.mxu0 %v1586
    %4829 = vmatmul.mubr.bf16.gmra.mrb[0].mxu0 %v1585
    %v4830 = vpop.f32.mrb[0].mxu0
    %v4831 = vadd.f32 %v2129, %v4830
    %v4832 = vpop.f32.mrb[0].mxu0
    %v4833 = vadd.f32 %v2133, %v4832
    %v4834 = vpop.f32.mrb[0].mxu0
    %v4835 = vadd.f32 %v2129, %v4834
    %v4836 = vpop.f32.mrb[0].mxu0
    %v4837 = vadd.f32 %v2133, %v4836
    %4838 = vdwg.mxu0
    %4839 = vmatprep.subr.bf16.mxu0 %v3837
    %4840 = vmatpush1.bf16.msra.mxu0 %v3836
    %4841 = vmatprep.subr.bf16.mxu0 %v3843
    %4842 = vmatpush1.bf16.msra.mxu0 %v3842
    %4843 = vmatprep.subr.bf16.mxu0 %v3849
    %4844 = vmatpush1.bf16.msra.mxu0 %v3848
    %4845 = vmatprep.subr.bf16.mxu0 %v3855
    %4846 = vmatpush1.bf16.msra.mxu0 %v3854
    %4847 = vmatprep.subr.bf16.mxu0 %v3861
    %4848 = vmatpush1.bf16.msra.mxu0 %v3860
    %4849 = vmatprep.subr.bf16.mxu0 %v3867
    %4850 = vmatpush1.bf16.msra.mxu0 %v3866
    %4851 = vmatprep.subr.bf16.mxu0 %v3873
    %4852 = vmatpush1.bf16.msra.mxu0 %v3872
    %4853 = vmatprep.subr.bf16.mxu0 %v3879
    %4854 = vmatpush1.bf16.msra.mxu0 %v3878
    %4855 = vmatprep.subr.bf16.mxu0 %v3885
    %4856 = vmatpush1.bf16.msra.mxu0 %v3884
    %4857 = vmatprep.subr.bf16.mxu0 %v3891
    %4858 = vmatpush1.bf16.msra.mxu0 %v3890
    %4859 = vmatprep.subr.bf16.mxu0 %v3897
    %4860 = vmatpush1.bf16.msra.mxu0 %v3896
    %4861 = vmatprep.subr.bf16.mxu0 %v3903
    %4862 = vmatpush1.bf16.msra.mxu0 %v3902
    %4863 = vmatprep.subr.bf16.mxu0 %v3909
    %4864 = vmatpush1.bf16.msra.mxu0 %v3908
    %4865 = vmatprep.subr.bf16.mxu0 %v3915
    %4866 = vmatpush1.bf16.msra.mxu0 %v3914
    %4867 = vmatprep.subr.bf16.mxu0 %v3921
    %4868 = vmatpush1.bf16.msra.mxu0 %v3920
    %4869 = vmatprep.subr.bf16.mxu0 %v3927
    %4870 = vmatpush1.bf16.msra.mxu0 %v3926
    %4871 = vmatprep.mubr.bf16.mxu0 %v1588
    %4872 = vmatmul.mubr.bf16.gmra.mrb[0].mxu0 %v1587
    %v4873 = vpop.f32.mrb[0].mxu0
    %v4874 = vadd.f32 %v4831, %v4873
    %v4875 = vpop.f32.mrb[0].mxu0
    %v4876 = vadd.f32 %v4833, %v4875
    %v4877 = vpop.f32.mrb[0].mxu0
    %v4878 = vadd.f32 %v4835, %v4877
    %v4879 = vpop.f32.mrb[0].mxu0
    %v4880 = vadd.f32 %v4837, %v4879
    %4881 = vdwg.mxu0
    %4882 = vmatprep.subr.bf16.mxu0 %v3933
    %4883 = vmatpush1.bf16.msra.mxu0 %v3932
    %4884 = vmatprep.subr.bf16.mxu0 %v3939
    %4885 = vmatpush1.bf16.msra.mxu0 %v3938
    %4886 = vmatprep.subr.bf16.mxu0 %v3945
    %4887 = vmatpush1.bf16.msra.mxu0 %v3944
    %4888 = vmatprep.subr.bf16.mxu0 %v3951
    %4889 = vmatpush1.bf16.msra.mxu0 %v3950
    %4890 = vmatprep.subr.bf16.mxu0 %v3957
    %4891 = vmatpush1.bf16.msra.mxu0 %v3956
    %4892 = vmatprep.subr.bf16.mxu0 %v3963
    %4893 = vmatpush1.bf16.msra.mxu0 %v3962
    %4894 = vmatprep.subr.bf16.mxu0 %v3969
    %4895 = vmatpush1.bf16.msra.mxu0 %v3968
    %4896 = vmatprep.subr.bf16.mxu0 %v3975
    %4897 = vmatpush1.bf16.msra.mxu0 %v3974
    %4898 = vmatprep.subr.bf16.mxu0 %v3981
    %4899 = vmatpush1.bf16.msra.mxu0 %v3980
    %4900 = vmatprep.subr.bf16.mxu0 %v3987
    %4901 = vmatpush1.bf16.msra.mxu0 %v3986
    %4902 = vmatprep.subr.bf16.mxu0 %v3993
    %4903 = vmatpush1.bf16.msra.mxu0 %v3992
    %4904 = vmatprep.subr.bf16.mxu0 %v3999
    %4905 = vmatpush1.bf16.msra.mxu0 %v3998
    %4906 = vmatprep.subr.bf16.mxu0 %v4005
    %4907 = vmatpush1.bf16.msra.mxu0 %v4004
    %4908 = vmatprep.subr.bf16.mxu0 %v4011
    %4909 = vmatpush1.bf16.msra.mxu0 %v4010
    %4910 = vmatprep.subr.bf16.mxu0 %v4017
    %4911 = vmatpush1.bf16.msra.mxu0 %v4016
    %4912 = vmatprep.subr.bf16.mxu0 %v4023
    %4913 = vmatpush1.bf16.msra.mxu0 %v4022
    %4914 = vmatprep.mubr.bf16.mxu0 %v1590
    %4915 = vmatmul.mubr.bf16.gmra.mrb[0].mxu0 %v1589
    %v4916 = vpop.f32.mrb[0].mxu0
    %v4917 = vadd.f32 %v4874, %v4916
    %v4918 = vpop.f32.mrb[0].mxu0
    %v4919 = vadd.f32 %v4876, %v4918
    %v4920 = vpop.f32.mrb[0].mxu0
    %v4921 = vadd.f32 %v4878, %v4920
    %v4922 = vpop.f32.mrb[0].mxu0
    %v4923 = vadd.f32 %v4880, %v4922
    %4924 = vdwg.mxu0
    %4925 = vmatprep.subr.bf16.mxu0 %v4029
    %4926 = vmatpush1.bf16.msra.mxu0 %v4028
    %4927 = vmatprep.subr.bf16.mxu0 %v4035
    %4928 = vmatpush1.bf16.msra.mxu0 %v4034
    %4929 = vmatprep.subr.bf16.mxu0 %v4041
    %4930 = vmatpush1.bf16.msra.mxu0 %v4040
    %4931 = vmatprep.subr.bf16.mxu0 %v4047
    %4932 = vmatpush1.bf16.msra.mxu0 %v4046
    %4933 = vmatprep.subr.bf16.mxu0 %v4053
    %4934 = vmatpush1.bf16.msra.mxu0 %v4052
    %4935 = vmatprep.subr.bf16.mxu0 %v4059
    %4936 = vmatpush1.bf16.msra.mxu0 %v4058
    %4937 = vmatprep.subr.bf16.mxu0 %v4065
    %4938 = vmatpush1.bf16.msra.mxu0 %v4064
    %4939 = vmatprep.subr.bf16.mxu0 %v4071
    %4940 = vmatpush1.bf16.msra.mxu0 %v4070
    %4941 = vmatprep.subr.bf16.mxu0 %v4077
    %4942 = vmatpush1.bf16.msra.mxu0 %v4076
    %4943 = vmatprep.subr.bf16.mxu0 %v4083
    %4944 = vmatpush1.bf16.msra.mxu0 %v4082
    %4945 = vmatprep.subr.bf16.mxu0 %v4089
    %4946 = vmatpush1.bf16.msra.mxu0 %v4088
    %4947 = vmatprep.subr.bf16.mxu0 %v4095
    %4948 = vmatpush1.bf16.msra.mxu0 %v4094
    %4949 = vmatprep.subr.bf16.mxu0 %v4101
    %4950 = vmatpush1.bf16.msra.mxu0 %v4100
    %4951 = vmatprep.subr.bf16.mxu0 %v4107
    %4952 = vmatpush1.bf16.msra.mxu0 %v4106
    %4953 = vmatprep.subr.bf16.mxu0 %v4113
    %4954 = vmatpush1.bf16.msra.mxu0 %v4112
    %4955 = vmatprep.subr.bf16.mxu0 %v4119
    %4956 = vmatpush1.bf16.msra.mxu0 %v4118
    %4957 = vmatprep.mubr.bf16.mxu0 %v1592
    %4958 = vmatmul.mubr.bf16.gmra.mrb[0].mxu0 %v1591
    %v4959 = vpop.f32.mrb[0].mxu0
    %v4960 = vadd.f32 %v4917, %v4959
    %v4961 = vpop.f32.mrb[0].mxu0
    %v4962 = vadd.f32 %v4919, %v4961
    %v4963 = vpop.f32.mrb[0].mxu0
    %v4964 = vadd.f32 %v4921, %v4963
    %v4965 = vpop.f32.mrb[0].mxu0
    %v4966 = vadd.f32 %v4923, %v4965
    %4967 = vdwg.mxu0
    %4968 = vmatprep.subr.bf16.mxu0 %v4125
    %4969 = vmatpush1.bf16.msra.mxu0 %v4124
    %4970 = vmatprep.subr.bf16.mxu0 %v4131
    %4971 = vmatpush1.bf16.msra.mxu0 %v4130
    %4972 = vmatprep.subr.bf16.mxu0 %v4137
    %4973 = vmatpush1.bf16.msra.mxu0 %v4136
    %4974 = vmatprep.subr.bf16.mxu0 %v4143
    %4975 = vmatpush1.bf16.msra.mxu0 %v4142
    %4976 = vmatprep.subr.bf16.mxu0 %v4149
    %4977 = vmatpush1.bf16.msra.mxu0 %v4148
    %4978 = vmatprep.subr.bf16.mxu0 %v4155
    %4979 = vmatpush1.bf16.msra.mxu0 %v4154
    %4980 = vmatprep.subr.bf16.mxu0 %v4161
    %4981 = vmatpush1.bf16.msra.mxu0 %v4160
    %4982 = vmatprep.subr.bf16.mxu0 %v4167
    %4983 = vmatpush1.bf16.msra.mxu0 %v4166
    %4984 = vmatprep.subr.bf16.mxu0 %v4173
    %4985 = vmatpush1.bf16.msra.mxu0 %v4172
    %4986 = vmatprep.subr.bf16.mxu0 %v4179
    %4987 = vmatpush1.bf16.msra.mxu0 %v4178
    %4988 = vmatprep.subr.bf16.mxu0 %v4185
    %4989 = vmatpush1.bf16.msra.mxu0 %v4184
    %4990 = vmatprep.subr.bf16.mxu0 %v4191
    %4991 = vmatpush1.bf16.msra.mxu0 %v4190
    %4992 = vmatprep.subr.bf16.mxu0 %v4197
    %4993 = vmatpush1.bf16.msra.mxu0 %v4196
    %4994 = vmatprep.subr.bf16.mxu0 %v4203
    %4995 = vmatpush1.bf16.msra.mxu0 %v4202
    %4996 = vmatprep.subr.bf16.mxu0 %v4209
    %4997 = vmatpush1.bf16.msra.mxu0 %v4208
    %4998 = vmatprep.subr.bf16.mxu0 %v4215
    %4999 = vmatpush1.bf16.msra.mxu0 %v4214
    %5000 = vmatprep.mubr.bf16.mxu0 %v1594
    %5001 = vmatmul.mubr.bf16.gmra.mrb[0].mxu0 %v1593
    %v5002 = vpop.f32.mrb[0].mxu0
    %v5003 = vadd.f32 %v4960, %v5002
    %v5004 = vpop.f32.mrb[0].mxu0
    %v5005 = vadd.f32 %v4962, %v5004
    %v5006 = vpop.f32.mrb[0].mxu0
    %v5007 = vadd.f32 %v4964, %v5006
    %v5008 = vpop.f32.mrb[0].mxu0
    %v5009 = vadd.f32 %v4966, %v5008
    %5010 = vdwg.mxu0
    %5011 = vmatprep.subr.bf16.mxu0 %v4221
    %5012 = vmatpush1.bf16.msra.mxu0 %v4220
    %5013 = vmatprep.subr.bf16.mxu0 %v4227
    %5014 = vmatpush1.bf16.msra.mxu0 %v4226
    %5015 = vmatprep.subr.bf16.mxu0 %v4233
    %5016 = vmatpush1.bf16.msra.mxu0 %v4232
    %5017 = vmatprep.subr.bf16.mxu0 %v4239
    %5018 = vmatpush1.bf16.msra.mxu0 %v4238
    %5019 = vmatprep.subr.bf16.mxu0 %v4245
    %5020 = vmatpush1.bf16.msra.mxu0 %v4244
    %5021 = vmatprep.subr.bf16.mxu0 %v4251
    %5022 = vmatpush1.bf16.msra.mxu0 %v4250
    %5023 = vmatprep.subr.bf16.mxu0 %v4257
    %5024 = vmatpush1.bf16.msra.mxu0 %v4256
    %5025 = vmatprep.subr.bf16.mxu0 %v4263
    %5026 = vmatpush1.bf16.msra.mxu0 %v4262
    %5027 = vmatprep.subr.bf16.mxu0 0
    %5028 = vmatpush1.bf16.msra.mxu0 0
    %5029 = vmatprep.subr.bf16.mxu0 0
    %5030 = vmatpush1.bf16.msra.mxu0 0
    %5031 = vmatprep.subr.bf16.mxu0 0
    %5032 = vmatpush1.bf16.msra.mxu0 0
    %5033 = vmatprep.subr.bf16.mxu0 0
    %5034 = vmatpush1.bf16.msra.mxu0 0
    %5035 = vmatprep.subr.bf16.mxu0 0
    %5036 = vmatpush1.bf16.msra.mxu0 0
    %5037 = vmatprep.subr.bf16.mxu0 0
    %5038 = vmatpush1.bf16.msra.mxu0 0
    %5039 = vmatprep.subr.bf16.mxu0 0
    %5040 = vmatpush1.bf16.msra.mxu0 0
    %5041 = vmatprep.subr.bf16.mxu0 0
    %5042 = vmatpush1.bf16.msra.mxu0 0
    %5043 = vmatprep.mubr.bf16.mxu0 0
    %5044 = vmatmul.mubr.bf16.gmra.mrb[0].mxu0 %v1595
    %v5045 = vpop.f32.mrb[0].mxu0
    %v5046 = vadd.f32 %v5003, %v5045
    %v5047 = vpop.f32.mrb[0].mxu0
    %v5048 = vadd.f32 %v5005, %v5047
    %v5049 = vpop.f32.mrb[0].mxu0
    %v5050 = vadd.f32 %v5007, %v5049
    %v5051 = vpop.f32.mrb[0].mxu0
    %v5052 = vadd.f32 %v5009, %v5051
    %5053 = vdwg.mxu0
    %5054 = vmatprep.subr.bf16.mxu0 %v3743
    %5055 = vmatpush1.bf16.msra.mxu0 %v3742
    %5056 = vmatprep.subr.bf16.mxu0 %v3749
    %5057 = vmatpush1.bf16.msra.mxu0 %v3748
    %5058 = vmatprep.subr.bf16.mxu0 %v3755
    %5059 = vmatpush1.bf16.msra.mxu0 %v3754
    %5060 = vmatprep.subr.bf16.mxu0 %v3761
    %5061 = vmatpush1.bf16.msra.mxu0 %v3760
    %5062 = vmatprep.subr.bf16.mxu0 %v3767
    %5063 = vmatpush1.bf16.msra.mxu0 %v3766
    %5064 = vmatprep.subr.bf16.mxu0 %v3773
    %5065 = vmatpush1.bf16.msra.mxu0 %v3772
    %5066 = vmatprep.subr.bf16.mxu0 %v3779
    %5067 = vmatpush1.bf16.msra.mxu0 %v3778
    %5068 = vmatprep.subr.bf16.mxu0 %v3785
    %5069 = vmatpush1.bf16.msra.mxu0 %v3784
    %5070 = vmatprep.subr.bf16.mxu0 %v3791
    %5071 = vmatpush1.bf16.msra.mxu0 %v3790
    %5072 = vmatprep.subr.bf16.mxu0 %v3797
    %5073 = vmatpush1.bf16.msra.mxu0 %v3796
    %5074 = vmatprep.subr.bf16.mxu0 %v3803
    %5075 = vmatpush1.bf16.msra.mxu0 %v3802
    %5076 = vmatprep.subr.bf16.mxu0 %v3809
    %5077 = vmatpush1.bf16.msra.mxu0 %v3808
    %5078 = vmatprep.subr.bf16.mxu0 %v3815
    %5079 = vmatpush1.bf16.msra.mxu0 %v3814
    %5080 = vmatprep.subr.bf16.mxu0 %v3821
    %5081 = vmatpush1.bf16.msra.mxu0 %v3820
    %5082 = vmatprep.subr.bf16.mxu0 %v3827
    %5083 = vmatpush1.bf16.msra.mxu0 %v3826
    %5084 = vmatprep.subr.bf16.mxu0 %v3833
    %5085 = vmatpush1.bf16.msra.mxu0 %v3832
    %5086 = vmatprep.mubr.bf16.mxu0 %v1586
    %5087 = vmatmul.mubr.bf16.gmra.mrb[0].mxu0 %v1585
    %v5088 = vpop.f32.mrb[0].mxu0
    %v5089 = vadd.f32 %v2137, %v5088
    %v5090 = vpop.f32.mrb[0].mxu0
    %v5091 = vadd.f32 %v2141, %v5090
    %v5092 = vpop.f32.mrb[0].mxu0
    %v5093 = vadd.f32 %v2137, %v5092
    %v5094 = vpop.f32.mrb[0].mxu0
    %v5095 = vadd.f32 %v2141, %v5094
    %5096 = vdwg.mxu0
    %5097 = vmatprep.subr.bf16.mxu0 %v3839
    %5098 = vmatpush1.bf16.msra.mxu0 %v3838
    %5099 = vmatprep.subr.bf16.mxu0 %v3845
    %5100 = vmatpush1.bf16.msra.mxu0 %v3844
    %5101 = vmatprep.subr.bf16.mxu0 %v3851
    %5102 = vmatpush1.bf16.msra.mxu0 %v3850
    %5103 = vmatprep.subr.bf16.mxu0 %v3857
    %5104 = vmatpush1.bf16.msra.mxu0 %v3856
    %5105 = vmatprep.subr.bf16.mxu0 %v3863
    %5106 = vmatpush1.bf16.msra.mxu0 %v3862
    %5107 = vmatprep.subr.bf16.mxu0 %v3869
    %5108 = vmatpush1.bf16.msra.mxu0 %v3868
    %5109 = vmatprep.subr.bf16.mxu0 %v3875
    %5110 = vmatpush1.bf16.msra.mxu0 %v3874
    %5111 = vmatprep.subr.bf16.mxu0 %v3881
    %5112 = vmatpush1.bf16.msra.mxu0 %v3880
    %5113 = vmatprep.subr.bf16.mxu0 %v3887
    %5114 = vmatpush1.bf16.msra.mxu0 %v3886
    %5115 = vmatprep.subr.bf16.mxu0 %v3893
    %5116 = vmatpush1.bf16.msra.mxu0 %v3892
    %5117 = vmatprep.subr.bf16.mxu0 %v3899
    %5118 = vmatpush1.bf16.msra.mxu0 %v3898
    %5119 = vmatprep.subr.bf16.mxu0 %v3905
    %5120 = vmatpush1.bf16.msra.mxu0 %v3904
    %5121 = vmatprep.subr.bf16.mxu0 %v3911
    %5122 = vmatpush1.bf16.msra.mxu0 %v3910
    %5123 = vmatprep.subr.bf16.mxu0 %v3917
    %5124 = vmatpush1.bf16.msra.mxu0 %v3916
    %5125 = vmatprep.subr.bf16.mxu0 %v3923
    %5126 = vmatpush1.bf16.msra.mxu0 %v3922
    %5127 = vmatprep.subr.bf16.mxu0 %v3929
    %5128 = vmatpush1.bf16.msra.mxu0 %v3928
    %5129 = vmatprep.mubr.bf16.mxu0 %v1588
    %5130 = vmatmul.mubr.bf16.gmra.mrb[0].mxu0 %v1587
    %v5131 = vpop.f32.mrb[0].mxu0
    %v5132 = vadd.f32 %v5089, %v5131
    %v5133 = vpop.f32.mrb[0].mxu0
    %v5134 = vadd.f32 %v5091, %v5133
    %v5135 = vpop.f32.mrb[0].mxu0
    %v5136 = vadd.f32 %v5093, %v5135
    %v5137 = vpop.f32.mrb[0].mxu0
    %v5138 = vadd.f32 %v5095, %v5137
    %5139 = vdwg.mxu0
    %5140 = vmatprep.subr.bf16.mxu0 %v3935
    %5141 = vmatpush1.bf16.msra.mxu0 %v3934
    %5142 = vmatprep.subr.bf16.mxu0 %v3941
    %5143 = vmatpush1.bf16.msra.mxu0 %v3940
    %5144 = vmatprep.subr.bf16.mxu0 %v3947
    %5145 = vmatpush1.bf16.msra.mxu0 %v3946
    %5146 = vmatprep.subr.bf16.mxu0 %v3953
    %5147 = vmatpush1.bf16.msra.mxu0 %v3952
    %5148 = vmatprep.subr.bf16.mxu0 %v3959
    %5149 = vmatpush1.bf16.msra.mxu0 %v3958
    %5150 = vmatprep.subr.bf16.mxu0 %v3965
    %5151 = vmatpush1.bf16.msra.mxu0 %v3964
    %5152 = vmatprep.subr.bf16.mxu0 %v3971
    %5153 = vmatpush1.bf16.msra.mxu0 %v3970
    %5154 = vmatprep.subr.bf16.mxu0 %v3977
    %5155 = vmatpush1.bf16.msra.mxu0 %v3976
    %5156 = vmatprep.subr.bf16.mxu0 %v3983
    %5157 = vmatpush1.bf16.msra.mxu0 %v3982
    %5158 = vmatprep.subr.bf16.mxu0 %v3989
    %5159 = vmatpush1.bf16.msra.mxu0 %v3988
    %5160 = vmatprep.subr.bf16.mxu0 %v3995
    %5161 = vmatpush1.bf16.msra.mxu0 %v3994
    %5162 = vmatprep.subr.bf16.mxu0 %v4001
    %5163 = vmatpush1.bf16.msra.mxu0 %v4000
    %5164 = vmatprep.subr.bf16.mxu0 %v4007
    %5165 = vmatpush1.bf16.msra.mxu0 %v4006
    %5166 = vmatprep.subr.bf16.mxu0 %v4013
    %5167 = vmatpush1.bf16.msra.mxu0 %v4012
    %5168 = vmatprep.subr.bf16.mxu0 %v4019
    %5169 = vmatpush1.bf16.msra.mxu0 %v4018
    %5170 = vmatprep.subr.bf16.mxu0 %v4025
    %5171 = vmatpush1.bf16.msra.mxu0 %v4024
    %5172 = vmatprep.mubr.bf16.mxu0 %v1590
    %5173 = vmatmul.mubr.bf16.gmra.mrb[0].mxu0 %v1589
    %v5174 = vpop.f32.mrb[0].mxu0
    %v5175 = vadd.f32 %v5132, %v5174
    %v5176 = vpop.f32.mrb[0].mxu0
    %v5177 = vadd.f32 %v5134, %v5176
    %v5178 = vpop.f32.mrb[0].mxu0
    %v5179 = vadd.f32 %v5136, %v5178
    %v5180 = vpop.f32.mrb[0].mxu0
    %v5181 = vadd.f32 %v5138, %v5180
    %5182 = vdwg.mxu0
    %5183 = vmatprep.subr.bf16.mxu0 %v4031
    %5184 = vmatpush1.bf16.msra.mxu0 %v4030
    %5185 = vmatprep.subr.bf16.mxu0 %v4037
    %5186 = vmatpush1.bf16.msra.mxu0 %v4036
    %5187 = vmatprep.subr.bf16.mxu0 %v4043
    %5188 = vmatpush1.bf16.msra.mxu0 %v4042
    %5189 = vmatprep.subr.bf16.mxu0 %v4049
    %5190 = vmatpush1.bf16.msra.mxu0 %v4048
    %5191 = vmatprep.subr.bf16.mxu0 %v4055
    %5192 = vmatpush1.bf16.msra.mxu0 %v4054
    %5193 = vmatprep.subr.bf16.mxu0 %v4061
    %5194 = vmatpush1.bf16.msra.mxu0 %v4060
    %5195 = vmatprep.subr.bf16.mxu0 %v4067
    %5196 = vmatpush1.bf16.msra.mxu0 %v4066
    %5197 = vmatprep.subr.bf16.mxu0 %v4073
    %5198 = vmatpush1.bf16.msra.mxu0 %v4072
    %5199 = vmatprep.subr.bf16.mxu0 %v4079
    %5200 = vmatpush1.bf16.msra.mxu0 %v4078
    %5201 = vmatprep.subr.bf16.mxu0 %v4085
    %5202 = vmatpush1.bf16.msra.mxu0 %v4084
    %5203 = vmatprep.subr.bf16.mxu0 %v4091
    %5204 = vmatpush1.bf16.msra.mxu0 %v4090
    %5205 = vmatprep.subr.bf16.mxu0 %v4097
    %5206 = vmatpush1.bf16.msra.mxu0 %v4096
    %5207 = vmatprep.subr.bf16.mxu0 %v4103
    %5208 = vmatpush1.bf16.msra.mxu0 %v4102
    %5209 = vmatprep.subr.bf16.mxu0 %v4109
    %5210 = vmatpush1.bf16.msra.mxu0 %v4108
    %5211 = vmatprep.subr.bf16.mxu0 %v4115
    %5212 = vmatpush1.bf16.msra.mxu0 %v4114
    %5213 = vmatprep.subr.bf16.mxu0 %v4121
    %5214 = vmatpush1.bf16.msra.mxu0 %v4120
    %5215 = vmatprep.mubr.bf16.mxu0 %v1592
    %5216 = vmatmul.mubr.bf16.gmra.mrb[0].mxu0 %v1591
    %v5217 = vpop.f32.mrb[0].mxu0
    %v5218 = vadd.f32 %v5175, %v5217
    %v5219 = vpop.f32.mrb[0].mxu0
    %v5220 = vadd.f32 %v5177, %v5219
    %v5221 = vpop.f32.mrb[0].mxu0
    %v5222 = vadd.f32 %v5179, %v5221
    %v5223 = vpop.f32.mrb[0].mxu0
    %v5224 = vadd.f32 %v5181, %v5223
    %5225 = vdwg.mxu0
    %5226 = vmatprep.subr.bf16.mxu0 %v4127
    %5227 = vmatpush1.bf16.msra.mxu0 %v4126
    %5228 = vmatprep.subr.bf16.mxu0 %v4133
    %5229 = vmatpush1.bf16.msra.mxu0 %v4132
    %5230 = vmatprep.subr.bf16.mxu0 %v4139
    %5231 = vmatpush1.bf16.msra.mxu0 %v4138
    %5232 = vmatprep.subr.bf16.mxu0 %v4145
    %5233 = vmatpush1.bf16.msra.mxu0 %v4144
    %5234 = vmatprep.subr.bf16.mxu0 %v4151
    %5235 = vmatpush1.bf16.msra.mxu0 %v4150
    %5236 = vmatprep.subr.bf16.mxu0 %v4157
    %5237 = vmatpush1.bf16.msra.mxu0 %v4156
    %5238 = vmatprep.subr.bf16.mxu0 %v4163
    %5239 = vmatpush1.bf16.msra.mxu0 %v4162
    %5240 = vmatprep.subr.bf16.mxu0 %v4169
    %5241 = vmatpush1.bf16.msra.mxu0 %v4168
    %5242 = vmatprep.subr.bf16.mxu0 %v4175
    %5243 = vmatpush1.bf16.msra.mxu0 %v4174
    %5244 = vmatprep.subr.bf16.mxu0 %v4181
    %5245 = vmatpush1.bf16.msra.mxu0 %v4180
    %5246 = vmatprep.subr.bf16.mxu0 %v4187
    %5247 = vmatpush1.bf16.msra.mxu0 %v4186
    %5248 = vmatprep.subr.bf16.mxu0 %v4193
    %5249 = vmatpush1.bf16.msra.mxu0 %v4192
    %5250 = vmatprep.subr.bf16.mxu0 %v4199
    %5251 = vmatpush1.bf16.msra.mxu0 %v4198
    %5252 = vmatprep.subr.bf16.mxu0 %v4205
    %5253 = vmatpush1.bf16.msra.mxu0 %v4204
    %5254 = vmatprep.subr.bf16.mxu0 %v4211
    %5255 = vmatpush1.bf16.msra.mxu0 %v4210
    %5256 = vmatprep.subr.bf16.mxu0 %v4217
    %5257 = vmatpush1.bf16.msra.mxu0 %v4216
    %5258 = vmatprep.mubr.bf16.mxu0 %v1594
    %5259 = vmatmul.mubr.bf16.gmra.mrb[0].mxu0 %v1593
    %v5260 = vpop.f32.mrb[0].mxu0
    %v5261 = vadd.f32 %v5218, %v5260
    %v5262 = vpop.f32.mrb[0].mxu0
    %v5263 = vadd.f32 %v5220, %v5262
    %v5264 = vpop.f32.mrb[0].mxu0
    %v5265 = vadd.f32 %v5222, %v5264
    %v5266 = vpop.f32.mrb[0].mxu0
    %v5267 = vadd.f32 %v5224, %v5266
    %5268 = vdwg.mxu0
    %5269 = vmatprep.subr.bf16.mxu0 %v4223
    %5270 = vmatpush1.bf16.msra.mxu0 %v4222
    %5271 = vmatprep.subr.bf16.mxu0 %v4229
    %5272 = vmatpush1.bf16.msra.mxu0 %v4228
    %5273 = vmatprep.subr.bf16.mxu0 %v4235
    %5274 = vmatpush1.bf16.msra.mxu0 %v4234
    %5275 = vmatprep.subr.bf16.mxu0 %v4241
    %5276 = vmatpush1.bf16.msra.mxu0 %v4240
    %5277 = vmatprep.subr.bf16.mxu0 %v4247
    %5278 = vmatpush1.bf16.msra.mxu0 %v4246
    %5279 = vmatprep.subr.bf16.mxu0 %v4253
    %5280 = vmatpush1.bf16.msra.mxu0 %v4252
    %5281 = vmatprep.subr.bf16.mxu0 %v4259
    %5282 = vmatpush1.bf16.msra.mxu0 %v4258
    %5283 = vmatprep.subr.bf16.mxu0 %v4265
    %5284 = vmatpush1.bf16.msra.mxu0 %v4264
    %5285 = vmatprep.subr.bf16.mxu0 0
    %5286 = vmatpush1.bf16.msra.mxu0 0
    %5287 = vmatprep.subr.bf16.mxu0 0
    %5288 = vmatpush1.bf16.msra.mxu0 0
    %5289 = vmatprep.subr.bf16.mxu0 0
    %5290 = vmatpush1.bf16.msra.mxu0 0
    %5291 = vmatprep.subr.bf16.mxu0 0
    %5292 = vmatpush1.bf16.msra.mxu0 0
    %5293 = vmatprep.subr.bf16.mxu0 0
    %5294 = vmatpush1.bf16.msra.mxu0 0
    %5295 = vmatprep.subr.bf16.mxu0 0
    %5296 = vmatpush1.bf16.msra.mxu0 0
    %5297 = vmatprep.subr.bf16.mxu0 0
    %5298 = vmatpush1.bf16.msra.mxu0 0
    %5299 = vmatprep.subr.bf16.mxu0 0
    %5300 = vmatpush1.bf16.msra.mxu0 0
    %5301 = vmatprep.mubr.bf16.mxu0 0
    %5302 = vmatmul.mubr.bf16.gmra.mrb[0].mxu0 %v1595
    %v5303 = vpop.f32.mrb[0].mxu0
    %v5304 = vadd.f32 %v5261, %v5303
    %v5305 = vpop.f32.mrb[0].mxu0
    %v5306 = vadd.f32 %v5263, %v5305
    %v5307 = vpop.f32.mrb[0].mxu0
    %v5308 = vadd.f32 %v5265, %v5307
    %v5309 = vpop.f32.mrb[0].mxu0
    %v5310 = vadd.f32 %v5267, %v5309
    %5311 = vdwg.mxu0
    %5312 = vmatprep.subr.bf16.mxu0 %v3745
    %5313 = vmatpush1.bf16.msra.mxu0 %v3744
    %5314 = vmatprep.subr.bf16.mxu0 %v3751
    %5315 = vmatpush1.bf16.msra.mxu0 %v3750
    %5316 = vmatprep.subr.bf16.mxu0 %v3757
    %5317 = vmatpush1.bf16.msra.mxu0 %v3756
    %5318 = vmatprep.subr.bf16.mxu0 %v3763
    %5319 = vmatpush1.bf16.msra.mxu0 %v3762
    %5320 = vmatprep.subr.bf16.mxu0 %v3769
    %5321 = vmatpush1.bf16.msra.mxu0 %v3768
    %5322 = vmatprep.subr.bf16.mxu0 %v3775
    %5323 = vmatpush1.bf16.msra.mxu0 %v3774
    %5324 = vmatprep.subr.bf16.mxu0 %v3781
    %5325 = vmatpush1.bf16.msra.mxu0 %v3780
    %5326 = vmatprep.subr.bf16.mxu0 %v3787
    %5327 = vmatpush1.bf16.msra.mxu0 %v3786
    %5328 = vmatprep.subr.bf16.mxu0 %v3793
    %5329 = vmatpush1.bf16.msra.mxu0 %v3792
    %5330 = vmatprep.subr.bf16.mxu0 %v3799
    %5331 = vmatpush1.bf16.msra.mxu0 %v3798
    %5332 = vmatprep.subr.bf16.mxu0 %v3805
    %5333 = vmatpush1.bf16.msra.mxu0 %v3804
    %5334 = vmatprep.subr.bf16.mxu0 %v3811
    %5335 = vmatpush1.bf16.msra.mxu0 %v3810
    %5336 = vmatprep.subr.bf16.mxu0 %v3817
    %5337 = vmatpush1.bf16.msra.mxu0 %v3816
    %5338 = vmatprep.subr.bf16.mxu0 %v3823
    %5339 = vmatpush1.bf16.msra.mxu0 %v3822
    %5340 = vmatprep.subr.bf16.mxu0 %v3829
    %5341 = vmatpush1.bf16.msra.mxu0 %v3828
    %5342 = vmatprep.subr.bf16.mxu0 %v3835
    %5343 = vmatpush1.bf16.msra.mxu0 %v3834
    %5344 = vmatprep.mubr.bf16.mxu0 %v1586
    %5345 = vmatmul.mubr.bf16.gmra.mrb[0].mxu0 %v1585
    %v5346 = vpop.f32.mrb[0].mxu0
    %v5347 = vadd.f32 %v2145, %v5346
    %v5348 = vpop.f32.mrb[0].mxu0
    %v5349 = vadd.f32 %v2149, %v5348
    %v5350 = vpop.f32.mrb[0].mxu0
    %v5351 = vadd.f32 %v2145, %v5350
    %v5352 = vpop.f32.mrb[0].mxu0
    %v5353 = vadd.f32 %v2149, %v5352
    %5354 = vdwg.mxu0
    %5355 = vmatprep.subr.bf16.mxu0 %v3841
    %5356 = vmatpush1.bf16.msra.mxu0 %v3840
    %5357 = vmatprep.subr.bf16.mxu0 %v3847
    %5358 = vmatpush1.bf16.msra.mxu0 %v3846
    %5359 = vmatprep.subr.bf16.mxu0 %v3853
    %5360 = vmatpush1.bf16.msra.mxu0 %v3852
    %5361 = vmatprep.subr.bf16.mxu0 %v3859
    %5362 = vmatpush1.bf16.msra.mxu0 %v3858
    %5363 = vmatprep.subr.bf16.mxu0 %v3865
    %5364 = vmatpush1.bf16.msra.mxu0 %v3864
    %5365 = vmatprep.subr.bf16.mxu0 %v3871
    %5366 = vmatpush1.bf16.msra.mxu0 %v3870
    %5367 = vmatprep.subr.bf16.mxu0 %v3877
    %5368 = vmatpush1.bf16.msra.mxu0 %v3876
    %5369 = vmatprep.subr.bf16.mxu0 %v3883
    %5370 = vmatpush1.bf16.msra.mxu0 %v3882
    %5371 = vmatprep.subr.bf16.mxu0 %v3889
    %5372 = vmatpush1.bf16.msra.mxu0 %v3888
    %5373 = vmatprep.subr.bf16.mxu0 %v3895
    %5374 = vmatpush1.bf16.msra.mxu0 %v3894
    %5375 = vmatprep.subr.bf16.mxu0 %v3901
    %5376 = vmatpush1.bf16.msra.mxu0 %v3900
    %5377 = vmatprep.subr.bf16.mxu0 %v3907
    %5378 = vmatpush1.bf16.msra.mxu0 %v3906
    %5379 = vmatprep.subr.bf16.mxu0 %v3913
    %5380 = vmatpush1.bf16.msra.mxu0 %v3912
    %5381 = vmatprep.subr.bf16.mxu0 %v3919
    %5382 = vmatpush1.bf16.msra.mxu0 %v3918
    %5383 = vmatprep.subr.bf16.mxu0 %v3925
    %5384 = vmatpush1.bf16.msra.mxu0 %v3924
    %5385 = vmatprep.subr.bf16.mxu0 %v3931
    %5386 = vmatpush1.bf16.msra.mxu0 %v3930
    %5387 = vmatprep.mubr.bf16.mxu0 %v1588
    %5388 = vmatmul.mubr.bf16.gmra.mrb[0].mxu0 %v1587
    %v5389 = vpop.f32.mrb[0].mxu0
    %v5390 = vadd.f32 %v5347, %v5389
    %v5391 = vpop.f32.mrb[0].mxu0
    %v5392 = vadd.f32 %v5349, %v5391
    %v5393 = vpop.f32.mrb[0].mxu0
    %v5394 = vadd.f32 %v5351, %v5393
    %v5395 = vpop.f32.mrb[0].mxu0
    %v5396 = vadd.f32 %v5353, %v5395
    %5397 = vdwg.mxu0
    %5398 = vmatprep.subr.bf16.mxu0 %v3937
    %5399 = vmatpush1.bf16.msra.mxu0 %v3936
    %5400 = vmatprep.subr.bf16.mxu0 %v3943
    %5401 = vmatpush1.bf16.msra.mxu0 %v3942
    %5402 = vmatprep.subr.bf16.mxu0 %v3949
    %5403 = vmatpush1.bf16.msra.mxu0 %v3948
    %5404 = vmatprep.subr.bf16.mxu0 %v3955
    %5405 = vmatpush1.bf16.msra.mxu0 %v3954
    %5406 = vmatprep.subr.bf16.mxu0 %v3961
    %5407 = vmatpush1.bf16.msra.mxu0 %v3960
    %5408 = vmatprep.subr.bf16.mxu0 %v3967
    %5409 = vmatpush1.bf16.msra.mxu0 %v3966
    %5410 = vmatprep.subr.bf16.mxu0 %v3973
    %5411 = vmatpush1.bf16.msra.mxu0 %v3972
    %5412 = vmatprep.subr.bf16.mxu0 %v3979
    %5413 = vmatpush1.bf16.msra.mxu0 %v3978
    %5414 = vmatprep.subr.bf16.mxu0 %v3985
    %5415 = vmatpush1.bf16.msra.mxu0 %v3984
    %5416 = vmatprep.subr.bf16.mxu0 %v3991
    %5417 = vmatpush1.bf16.msra.mxu0 %v3990
    %5418 = vmatprep.subr.bf16.mxu0 %v3997
    %5419 = vmatpush1.bf16.msra.mxu0 %v3996
    %5420 = vmatprep.subr.bf16.mxu0 %v4003
    %5421 = vmatpush1.bf16.msra.mxu0 %v4002
    %5422 = vmatprep.subr.bf16.mxu0 %v4009
    %5423 = vmatpush1.bf16.msra.mxu0 %v4008
    %5424 = vmatprep.subr.bf16.mxu0 %v4015
    %5425 = vmatpush1.bf16.msra.mxu0 %v4014
    %5426 = vmatprep.subr.bf16.mxu0 %v4021
    %5427 = vmatpush1.bf16.msra.mxu0 %v4020
    %5428 = vmatprep.subr.bf16.mxu0 %v4027
    %5429 = vmatpush1.bf16.msra.mxu0 %v4026
    %5430 = vmatprep.mubr.bf16.mxu0 %v1590
    %5431 = vmatmul.mubr.bf16.gmra.mrb[0].mxu0 %v1589
    %v5432 = vpop.f32.mrb[0].mxu0
    %v5433 = vadd.f32 %v5390, %v5432
    %v5434 = vpop.f32.mrb[0].mxu0
    %v5435 = vadd.f32 %v5392, %v5434
    %v5436 = vpop.f32.mrb[0].mxu0
    %v5437 = vadd.f32 %v5394, %v5436
    %v5438 = vpop.f32.mrb[0].mxu0
    %v5439 = vadd.f32 %v5396, %v5438
    %5440 = vdwg.mxu0
    %5441 = vmatprep.subr.bf16.mxu0 %v4033
    %5442 = vmatpush1.bf16.msra.mxu0 %v4032
    %5443 = vmatprep.subr.bf16.mxu0 %v4039
    %5444 = vmatpush1.bf16.msra.mxu0 %v4038
    %5445 = vmatprep.subr.bf16.mxu0 %v4045
    %5446 = vmatpush1.bf16.msra.mxu0 %v4044
    %5447 = vmatprep.subr.bf16.mxu0 %v4051
    %5448 = vmatpush1.bf16.msra.mxu0 %v4050
    %5449 = vmatprep.subr.bf16.mxu0 %v4057
    %5450 = vmatpush1.bf16.msra.mxu0 %v4056
    %5451 = vmatprep.subr.bf16.mxu0 %v4063
    %5452 = vmatpush1.bf16.msra.mxu0 %v4062
    %5453 = vmatprep.subr.bf16.mxu0 %v4069
    %5454 = vmatpush1.bf16.msra.mxu0 %v4068
    %5455 = vmatprep.subr.bf16.mxu0 %v4075
    %5456 = vmatpush1.bf16.msra.mxu0 %v4074
    %5457 = vmatprep.subr.bf16.mxu0 %v4081
    %5458 = vmatpush1.bf16.msra.mxu0 %v4080
    %5459 = vmatprep.subr.bf16.mxu0 %v4087
    %5460 = vmatpush1.bf16.msra.mxu0 %v4086
    %5461 = vmatprep.subr.bf16.mxu0 %v4093
    %5462 = vmatpush1.bf16.msra.mxu0 %v4092
    %5463 = vmatprep.subr.bf16.mxu0 %v4099
    %5464 = vmatpush1.bf16.msra.mxu0 %v4098
    %5465 = vmatprep.subr.bf16.mxu0 %v4105
    %5466 = vmatpush1.bf16.msra.mxu0 %v4104
    %5467 = vmatprep.subr.bf16.mxu0 %v4111
    %5468 = vmatpush1.bf16.msra.mxu0 %v4110
    %5469 = vmatprep.subr.bf16.mxu0 %v4117
    %5470 = vmatpush1.bf16.msra.mxu0 %v4116
    %5471 = vmatprep.subr.bf16.mxu0 %v4123
    %5472 = vmatpush1.bf16.msra.mxu0 %v4122
    %5473 = vmatprep.mubr.bf16.mxu0 %v1592
    %5474 = vmatmul.mubr.bf16.gmra.mrb[0].mxu0 %v1591
    %v5475 = vpop.f32.mrb[0].mxu0
    %v5476 = vadd.f32 %v5433, %v5475
    %v5477 = vpop.f32.mrb[0].mxu0
    %v5478 = vadd.f32 %v5435, %v5477
    %v5479 = vpop.f32.mrb[0].mxu0
    %v5480 = vadd.f32 %v5437, %v5479
    %v5481 = vpop.f32.mrb[0].mxu0
    %v5482 = vadd.f32 %v5439, %v5481
    %5483 = vdwg.mxu0
    %5484 = vmatprep.subr.bf16.mxu0 %v4129
    %5485 = vmatpush1.bf16.msra.mxu0 %v4128
    %5486 = vmatprep.subr.bf16.mxu0 %v4135
    %5487 = vmatpush1.bf16.msra.mxu0 %v4134
    %5488 = vmatprep.subr.bf16.mxu0 %v4141
    %5489 = vmatpush1.bf16.msra.mxu0 %v4140
    %5490 = vmatprep.subr.bf16.mxu0 %v4147
    %5491 = vmatpush1.bf16.msra.mxu0 %v4146
    %5492 = vmatprep.subr.bf16.mxu0 %v4153
    %5493 = vmatpush1.bf16.msra.mxu0 %v4152
    %5494 = vmatprep.subr.bf16.mxu0 %v4159
    %5495 = vmatpush1.bf16.msra.mxu0 %v4158
    %5496 = vmatprep.subr.bf16.mxu0 %v4165
    %5497 = vmatpush1.bf16.msra.mxu0 %v4164
    %5498 = vmatprep.subr.bf16.mxu0 %v4171
    %5499 = vmatpush1.bf16.msra.mxu0 %v4170
    %5500 = vmatprep.subr.bf16.mxu0 %v4177
    %5501 = vmatpush1.bf16.msra.mxu0 %v4176
    %5502 = vmatprep.subr.bf16.mxu0 %v4183
    %5503 = vmatpush1.bf16.msra.mxu0 %v4182
    %5504 = vmatprep.subr.bf16.mxu0 %v4189
    %5505 = vmatpush1.bf16.msra.mxu0 %v4188
    %5506 = vmatprep.subr.bf16.mxu0 %v4195
    %5507 = vmatpush1.bf16.msra.mxu0 %v4194
    %5508 = vmatprep.subr.bf16.mxu0 %v4201
    %5509 = vmatpush1.bf16.msra.mxu0 %v4200
    %5510 = vmatprep.subr.bf16.mxu0 %v4207
    %5511 = vmatpush1.bf16.msra.mxu0 %v4206
    %5512 = vmatprep.subr.bf16.mxu0 %v4213
    %5513 = vmatpush1.bf16.msra.mxu0 %v4212
    %5514 = vmatprep.subr.bf16.mxu0 %v4219
    %5515 = vmatpush1.bf16.msra.mxu0 %v4218
    %5516 = vmatprep.mubr.bf16.mxu0 %v1594
    %5517 = vmatmul.mubr.bf16.gmra.mrb[0].mxu0 %v1593
    %v5518 = vpop.f32.mrb[0].mxu0
    %v5519 = vadd.f32 %v5476, %v5518
    %v5520 = vpop.f32.mrb[0].mxu0
    %v5521 = vadd.f32 %v5478, %v5520
    %v5522 = vpop.f32.mrb[0].mxu0
    %v5523 = vadd.f32 %v5480, %v5522
    %v5524 = vpop.f32.mrb[0].mxu0
    %v5525 = vadd.f32 %v5482, %v5524
    %5526 = vdwg.mxu0
    %5527 = vmatprep.subr.bf16.mxu0 %v4225
    %5528 = vmatpush1.bf16.msra.mxu0 %v4224
    %5529 = vmatprep.subr.bf16.mxu0 %v4231
    %5530 = vmatpush1.bf16.msra.mxu0 %v4230
    %5531 = vmatprep.subr.bf16.mxu0 %v4237
    %5532 = vmatpush1.bf16.msra.mxu0 %v4236
    %5533 = vmatprep.subr.bf16.mxu0 %v4243
    %5534 = vmatpush1.bf16.msra.mxu0 %v4242
    %5535 = vmatprep.subr.bf16.mxu0 %v4249
    %5536 = vmatpush1.bf16.msra.mxu0 %v4248
    %5537 = vmatprep.subr.bf16.mxu0 %v4255
    %5538 = vmatpush1.bf16.msra.mxu0 %v4254
    %5539 = vmatprep.subr.bf16.mxu0 %v4261
    %5540 = vmatpush1.bf16.msra.mxu0 %v4260
    %5541 = vmatprep.subr.bf16.mxu0 %v4267
    %5542 = vmatpush1.bf16.msra.mxu0 %v4266
    %5543 = vmatprep.subr.bf16.mxu0 0
    %5544 = vmatpush1.bf16.msra.mxu0 0
    %5545 = vmatprep.subr.bf16.mxu0 0
    %5546 = vmatpush1.bf16.msra.mxu0 0
    %5547 = vmatprep.subr.bf16.mxu0 0
    %5548 = vmatpush1.bf16.msra.mxu0 0
    %5549 = vmatprep.subr.bf16.mxu0 0
    %5550 = vmatpush1.bf16.msra.mxu0 0
    %5551 = vmatprep.subr.bf16.mxu0 0
    %5552 = vmatpush1.bf16.msra.mxu0 0
    %5553 = vmatprep.subr.bf16.mxu0 0
    %5554 = vmatpush1.bf16.msra.mxu0 0
    %5555 = vmatprep.subr.bf16.mxu0 0
    %5556 = vmatpush1.bf16.msra.mxu0 0
    %5557 = vmatprep.subr.bf16.mxu0 0
    %5558 = vmatpush1.bf16.msra.mxu0 0
    %5559 = vmatprep.mubr.bf16.mxu0 0
    %5560 = vmatmul.mubr.bf16.gmra.mrb[0].mxu0 %v1595
    %v5561 = vpop.f32.mrb[0].mxu0
    %v5562 = vadd.f32 %v5519, %v5561
    %v5563 = vpop.f32.mrb[0].mxu0
    %v5564 = vadd.f32 %v5521, %v5563
    %v5565 = vpop.f32.mrb[0].mxu0
    %v5566 = vadd.f32 %v5523, %v5565
    %v5567 = vpop.f32.mrb[0].mxu0
    %v5568 = vadd.f32 %v5525, %v5567
    %5569 = vdwg.mxu0
    %v5570 = vmax.f32 %v5046, 0.0
    %v5571 = vmax.f32 %v5048, 0.0
    %v5572 = vmax.f32 %v5304, 0.0
    %v5573 = vmax.f32 %v5306, 0.0
    %v5574 = vmax.f32 %v5562, 0.0
    %v5575 = vmax.f32 %v5564, 0.0
    %v5576 = vmax.f32 %v5050, 0.0
    %v5577 = vmax.f32 %v5052, 0.0
    %v5578 = vmax.f32 %v5308, 0.0
    %v5579 = vmax.f32 %v5310, 0.0
    %v5580 = vmax.f32 %v5566, 0.0
    %v5581 = vmax.f32 %v5568, 0.0
    %v5582 = vpack.c.bf16 %v5576, %v5570
    %v5583 = vpack.c.bf16 %v5577, %v5571
    %v5584 = vpack.c.bf16 %v5578, %v5572
    %v5585 = vpack.c.bf16 %v5579, %v5573
    %v5586 = vpack.c.bf16 %v5580, %v5574
    %v5587 = vpack.c.bf16 %v5581, %v5575
    %v5588 = vld [vmem:[#allocation11] sm:$0xff]
    %v5589 = vld [vmem:[#allocation11 + $0x8] sm:$0xf]
    %v5590 = vld [vmem:[#allocation11 + $0xc] sm:$0xff]
    %v5591 = vld [vmem:[#allocation11 + $0x14] sm:$0xf]
    %v5592 = vld [vmem:[#allocation11 + $0x18] sm:$0xff]
    %v5593 = vld [vmem:[#allocation11 + $0x20] sm:$0xf]
    %v5594 = vld [vmem:[#allocation11 + $0x24] sm:$0xff]
    %v5595 = vld [vmem:[#allocation11 + $0x2c] sm:$0xf]
    %v5596 = vld [vmem:[#allocation11 + $0x30] sm:$0xff]
    %v5597 = vld [vmem:[#allocation11 + $0x38] sm:$0xf]
    %v5598 = vld [vmem:[#allocation11 + $0x3c] sm:$0xff]
    %v5599 = vld [vmem:[#allocation11 + $0x44] sm:$0xf]
    %v5600 = vld [vmem:[#allocation11 + $0x48] sm:$0xff]
    %v5601 = vld [vmem:[#allocation11 + $0x50] sm:$0xf]
    %v5602 = vld [vmem:[#allocation11 + $0x54] sm:$0xff]
    %v5603 = vld [vmem:[#allocation11 + $0x5c] sm:$0xf]
    %v5604 = vld [vmem:[#allocation11 + $0x60] sm:$0xff]
    %v5605 = vld [vmem:[#allocation11 + $0x68] sm:$0xf]
    %v5606 = vld [vmem:[#allocation11 + $0x6c] sm:$0xff]
    %v5607 = vld [vmem:[#allocation11 + $0x74] sm:$0xf]
    %v5608 = vld [vmem:[#allocation11 + $0x78] sm:$0xff]
    %v5609 = vld [vmem:[#allocation11 + $0x80] sm:$0xf]
    %v5610 = vld [vmem:[#allocation11 + $0x84] sm:$0xff]
    %v5611 = vld [vmem:[#allocation11 + $0x8c] sm:$0xf]
    %v5612 = vld [vmem:[#allocation11 + $0x90] sm:$0xff]
    %v5613 = vld [vmem:[#allocation11 + $0x98] sm:$0xf]
    %v5614 = vld [vmem:[#allocation11 + $0x9c] sm:$0xff]
    %v5615 = vld [vmem:[#allocation11 + $0xa4] sm:$0xf]
    %v5616 = vld [vmem:[#allocation11 + $0xa8] sm:$0xff]
    %v5617 = vld [vmem:[#allocation11 + $0xb0] sm:$0xf]
    %v5618 = vld [vmem:[#allocation11 + $0xb4] sm:$0xff]
    %v5619 = vld [vmem:[#allocation11 + $0xbc] sm:$0xf]
    %v5620 = vld [vmem:[#allocation11 + $0xc0] sm:$0xff]
    %v5621 = vld [vmem:[#allocation11 + $0xc8] sm:$0xf]
    %v5622 = vld [vmem:[#allocation11 + $0xcc] sm:$0xff]
    %v5623 = vld [vmem:[#allocation11 + $0xd4] sm:$0xf]
    %v5624 = vld [vmem:[#allocation11 + $0xd8] sm:$0xff]
    %v5625 = vld [vmem:[#allocation11 + $0xe0] sm:$0xf]
    %v5626 = vld [vmem:[#allocation11 + $0xe4] sm:$0xff]
    %v5627 = vld [vmem:[#allocation11 + $0xec] sm:$0xf]
    %v5628 = vld [vmem:[#allocation11 + $0xf0] sm:$0xff]
    %v5629 = vld [vmem:[#allocation11 + $0xf8] sm:$0xf]
    %v5630 = vld [vmem:[#allocation11 + $0xfc] sm:$0xff]
    %v5631 = vld [vmem:[#allocation11 + $0x104] sm:$0xf]
    %v5632 = vld [vmem:[#allocation11 + $0x108] sm:$0xff]
    %v5633 = vld [vmem:[#allocation11 + $0x110] sm:$0xf]
    %v5634 = vld [vmem:[#allocation11 + $0x114] sm:$0xff]
    %v5635 = vld [vmem:[#allocation11 + $0x11c] sm:$0xf]
    %v5636 = vld [vmem:[#allocation11 + $0x120] sm:$0xff]
    %v5637 = vld [vmem:[#allocation11 + $0x128] sm:$0xf]
    %v5638 = vld [vmem:[#allocation11 + $0x12c] sm:$0xff]
    %v5639 = vld [vmem:[#allocation11 + $0x134] sm:$0xf]
    %v5640 = vld [vmem:[#allocation11 + $0x138] sm:$0xff]
    %v5641 = vld [vmem:[#allocation11 + $0x140] sm:$0xf]
    %v5642 = vld [vmem:[#allocation11 + $0x144] sm:$0xff]
    %v5643 = vld [vmem:[#allocation11 + $0x14c] sm:$0xf]
    %v5644 = vld [vmem:[#allocation11 + $0x150] sm:$0xff]
    %v5645 = vld [vmem:[#allocation11 + $0x158] sm:$0xf]
    %v5646 = vld [vmem:[#allocation11 + $0x15c] sm:$0xff]
    %v5647 = vld [vmem:[#allocation11 + $0x164] sm:$0xf]
    %v5648 = vld [vmem:[#allocation11 + $0x168] sm:$0xff]
    %v5649 = vld [vmem:[#allocation11 + $0x170] sm:$0xf]
    %v5650 = vld [vmem:[#allocation11 + $0x174] sm:$0xff]
    %v5651 = vld [vmem:[#allocation11 + $0x17c] sm:$0xf]
    %v5652 = vld [vmem:[#allocation11 + $0x180] sm:$0xff]
    %v5653 = vld [vmem:[#allocation11 + $0x188] sm:$0xf]
    %v5654 = vld [vmem:[#allocation11 + $0x18c] sm:$0xff]
    %v5655 = vld [vmem:[#allocation11 + $0x194] sm:$0xf]
    %v5656 = vld [vmem:[#allocation11 + $0x198] sm:$0xff]
    %v5657 = vld [vmem:[#allocation11 + $0x1a0] sm:$0xf]
    %v5658 = vld [vmem:[#allocation11 + $0x1a4] sm:$0xff]
    %v5659 = vld [vmem:[#allocation11 + $0x1ac] sm:$0xf]
    %v5660 = vld [vmem:[#allocation11 + $0x1b0] sm:$0xff]
    %v5661 = vld [vmem:[#allocation11 + $0x1b8] sm:$0xf]
    %v5662 = vld [vmem:[#allocation11 + $0x1bc] sm:$0xff]
    %v5663 = vld [vmem:[#allocation11 + $0x1c4] sm:$0xf]
    %v5664 = vld [vmem:[#allocation11 + $0x1c8] sm:$0xff]
    %v5665 = vld [vmem:[#allocation11 + $0x1d0] sm:$0xf]
    %v5666 = vld [vmem:[#allocation11 + $0x1d4] sm:$0xff]
    %v5667 = vld [vmem:[#allocation11 + $0x1dc] sm:$0xf]
    %v5668 = vld [vmem:[#allocation11 + $0x1e0] sm:$0xff]
    %v5669 = vld [vmem:[#allocation11 + $0x1e8] sm:$0xf]
    %v5670 = vld [vmem:[#allocation11 + $0x1ec] sm:$0xff]
    %v5671 = vld [vmem:[#allocation11 + $0x1f4] sm:$0xf]
    %v5672 = vld [vmem:[#allocation11 + $0x1f8] sm:$0xff]
    %v5673 = vld [vmem:[#allocation11 + $0x200] sm:$0xf]
    %v5674 = vld [vmem:[#allocation11 + $0x204] sm:$0xff]
    %v5675 = vld [vmem:[#allocation11 + $0x20c] sm:$0xf]
    %v5676 = vld [vmem:[#allocation11 + $0x210] sm:$0xff]
    %v5677 = vld [vmem:[#allocation11 + $0x218] sm:$0xf]
    %v5678 = vld [vmem:[#allocation11 + $0x21c] sm:$0xff]
    %v5679 = vld [vmem:[#allocation11 + $0x224] sm:$0xf]
    %v5680 = vld [vmem:[#allocation11 + $0x228] sm:$0xff]
    %v5681 = vld [vmem:[#allocation11 + $0x230] sm:$0xf]
    %v5682 = vld [vmem:[#allocation11 + $0x234] sm:$0xff]
    %v5683 = vld [vmem:[#allocation11 + $0x23c] sm:$0xf]
    %v5684 = vld [vmem:[#allocation11 + $0x240] sm:$0xff]
    %v5685 = vld [vmem:[#allocation11 + $0x248] sm:$0xf]
    %v5686 = vld [vmem:[#allocation11 + $0x24c] sm:$0xff]
    %v5687 = vld [vmem:[#allocation11 + $0x254] sm:$0xf]
    %v5688 = vld [vmem:[#allocation11 + $0x258] sm:$0xff]
    %v5689 = vld [vmem:[#allocation11 + $0x260] sm:$0xf]
    %v5690 = vld [vmem:[#allocation11 + $0x264] sm:$0xff]
    %v5691 = vld [vmem:[#allocation11 + $0x26c] sm:$0xf]
    %v5692 = vld [vmem:[#allocation11 + $0x270] sm:$0xff]
    %v5693 = vld [vmem:[#allocation11 + $0x278] sm:$0xf]
    %v5694 = vld [vmem:[#allocation11 + $0x27c] sm:$0xff]
    %v5695 = vld [vmem:[#allocation11 + $0x284] sm:$0xf]
    %v5696 = vld [vmem:[#allocation11 + $0x288] sm:$0xff]
    %v5697 = vld [vmem:[#allocation11 + $0x290] sm:$0xf]
    %v5698 = vld [vmem:[#allocation11 + $0x294] sm:$0xff]
    %v5699 = vld [vmem:[#allocation11 + $0x29c] sm:$0xf]
    %v5700 = vld [vmem:[#allocation11 + $0x2a0] sm:$0xff]
    %v5701 = vld [vmem:[#allocation11 + $0x2a8] sm:$0xf]
    %v5702 = vld [vmem:[#allocation11 + $0x2ac] sm:$0xff]
    %v5703 = vld [vmem:[#allocation11 + $0x2b4] sm:$0xf]
    %v5704 = vld [vmem:[#allocation11 + $0x2b8] sm:$0xff]
    %v5705 = vld [vmem:[#allocation11 + $0x2c0] sm:$0xf]
    %v5706 = vld [vmem:[#allocation11 + $0x2c4] sm:$0xff]
    %v5707 = vld [vmem:[#allocation11 + $0x2cc] sm:$0xf]
    %v5708 = vld [vmem:[#allocation11 + $0x2d0] sm:$0xff]
    %v5709 = vld [vmem:[#allocation11 + $0x2d8] sm:$0xf]
    %v5710 = vld [vmem:[#allocation11 + $0x2dc] sm:$0xff]
    %v5711 = vld [vmem:[#allocation11 + $0x2e4] sm:$0xf]
    %v5712 = vld [vmem:[#allocation11 + $0x2e8] sm:$0xff]
    %v5713 = vld [vmem:[#allocation11 + $0x2f0] sm:$0xf]
    %v5714 = vld [vmem:[#allocation11 + $0x2f4] sm:$0xff]
    %v5715 = vld [vmem:[#allocation11 + $0x2fc] sm:$0xf]
    %v5716 = vld [vmem:[#allocation11 + $0x300] sm:$0xff]
    %v5717 = vld [vmem:[#allocation11 + $0x308] sm:$0xf]
    %v5718 = vld [vmem:[#allocation11 + $0x30c] sm:$0xff]
    %v5719 = vld [vmem:[#allocation11 + $0x314] sm:$0xf]
    %v5720 = vld [vmem:[#allocation11 + $0x318] sm:$0xff]
    %v5721 = vld [vmem:[#allocation11 + $0x320] sm:$0xf]
    %v5722 = vld [vmem:[#allocation11 + $0x324] sm:$0xff]
    %v5723 = vld [vmem:[#allocation11 + $0x32c] sm:$0xf]
    %v5724 = vld [vmem:[#allocation11 + $0x330] sm:$0xff]
    %v5725 = vld [vmem:[#allocation11 + $0x338] sm:$0xf]
    %v5726 = vld [vmem:[#allocation11 + $0x33c] sm:$0xff]
    %v5727 = vld [vmem:[#allocation11 + $0x344] sm:$0xf]
    %v5728 = vld [vmem:[#allocation11 + $0x348] sm:$0xff]
    %v5729 = vld [vmem:[#allocation11 + $0x350] sm:$0xf]
    %v5730 = vld [vmem:[#allocation11 + $0x354] sm:$0xff]
    %v5731 = vld [vmem:[#allocation11 + $0x35c] sm:$0xf]
    %v5732 = vld [vmem:[#allocation11 + $0x360] sm:$0xff]
    %v5733 = vld [vmem:[#allocation11 + $0x368] sm:$0xf]
    %v5734 = vld [vmem:[#allocation11 + $0x36c] sm:$0xff]
    %v5735 = vld [vmem:[#allocation11 + $0x374] sm:$0xf]
    %v5736 = vld [vmem:[#allocation11 + $0x378] sm:$0xff]
    %v5737 = vld [vmem:[#allocation11 + $0x380] sm:$0xf]
    %v5738 = vld [vmem:[#allocation11 + $0x384] sm:$0xff]
    %v5739 = vld [vmem:[#allocation11 + $0x38c] sm:$0xf]
    %v5740 = vld [vmem:[#allocation11 + $0x390] sm:$0xff]
    %v5741 = vld [vmem:[#allocation11 + $0x398] sm:$0xf]
    %v5742 = vld [vmem:[#allocation11 + $0x39c] sm:$0xff]
    %v5743 = vld [vmem:[#allocation11 + $0x3a4] sm:$0xf]
    %v5744 = vld [vmem:[#allocation11 + $0x3a8] sm:$0xff]
    %v5745 = vld [vmem:[#allocation11 + $0x3b0] sm:$0xf]
    %v5746 = vld [vmem:[#allocation11 + $0x3b4] sm:$0xff]
    %v5747 = vld [vmem:[#allocation11 + $0x3bc] sm:$0xf]
    %v5748 = vld [vmem:[#allocation11 + $0x3c0] sm:$0xff]
    %v5749 = vld [vmem:[#allocation11 + $0x3c8] sm:$0xf]
    %v5750 = vld [vmem:[#allocation11 + $0x3cc] sm:$0xff]
    %v5751 = vld [vmem:[#allocation11 + $0x3d4] sm:$0xf]
    %v5752 = vld [vmem:[#allocation11 + $0x3d8] sm:$0xff]
    %v5753 = vld [vmem:[#allocation11 + $0x3e0] sm:$0xf]
    %v5754 = vld [vmem:[#allocation11 + $0x3e4] sm:$0xff]
    %v5755 = vld [vmem:[#allocation11 + $0x3ec] sm:$0xf]
    %v5756 = vld [vmem:[#allocation11 + $0x3f0] sm:$0xff]
    %v5757 = vld [vmem:[#allocation11 + $0x3f8] sm:$0xf]
    %v5758 = vld [vmem:[#allocation11 + $0x3fc] sm:$0xff]
    %v5759 = vld [vmem:[#allocation11 + $0x404] sm:$0xf]
    %v5760 = vld [vmem:[#allocation11 + $0x408] sm:$0xff]
    %v5761 = vld [vmem:[#allocation11 + $0x410] sm:$0xf]
    %v5762 = vld [vmem:[#allocation11 + $0x414] sm:$0xff]
    %v5763 = vld [vmem:[#allocation11 + $0x41c] sm:$0xf]
    %v5764 = vld [vmem:[#allocation11 + $0x420] sm:$0xff]
    %v5765 = vld [vmem:[#allocation11 + $0x428] sm:$0xf]
    %v5766 = vld [vmem:[#allocation11 + $0x42c] sm:$0xff]
    %v5767 = vld [vmem:[#allocation11 + $0x434] sm:$0xf]
    %v5768 = vld [vmem:[#allocation11 + $0x438] sm:$0xff]
    %v5769 = vld [vmem:[#allocation11 + $0x440] sm:$0xf]
    %v5770 = vld [vmem:[#allocation11 + $0x444] sm:$0xff]
    %v5771 = vld [vmem:[#allocation11 + $0x44c] sm:$0xf]
    %v5772 = vld [vmem:[#allocation11 + $0x450] sm:$0xff]
    %v5773 = vld [vmem:[#allocation11 + $0x458] sm:$0xf]
    %v5774 = vld [vmem:[#allocation11 + $0x45c] sm:$0xff]
    %v5775 = vld [vmem:[#allocation11 + $0x464] sm:$0xf]
    %v5776 = vld [vmem:[#allocation11 + $0x468] sm:$0xff]
    %v5777 = vld [vmem:[#allocation11 + $0x470] sm:$0xf]
    %v5778 = vld [vmem:[#allocation11 + $0x474] sm:$0xff]
    %v5779 = vld [vmem:[#allocation11 + $0x47c] sm:$0xf]
    %v5780 = vld [vmem:[#allocation13] sm:$0x7]
    %v5782 = vlaneseq
    %v5783 = vshrl.u32 %v5782, 7
    %v5784 = vsub.s32 0, %v5783
    %v5785 = vrot.slane %v5780, %v5784
    %v5786 = vlaneseq
    %v5787 = vshrl.u32 %v5786, 7
    %v5788 = vsub.s32 1, %v5787
    %v5789 = vrot.slane %v5780, %v5788
    %v5790 = vlaneseq
    %v5791 = vshrl.u32 %v5790, 7
    %v5792 = vsub.s32 2, %v5791
    %v5793 = vrot.slane %v5780, %v5792
    %v5989 = vunpack.c.l.b16 %v5588
    %v5990 = vunpack.c.h.b16 %v5588
    %v5991 = vunpack.c.l.b16 %v5589
    %v5992 = vunpack.c.l.b16 %v5590
    %v5993 = vunpack.c.h.b16 %v5590
    %v5994 = vunpack.c.l.b16 %v5591
    %v5995 = vunpack.c.l.b16 %v5592
    %v5996 = vunpack.c.h.b16 %v5592
    %v5997 = vunpack.c.l.b16 %v5593
    %v5998 = vunpack.c.l.b16 %v5594
    %v5999 = vunpack.c.h.b16 %v5594
    %v6000 = vunpack.c.l.b16 %v5595
    %v6001 = vunpack.c.l.b16 %v5596
    %v6002 = vunpack.c.h.b16 %v5596
    %v6003 = vunpack.c.l.b16 %v5597
    %v6004 = vunpack.c.l.b16 %v5598
    %v6005 = vunpack.c.h.b16 %v5598
    %v6006 = vunpack.c.l.b16 %v5599
    %v6007 = vunpack.c.l.b16 %v5600
    %v6008 = vunpack.c.h.b16 %v5600
    %v6009 = vunpack.c.l.b16 %v5601
    %v6010 = vunpack.c.l.b16 %v5602
    %v6011 = vunpack.c.h.b16 %v5602
    %v6012 = vunpack.c.l.b16 %v5603
    %v6013 = vunpack.c.l.b16 %v5604
    %v6014 = vunpack.c.h.b16 %v5604
    %v6015 = vunpack.c.l.b16 %v5605
    %v6016 = vunpack.c.l.b16 %v5606
    %v6017 = vunpack.c.h.b16 %v5606
    %v6018 = vunpack.c.l.b16 %v5607
    %v6019 = vunpack.c.l.b16 %v5608
    %v6020 = vunpack.c.h.b16 %v5608
    %v6021 = vunpack.c.l.b16 %v5609
    %v6022 = vunpack.c.l.b16 %v5610
    %v6023 = vunpack.c.h.b16 %v5610
    %v6024 = vunpack.c.l.b16 %v5611
    %v6025 = vunpack.c.l.b16 %v5612
    %v6026 = vunpack.c.h.b16 %v5612
    %v6027 = vunpack.c.l.b16 %v5613
    %v6028 = vunpack.c.l.b16 %v5614
    %v6029 = vunpack.c.h.b16 %v5614
    %v6030 = vunpack.c.l.b16 %v5615
    %v6031 = vunpack.c.l.b16 %v5616
    %v6032 = vunpack.c.h.b16 %v5616
    %v6033 = vunpack.c.l.b16 %v5617
    %v6034 = vunpack.c.l.b16 %v5618
    %v6035 = vunpack.c.h.b16 %v5618
    %v6036 = vunpack.c.l.b16 %v5619
    %v6037 = vunpack.c.l.b16 %v5620
    %v6038 = vunpack.c.h.b16 %v5620
    %v6039 = vunpack.c.l.b16 %v5621
    %v6040 = vunpack.c.l.b16 %v5622
    %v6041 = vunpack.c.h.b16 %v5622
    %v6042 = vunpack.c.l.b16 %v5623
    %v6043 = vunpack.c.l.b16 %v5624
    %v6044 = vunpack.c.h.b16 %v5624
    %v6045 = vunpack.c.l.b16 %v5625
    %v6046 = vunpack.c.l.b16 %v5626
    %v6047 = vunpack.c.h.b16 %v5626
    %v6048 = vunpack.c.l.b16 %v5627
    %v6049 = vunpack.c.l.b16 %v5628
    %v6050 = vunpack.c.h.b16 %v5628
    %v6051 = vunpack.c.l.b16 %v5629
    %v6052 = vunpack.c.l.b16 %v5630
    %v6053 = vunpack.c.h.b16 %v5630
    %v6054 = vunpack.c.l.b16 %v5631
    %v6055 = vunpack.c.l.b16 %v5632
    %v6056 = vunpack.c.h.b16 %v5632
    %v6057 = vunpack.c.l.b16 %v5633
    %v6058 = vunpack.c.l.b16 %v5634
    %v6059 = vunpack.c.h.b16 %v5634
    %v6060 = vunpack.c.l.b16 %v5635
    %v6061 = vunpack.c.l.b16 %v5636
    %v6062 = vunpack.c.h.b16 %v5636
    %v6063 = vunpack.c.l.b16 %v5637
    %v6064 = vunpack.c.l.b16 %v5638
    %v6065 = vunpack.c.h.b16 %v5638
    %v6066 = vunpack.c.l.b16 %v5639
    %v6067 = vunpack.c.l.b16 %v5640
    %v6068 = vunpack.c.h.b16 %v5640
    %v6069 = vunpack.c.l.b16 %v5641
    %v6070 = vunpack.c.l.b16 %v5642
    %v6071 = vunpack.c.h.b16 %v5642
    %v6072 = vunpack.c.l.b16 %v5643
    %v6073 = vunpack.c.l.b16 %v5644
    %v6074 = vunpack.c.h.b16 %v5644
    %v6075 = vunpack.c.l.b16 %v5645
    %v6076 = vunpack.c.l.b16 %v5646
    %v6077 = vunpack.c.h.b16 %v5646
    %v6078 = vunpack.c.l.b16 %v5647
    %v6079 = vunpack.c.l.b16 %v5648
    %v6080 = vunpack.c.h.b16 %v5648
    %v6081 = vunpack.c.l.b16 %v5649
    %v6082 = vunpack.c.l.b16 %v5650
    %v6083 = vunpack.c.h.b16 %v5650
    %v6084 = vunpack.c.l.b16 %v5651
    %v6085 = vunpack.c.l.b16 %v5652
    %v6086 = vunpack.c.h.b16 %v5652
    %v6087 = vunpack.c.l.b16 %v5653
    %v6088 = vunpack.c.l.b16 %v5654
    %v6089 = vunpack.c.h.b16 %v5654
    %v6090 = vunpack.c.l.b16 %v5655
    %v6091 = vunpack.c.l.b16 %v5656
    %v6092 = vunpack.c.h.b16 %v5656
    %v6093 = vunpack.c.l.b16 %v5657
    %v6094 = vunpack.c.l.b16 %v5658
    %v6095 = vunpack.c.h.b16 %v5658
    %v6096 = vunpack.c.l.b16 %v5659
    %v6097 = vunpack.c.l.b16 %v5660
    %v6098 = vunpack.c.h.b16 %v5660
    %v6099 = vunpack.c.l.b16 %v5661
    %v6100 = vunpack.c.l.b16 %v5662
    %v6101 = vunpack.c.h.b16 %v5662
    %v6102 = vunpack.c.l.b16 %v5663
    %v6103 = vunpack.c.l.b16 %v5664
    %v6104 = vunpack.c.h.b16 %v5664
    %v6105 = vunpack.c.l.b16 %v5665
    %v6106 = vunpack.c.l.b16 %v5666
    %v6107 = vunpack.c.h.b16 %v5666
    %v6108 = vunpack.c.l.b16 %v5667
    %v6109 = vunpack.c.l.b16 %v5668
    %v6110 = vunpack.c.h.b16 %v5668
    %v6111 = vunpack.c.l.b16 %v5669
    %v6112 = vunpack.c.l.b16 %v5670
    %v6113 = vunpack.c.h.b16 %v5670
    %v6114 = vunpack.c.l.b16 %v5671
    %v6115 = vunpack.c.l.b16 %v5672
    %v6116 = vunpack.c.h.b16 %v5672
    %v6117 = vunpack.c.l.b16 %v5673
    %v6118 = vunpack.c.l.b16 %v5674
    %v6119 = vunpack.c.h.b16 %v5674
    %v6120 = vunpack.c.l.b16 %v5675
    %v6121 = vunpack.c.l.b16 %v5676
    %v6122 = vunpack.c.h.b16 %v5676
    %v6123 = vunpack.c.l.b16 %v5677
    %v6124 = vunpack.c.l.b16 %v5678
    %v6125 = vunpack.c.h.b16 %v5678
    %v6126 = vunpack.c.l.b16 %v5679
    %v6127 = vunpack.c.l.b16 %v5680
    %v6128 = vunpack.c.h.b16 %v5680
    %v6129 = vunpack.c.l.b16 %v5681
    %v6130 = vunpack.c.l.b16 %v5682
    %v6131 = vunpack.c.h.b16 %v5682
    %v6132 = vunpack.c.l.b16 %v5683
    %v6133 = vunpack.c.l.b16 %v5684
    %v6134 = vunpack.c.h.b16 %v5684
    %v6135 = vunpack.c.l.b16 %v5685
    %v6136 = vunpack.c.l.b16 %v5686
    %v6137 = vunpack.c.h.b16 %v5686
    %v6138 = vunpack.c.l.b16 %v5687
    %v6139 = vunpack.c.l.b16 %v5688
    %v6140 = vunpack.c.h.b16 %v5688
    %v6141 = vunpack.c.l.b16 %v5689
    %v6142 = vunpack.c.l.b16 %v5690
    %v6143 = vunpack.c.h.b16 %v5690
    %v6144 = vunpack.c.l.b16 %v5691
    %v6145 = vunpack.c.l.b16 %v5692
    %v6146 = vunpack.c.h.b16 %v5692
    %v6147 = vunpack.c.l.b16 %v5693
    %v6148 = vunpack.c.l.b16 %v5694
    %v6149 = vunpack.c.h.b16 %v5694
    %v6150 = vunpack.c.l.b16 %v5695
    %v6151 = vunpack.c.l.b16 %v5696
    %v6152 = vunpack.c.h.b16 %v5696
    %v6153 = vunpack.c.l.b16 %v5697
    %v6154 = vunpack.c.l.b16 %v5698
    %v6155 = vunpack.c.h.b16 %v5698
    %v6156 = vunpack.c.l.b16 %v5699
    %v6157 = vunpack.c.l.b16 %v5700
    %v6158 = vunpack.c.h.b16 %v5700
    %v6159 = vunpack.c.l.b16 %v5701
    %v6160 = vunpack.c.l.b16 %v5702
    %v6161 = vunpack.c.h.b16 %v5702
    %v6162 = vunpack.c.l.b16 %v5703
    %v6163 = vunpack.c.l.b16 %v5704
    %v6164 = vunpack.c.h.b16 %v5704
    %v6165 = vunpack.c.l.b16 %v5705
    %v6166 = vunpack.c.l.b16 %v5706
    %v6167 = vunpack.c.h.b16 %v5706
    %v6168 = vunpack.c.l.b16 %v5707
    %v6169 = vunpack.c.l.b16 %v5708
    %v6170 = vunpack.c.h.b16 %v5708
    %v6171 = vunpack.c.l.b16 %v5709
    %v6172 = vunpack.c.l.b16 %v5710
    %v6173 = vunpack.c.h.b16 %v5710
    %v6174 = vunpack.c.l.b16 %v5711
    %v6175 = vunpack.c.l.b16 %v5712
    %v6176 = vunpack.c.h.b16 %v5712
    %v6177 = vunpack.c.l.b16 %v5713
    %v6178 = vunpack.c.l.b16 %v5714
    %v6179 = vunpack.c.h.b16 %v5714
    %v6180 = vunpack.c.l.b16 %v5715
    %v6181 = vunpack.c.l.b16 %v5716
    %v6182 = vunpack.c.h.b16 %v5716
    %v6183 = vunpack.c.l.b16 %v5717
    %v6184 = vunpack.c.l.b16 %v5718
    %v6185 = vunpack.c.h.b16 %v5718
    %v6186 = vunpack.c.l.b16 %v5719
    %v6187 = vunpack.c.l.b16 %v5720
    %v6188 = vunpack.c.h.b16 %v5720
    %v6189 = vunpack.c.l.b16 %v5721
    %v6190 = vunpack.c.l.b16 %v5722
    %v6191 = vunpack.c.h.b16 %v5722
    %v6192 = vunpack.c.l.b16 %v5723
    %v6193 = vunpack.c.l.b16 %v5724
    %v6194 = vunpack.c.h.b16 %v5724
    %v6195 = vunpack.c.l.b16 %v5725
    %v6196 = vunpack.c.l.b16 %v5726
    %v6197 = vunpack.c.h.b16 %v5726
    %v6198 = vunpack.c.l.b16 %v5727
    %v6199 = vunpack.c.l.b16 %v5728
    %v6200 = vunpack.c.h.b16 %v5728
    %v6201 = vunpack.c.l.b16 %v5729
    %v6202 = vunpack.c.l.b16 %v5730
    %v6203 = vunpack.c.h.b16 %v5730
    %v6204 = vunpack.c.l.b16 %v5731
    %v6205 = vunpack.c.l.b16 %v5732
    %v6206 = vunpack.c.h.b16 %v5732
    %v6207 = vunpack.c.l.b16 %v5733
    %v6208 = vunpack.c.l.b16 %v5734
    %v6209 = vunpack.c.h.b16 %v5734
    %v6210 = vunpack.c.l.b16 %v5735
    %v6211 = vunpack.c.l.b16 %v5736
    %v6212 = vunpack.c.h.b16 %v5736
    %v6213 = vunpack.c.l.b16 %v5737
    %v6214 = vunpack.c.l.b16 %v5738
    %v6215 = vunpack.c.h.b16 %v5738
    %v6216 = vunpack.c.l.b16 %v5739
    %v6217 = vunpack.c.l.b16 %v5740
    %v6218 = vunpack.c.h.b16 %v5740
    %v6219 = vunpack.c.l.b16 %v5741
    %v6220 = vunpack.c.l.b16 %v5742
    %v6221 = vunpack.c.h.b16 %v5742
    %v6222 = vunpack.c.l.b16 %v5743
    %v6223 = vunpack.c.l.b16 %v5744
    %v6224 = vunpack.c.h.b16 %v5744
    %v6225 = vunpack.c.l.b16 %v5745
    %v6226 = vunpack.c.l.b16 %v5746
    %v6227 = vunpack.c.h.b16 %v5746
    %v6228 = vunpack.c.l.b16 %v5747
    %v6229 = vunpack.c.l.b16 %v5748
    %v6230 = vunpack.c.h.b16 %v5748
    %v6231 = vunpack.c.l.b16 %v5749
    %v6232 = vunpack.c.l.b16 %v5750
    %v6233 = vunpack.c.h.b16 %v5750
    %v6234 = vunpack.c.l.b16 %v5751
    %v6235 = vunpack.c.l.b16 %v5752
    %v6236 = vunpack.c.h.b16 %v5752
    %v6237 = vunpack.c.l.b16 %v5753
    %v6238 = vunpack.c.l.b16 %v5754
    %v6239 = vunpack.c.h.b16 %v5754
    %v6240 = vunpack.c.l.b16 %v5755
    %v6241 = vunpack.c.l.b16 %v5756
    %v6242 = vunpack.c.h.b16 %v5756
    %v6243 = vunpack.c.l.b16 %v5757
    %v6244 = vunpack.c.l.b16 %v5758
    %v6245 = vunpack.c.h.b16 %v5758
    %v6246 = vunpack.c.l.b16 %v5759
    %v6247 = vunpack.c.l.b16 %v5760
    %v6248 = vunpack.c.h.b16 %v5760
    %v6249 = vunpack.c.l.b16 %v5761
    %v6250 = vunpack.c.l.b16 %v5762
    %v6251 = vunpack.c.h.b16 %v5762
    %v6252 = vunpack.c.l.b16 %v5763
    %v6253 = vunpack.c.l.b16 %v5764
    %v6254 = vunpack.c.h.b16 %v5764
    %v6255 = vunpack.c.l.b16 %v5765
    %v6256 = vunpack.c.l.b16 %v5766
    %v6257 = vunpack.c.h.b16 %v5766
    %v6258 = vunpack.c.l.b16 %v5767
    %v6259 = vunpack.c.l.b16 %v5768
    %v6260 = vunpack.c.h.b16 %v5768
    %v6261 = vunpack.c.l.b16 %v5769
    %v6262 = vunpack.c.l.b16 %v5770
    %v6263 = vunpack.c.h.b16 %v5770
    %v6264 = vunpack.c.l.b16 %v5771
    %v6265 = vunpack.c.l.b16 %v5772
    %v6266 = vunpack.c.h.b16 %v5772
    %v6267 = vunpack.c.l.b16 %v5773
    %v6268 = vunpack.c.l.b16 %v5774
    %v6269 = vunpack.c.h.b16 %v5774
    %v6270 = vunpack.c.l.b16 %v5775
    %v6271 = vunpack.c.l.b16 %v5776
    %v6272 = vunpack.c.h.b16 %v5776
    %v6273 = vunpack.c.l.b16 %v5777
    %v6274 = vunpack.c.l.b16 %v5778
    %v6275 = vunpack.c.h.b16 %v5778
    %v6276 = vunpack.c.l.b16 %v5779
    %v6277 = vpack.c.b16 %v5992, %v5989
    %v6278 = vpack.c.b16 %v5993, %v5990
    %v6279 = vpack.c.b16 %v5994, %v5991
    %v6280 = vpack.c.b16 %v5998, %v5995
    %v6281 = vpack.c.b16 %v5999, %v5996
    %v6282 = vpack.c.b16 %v6000, %v5997
    %v6283 = vpack.c.b16 %v6004, %v6001
    %v6284 = vpack.c.b16 %v6005, %v6002
    %v6285 = vpack.c.b16 %v6006, %v6003
    %v6286 = vpack.c.b16 %v6010, %v6007
    %v6287 = vpack.c.b16 %v6011, %v6008
    %v6288 = vpack.c.b16 %v6012, %v6009
    %v6289 = vpack.c.b16 %v6016, %v6013
    %v6290 = vpack.c.b16 %v6017, %v6014
    %v6291 = vpack.c.b16 %v6018, %v6015
    %v6292 = vpack.c.b16 %v6022, %v6019
    %v6293 = vpack.c.b16 %v6023, %v6020
    %v6294 = vpack.c.b16 %v6024, %v6021
    %v6295 = vpack.c.b16 %v6028, %v6025
    %v6296 = vpack.c.b16 %v6029, %v6026
    %v6297 = vpack.c.b16 %v6030, %v6027
    %v6298 = vpack.c.b16 %v6034, %v6031
    %v6299 = vpack.c.b16 %v6035, %v6032
    %v6300 = vpack.c.b16 %v6036, %v6033
    %v6301 = vpack.c.b16 %v6040, %v6037
    %v6302 = vpack.c.b16 %v6041, %v6038
    %v6303 = vpack.c.b16 %v6042, %v6039
    %v6304 = vpack.c.b16 %v6046, %v6043
    %v6305 = vpack.c.b16 %v6047, %v6044
    %v6306 = vpack.c.b16 %v6048, %v6045
    %v6307 = vpack.c.b16 %v6052, %v6049
    %v6308 = vpack.c.b16 %v6053, %v6050
    %v6309 = vpack.c.b16 %v6054, %v6051
    %v6310 = vpack.c.b16 %v6058, %v6055
    %v6311 = vpack.c.b16 %v6059, %v6056
    %v6312 = vpack.c.b16 %v6060, %v6057
    %v6313 = vpack.c.b16 %v6064, %v6061
    %v6314 = vpack.c.b16 %v6065, %v6062
    %v6315 = vpack.c.b16 %v6066, %v6063
    %v6316 = vpack.c.b16 %v6070, %v6067
    %v6317 = vpack.c.b16 %v6071, %v6068
    %v6318 = vpack.c.b16 %v6072, %v6069
    %v6319 = vpack.c.b16 %v6076, %v6073
    %v6320 = vpack.c.b16 %v6077, %v6074
    %v6321 = vpack.c.b16 %v6078, %v6075
    %v6322 = vpack.c.b16 %v6082, %v6079
    %v6323 = vpack.c.b16 %v6083, %v6080
    %v6324 = vpack.c.b16 %v6084, %v6081
    %v6325 = vpack.c.b16 %v6088, %v6085
    %v6326 = vpack.c.b16 %v6089, %v6086
    %v6327 = vpack.c.b16 %v6090, %v6087
    %v6328 = vpack.c.b16 %v6094, %v6091
    %v6329 = vpack.c.b16 %v6095, %v6092
    %v6330 = vpack.c.b16 %v6096, %v6093
    %v6331 = vpack.c.b16 %v6100, %v6097
    %v6332 = vpack.c.b16 %v6101, %v6098
    %v6333 = vpack.c.b16 %v6102, %v6099
    %v6334 = vpack.c.b16 %v6106, %v6103
    %v6335 = vpack.c.b16 %v6107, %v6104
    %v6336 = vpack.c.b16 %v6108, %v6105
    %v6337 = vpack.c.b16 %v6112, %v6109
    %v6338 = vpack.c.b16 %v6113, %v6110
    %v6339 = vpack.c.b16 %v6114, %v6111
    %v6340 = vpack.c.b16 %v6118, %v6115
    %v6341 = vpack.c.b16 %v6119, %v6116
    %v6342 = vpack.c.b16 %v6120, %v6117
    %v6343 = vpack.c.b16 %v6124, %v6121
    %v6344 = vpack.c.b16 %v6125, %v6122
    %v6345 = vpack.c.b16 %v6126, %v6123
    %v6346 = vpack.c.b16 %v6130, %v6127
    %v6347 = vpack.c.b16 %v6131, %v6128
    %v6348 = vpack.c.b16 %v6132, %v6129
    %v6349 = vpack.c.b16 %v6136, %v6133
    %v6350 = vpack.c.b16 %v6137, %v6134
    %v6351 = vpack.c.b16 %v6138, %v6135
    %v6352 = vpack.c.b16 %v6142, %v6139
    %v6353 = vpack.c.b16 %v6143, %v6140
    %v6354 = vpack.c.b16 %v6144, %v6141
    %v6355 = vpack.c.b16 %v6148, %v6145
    %v6356 = vpack.c.b16 %v6149, %v6146
    %v6357 = vpack.c.b16 %v6150, %v6147
    %v6358 = vpack.c.b16 %v6154, %v6151
    %v6359 = vpack.c.b16 %v6155, %v6152
    %v6360 = vpack.c.b16 %v6156, %v6153
    %v6361 = vpack.c.b16 %v6160, %v6157
    %v6362 = vpack.c.b16 %v6161, %v6158
    %v6363 = vpack.c.b16 %v6162, %v6159
    %v6364 = vpack.c.b16 %v6166, %v6163
    %v6365 = vpack.c.b16 %v6167, %v6164
    %v6366 = vpack.c.b16 %v6168, %v6165
    %v6367 = vpack.c.b16 %v6172, %v6169
    %v6368 = vpack.c.b16 %v6173, %v6170
    %v6369 = vpack.c.b16 %v6174, %v6171
    %v6370 = vpack.c.b16 %v6178, %v6175
    %v6371 = vpack.c.b16 %v6179, %v6176
    %v6372 = vpack.c.b16 %v6180, %v6177
    %v6373 = vpack.c.b16 %v6184, %v6181
    %v6374 = vpack.c.b16 %v6185, %v6182
    %v6375 = vpack.c.b16 %v6186, %v6183
    %v6376 = vpack.c.b16 %v6190, %v6187
    %v6377 = vpack.c.b16 %v6191, %v6188
    %v6378 = vpack.c.b16 %v6192, %v6189
    %v6379 = vpack.c.b16 %v6196, %v6193
    %v6380 = vpack.c.b16 %v6197, %v6194
    %v6381 = vpack.c.b16 %v6198, %v6195
    %v6382 = vpack.c.b16 %v6202, %v6199
    %v6383 = vpack.c.b16 %v6203, %v6200
    %v6384 = vpack.c.b16 %v6204, %v6201
    %v6385 = vpack.c.b16 %v6208, %v6205
    %v6386 = vpack.c.b16 %v6209, %v6206
    %v6387 = vpack.c.b16 %v6210, %v6207
    %v6388 = vpack.c.b16 %v6214, %v6211
    %v6389 = vpack.c.b16 %v6215, %v6212
    %v6390 = vpack.c.b16 %v6216, %v6213
    %v6391 = vpack.c.b16 %v6220, %v6217
    %v6392 = vpack.c.b16 %v6221, %v6218
    %v6393 = vpack.c.b16 %v6222, %v6219
    %v6394 = vpack.c.b16 %v6226, %v6223
    %v6395 = vpack.c.b16 %v6227, %v6224
    %v6396 = vpack.c.b16 %v6228, %v6225
    %v6397 = vpack.c.b16 %v6232, %v6229
    %v6398 = vpack.c.b16 %v6233, %v6230
    %v6399 = vpack.c.b16 %v6234, %v6231
    %v6400 = vpack.c.b16 %v6238, %v6235
    %v6401 = vpack.c.b16 %v6239, %v6236
    %v6402 = vpack.c.b16 %v6240, %v6237
    %v6403 = vpack.c.b16 %v6244, %v6241
    %v6404 = vpack.c.b16 %v6245, %v6242
    %v6405 = vpack.c.b16 %v6246, %v6243
    %v6406 = vpack.c.b16 %v6250, %v6247
    %v6407 = vpack.c.b16 %v6251, %v6248
    %v6408 = vpack.c.b16 %v6252, %v6249
    %v6409 = vpack.c.b16 %v6256, %v6253
    %v6410 = vpack.c.b16 %v6257, %v6254
    %v6411 = vpack.c.b16 %v6258, %v6255
    %v6412 = vpack.c.b16 %v6262, %v6259
    %v6413 = vpack.c.b16 %v6263, %v6260
    %v6414 = vpack.c.b16 %v6264, %v6261
    %v6415 = vpack.c.b16 %v6268, %v6265
    %v6416 = vpack.c.b16 %v6269, %v6266
    %v6417 = vpack.c.b16 %v6270, %v6267
    %v6418 = vpack.c.b16 %v6274, %v6271
    %v6419 = vpack.c.b16 %v6275, %v6272
    %v6420 = vpack.c.b16 %v6276, %v6273
    %6565 = vmatprep.subr.bf16.mxu0 %v6278
    %6566 = vmatpush1.bf16.msra.mxu0 %v6277
    %6567 = vmatprep.subr.bf16.mxu0 %v6281
    %6568 = vmatpush1.bf16.msra.mxu0 %v6280
    %6569 = vmatprep.subr.bf16.mxu0 %v6284
    %6570 = vmatpush1.bf16.msra.mxu0 %v6283
    %6571 = vmatprep.subr.bf16.mxu0 %v6287
    %6572 = vmatpush1.bf16.msra.mxu0 %v6286
    %6573 = vmatprep.subr.bf16.mxu0 %v6290
    %6574 = vmatpush1.bf16.msra.mxu0 %v6289
    %6575 = vmatprep.subr.bf16.mxu0 %v6293
    %6576 = vmatpush1.bf16.msra.mxu0 %v6292
    %6577 = vmatprep.subr.bf16.mxu0 %v6296
    %6578 = vmatpush1.bf16.msra.mxu0 %v6295
    %6579 = vmatprep.subr.bf16.mxu0 %v6299
    %6580 = vmatpush1.bf16.msra.mxu0 %v6298
    %6581 = vmatprep.subr.bf16.mxu0 %v6302
    %6582 = vmatpush1.bf16.msra.mxu0 %v6301
    %6583 = vmatprep.subr.bf16.mxu0 %v6305
    %6584 = vmatpush1.bf16.msra.mxu0 %v6304
    %6585 = vmatprep.subr.bf16.mxu0 %v6308
    %6586 = vmatpush1.bf16.msra.mxu0 %v6307
    %6587 = vmatprep.subr.bf16.mxu0 %v6311
    %6588 = vmatpush1.bf16.msra.mxu0 %v6310
    %6589 = vmatprep.subr.bf16.mxu0 %v6314
    %6590 = vmatpush1.bf16.msra.mxu0 %v6313
    %6591 = vmatprep.subr.bf16.mxu0 %v6317
    %6592 = vmatpush1.bf16.msra.mxu0 %v6316
    %6593 = vmatprep.subr.bf16.mxu0 %v6320
    %6594 = vmatpush1.bf16.msra.mxu0 %v6319
    %6595 = vmatprep.subr.bf16.mxu0 %v6323
    %6596 = vmatpush1.bf16.msra.mxu0 %v6322
    %6597 = vmatprep.mubr.bf16.mxu0 %v5583
    %6598 = vmatmul.mubr.bf16.gmra.mrb[0].mxu0 %v5582
    %v6599 = vpop.f32.mrb[0].mxu0
    %v6600 = vadd.f32 %v5785, %v6599
    %v6601 = vpop.f32.mrb[0].mxu0
    %v6602 = vadd.f32 %v5789, %v6601
    %v6603 = vpop.f32.mrb[0].mxu0
    %v6604 = vadd.f32 %v5785, %v6603
    %v6605 = vpop.f32.mrb[0].mxu0
    %v6606 = vadd.f32 %v5789, %v6605
    %6607 = vdwg.mxu0
    %6608 = vmatprep.subr.bf16.mxu0 %v6326
    %6609 = vmatpush1.bf16.msra.mxu0 %v6325
    %6610 = vmatprep.subr.bf16.mxu0 %v6329
    %6611 = vmatpush1.bf16.msra.mxu0 %v6328
    %6612 = vmatprep.subr.bf16.mxu0 %v6332
    %6613 = vmatpush1.bf16.msra.mxu0 %v6331
    %6614 = vmatprep.subr.bf16.mxu0 %v6335
    %6615 = vmatpush1.bf16.msra.mxu0 %v6334
    %6616 = vmatprep.subr.bf16.mxu0 %v6338
    %6617 = vmatpush1.bf16.msra.mxu0 %v6337
    %6618 = vmatprep.subr.bf16.mxu0 %v6341
    %6619 = vmatpush1.bf16.msra.mxu0 %v6340
    %6620 = vmatprep.subr.bf16.mxu0 %v6344
    %6621 = vmatpush1.bf16.msra.mxu0 %v6343
    %6622 = vmatprep.subr.bf16.mxu0 %v6347
    %6623 = vmatpush1.bf16.msra.mxu0 %v6346
    %6624 = vmatprep.subr.bf16.mxu0 %v6350
    %6625 = vmatpush1.bf16.msra.mxu0 %v6349
    %6626 = vmatprep.subr.bf16.mxu0 %v6353
    %6627 = vmatpush1.bf16.msra.mxu0 %v6352
    %6628 = vmatprep.subr.bf16.mxu0 %v6356
    %6629 = vmatpush1.bf16.msra.mxu0 %v6355
    %6630 = vmatprep.subr.bf16.mxu0 %v6359
    %6631 = vmatpush1.bf16.msra.mxu0 %v6358
    %6632 = vmatprep.subr.bf16.mxu0 %v6362
    %6633 = vmatpush1.bf16.msra.mxu0 %v6361
    %6634 = vmatprep.subr.bf16.mxu0 %v6365
    %6635 = vmatpush1.bf16.msra.mxu0 %v6364
    %6636 = vmatprep.subr.bf16.mxu0 %v6368
    %6637 = vmatpush1.bf16.msra.mxu0 %v6367
    %6638 = vmatprep.subr.bf16.mxu0 %v6371
    %6639 = vmatpush1.bf16.msra.mxu0 %v6370
    %6640 = vmatprep.mubr.bf16.mxu0 %v5585
    %6641 = vmatmul.mubr.bf16.gmra.mrb[0].mxu0 %v5584
    %v6642 = vpop.f32.mrb[0].mxu0
    %v6643 = vadd.f32 %v6600, %v6642
    %v6644 = vpop.f32.mrb[0].mxu0
    %v6645 = vadd.f32 %v6602, %v6644
    %v6646 = vpop.f32.mrb[0].mxu0
    %v6647 = vadd.f32 %v6604, %v6646
    %v6648 = vpop.f32.mrb[0].mxu0
    %v6649 = vadd.f32 %v6606, %v6648
    %6650 = vdwg.mxu0
    %6651 = vmatprep.subr.bf16.mxu0 %v6374
    %6652 = vmatpush1.bf16.msra.mxu0 %v6373
    %6653 = vmatprep.subr.bf16.mxu0 %v6377
    %6654 = vmatpush1.bf16.msra.mxu0 %v6376
    %6655 = vmatprep.subr.bf16.mxu0 %v6380
    %6656 = vmatpush1.bf16.msra.mxu0 %v6379
    %6657 = vmatprep.subr.bf16.mxu0 %v6383
    %6658 = vmatpush1.bf16.msra.mxu0 %v6382
    %6659 = vmatprep.subr.bf16.mxu0 %v6386
    %6660 = vmatpush1.bf16.msra.mxu0 %v6385
    %6661 = vmatprep.subr.bf16.mxu0 %v6389
    %6662 = vmatpush1.bf16.msra.mxu0 %v6388
    %6663 = vmatprep.subr.bf16.mxu0 %v6392
    %6664 = vmatpush1.bf16.msra.mxu0 %v6391
    %6665 = vmatprep.subr.bf16.mxu0 %v6395
    %6666 = vmatpush1.bf16.msra.mxu0 %v6394
    %6667 = vmatprep.subr.bf16.mxu0 %v6398
    %6668 = vmatpush1.bf16.msra.mxu0 %v6397
    %6669 = vmatprep.subr.bf16.mxu0 %v6401
    %6670 = vmatpush1.bf16.msra.mxu0 %v6400
    %6671 = vmatprep.subr.bf16.mxu0 %v6404
    %6672 = vmatpush1.bf16.msra.mxu0 %v6403
    %6673 = vmatprep.subr.bf16.mxu0 %v6407
    %6674 = vmatpush1.bf16.msra.mxu0 %v6406
    %6675 = vmatprep.subr.bf16.mxu0 %v6410
    %6676 = vmatpush1.bf16.msra.mxu0 %v6409
    %6677 = vmatprep.subr.bf16.mxu0 %v6413
    %6678 = vmatpush1.bf16.msra.mxu0 %v6412
    %6679 = vmatprep.subr.bf16.mxu0 %v6416
    %6680 = vmatpush1.bf16.msra.mxu0 %v6415
    %6681 = vmatprep.subr.bf16.mxu0 %v6419
    %6682 = vmatpush1.bf16.msra.mxu0 %v6418
    %6683 = vmatprep.mubr.bf16.mxu0 %v5587
    %6684 = vmatmul.mubr.bf16.gmra.mrb[0].mxu0 %v5586
    %v6685 = vpop.f32.mrb[0].mxu0
    %v6686 = vadd.f32 %v6643, %v6685
    %v6687 = vpop.f32.mrb[0].mxu0
    %v6688 = vadd.f32 %v6645, %v6687
    %v6689 = vpop.f32.mrb[0].mxu0
    %v6690 = vadd.f32 %v6647, %v6689
    %v6691 = vpop.f32.mrb[0].mxu0
    %v6692 = vadd.f32 %v6649, %v6691
    %6693 = vdwg.mxu0
    %6694 = vmatprep.subr.bf16.mxu0 0
    %6695 = vmatpush1.bf16.msra.mxu0 %v6279
    %6696 = vmatprep.subr.bf16.mxu0 0
    %6697 = vmatpush1.bf16.msra.mxu0 %v6282
    %6698 = vmatprep.subr.bf16.mxu0 0
    %6699 = vmatpush1.bf16.msra.mxu0 %v6285
    %6700 = vmatprep.subr.bf16.mxu0 0
    %6701 = vmatpush1.bf16.msra.mxu0 %v6288
    %6702 = vmatprep.subr.bf16.mxu0 0
    %6703 = vmatpush1.bf16.msra.mxu0 %v6291
    %6704 = vmatprep.subr.bf16.mxu0 0
    %6705 = vmatpush1.bf16.msra.mxu0 %v6294
    %6706 = vmatprep.subr.bf16.mxu0 0
    %6707 = vmatpush1.bf16.msra.mxu0 %v6297
    %6708 = vmatprep.subr.bf16.mxu0 0
    %6709 = vmatpush1.bf16.msra.mxu0 %v6300
    %6710 = vmatprep.subr.bf16.mxu0 0
    %6711 = vmatpush1.bf16.msra.mxu0 %v6303
    %6712 = vmatprep.subr.bf16.mxu0 0
    %6713 = vmatpush1.bf16.msra.mxu0 %v6306
    %6714 = vmatprep.subr.bf16.mxu0 0
    %6715 = vmatpush1.bf16.msra.mxu0 %v6309
    %6716 = vmatprep.subr.bf16.mxu0 0
    %6717 = vmatpush1.bf16.msra.mxu0 %v6312
    %6718 = vmatprep.subr.bf16.mxu0 0
    %6719 = vmatpush1.bf16.msra.mxu0 %v6315
    %6720 = vmatprep.subr.bf16.mxu0 0
    %6721 = vmatpush1.bf16.msra.mxu0 %v6318
    %6722 = vmatprep.subr.bf16.mxu0 0
    %6723 = vmatpush1.bf16.msra.mxu0 %v6321
    %6724 = vmatprep.subr.bf16.mxu0 0
    %6725 = vmatpush1.bf16.msra.mxu0 %v6324
    %6726 = vmatprep.mubr.bf16.mxu0 %v5583
    %6727 = vmatmul.mubr.bf16.gmra.mrb[0].mxu0 %v5582
    %v6728 = vpop.f32.mrb[0].mxu0
    %v6729 = vadd.f32 %v5793, %v6728
    %v6730 = vpop.f32.mrb[0].mxu0
    %v6731 = vpop.f32.mrb[0].mxu0
    %v6732 = vadd.f32 %v5793, %v6731
    %v6733 = vpop.f32.mrb[0].mxu0
    %6734 = vdwg.mxu0
    %6735 = vmatprep.subr.bf16.mxu0 0
    %6736 = vmatpush1.bf16.msra.mxu0 %v6327
    %6737 = vmatprep.subr.bf16.mxu0 0
    %6738 = vmatpush1.bf16.msra.mxu0 %v6330
    %6739 = vmatprep.subr.bf16.mxu0 0
    %6740 = vmatpush1.bf16.msra.mxu0 %v6333
    %6741 = vmatprep.subr.bf16.mxu0 0
    %6742 = vmatpush1.bf16.msra.mxu0 %v6336
    %6743 = vmatprep.subr.bf16.mxu0 0
    %6744 = vmatpush1.bf16.msra.mxu0 %v6339
    %6745 = vmatprep.subr.bf16.mxu0 0
    %6746 = vmatpush1.bf16.msra.mxu0 %v6342
    %6747 = vmatprep.subr.bf16.mxu0 0
    %6748 = vmatpush1.bf16.msra.mxu0 %v6345
    %6749 = vmatprep.subr.bf16.mxu0 0
    %6750 = vmatpush1.bf16.msra.mxu0 %v6348
    %6751 = vmatprep.subr.bf16.mxu0 0
    %6752 = vmatpush1.bf16.msra.mxu0 %v6351
    %6753 = vmatprep.subr.bf16.mxu0 0
    %6754 = vmatpush1.bf16.msra.mxu0 %v6354
    %6755 = vmatprep.subr.bf16.mxu0 0
    %6756 = vmatpush1.bf16.msra.mxu0 %v6357
    %6757 = vmatprep.subr.bf16.mxu0 0
    %6758 = vmatpush1.bf16.msra.mxu0 %v6360
    %6759 = vmatprep.subr.bf16.mxu0 0
    %6760 = vmatpush1.bf16.msra.mxu0 %v6363
    %6761 = vmatprep.subr.bf16.mxu0 0
    %6762 = vmatpush1.bf16.msra.mxu0 %v6366
    %6763 = vmatprep.subr.bf16.mxu0 0
    %6764 = vmatpush1.bf16.msra.mxu0 %v6369
    %6765 = vmatprep.subr.bf16.mxu0 0
    %6766 = vmatpush1.bf16.msra.mxu0 %v6372
    %6767 = vmatprep.mubr.bf16.mxu0 %v5585
    %6768 = vmatmul.mubr.bf16.gmra.mrb[0].mxu0 %v5584
    %v6769 = vpop.f32.mrb[0].mxu0
    %v6770 = vadd.f32 %v6729, %v6769
    %v6771 = vpop.f32.mrb[0].mxu0
    %v6772 = vpop.f32.mrb[0].mxu0
    %v6773 = vadd.f32 %v6732, %v6772
    %v6774 = vpop.f32.mrb[0].mxu0
    %6775 = vdwg.mxu0
    %6776 = vmatprep.subr.bf16.mxu0 0
    %6777 = vmatpush1.bf16.msra.mxu0 %v6375
    %6778 = vmatprep.subr.bf16.mxu0 0
    %6779 = vmatpush1.bf16.msra.mxu0 %v6378
    %6780 = vmatprep.subr.bf16.mxu0 0
    %6781 = vmatpush1.bf16.msra.mxu0 %v6381
    %6782 = vmatprep.subr.bf16.mxu0 0
    %6783 = vmatpush1.bf16.msra.mxu0 %v6384
    %6784 = vmatprep.subr.bf16.mxu0 0
    %6785 = vmatpush1.bf16.msra.mxu0 %v6387
    %6786 = vmatprep.subr.bf16.mxu0 0
    %6787 = vmatpush1.bf16.msra.mxu0 %v6390
    %6788 = vmatprep.subr.bf16.mxu0 0
    %6789 = vmatpush1.bf16.msra.mxu0 %v6393
    %6790 = vmatprep.subr.bf16.mxu0 0
    %6791 = vmatpush1.bf16.msra.mxu0 %v6396
    %6792 = vmatprep.subr.bf16.mxu0 0
    %6793 = vmatpush1.bf16.msra.mxu0 %v6399
    %6794 = vmatprep.subr.bf16.mxu0 0
    %6795 = vmatpush1.bf16.msra.mxu0 %v6402
    %6796 = vmatprep.subr.bf16.mxu0 0
    %6797 = vmatpush1.bf16.msra.mxu0 %v6405
    %6798 = vmatprep.subr.bf16.mxu0 0
    %6799 = vmatpush1.bf16.msra.mxu0 %v6408
    %6800 = vmatprep.subr.bf16.mxu0 0
    %6801 = vmatpush1.bf16.msra.mxu0 %v6411
    %6802 = vmatprep.subr.bf16.mxu0 0
    %6803 = vmatpush1.bf16.msra.mxu0 %v6414
    %6804 = vmatprep.subr.bf16.mxu0 0
    %6805 = vmatpush1.bf16.msra.mxu0 %v6417
    %6806 = vmatprep.subr.bf16.mxu0 0
    %6807 = vmatpush1.bf16.msra.mxu0 %v6420
    %6808 = vmatprep.mubr.bf16.mxu0 %v5587
    %6809 = vmatmul.mubr.bf16.gmra.mrb[0].mxu0 %v5586
    %v6810 = vpop.f32.mrb[0].mxu0
    %v6811 = vadd.f32 %v6770, %v6810
    %v6812 = vpop.f32.mrb[0].mxu0
    %v6813 = vpop.f32.mrb[0].mxu0
    %v6814 = vadd.f32 %v6773, %v6813
    %v6815 = vpop.f32.mrb[0].mxu0
    %6816 = vdwg.mxu0
    %v6817 = vmax.f32 %v6686, 0.0
    %v6818 = vmax.f32 %v6688, 0.0
    %v6819 = vmax.f32 %v6811, 0.0
    %v6820 = vmax.f32 %v6690, 0.0
    %v6821 = vmax.f32 %v6692, 0.0
    %v6822 = vmax.f32 %v6814, 0.0
    %v6823 = vpack.c.bf16 %v6820, %v6817
    %v6824 = vpack.c.bf16 %v6821, %v6818
    %v6825 = vpack.c.bf16 %v6822, %v6819
    %v6826 = vld [vmem:[#allocation14] sm:$0xf]
    %v6827 = vld [vmem:[#allocation14 + $0x4] sm:$0xf]
    %v6828 = vld [vmem:[#allocation14 + $0x8] sm:$0xf]
    %v6829 = vld [vmem:[#allocation14 + $0xc] sm:$0xf]
    %v6830 = vld [vmem:[#allocation14 + $0x10] sm:$0xf]
    %v6831 = vld [vmem:[#allocation14 + $0x14] sm:$0xf]
    %v6832 = vld [vmem:[#allocation14 + $0x18] sm:$0xf]
    %v6833 = vld [vmem:[#allocation14 + $0x1c] sm:$0xf]
    %v6834 = vld [vmem:[#allocation14 + $0x20] sm:$0xf]
    %v6835 = vld [vmem:[#allocation14 + $0x24] sm:$0xf]
    %v6836 = vld [vmem:[#allocation14 + $0x28] sm:$0xf]
    %v6837 = vld [vmem:[#allocation14 + $0x2c] sm:$0xf]
    %v6838 = vld [vmem:[#allocation14 + $0x30] sm:$0xf]
    %v6839 = vld [vmem:[#allocation14 + $0x34] sm:$0xf]
    %v6840 = vld [vmem:[#allocation14 + $0x38] sm:$0xf]
    %v6841 = vld [vmem:[#allocation14 + $0x3c] sm:$0xf]
    %v6842 = vld [vmem:[#allocation14 + $0x40] sm:$0xf]
    %v6843 = vld [vmem:[#allocation14 + $0x44] sm:$0xf]
    %v6844 = vld [vmem:[#allocation14 + $0x48] sm:$0xf]
    %v6845 = vld [vmem:[#allocation14 + $0x4c] sm:$0xf]
    %v6846 = vld [vmem:[#allocation14 + $0x50] sm:$0xf]
    %v6847 = vld [vmem:[#allocation14 + $0x54] sm:$0xf]
    %v6848 = vld [vmem:[#allocation14 + $0x58] sm:$0xf]
    %v6849 = vld [vmem:[#allocation14 + $0x5c] sm:$0xf]
    %v6850 = vld [vmem:[#allocation14 + $0x60] sm:$0xf]
    %v6851 = vld [vmem:[#allocation14 + $0x64] sm:$0xf]
    %v6852 = vld [vmem:[#allocation14 + $0x68] sm:$0xf]
    %v6853 = vld [vmem:[#allocation14 + $0x6c] sm:$0xf]
    %v6854 = vld [vmem:[#allocation14 + $0x70] sm:$0xf]
    %v6855 = vld [vmem:[#allocation14 + $0x74] sm:$0xf]
    %v6856 = vld [vmem:[#allocation14 + $0x78] sm:$0xf]
    %v6857 = vld [vmem:[#allocation14 + $0x7c] sm:$0xf]
    %v6858 = vld [vmem:[#allocation14 + $0x80] sm:$0xf]
    %v6859 = vld [vmem:[#allocation14 + $0x84] sm:$0xf]
    %v6860 = vld [vmem:[#allocation14 + $0x88] sm:$0xf]
    %v6861 = vld [vmem:[#allocation14 + $0x8c] sm:$0xf]
    %v6862 = vld [vmem:[#allocation14 + $0x90] sm:$0xf]
    %v6863 = vld [vmem:[#allocation14 + $0x94] sm:$0xf]
    %v6864 = vld [vmem:[#allocation14 + $0x98] sm:$0xf]
    %v6865 = vld [vmem:[#allocation14 + $0x9c] sm:$0xf]
    %v6866 = vld [vmem:[#allocation14 + $0xa0] sm:$0xf]
    %v6867 = vld [vmem:[#allocation14 + $0xa4] sm:$0xf]
    %v6868 = vld [vmem:[#allocation14 + $0xa8] sm:$0xf]
    %v6869 = vld [vmem:[#allocation14 + $0xac] sm:$0xf]
    %v6870 = vld [vmem:[#allocation14 + $0xb0] sm:$0xf]
    %v6871 = vld [vmem:[#allocation14 + $0xb4] sm:$0xf]
    %v6872 = vld [vmem:[#allocation14 + $0xb8] sm:$0xf]
    %v6873 = vld [vmem:[#allocation14 + $0xbc] sm:$0xf]
    %v6874 = vld [vmem:[#allocation16] sm:$0x1]
    %v6876 = vlaneseq
    %v6877 = vshrl.u32 %v6876, 7
    %v6878 = vsub.s32 0, %v6877
    %v6879 = vrot.slane %v6874, %v6878
    %v6929 = vunpack.c.l.b16 %v6826
    %v6930 = vunpack.c.l.b16 %v6827
    %v6931 = vunpack.c.l.b16 %v6828
    %v6932 = vunpack.c.l.b16 %v6829
    %v6933 = vunpack.c.l.b16 %v6830
    %v6934 = vunpack.c.l.b16 %v6831
    %v6935 = vunpack.c.l.b16 %v6832
    %v6936 = vunpack.c.l.b16 %v6833
    %v6937 = vunpack.c.l.b16 %v6834
    %v6938 = vunpack.c.l.b16 %v6835
    %v6939 = vunpack.c.l.b16 %v6836
    %v6940 = vunpack.c.l.b16 %v6837
    %v6941 = vunpack.c.l.b16 %v6838
    %v6942 = vunpack.c.l.b16 %v6839
    %v6943 = vunpack.c.l.b16 %v6840
    %v6944 = vunpack.c.l.b16 %v6841
    %v6945 = vunpack.c.l.b16 %v6842
    %v6946 = vunpack.c.l.b16 %v6843
    %v6947 = vunpack.c.l.b16 %v6844
    %v6948 = vunpack.c.l.b16 %v6845
    %v6949 = vunpack.c.l.b16 %v6846
    %v6950 = vunpack.c.l.b16 %v6847
    %v6951 = vunpack.c.l.b16 %v6848
    %v6952 = vunpack.c.l.b16 %v6849
    %v6953 = vunpack.c.l.b16 %v6850
    %v6954 = vunpack.c.l.b16 %v6851
    %v6955 = vunpack.c.l.b16 %v6852
    %v6956 = vunpack.c.l.b16 %v6853
    %v6957 = vunpack.c.l.b16 %v6854
    %v6958 = vunpack.c.l.b16 %v6855
    %v6959 = vunpack.c.l.b16 %v6856
    %v6960 = vunpack.c.l.b16 %v6857
    %v6961 = vunpack.c.l.b16 %v6858
    %v6962 = vunpack.c.l.b16 %v6859
    %v6963 = vunpack.c.l.b16 %v6860
    %v6964 = vunpack.c.l.b16 %v6861
    %v6965 = vunpack.c.l.b16 %v6862
    %v6966 = vunpack.c.l.b16 %v6863
    %v6967 = vunpack.c.l.b16 %v6864
    %v6968 = vunpack.c.l.b16 %v6865
    %v6969 = vunpack.c.l.b16 %v6866
    %v6970 = vunpack.c.l.b16 %v6867
    %v6971 = vunpack.c.l.b16 %v6868
    %v6972 = vunpack.c.l.b16 %v6869
    %v6973 = vunpack.c.l.b16 %v6870
    %v6974 = vunpack.c.l.b16 %v6871
    %v6975 = vunpack.c.l.b16 %v6872
    %v6976 = vunpack.c.l.b16 %v6873
    %v6977 = vpack.c.b16 %v6930, %v6929
    %v6978 = vpack.c.b16 %v6932, %v6931
    %v6979 = vpack.c.b16 %v6934, %v6933
    %v6980 = vpack.c.b16 %v6936, %v6935
    %v6981 = vpack.c.b16 %v6938, %v6937
    %v6982 = vpack.c.b16 %v6940, %v6939
    %v6983 = vpack.c.b16 %v6942, %v6941
    %v6984 = vpack.c.b16 %v6944, %v6943
    %v6985 = vpack.c.b16 %v6946, %v6945
    %v6986 = vpack.c.b16 %v6948, %v6947
    %v6987 = vpack.c.b16 %v6950, %v6949
    %v6988 = vpack.c.b16 %v6952, %v6951
    %v6989 = vpack.c.b16 %v6954, %v6953
    %v6990 = vpack.c.b16 %v6956, %v6955
    %v6991 = vpack.c.b16 %v6958, %v6957
    %v6992 = vpack.c.b16 %v6960, %v6959
    %v6993 = vpack.c.b16 %v6962, %v6961
    %v6994 = vpack.c.b16 %v6964, %v6963
    %v6995 = vpack.c.b16 %v6966, %v6965
    %v6996 = vpack.c.b16 %v6968, %v6967
    %v6997 = vpack.c.b16 %v6970, %v6969
    %v6998 = vpack.c.b16 %v6972, %v6971
    %v6999 = vpack.c.b16 %v6974, %v6973
    %v7000 = vpack.c.b16 %v6976, %v6975
    %7025 = vmatprep.subr.bf16.mxu0 0
    %7026 = vmatpush1.bf16.msra.mxu0 %v6977
    %7027 = vmatprep.subr.bf16.mxu0 0
    %7028 = vmatpush1.bf16.msra.mxu0 %v6978
    %7029 = vmatprep.subr.bf16.mxu0 0
    %7030 = vmatpush1.bf16.msra.mxu0 %v6979
    %7031 = vmatprep.subr.bf16.mxu0 0
    %7032 = vmatpush1.bf16.msra.mxu0 %v6980
    %7033 = vmatprep.subr.bf16.mxu0 0
    %7034 = vmatpush1.bf16.msra.mxu0 %v6981
    %7035 = vmatprep.subr.bf16.mxu0 0
    %7036 = vmatpush1.bf16.msra.mxu0 %v6982
    %7037 = vmatprep.subr.bf16.mxu0 0
    %7038 = vmatpush1.bf16.msra.mxu0 %v6983
    %7039 = vmatprep.subr.bf16.mxu0 0
    %7040 = vmatpush1.bf16.msra.mxu0 %v6984
    %7041 = vmatprep.subr.bf16.mxu0 0
    %7042 = vmatpush1.bf16.msra.mxu0 %v6985
    %7043 = vmatprep.subr.bf16.mxu0 0
    %7044 = vmatpush1.bf16.msra.mxu0 %v6986
    %7045 = vmatprep.subr.bf16.mxu0 0
    %7046 = vmatpush1.bf16.msra.mxu0 %v6987
    %7047 = vmatprep.subr.bf16.mxu0 0
    %7048 = vmatpush1.bf16.msra.mxu0 %v6988
    %7049 = vmatprep.subr.bf16.mxu0 0
    %7050 = vmatpush1.bf16.msra.mxu0 %v6989
    %7051 = vmatprep.subr.bf16.mxu0 0
    %7052 = vmatpush1.bf16.msra.mxu0 %v6990
    %7053 = vmatprep.subr.bf16.mxu0 0
    %7054 = vmatpush1.bf16.msra.mxu0 %v6991
    %7055 = vmatprep.subr.bf16.mxu0 0
    %7056 = vmatpush1.bf16.msra.mxu0 %v6992
    %7057 = vmatprep.mubr.bf16.mxu0 %v6824
    %7058 = vmatmul.mubr.bf16.gmra.mrb[0].mxu0 %v6823
    %v7059 = vpop.f32.mrb[0].mxu0
    %v7060 = vadd.f32 %v6879, %v7059
    %v7061 = vpop.f32.mrb[0].mxu0
    %v7062 = vpop.f32.mrb[0].mxu0
    %v7063 = vadd.f32 %v6879, %v7062
    %v7064 = vpop.f32.mrb[0].mxu0
    %7065 = vdwg.mxu0
    %7066 = vmatprep.subr.bf16.mxu0 0
    %7067 = vmatpush1.bf16.msra.mxu0 %v6993
    %7068 = vmatprep.subr.bf16.mxu0 0
    %7069 = vmatpush1.bf16.msra.mxu0 %v6994
    %7070 = vmatprep.subr.bf16.mxu0 0
    %7071 = vmatpush1.bf16.msra.mxu0 %v6995
    %7072 = vmatprep.subr.bf16.mxu0 0
    %7073 = vmatpush1.bf16.msra.mxu0 %v6996
    %7074 = vmatprep.subr.bf16.mxu0 0
    %7075 = vmatpush1.bf16.msra.mxu0 %v6997
    %7076 = vmatprep.subr.bf16.mxu0 0
    %7077 = vmatpush1.bf16.msra.mxu0 %v6998
    %7078 = vmatprep.subr.bf16.mxu0 0
    %7079 = vmatpush1.bf16.msra.mxu0 %v6999
    %7080 = vmatprep.subr.bf16.mxu0 0
    %7081 = vmatpush1.bf16.msra.mxu0 %v7000
    %7082 = vmatprep.subr.bf16.mxu0 0
    %7083 = vmatpush1.bf16.msra.mxu0 0
    %7084 = vmatprep.subr.bf16.mxu0 0
    %7085 = vmatpush1.bf16.msra.mxu0 0
    %7086 = vmatprep.subr.bf16.mxu0 0
    %7087 = vmatpush1.bf16.msra.mxu0 0
    %7088 = vmatprep.subr.bf16.mxu0 0
    %7089 = vmatpush1.bf16.msra.mxu0 0
    %7090 = vmatprep.subr.bf16.mxu0 0
    %7091 = vmatpush1.bf16.msra.mxu0 0
    %7092 = vmatprep.subr.bf16.mxu0 0
    %7093 = vmatpush1.bf16.msra.mxu0 0
    %7094 = vmatprep.subr.bf16.mxu0 0
    %7095 = vmatpush1.bf16.msra.mxu0 0
    %7096 = vmatprep.subr.bf16.mxu0 0
    %7097 = vmatpush1.bf16.msra.mxu0 0
    %7098 = vmatprep.mubr.bf16.mxu0 0
    %7099 = vmatmul.mubr.bf16.gmra.mrb[0].mxu0 %v6825
    %v7100 = vpop.f32.mrb[0].mxu0
    %v7101 = vadd.f32 %v7060, %v7100
    %v7102 = vpop.f32.mrb[0].mxu0
    %v7103 = vpop.f32.mrb[0].mxu0
    %v7104 = vadd.f32 %v7063, %v7103
    %v7105 = vpop.f32.mrb[0].mxu0
    %7106 = vdwg.mxu0
    %v7107 = vmax.f32 %v7101, 0.0
    %v7108 = vmax.f32 %v7104, 0.0
    %7109 = vst [vmem:[#allocation17] sm:$0xff] %v7107
    %7110 = vst [vmem:[#allocation17 + $0x8] sm:$0xff] %v7108
    // Predicated region
    $region74: #{tpu_custom_call.1} parent=1 // pred_check
      _
    $region75: #{tpu_custom_call.1} parent=1 // pred_check_branch
      %7112 = sbr.rel (0) target = $region77
    $region76: #{tpu_custom_call.1} parent=1 // pred_region
      %s7114 = ssub.s32 256, 256
      %7115 = vsyncadd [#allocation4], %s7114
      %s7116 = sshll.u32 [#allocation17], 4
      %s7117 = int_to_ptr.vmem [resolvable:$true] %s7116
      %7122 = dma.vmem_to_hbm [thread:$0]  %s7117, 256, %s9, [#allocation4], 128, 128, 8
    $region77: #{tpu_custom_call.1} parent=1 // pred_fallthru
      _
    // Predicated region
    $region78: #{tpu_custom_call.1} parent=1 // pred_check
      _
    $region79: #{tpu_custom_call.1} parent=1 // pred_check_branch
      %7124 = sbr.rel (0) target = $region81
    $region80: #{tpu_custom_call.1} parent=1 // pred_region
      %7125 = dma.done [#allocation4], 256
    $region81: #{tpu_custom_call.1} parent=1 // pred_fallthru
      _
    %7126 = vsyncpa [#allocation3], 1
    %7127 = vsyncpa [#allocation6], 1
    %7128 = vsyncpa [#allocation9], 1
    %7129 = vsyncpa [#allocation12], 1
    %7130 = vsyncpa [#allocation15], 1
    %7131 = vsyncpa [#allocation4], 1

</llo_original>
